<compile_context>
chip_gen: v7x
topology: tpu7x:2x2x1
jax: 0.10.0
libtpu: 0.0.40
codegen_flags: <defaults>
</compile_context>

<pallas_src>
import functools
import math

import jax
import jax.numpy as jnp
from jax.experimental import pallas as pl
from jax.experimental.pallas import tpu as pltpu


# ----------------------------------------------------------------------------
# Fused forward kernel (one pallas_call for the whole model)
# ----------------------------------------------------------------------------
def _forward_kernel(patches_ref, cls_ref, cw_ref, cb_ref,
                    wqkv_ref, bqkv_ref, wo_ref, w1_ref, b1_ref, w2_ref,
                    vecc_ref, wout_ref, bout_ref,
                    out_ref, attn_ref,
                    x_scr, o_scr,
                    *, nb, t_conv, n_heads, n_layers, eps):
    f32 = jnp.float32
    c = wo_ref.shape[-1]
    dh = c // n_heads
    t1 = t_conv + 1

    # ---- Conv1d + ReLU (BatchNorm folded into cw/cb) via im2col matmul ----
    conv = jnp.dot(patches_ref[...], cw_ref[...], preferred_element_type=f32)
    conv = jnp.maximum(conv + cb_ref[...], 0.0)              # (nb*t_conv, c)

    # ---- assemble [CLS ; conv tokens] per batch into VMEM scratch ----
    cls = cls_ref[...]                                       # (nb, c)
    for bb in range(nb):
        r0 = bb * t1
        x_scr[r0:r0 + 1, :] = cls[bb:bb + 1, :]
        x_scr[r0 + 1:r0 + t1, :] = conv[bb * t_conv:(bb + 1) * t_conv, :]
    x = x_scr[...]                                           # (nb*t1, c)

    def layer_norm(v, g, b):
        mu = jnp.mean(v, axis=-1, keepdims=True)
        var = jnp.mean((v - mu) ** 2, axis=-1, keepdims=True)
        return (v - mu) * jax.lax.rsqrt(var + eps) * g + b

    # per-head lane masks (hoisted: identical for every layer / batch)
    lane = jax.lax.broadcasted_iota(jnp.int32, (t1, c), 1)
    head_mask = [(lane >= h * dh) & (lane < (h + 1) * dh)
                 for h in range(n_heads)]
    inv_heads = 1.0 / n_heads

    # ---- transformer encoder layers (fully fused, statically unrolled) ----
    for l in range(n_layers):
        last = (l == n_layers - 1)
        vec = vecc_ref[l]                                    # (8, c) packed
        bo, b2 = vec[0:1, :], vec[1:2, :]
        ln1_g, ln1_b = vec[2:3, :], vec[3:4, :]
        ln2_g, ln2_b = vec[4:5, :], vec[5:6, :]

        # fused Q/K/V projection (1/sqrt(d_head) already folded into Wq/bq)
        qkv = jnp.dot(x, wqkv_ref[l], preferred_element_type=f32) + bqkv_ref[l]
        q, k, v = qkv[:, 0:c], qkv[:, c:2 * c], qkv[:, 2 * c:3 * c]

        # self-attention, per (batch, head) with lane-masked full-width
        # operands (keeps everything lane-dense, no (T, dh) relayouts)
        for bb in range(nb):
            r0 = bb * t1
            q_b = q[r0:r0 + t1, :]
            k_b = k[r0:r0 + t1, :]
            v_b = v[r0:r0 + t1, :]
            o_b = jnp.zeros((t1, c), f32)
            p_sum = jnp.zeros((t1, t1), f32)
            for h in range(n_heads):
                q_h = jnp.where(head_mask[h], q_b, 0.0)
                # q_h @ k_b.T without materializing the transpose
                s = jax.lax.dot_general(
                    q_h, k_b, (((1,), (1,)), ((), ())),
                    preferred_element_type=f32)               # (t1, t1)
                s = s - jnp.max(s, axis=-1, keepdims=True)
                e = jnp.exp(s)
                # exact reciprocal: probabilities are model outputs
                p = e * pl.reciprocal(jnp.sum(e, axis=-1, keepdims=True),
                                      approx=False)
                v_h = jnp.where(head_mask[h], v_b, 0.0)
                o_b = o_b + jnp.dot(p, v_h, preferred_element_type=f32)
                p_sum = p_sum + p
            o_scr[r0:r0 + t1, :] = o_b
            # head-averaged attention map written directly (no per-head probs)
            attn_ref[l * nb + bb, :, :] = p_sum * inv_heads

        if not last:
            # output projection + residual + LayerNorm1
            o = jnp.dot(o_scr[...], wo_ref[l], preferred_element_type=f32) + bo
            x = layer_norm(x + o, ln1_g, ln1_b)
            # fused FFN (hidden activation never leaves VMEM) + residual + LN2
            h1 = jnp.maximum(
                jnp.dot(x, w1_ref[l], preferred_element_type=f32) + b1_ref[l],
                0.0)
            ff = jnp.dot(h1, w2_ref[l], preferred_element_type=f32) + b2
            x = layer_norm(x + ff, ln2_g, ln2_b)
        else:
            # Only the CLS rows feed the model output -> restrict the last
            # layer's post-attention work (O-proj, LN1, FFN, LN2, head) to
            # nb rows instead of nb*t1 rows.
            for bb in range(nb):
                r0 = bb * t1
                x_scr[bb:bb + 1, :] = x[r0:r0 + 1, :]
                x_scr[nb + bb:nb + bb + 1, :] = o_scr[r0:r0 + 1, :]
            xc = x_scr[0:nb, :]                               # (nb, c)
            oc = (jnp.dot(x_scr[nb:2 * nb, :], wo_ref[l],
                          preferred_element_type=f32) + bo)
            xc = layer_norm(xc + oc, ln1_g, ln1_b)
            h1 = jnp.maximum(
                jnp.dot(xc, w1_ref[l], preferred_element_type=f32) + b1_ref[l],
                0.0)
            ff = jnp.dot(h1, w2_ref[l], preferred_element_type=f32) + b2
            xc = layer_norm(xc + ff, ln2_g, ln2_b)
            # ---- CLS head: ReLU + final linear (dropout is identity) ----
            cls_out = jnp.maximum(xc, 0.0)
            out_ref[...] = (jnp.dot(cls_out, wout_ref[...],
                                    preferred_element_type=f32)
                            + bout_ref[...])


def _vspec(shape):
    zero = (0,) * len(shape)
    return pl.BlockSpec(shape, lambda i: zero)


# ----------------------------------------------------------------------------
# Parameter init + packing (BN fold, QK-scale fold, QKV concat, stacking)
# ----------------------------------------------------------------------------
def init_params(key, *, cin, channel, window, ff_dim, n_layers, n_out):
    keys = iter(jax.random.split(key, 8 + 10 * n_layers))

    def w(shape, scale=0.05):
        return scale * jax.random.normal(next(keys), shape, dtype=jnp.float32)

    params = {
        # Conv1d(3, C, W): weight (Cout, Cin, W)
        "conv_w": w((channel, cin, window)),
        "conv_b": w((channel,)),
        # BatchNorm1d(C) (fresh / eval-mode running stats)
        "bn_gamma": jnp.ones((channel,), jnp.float32),
        "bn_beta": jnp.zeros((channel,), jnp.float32),
        "bn_mean": jnp.zeros((channel,), jnp.float32),
        "bn_var": jnp.ones((channel,), jnp.float32),
        # final Linear(C, 3)
        "w_out": w((channel, n_out)),
        "b_out": jnp.zeros((n_out,), jnp.float32),
        "layers": [],
    }
    for _ in range(n_layers):
        params["layers"].append({
            "wq": w((channel, channel)), "bq": jnp.zeros((channel,), jnp.float32),
            "wk": w((channel, channel)), "bk": jnp.zeros((channel,), jnp.float32),
            "wv": w((channel, channel)), "bv": jnp.zeros((channel,), jnp.float32),
            "wo": w((channel, channel)), "bo": jnp.zeros((channel,), jnp.float32),
            "w1": w((channel, ff_dim)), "b1": jnp.zeros((ff_dim,), jnp.float32),
            "w2": w((ff_dim, channel)), "b2": jnp.zeros((channel,), jnp.float32),
            "ln1_g": jnp.ones((channel,), jnp.float32),
            "ln1_b": jnp.zeros((channel,), jnp.float32),
            "ln2_g": jnp.ones((channel,), jnp.float32),
            "ln2_b": jnp.zeros((channel,), jnp.float32),
        })
    return params


def _pack_params(params, *, cin, window, n_heads, eps):
    channel = params["conv_w"].shape[0]
    # fold eval-mode BatchNorm into the conv weight/bias
    bn_scale = params["bn_gamma"] * jax.lax.rsqrt(params["bn_var"] + eps)
    conv_w = (params["conv_w"].reshape(channel, cin * window).T
              * bn_scale[None, :])
    conv_b = ((params["conv_b"] - params["bn_mean"]) * bn_scale
              + params["bn_beta"]).reshape(1, channel)

    # fold the attention score scale 1/sqrt(d_head) into Wq/bq
    attn_scale = 1.0 / math.sqrt(channel // n_heads)

    zeros_c = jnp.zeros((channel,), jnp.float32)
    wqkv, bqkv, wo, w1, b1, w2, vec_c = [], [], [], [], [], [], []
    for lp in params["layers"]:
        wqkv.append(jnp.concatenate(
            [lp["wq"] * attn_scale, lp["wk"], lp["wv"]], axis=1))
        bqkv.append(jnp.concatenate(
            [lp["bq"] * attn_scale, lp["bk"], lp["bv"]])[None, :])
        wo.append(lp["wo"])
        w1.append(lp["w1"])
        b1.append(lp["b1"][None, :])
        w2.append(lp["w2"])
        vec_c.append(jnp.stack([lp["bo"], lp["b2"],
                                lp["ln1_g"], lp["ln1_b"],
                                lp["ln2_g"], lp["ln2_b"],
                                zeros_c, zeros_c], axis=0))
    return dict(
        conv_w=conv_w, conv_b=conv_b,
        wqkv=jnp.stack(wqkv), bqkv=jnp.stack(bqkv),
        wo=jnp.stack(wo), w1=jnp.stack(w1), b1=jnp.stack(b1),
        w2=jnp.stack(w2), vec_c=jnp.stack(vec_c),
        w_out=params["w_out"], b_out=params["b_out"].reshape(1, -1))


# ----------------------------------------------------------------------------
# Forward pass
# ----------------------------------------------------------------------------
@functools.partial(jax.jit, static_argnames=("window", "stride", "n_heads"))
def forward(src, params, cls_key, *, window, stride, n_heads):
    eps = 1e-5
    b, length, cin = src.shape
    channel = params["conv_w"].shape[0]
    n_layers = len(params["layers"])
    n_out = params["w_out"].shape[1]
    t_conv = (length - window) // stride + 1
    t1 = t_conv + 1

    # im2col patch extraction (pure data layout, done once by XLA)
    x_ncl = src.transpose(0, 2, 1)                       # (B, Cin, L)
    idx = jnp.arange(t_conv)[:, None] * stride + jnp.arange(window)[None, :]
    patches = (x_ncl[:, :, idx]                          # (B, Cin, T, W)
               .transpose(0, 2, 1, 3)
               .reshape(b * t_conv, cin * window))

    pk = _pack_params(params, cin=cin, window=window, n_heads=n_heads, eps=eps)

    # random CLS token (torch.randn in the reference forward)
    cls_tok = jax.random.normal(cls_key, (b, channel), dtype=jnp.float32)

    kern = functools.partial(_forward_kernel, nb=b, t_conv=t_conv,
                             n_heads=n_heads, n_layers=n_layers, eps=eps)
    inputs = (patches, cls_tok, pk["conv_w"], pk["conv_b"],
              pk["wqkv"], pk["bqkv"], pk["wo"], pk["w1"], pk["b1"], pk["w2"],
              pk["vec_c"], pk["w_out"], pk["b_out"])

    out, attn_stack = pl.pallas_call(
        kern,
        out_shape=(jax.ShapeDtypeStruct((b, n_out), jnp.float32),
                   jax.ShapeDtypeStruct((n_layers * b, t1, t1), jnp.float32)),
        grid=(1,),
        in_specs=[_vspec(x.shape) for x in inputs],
        out_specs=(_vspec((b, n_out)), _vspec((n_layers * b, t1, t1))),
        scratch_shapes=[pltpu.VMEM((b * t1, channel), jnp.float32),
                        pltpu.VMEM((b * t1, channel), jnp.float32)],
        compiler_params=pltpu.CompilerParams(
            dimension_semantics=("arbitrary",)),
    )(*inputs)

    attn_list = [attn_stack[l * b:(l + 1) * b] for l in range(n_layers)]
    return out, attn_list


# ----------------------------------------------------------------------------
if __name__ == "__main__":
    # Small, self-consistent hyper-parameters (module defaults scaled down):
    B, L, CIN = 2, 40, 3
    WINDOW, STRIDE = 8, 4
    CHANNEL, N_HEADS, FF_DIM, N_LAYERS = 32, 4, 64, 3
    N_OUT = 3

    key = jax.random.PRNGKey(0)
    k_param, k_input, k_cls = jax.random.split(key, 3)

    params = init_params(k_param, cin=CIN, channel=CHANNEL, window=WINDOW,
                         ff_dim=FF_DIM, n_layers=N_LAYERS, n_out=N_OUT)
    src = jax.random.normal(k_input, (B, L, CIN), dtype=jnp.float32)

    out, attn_list = forward(src, params, k_cls,
                             window=WINDOW, stride=STRIDE, n_heads=N_HEADS)
    out = jax.block_until_ready(out)
    attn_list = [jax.block_until_ready(a) for a in attn_list]

    T_tokens = (L - WINDOW) // STRIDE + 1 + 1            # conv steps + CLS
    assert out.shape == (B, N_OUT)
    assert len(attn_list) == N_LAYERS
    assert all(a.shape == (B, T_tokens, T_tokens) for a in attn_list)
    # head-averaged attention rows must be probability distributions
    row_sums = jnp.stack([a.sum(-1) for a in attn_list])
    assert bool(jnp.all(jnp.abs(row_sums - 1.0) < 1e-3))
    assert bool(jnp.all(jnp.isfinite(out)))
    print("KERNEL_OK")
</pallas_src>

<mosaic_0001>
module attributes {stable_mosaic.version = 11 : i64} {
  func.func @_forward_kernel(%arg0: i32, %arg1: memref<18x24xf32, #tpu.memory_space<vmem>>, %arg2: memref<2x32xf32, #tpu.memory_space<vmem>>, %arg3: memref<24x32xf32, #tpu.memory_space<vmem>>, %arg4: memref<1x32xf32, #tpu.memory_space<vmem>>, %arg5: memref<3x32x96xf32, #tpu.memory_space<vmem>>, %arg6: memref<3x1x96xf32, #tpu.memory_space<vmem>>, %arg7: memref<3x32x32xf32, #tpu.memory_space<vmem>>, %arg8: memref<3x32x64xf32, #tpu.memory_space<vmem>>, %arg9: memref<3x1x64xf32, #tpu.memory_space<vmem>>, %arg10: memref<3x64x32xf32, #tpu.memory_space<vmem>>, %arg11: memref<3x8x32xf32, #tpu.memory_space<vmem>>, %arg12: memref<32x3xf32, #tpu.memory_space<vmem>>, %arg13: memref<1x3xf32, #tpu.memory_space<vmem>>, %arg14: memref<2x3xf32, #tpu.memory_space<vmem>>, %arg15: memref<6x10x10xf32, #tpu.memory_space<vmem>>, %arg16: memref<20x32xf32, #tpu.memory_space<vmem>>, %arg17: memref<20x32xf32, #tpu.memory_space<vmem>>) attributes {dimension_semantics = [#tpu.dimension_semantics<arbitrary>], iteration_bounds = array<i64: 1>, scalar_prefetch = 0 : i64, scratch_operands = 2 : i64, tpu.core_type = #tpu.core_type<tc>, window_params = [{pipeline_mode = #tpu.pipeline_mode<synchronous>, transform_indices = @transform_0, window_bounds = array<i64: 18, 24>}, {pipeline_mode = #tpu.pipeline_mode<synchronous>, transform_indices = @transform_1, window_bounds = array<i64: 2, 32>}, {pipeline_mode = #tpu.pipeline_mode<synchronous>, transform_indices = @transform_2, window_bounds = array<i64: 24, 32>}, {pipeline_mode = #tpu.pipeline_mode<synchronous>, transform_indices = @transform_3, window_bounds = array<i64: 1, 32>}, {pipeline_mode = #tpu.pipeline_mode<synchronous>, transform_indices = @transform_4, window_bounds = array<i64: 3, 32, 96>}, {pipeline_mode = #tpu.pipeline_mode<synchronous>, transform_indices = @transform_5, window_bounds = array<i64: 3, 1, 96>}, {pipeline_mode = #tpu.pipeline_mode<synchronous>, transform_indices = @transform_6, window_bounds = array<i64: 3, 32, 32>}, {pipeline_mode = #tpu.pipeline_mode<synchronous>, transform_indices = @transform_7, window_bounds = array<i64: 3, 32, 64>}, {pipeline_mode = #tpu.pipeline_mode<synchronous>, transform_indices = @transform_8, window_bounds = array<i64: 3, 1, 64>}, {pipeline_mode = #tpu.pipeline_mode<synchronous>, transform_indices = @transform_9, window_bounds = array<i64: 3, 64, 32>}, {pipeline_mode = #tpu.pipeline_mode<synchronous>, transform_indices = @transform_10, window_bounds = array<i64: 3, 8, 32>}, {pipeline_mode = #tpu.pipeline_mode<synchronous>, transform_indices = @transform_11, window_bounds = array<i64: 32, 3>}, {pipeline_mode = #tpu.pipeline_mode<synchronous>, transform_indices = @transform_12, window_bounds = array<i64: 1, 3>}, {pipeline_mode = #tpu.pipeline_mode<synchronous>, transform_indices = @transform_13, window_bounds = array<i64: 2, 3>}, {pipeline_mode = #tpu.pipeline_mode<synchronous>, transform_indices = @transform_14, window_bounds = array<i64: 6, 10, 10>}]} {
    %c0 = arith.constant 0 : index
    %c0_0 = arith.constant 0 : index
    %0 = vector.load %arg1[%c0, %c0_0] : memref<18x24xf32, #tpu.memory_space<vmem>>, vector<18x24xf32>
    %c0_1 = arith.constant 0 : index
    %c0_2 = arith.constant 0 : index
    %1 = vector.load %arg3[%c0_1, %c0_2] : memref<24x32xf32, #tpu.memory_space<vmem>>, vector<24x32xf32>
    %cst = arith.constant dense<0.000000e+00> : vector<18x32xf32>
    %2 = tpu.matmul %0, %1, %cst {dimension_numbers = #tpu.dot_dimension_numbers<[1], [0], [0], [1], [0, 0, 1, 1], [], []>} : vector<18x24xf32>, vector<24x32xf32>, vector<18x32xf32> -> vector<18x32xf32>
    %c0_3 = arith.constant 0 : index
    %c0_4 = arith.constant 0 : index
    %3 = vector.load %arg4[%c0_3, %c0_4] : memref<1x32xf32, #tpu.memory_space<vmem>>, vector<1x32xf32>
    %4 = vector.broadcast %3 : vector<1x32xf32> to vector<18x32xf32>
    %5 = arith.addf %2, %4 : vector<18x32xf32>
    %cst_5 = arith.constant 0.000000e+00 : f32
    %6 = vector.broadcast %cst_5 : f32 to vector<18x32xf32>
    %7 = arith.maximumf %5, %6 : vector<18x32xf32>
    %c0_6 = arith.constant 0 : index
    %c0_7 = arith.constant 0 : index
    %8 = vector.load %arg2[%c0_6, %c0_7] : memref<2x32xf32, #tpu.memory_space<vmem>>, vector<2x32xf32>
    %9 = vector.extract_strided_slice %8 {offsets = [0, 0], sizes = [1, 32], strides = [1, 1]} : vector<2x32xf32> to vector<1x32xf32>
    %c0_8 = arith.constant 0 : index
    %c0_9 = arith.constant 0 : index
    %10 = vector.load %arg16[%c0_8, %c0_9] : memref<20x32xf32, #tpu.memory_space<vmem>>, vector<1x32xf32>
    tpu.vector_store %arg16[%c0_8, %c0_9], %9 {strides = array<i32>} : memref<20x32xf32, #tpu.memory_space<vmem>>, vector<1x32xf32>,
    %11 = vector.extract_strided_slice %7 {offsets = [0, 0], sizes = [9, 32], strides = [1, 1]} : vector<18x32xf32> to vector<9x32xf32>
    %c1 = arith.constant 1 : index
    %c0_10 = arith.constant 0 : index
    %12 = vector.load %arg16[%c1, %c0_10] : memref<20x32xf32, #tpu.memory_space<vmem>>, vector<9x32xf32>
    tpu.vector_store %arg16[%c1, %c0_10], %11 {strides = array<i32>} : memref<20x32xf32, #tpu.memory_space<vmem>>, vector<9x32xf32>,
    %13 = vector.extract_strided_slice %8 {offsets = [1, 0], sizes = [1, 32], strides = [1, 1]} : vector<2x32xf32> to vector<1x32xf32>
    %c10 = arith.constant 10 : index
    %c0_11 = arith.constant 0 : index
    %14 = vector.load %arg16[%c10, %c0_11] : memref<20x32xf32, #tpu.memory_space<vmem>>, vector<1x32xf32>
    tpu.vector_store %arg16[%c10, %c0_11], %13 {strides = array<i32>} : memref<20x32xf32, #tpu.memory_space<vmem>>, vector<1x32xf32>,
    %15 = vector.extract_strided_slice %7 {offsets = [9, 0], sizes = [9, 32], strides = [1, 1]} : vector<18x32xf32> to vector<9x32xf32>
    %c11 = arith.constant 11 : index
    %c0_12 = arith.constant 0 : index
    %16 = vector.load %arg16[%c11, %c0_12] : memref<20x32xf32, #tpu.memory_space<vmem>>, vector<9x32xf32>
    tpu.vector_store %arg16[%c11, %c0_12], %15 {strides = array<i32>} : memref<20x32xf32, #tpu.memory_space<vmem>>, vector<9x32xf32>,
    %c0_13 = arith.constant 0 : index
    %c0_14 = arith.constant 0 : index
    %17 = vector.load %arg16[%c0_13, %c0_14] : memref<20x32xf32, #tpu.memory_space<vmem>>, vector<20x32xf32>
    %18 = tpu.iota {dimensions = array<i32: 1>} : vector<10x32xi32>
    %c0_i32 = arith.constant 0 : i32
    %19 = vector.broadcast %c0_i32 : i32 to vector<10x32xi32>
    %20 = arith.cmpi sge, %18, %19 : vector<10x32xi32>
    %c8_i32 = arith.constant 8 : i32
    %21 = vector.broadcast %c8_i32 : i32 to vector<10x32xi32>
    %22 = arith.cmpi slt, %18, %21 : vector<10x32xi32>
    %23 = arith.andi %20, %22 : vector<10x32xi1>
    %c8_i32_15 = arith.constant 8 : i32
    %24 = vector.broadcast %c8_i32_15 : i32 to vector<10x32xi32>
    %25 = arith.cmpi sge, %18, %24 : vector<10x32xi32>
    %c16_i32 = arith.constant 16 : i32
    %26 = vector.broadcast %c16_i32 : i32 to vector<10x32xi32>
    %27 = arith.cmpi slt, %18, %26 : vector<10x32xi32>
    %28 = arith.andi %25, %27 : vector<10x32xi1>
    %c16_i32_16 = arith.constant 16 : i32
    %29 = vector.broadcast %c16_i32_16 : i32 to vector<10x32xi32>
    %30 = arith.cmpi sge, %18, %29 : vector<10x32xi32>
    %c24_i32 = arith.constant 24 : i32
    %31 = vector.broadcast %c24_i32 : i32 to vector<10x32xi32>
    %32 = arith.cmpi slt, %18, %31 : vector<10x32xi32>
    %33 = arith.andi %30, %32 : vector<10x32xi1>
    %c24_i32_17 = arith.constant 24 : i32
    %34 = vector.broadcast %c24_i32_17 : i32 to vector<10x32xi32>
    %35 = arith.cmpi sge, %18, %34 : vector<10x32xi32>
    %c32_i32 = arith.constant 32 : i32
    %36 = vector.broadcast %c32_i32 : i32 to vector<10x32xi32>
    %37 = arith.cmpi slt, %18, %36 : vector<10x32xi32>
    %38 = arith.andi %35, %37 : vector<10x32xi1>
    %c0_18 = arith.constant 0 : index
    %c0_19 = arith.constant 0 : index
    %c0_20 = arith.constant 0 : index
    %39 = vector.load %arg11[%c0_18, %c0_19, %c0_20] : memref<3x8x32xf32, #tpu.memory_space<vmem>>, vector<1x8x32xf32>
    %40 = vector.shape_cast %39 : vector<1x8x32xf32> to vector<8x32xf32>
    %41 = vector.extract_strided_slice %40 {offsets = [0, 0], sizes = [1, 32], strides = [1, 1]} : vector<8x32xf32> to vector<1x32xf32>
    %42 = vector.extract_strided_slice %40 {offsets = [1, 0], sizes = [1, 32], strides = [1, 1]} : vector<8x32xf32> to vector<1x32xf32>
    %43 = vector.extract_strided_slice %40 {offsets = [2, 0], sizes = [1, 32], strides = [1, 1]} : vector<8x32xf32> to vector<1x32xf32>
    %44 = vector.extract_strided_slice %40 {offsets = [3, 0], sizes = [1, 32], strides = [1, 1]} : vector<8x32xf32> to vector<1x32xf32>
    %45 = vector.extract_strided_slice %40 {offsets = [4, 0], sizes = [1, 32], strides = [1, 1]} : vector<8x32xf32> to vector<1x32xf32>
    %46 = vector.extract_strided_slice %40 {offsets = [5, 0], sizes = [1, 32], strides = [1, 1]} : vector<8x32xf32> to vector<1x32xf32>
    %c0_21 = arith.constant 0 : index
    %c0_22 = arith.constant 0 : index
    %c0_23 = arith.constant 0 : index
    %47 = vector.load %arg5[%c0_21, %c0_22, %c0_23] : memref<3x32x96xf32, #tpu.memory_space<vmem>>, vector<1x32x96xf32>
    %48 = vector.shape_cast %47 : vector<1x32x96xf32> to vector<32x96xf32>
    %cst_24 = arith.constant dense<0.000000e+00> : vector<20x96xf32>
    %49 = tpu.matmul %17, %48, %cst_24 {dimension_numbers = #tpu.dot_dimension_numbers<[1], [0], [0], [1], [0, 0, 1, 1], [], []>} : vector<20x32xf32>, vector<32x96xf32>, vector<20x96xf32> -> vector<20x96xf32>
    %c0_25 = arith.constant 0 : index
    %c0_26 = arith.constant 0 : index
    %c0_27 = arith.constant 0 : index
    %50 = vector.load %arg6[%c0_25, %c0_26, %c0_27] : memref<3x1x96xf32, #tpu.memory_space<vmem>>, vector<1x1x96xf32>
    %51 = vector.shape_cast %50 : vector<1x1x96xf32> to vector<1x96xf32>
    %52 = vector.broadcast %51 : vector<1x96xf32> to vector<20x96xf32>
    %53 = arith.addf %49, %52 : vector<20x96xf32>
    %54 = vector.extract_strided_slice %53 {offsets = [0, 0], sizes = [20, 32], strides = [1, 1]} : vector<20x96xf32> to vector<20x32xf32>
    %55 = vector.extract_strided_slice %53 {offsets = [0, 32], sizes = [20, 32], strides = [1, 1]} : vector<20x96xf32> to vector<20x32xf32>
    %56 = vector.extract_strided_slice %53 {offsets = [0, 64], sizes = [20, 32], strides = [1, 1]} : vector<20x96xf32> to vector<20x32xf32>
    %57 = vector.extract_strided_slice %54 {offsets = [0, 0], sizes = [10, 32], strides = [1, 1]} : vector<20x32xf32> to vector<10x32xf32>
    %58 = vector.extract_strided_slice %55 {offsets = [0, 0], sizes = [10, 32], strides = [1, 1]} : vector<20x32xf32> to vector<10x32xf32>
    %59 = vector.extract_strided_slice %56 {offsets = [0, 0], sizes = [10, 32], strides = [1, 1]} : vector<20x32xf32> to vector<10x32xf32>
    %cst_28 = arith.constant 0.000000e+00 : f32
    %60 = vector.broadcast %cst_28 : f32 to vector<10x32xf32>
    %cst_29 = arith.constant 0.000000e+00 : f32
    %61 = vector.broadcast %cst_29 : f32 to vector<10x10xf32>
    %cst_30 = arith.constant 0.000000e+00 : f32
    %62 = vector.broadcast %cst_30 : f32 to vector<10x32xf32>
    %63 = arith.select %23, %57, %62 : vector<10x32xi1>, vector<10x32xf32>
    %cst_31 = arith.constant dense<0.000000e+00> : vector<10x10xf32>
    %64 = tpu.matmul %63, %58, %cst_31 {dimension_numbers = #tpu.dot_dimension_numbers<[1], [1], [0], [0], [0, 0, 1, 0], [], []>} : vector<10x32xf32>, vector<10x32xf32>, vector<10x10xf32> -> vector<10x10xf32>
    %cst_32 = arith.constant dense<0xFF800000> : vector<10xf32>
    %65 = vector.multi_reduction <maximumf>, %64, %cst_32 [1] : vector<10x10xf32> to vector<10xf32>
    %66 = vector.shape_cast %65 : vector<10xf32> to vector<10x1xf32>
    %67 = vector.broadcast %66 : vector<10x1xf32> to vector<10x10xf32>
    %68 = arith.subf %64, %67 : vector<10x10xf32>
    %69 = math.exp %68 : vector<10x10xf32>
    %cst_33 = arith.constant dense<0.000000e+00> : vector<10xf32>
    %70 = vector.multi_reduction <add>, %69, %cst_33 [1] : vector<10x10xf32> to vector<10xf32>
    %71 = vector.shape_cast %70 : vector<10xf32> to vector<10x1xf32>
    %72 = tpu.reciprocal %71 : vector<10x1xf32> -> vector<10x1xf32>
    %73 = vector.broadcast %72 : vector<10x1xf32> to vector<10x10xf32>
    %74 = arith.mulf %69, %73 : vector<10x10xf32>
    %cst_34 = arith.constant 0.000000e+00 : f32
    %75 = vector.broadcast %cst_34 : f32 to vector<10x32xf32>
    %76 = arith.select %23, %59, %75 : vector<10x32xi1>, vector<10x32xf32>
    %cst_35 = arith.constant dense<0.000000e+00> : vector<10x32xf32>
    %77 = tpu.matmul %74, %76, %cst_35 {dimension_numbers = #tpu.dot_dimension_numbers<[1], [0], [0], [1], [0, 0, 1, 1], [], []>} : vector<10x10xf32>, vector<10x32xf32>, vector<10x32xf32> -> vector<10x32xf32>
    %78 = arith.addf %60, %77 : vector<10x32xf32>
    %79 = arith.addf %61, %74 : vector<10x10xf32>
    %cst_36 = arith.constant 0.000000e+00 : f32
    %80 = vector.broadcast %cst_36 : f32 to vector<10x32xf32>
    %81 = arith.select %28, %57, %80 : vector<10x32xi1>, vector<10x32xf32>
    %cst_37 = arith.constant dense<0.000000e+00> : vector<10x10xf32>
    %82 = tpu.matmul %81, %58, %cst_37 {dimension_numbers = #tpu.dot_dimension_numbers<[1], [1], [0], [0], [0, 0, 1, 0], [], []>} : vector<10x32xf32>, vector<10x32xf32>, vector<10x10xf32> -> vector<10x10xf32>
    %cst_38 = arith.constant dense<0xFF800000> : vector<10xf32>
    %83 = vector.multi_reduction <maximumf>, %82, %cst_38 [1] : vector<10x10xf32> to vector<10xf32>
    %84 = vector.shape_cast %83 : vector<10xf32> to vector<10x1xf32>
    %85 = vector.broadcast %84 : vector<10x1xf32> to vector<10x10xf32>
    %86 = arith.subf %82, %85 : vector<10x10xf32>
    %87 = math.exp %86 : vector<10x10xf32>
    %cst_39 = arith.constant dense<0.000000e+00> : vector<10xf32>
    %88 = vector.multi_reduction <add>, %87, %cst_39 [1] : vector<10x10xf32> to vector<10xf32>
    %89 = vector.shape_cast %88 : vector<10xf32> to vector<10x1xf32>
    %90 = tpu.reciprocal %89 : vector<10x1xf32> -> vector<10x1xf32>
    %91 = vector.broadcast %90 : vector<10x1xf32> to vector<10x10xf32>
    %92 = arith.mulf %87, %91 : vector<10x10xf32>
    %cst_40 = arith.constant 0.000000e+00 : f32
    %93 = vector.broadcast %cst_40 : f32 to vector<10x32xf32>
    %94 = arith.select %28, %59, %93 : vector<10x32xi1>, vector<10x32xf32>
    %cst_41 = arith.constant dense<0.000000e+00> : vector<10x32xf32>
    %95 = tpu.matmul %92, %94, %cst_41 {dimension_numbers = #tpu.dot_dimension_numbers<[1], [0], [0], [1], [0, 0, 1, 1], [], []>} : vector<10x10xf32>, vector<10x32xf32>, vector<10x32xf32> -> vector<10x32xf32>
    %96 = arith.addf %78, %95 : vector<10x32xf32>
    %97 = arith.addf %79, %92 : vector<10x10xf32>
    %cst_42 = arith.constant 0.000000e+00 : f32
    %98 = vector.broadcast %cst_42 : f32 to vector<10x32xf32>
    %99 = arith.select %33, %57, %98 : vector<10x32xi1>, vector<10x32xf32>
    %cst_43 = arith.constant dense<0.000000e+00> : vector<10x10xf32>
    %100 = tpu.matmul %99, %58, %cst_43 {dimension_numbers = #tpu.dot_dimension_numbers<[1], [1], [0], [0], [0, 0, 1, 0], [], []>} : vector<10x32xf32>, vector<10x32xf32>, vector<10x10xf32> -> vector<10x10xf32>
    %cst_44 = arith.constant dense<0xFF800000> : vector<10xf32>
    %101 = vector.multi_reduction <maximumf>, %100, %cst_44 [1] : vector<10x10xf32> to vector<10xf32>
    %102 = vector.shape_cast %101 : vector<10xf32> to vector<10x1xf32>
    %103 = vector.broadcast %102 : vector<10x1xf32> to vector<10x10xf32>
    %104 = arith.subf %100, %103 : vector<10x10xf32>
    %105 = math.exp %104 : vector<10x10xf32>
    %cst_45 = arith.constant dense<0.000000e+00> : vector<10xf32>
    %106 = vector.multi_reduction <add>, %105, %cst_45 [1] : vector<10x10xf32> to vector<10xf32>
    %107 = vector.shape_cast %106 : vector<10xf32> to vector<10x1xf32>
    %108 = tpu.reciprocal %107 : vector<10x1xf32> -> vector<10x1xf32>
    %109 = vector.broadcast %108 : vector<10x1xf32> to vector<10x10xf32>
    %110 = arith.mulf %105, %109 : vector<10x10xf32>
    %cst_46 = arith.constant 0.000000e+00 : f32
    %111 = vector.broadcast %cst_46 : f32 to vector<10x32xf32>
    %112 = arith.select %33, %59, %111 : vector<10x32xi1>, vector<10x32xf32>
    %cst_47 = arith.constant dense<0.000000e+00> : vector<10x32xf32>
    %113 = tpu.matmul %110, %112, %cst_47 {dimension_numbers = #tpu.dot_dimension_numbers<[1], [0], [0], [1], [0, 0, 1, 1], [], []>} : vector<10x10xf32>, vector<10x32xf32>, vector<10x32xf32> -> vector<10x32xf32>
    %114 = arith.addf %96, %113 : vector<10x32xf32>
    %115 = arith.addf %97, %110 : vector<10x10xf32>
    %cst_48 = arith.constant 0.000000e+00 : f32
    %116 = vector.broadcast %cst_48 : f32 to vector<10x32xf32>
    %117 = arith.select %38, %57, %116 : vector<10x32xi1>, vector<10x32xf32>
    %cst_49 = arith.constant dense<0.000000e+00> : vector<10x10xf32>
    %118 = tpu.matmul %117, %58, %cst_49 {dimension_numbers = #tpu.dot_dimension_numbers<[1], [1], [0], [0], [0, 0, 1, 0], [], []>} : vector<10x32xf32>, vector<10x32xf32>, vector<10x10xf32> -> vector<10x10xf32>
    %cst_50 = arith.constant dense<0xFF800000> : vector<10xf32>
    %119 = vector.multi_reduction <maximumf>, %118, %cst_50 [1] : vector<10x10xf32> to vector<10xf32>
    %120 = vector.shape_cast %119 : vector<10xf32> to vector<10x1xf32>
    %121 = vector.broadcast %120 : vector<10x1xf32> to vector<10x10xf32>
    %122 = arith.subf %118, %121 : vector<10x10xf32>
    %123 = math.exp %122 : vector<10x10xf32>
    %cst_51 = arith.constant dense<0.000000e+00> : vector<10xf32>
    %124 = vector.multi_reduction <add>, %123, %cst_51 [1] : vector<10x10xf32> to vector<10xf32>
    %125 = vector.shape_cast %124 : vector<10xf32> to vector<10x1xf32>
    %126 = tpu.reciprocal %125 : vector<10x1xf32> -> vector<10x1xf32>
    %127 = vector.broadcast %126 : vector<10x1xf32> to vector<10x10xf32>
    %128 = arith.mulf %123, %127 : vector<10x10xf32>
    %cst_52 = arith.constant 0.000000e+00 : f32
    %129 = vector.broadcast %cst_52 : f32 to vector<10x32xf32>
    %130 = arith.select %38, %59, %129 : vector<10x32xi1>, vector<10x32xf32>
    %cst_53 = arith.constant dense<0.000000e+00> : vector<10x32xf32>
    %131 = tpu.matmul %128, %130, %cst_53 {dimension_numbers = #tpu.dot_dimension_numbers<[1], [0], [0], [1], [0, 0, 1, 1], [], []>} : vector<10x10xf32>, vector<10x32xf32>, vector<10x32xf32> -> vector<10x32xf32>
    %132 = arith.addf %114, %131 : vector<10x32xf32>
    %133 = arith.addf %115, %128 : vector<10x10xf32>
    %c0_54 = arith.constant 0 : index
    %c0_55 = arith.constant 0 : index
    %134 = vector.load %arg17[%c0_54, %c0_55] : memref<20x32xf32, #tpu.memory_space<vmem>>, vector<10x32xf32>
    tpu.vector_store %arg17[%c0_54, %c0_55], %132 {strides = array<i32>} : memref<20x32xf32, #tpu.memory_space<vmem>>, vector<10x32xf32>,
    %cst_56 = arith.constant 2.500000e-01 : f32
    %135 = vector.broadcast %cst_56 : f32 to vector<10x10xf32>
    %136 = arith.mulf %133, %135 : vector<10x10xf32>
    %c0_57 = arith.constant 0 : index
    %c0_58 = arith.constant 0 : index
    %c0_59 = arith.constant 0 : index
    %137 = vector.load %arg15[%c0_57, %c0_58, %c0_59] : memref<6x10x10xf32, #tpu.memory_space<vmem>>, vector<1x10x10xf32>
    %138 = vector.shape_cast %137 : vector<1x10x10xf32> to vector<10x10xf32>
    %139 = vector.shape_cast %136 : vector<10x10xf32> to vector<1x10x10xf32>
    tpu.vector_store %arg15[%c0_57, %c0_58, %c0_59], %139 {strides = array<i32>} : memref<6x10x10xf32, #tpu.memory_space<vmem>>, vector<1x10x10xf32>,
    %140 = vector.extract_strided_slice %54 {offsets = [10, 0], sizes = [10, 32], strides = [1, 1]} : vector<20x32xf32> to vector<10x32xf32>
    %141 = vector.extract_strided_slice %55 {offsets = [10, 0], sizes = [10, 32], strides = [1, 1]} : vector<20x32xf32> to vector<10x32xf32>
    %142 = vector.extract_strided_slice %56 {offsets = [10, 0], sizes = [10, 32], strides = [1, 1]} : vector<20x32xf32> to vector<10x32xf32>
    %cst_60 = arith.constant 0.000000e+00 : f32
    %143 = vector.broadcast %cst_60 : f32 to vector<10x32xf32>
    %cst_61 = arith.constant 0.000000e+00 : f32
    %144 = vector.broadcast %cst_61 : f32 to vector<10x10xf32>
    %cst_62 = arith.constant 0.000000e+00 : f32
    %145 = vector.broadcast %cst_62 : f32 to vector<10x32xf32>
    %146 = arith.select %23, %140, %145 : vector<10x32xi1>, vector<10x32xf32>
    %cst_63 = arith.constant dense<0.000000e+00> : vector<10x10xf32>
    %147 = tpu.matmul %146, %141, %cst_63 {dimension_numbers = #tpu.dot_dimension_numbers<[1], [1], [0], [0], [0, 0, 1, 0], [], []>} : vector<10x32xf32>, vector<10x32xf32>, vector<10x10xf32> -> vector<10x10xf32>
    %cst_64 = arith.constant dense<0xFF800000> : vector<10xf32>
    %148 = vector.multi_reduction <maximumf>, %147, %cst_64 [1] : vector<10x10xf32> to vector<10xf32>
    %149 = vector.shape_cast %148 : vector<10xf32> to vector<10x1xf32>
    %150 = vector.broadcast %149 : vector<10x1xf32> to vector<10x10xf32>
    %151 = arith.subf %147, %150 : vector<10x10xf32>
    %152 = math.exp %151 : vector<10x10xf32>
    %cst_65 = arith.constant dense<0.000000e+00> : vector<10xf32>
    %153 = vector.multi_reduction <add>, %152, %cst_65 [1] : vector<10x10xf32> to vector<10xf32>
    %154 = vector.shape_cast %153 : vector<10xf32> to vector<10x1xf32>
    %155 = tpu.reciprocal %154 : vector<10x1xf32> -> vector<10x1xf32>
    %156 = vector.broadcast %155 : vector<10x1xf32> to vector<10x10xf32>
    %157 = arith.mulf %152, %156 : vector<10x10xf32>
    %cst_66 = arith.constant 0.000000e+00 : f32
    %158 = vector.broadcast %cst_66 : f32 to vector<10x32xf32>
    %159 = arith.select %23, %142, %158 : vector<10x32xi1>, vector<10x32xf32>
    %cst_67 = arith.constant dense<0.000000e+00> : vector<10x32xf32>
    %160 = tpu.matmul %157, %159, %cst_67 {dimension_numbers = #tpu.dot_dimension_numbers<[1], [0], [0], [1], [0, 0, 1, 1], [], []>} : vector<10x10xf32>, vector<10x32xf32>, vector<10x32xf32> -> vector<10x32xf32>
    %161 = arith.addf %143, %160 : vector<10x32xf32>
    %162 = arith.addf %144, %157 : vector<10x10xf32>
    %cst_68 = arith.constant 0.000000e+00 : f32
    %163 = vector.broadcast %cst_68 : f32 to vector<10x32xf32>
    %164 = arith.select %28, %140, %163 : vector<10x32xi1>, vector<10x32xf32>
    %cst_69 = arith.constant dense<0.000000e+00> : vector<10x10xf32>
    %165 = tpu.matmul %164, %141, %cst_69 {dimension_numbers = #tpu.dot_dimension_numbers<[1], [1], [0], [0], [0, 0, 1, 0], [], []>} : vector<10x32xf32>, vector<10x32xf32>, vector<10x10xf32> -> vector<10x10xf32>
    %cst_70 = arith.constant dense<0xFF800000> : vector<10xf32>
    %166 = vector.multi_reduction <maximumf>, %165, %cst_70 [1] : vector<10x10xf32> to vector<10xf32>
    %167 = vector.shape_cast %166 : vector<10xf32> to vector<10x1xf32>
    %168 = vector.broadcast %167 : vector<10x1xf32> to vector<10x10xf32>
    %169 = arith.subf %165, %168 : vector<10x10xf32>
    %170 = math.exp %169 : vector<10x10xf32>
    %cst_71 = arith.constant dense<0.000000e+00> : vector<10xf32>
    %171 = vector.multi_reduction <add>, %170, %cst_71 [1] : vector<10x10xf32> to vector<10xf32>
    %172 = vector.shape_cast %171 : vector<10xf32> to vector<10x1xf32>
    %173 = tpu.reciprocal %172 : vector<10x1xf32> -> vector<10x1xf32>
    %174 = vector.broadcast %173 : vector<10x1xf32> to vector<10x10xf32>
    %175 = arith.mulf %170, %174 : vector<10x10xf32>
    %cst_72 = arith.constant 0.000000e+00 : f32
    %176 = vector.broadcast %cst_72 : f32 to vector<10x32xf32>
    %177 = arith.select %28, %142, %176 : vector<10x32xi1>, vector<10x32xf32>
    %cst_73 = arith.constant dense<0.000000e+00> : vector<10x32xf32>
    %178 = tpu.matmul %175, %177, %cst_73 {dimension_numbers = #tpu.dot_dimension_numbers<[1], [0], [0], [1], [0, 0, 1, 1], [], []>} : vector<10x10xf32>, vector<10x32xf32>, vector<10x32xf32> -> vector<10x32xf32>
    %179 = arith.addf %161, %178 : vector<10x32xf32>
    %180 = arith.addf %162, %175 : vector<10x10xf32>
    %cst_74 = arith.constant 0.000000e+00 : f32
    %181 = vector.broadcast %cst_74 : f32 to vector<10x32xf32>
    %182 = arith.select %33, %140, %181 : vector<10x32xi1>, vector<10x32xf32>
    %cst_75 = arith.constant dense<0.000000e+00> : vector<10x10xf32>
    %183 = tpu.matmul %182, %141, %cst_75 {dimension_numbers = #tpu.dot_dimension_numbers<[1], [1], [0], [0], [0, 0, 1, 0], [], []>} : vector<10x32xf32>, vector<10x32xf32>, vector<10x10xf32> -> vector<10x10xf32>
    %cst_76 = arith.constant dense<0xFF800000> : vector<10xf32>
    %184 = vector.multi_reduction <maximumf>, %183, %cst_76 [1] : vector<10x10xf32> to vector<10xf32>
    %185 = vector.shape_cast %184 : vector<10xf32> to vector<10x1xf32>
    %186 = vector.broadcast %185 : vector<10x1xf32> to vector<10x10xf32>
    %187 = arith.subf %183, %186 : vector<10x10xf32>
    %188 = math.exp %187 : vector<10x10xf32>
    %cst_77 = arith.constant dense<0.000000e+00> : vector<10xf32>
    %189 = vector.multi_reduction <add>, %188, %cst_77 [1] : vector<10x10xf32> to vector<10xf32>
    %190 = vector.shape_cast %189 : vector<10xf32> to vector<10x1xf32>
    %191 = tpu.reciprocal %190 : vector<10x1xf32> -> vector<10x1xf32>
    %192 = vector.broadcast %191 : vector<10x1xf32> to vector<10x10xf32>
    %193 = arith.mulf %188, %192 : vector<10x10xf32>
    %cst_78 = arith.constant 0.000000e+00 : f32
    %194 = vector.broadcast %cst_78 : f32 to vector<10x32xf32>
    %195 = arith.select %33, %142, %194 : vector<10x32xi1>, vector<10x32xf32>
    %cst_79 = arith.constant dense<0.000000e+00> : vector<10x32xf32>
    %196 = tpu.matmul %193, %195, %cst_79 {dimension_numbers = #tpu.dot_dimension_numbers<[1], [0], [0], [1], [0, 0, 1, 1], [], []>} : vector<10x10xf32>, vector<10x32xf32>, vector<10x32xf32> -> vector<10x32xf32>
    %197 = arith.addf %179, %196 : vector<10x32xf32>
    %198 = arith.addf %180, %193 : vector<10x10xf32>
    %cst_80 = arith.constant 0.000000e+00 : f32
    %199 = vector.broadcast %cst_80 : f32 to vector<10x32xf32>
    %200 = arith.select %38, %140, %199 : vector<10x32xi1>, vector<10x32xf32>
    %cst_81 = arith.constant dense<0.000000e+00> : vector<10x10xf32>
    %201 = tpu.matmul %200, %141, %cst_81 {dimension_numbers = #tpu.dot_dimension_numbers<[1], [1], [0], [0], [0, 0, 1, 0], [], []>} : vector<10x32xf32>, vector<10x32xf32>, vector<10x10xf32> -> vector<10x10xf32>
    %cst_82 = arith.constant dense<0xFF800000> : vector<10xf32>
    %202 = vector.multi_reduction <maximumf>, %201, %cst_82 [1] : vector<10x10xf32> to vector<10xf32>
    %203 = vector.shape_cast %202 : vector<10xf32> to vector<10x1xf32>
    %204 = vector.broadcast %203 : vector<10x1xf32> to vector<10x10xf32>
    %205 = arith.subf %201, %204 : vector<10x10xf32>
    %206 = math.exp %205 : vector<10x10xf32>
    %cst_83 = arith.constant dense<0.000000e+00> : vector<10xf32>
    %207 = vector.multi_reduction <add>, %206, %cst_83 [1] : vector<10x10xf32> to vector<10xf32>
    %208 = vector.shape_cast %207 : vector<10xf32> to vector<10x1xf32>
    %209 = tpu.reciprocal %208 : vector<10x1xf32> -> vector<10x1xf32>
    %210 = vector.broadcast %209 : vector<10x1xf32> to vector<10x10xf32>
    %211 = arith.mulf %206, %210 : vector<10x10xf32>
    %cst_84 = arith.constant 0.000000e+00 : f32
    %212 = vector.broadcast %cst_84 : f32 to vector<10x32xf32>
    %213 = arith.select %38, %142, %212 : vector<10x32xi1>, vector<10x32xf32>
    %cst_85 = arith.constant dense<0.000000e+00> : vector<10x32xf32>
    %214 = tpu.matmul %211, %213, %cst_85 {dimension_numbers = #tpu.dot_dimension_numbers<[1], [0], [0], [1], [0, 0, 1, 1], [], []>} : vector<10x10xf32>, vector<10x32xf32>, vector<10x32xf32> -> vector<10x32xf32>
    %215 = arith.addf %197, %214 : vector<10x32xf32>
    %216 = arith.addf %198, %211 : vector<10x10xf32>
    %c10_86 = arith.constant 10 : index
    %c0_87 = arith.constant 0 : index
    %217 = vector.load %arg17[%c10_86, %c0_87] : memref<20x32xf32, #tpu.memory_space<vmem>>, vector<10x32xf32>
    tpu.vector_store %arg17[%c10_86, %c0_87], %215 {strides = array<i32>} : memref<20x32xf32, #tpu.memory_space<vmem>>, vector<10x32xf32>,
    %cst_88 = arith.constant 2.500000e-01 : f32
    %218 = vector.broadcast %cst_88 : f32 to vector<10x10xf32>
    %219 = arith.mulf %216, %218 : vector<10x10xf32>
    %c1_89 = arith.constant 1 : index
    %c0_90 = arith.constant 0 : index
    %c0_91 = arith.constant 0 : index
    %220 = vector.load %arg15[%c1_89, %c0_90, %c0_91] : memref<6x10x10xf32, #tpu.memory_space<vmem>>, vector<1x10x10xf32>
    %221 = vector.shape_cast %220 : vector<1x10x10xf32> to vector<10x10xf32>
    %222 = vector.shape_cast %219 : vector<10x10xf32> to vector<1x10x10xf32>
    tpu.vector_store %arg15[%c1_89, %c0_90, %c0_91], %222 {strides = array<i32>} : memref<6x10x10xf32, #tpu.memory_space<vmem>>, vector<1x10x10xf32>,
    %c0_92 = arith.constant 0 : index
    %c0_93 = arith.constant 0 : index
    %223 = vector.load %arg17[%c0_92, %c0_93] : memref<20x32xf32, #tpu.memory_space<vmem>>, vector<20x32xf32>
    %c0_94 = arith.constant 0 : index
    %c0_95 = arith.constant 0 : index
    %c0_96 = arith.constant 0 : index
    %224 = vector.load %arg7[%c0_94, %c0_95, %c0_96] : memref<3x32x32xf32, #tpu.memory_space<vmem>>, vector<1x32x32xf32>
    %225 = vector.shape_cast %224 : vector<1x32x32xf32> to vector<32x32xf32>
    %cst_97 = arith.constant dense<0.000000e+00> : vector<20x32xf32>
    %226 = tpu.matmul %223, %225, %cst_97 {dimension_numbers = #tpu.dot_dimension_numbers<[1], [0], [0], [1], [0, 0, 1, 1], [], []>} : vector<20x32xf32>, vector<32x32xf32>, vector<20x32xf32> -> vector<20x32xf32>
    %227 = vector.broadcast %41 : vector<1x32xf32> to vector<20x32xf32>
    %228 = arith.addf %226, %227 : vector<20x32xf32>
    %229 = arith.addf %17, %228 : vector<20x32xf32>
    %cst_98 = arith.constant dense<0.000000e+00> : vector<20xf32>
    %230 = vector.multi_reduction <add>, %229, %cst_98 [1] : vector<20x32xf32> to vector<20xf32>
    %231 = vector.shape_cast %230 : vector<20xf32> to vector<20x1xf32>
    %cst_99 = arith.constant 3.200000e+01 : f32
    %232 = vector.broadcast %cst_99 : f32 to vector<20x1xf32>
    %233 = arith.divf %231, %232 : vector<20x1xf32>
    %234 = vector.broadcast %233 : vector<20x1xf32> to vector<20x32xf32>
    %235 = arith.subf %229, %234 : vector<20x32xf32>
    %236 = arith.mulf %235, %235 : vector<20x32xf32>
    %cst_100 = arith.constant dense<0.000000e+00> : vector<20xf32>
    %237 = vector.multi_reduction <add>, %236, %cst_100 [1] : vector<20x32xf32> to vector<20xf32>
    %238 = vector.shape_cast %237 : vector<20xf32> to vector<20x1xf32>
    %cst_101 = arith.constant 3.200000e+01 : f32
    %239 = vector.broadcast %cst_101 : f32 to vector<20x1xf32>
    %240 = arith.divf %238, %239 : vector<20x1xf32>
    %241 = vector.broadcast %233 : vector<20x1xf32> to vector<20x32xf32>
    %242 = arith.subf %229, %241 : vector<20x32xf32>
    %cst_102 = arith.constant 9.99999974E-6 : f32
    %243 = vector.broadcast %cst_102 : f32 to vector<20x1xf32>
    %244 = arith.addf %240, %243 : vector<20x1xf32>
    %245 = math.rsqrt %244 : vector<20x1xf32>
    %246 = vector.broadcast %245 : vector<20x1xf32> to vector<20x32xf32>
    %247 = arith.mulf %242, %246 : vector<20x32xf32>
    %248 = vector.broadcast %43 : vector<1x32xf32> to vector<20x32xf32>
    %249 = arith.mulf %247, %248 : vector<20x32xf32>
    %250 = vector.broadcast %44 : vector<1x32xf32> to vector<20x32xf32>
    %251 = arith.addf %249, %250 : vector<20x32xf32>
    %c0_103 = arith.constant 0 : index
    %c0_104 = arith.constant 0 : index
    %c0_105 = arith.constant 0 : index
    %252 = vector.load %arg8[%c0_103, %c0_104, %c0_105] : memref<3x32x64xf32, #tpu.memory_space<vmem>>, vector<1x32x64xf32>
    %253 = vector.shape_cast %252 : vector<1x32x64xf32> to vector<32x64xf32>
    %cst_106 = arith.constant dense<0.000000e+00> : vector<20x64xf32>
    %254 = tpu.matmul %251, %253, %cst_106 {dimension_numbers = #tpu.dot_dimension_numbers<[1], [0], [0], [1], [0, 0, 1, 1], [], []>} : vector<20x32xf32>, vector<32x64xf32>, vector<20x64xf32> -> vector<20x64xf32>
    %c0_107 = arith.constant 0 : index
    %c0_108 = arith.constant 0 : index
    %c0_109 = arith.constant 0 : index
    %255 = vector.load %arg9[%c0_107, %c0_108, %c0_109] : memref<3x1x64xf32, #tpu.memory_space<vmem>>, vector<1x1x64xf32>
    %256 = vector.shape_cast %255 : vector<1x1x64xf32> to vector<1x64xf32>
    %257 = vector.broadcast %256 : vector<1x64xf32> to vector<20x64xf32>
    %258 = arith.addf %254, %257 : vector<20x64xf32>
    %cst_110 = arith.constant 0.000000e+00 : f32
    %259 = vector.broadcast %cst_110 : f32 to vector<20x64xf32>
    %260 = arith.maximumf %258, %259 : vector<20x64xf32>
    %c0_111 = arith.constant 0 : index
    %c0_112 = arith.constant 0 : index
    %c0_113 = arith.constant 0 : index
    %261 = vector.load %arg10[%c0_111, %c0_112, %c0_113] : memref<3x64x32xf32, #tpu.memory_space<vmem>>, vector<1x64x32xf32>
    %262 = vector.shape_cast %261 : vector<1x64x32xf32> to vector<64x32xf32>
    %cst_114 = arith.constant dense<0.000000e+00> : vector<20x32xf32>
    %263 = tpu.matmul %260, %262, %cst_114 {dimension_numbers = #tpu.dot_dimension_numbers<[1], [0], [0], [1], [0, 0, 1, 1], [], []>} : vector<20x64xf32>, vector<64x32xf32>, vector<20x32xf32> -> vector<20x32xf32>
    %264 = vector.broadcast %42 : vector<1x32xf32> to vector<20x32xf32>
    %265 = arith.addf %263, %264 : vector<20x32xf32>
    %266 = arith.addf %251, %265 : vector<20x32xf32>
    %cst_115 = arith.constant dense<0.000000e+00> : vector<20xf32>
    %267 = vector.multi_reduction <add>, %266, %cst_115 [1] : vector<20x32xf32> to vector<20xf32>
    %268 = vector.shape_cast %267 : vector<20xf32> to vector<20x1xf32>
    %cst_116 = arith.constant 3.200000e+01 : f32
    %269 = vector.broadcast %cst_116 : f32 to vector<20x1xf32>
    %270 = arith.divf %268, %269 : vector<20x1xf32>
    %271 = vector.broadcast %270 : vector<20x1xf32> to vector<20x32xf32>
    %272 = arith.subf %266, %271 : vector<20x32xf32>
    %273 = arith.mulf %272, %272 : vector<20x32xf32>
    %cst_117 = arith.constant dense<0.000000e+00> : vector<20xf32>
    %274 = vector.multi_reduction <add>, %273, %cst_117 [1] : vector<20x32xf32> to vector<20xf32>
    %275 = vector.shape_cast %274 : vector<20xf32> to vector<20x1xf32>
    %cst_118 = arith.constant 3.200000e+01 : f32
    %276 = vector.broadcast %cst_118 : f32 to vector<20x1xf32>
    %277 = arith.divf %275, %276 : vector<20x1xf32>
    %278 = vector.broadcast %270 : vector<20x1xf32> to vector<20x32xf32>
    %279 = arith.subf %266, %278 : vector<20x32xf32>
    %cst_119 = arith.constant 9.99999974E-6 : f32
    %280 = vector.broadcast %cst_119 : f32 to vector<20x1xf32>
    %281 = arith.addf %277, %280 : vector<20x1xf32>
    %282 = math.rsqrt %281 : vector<20x1xf32>
    %283 = vector.broadcast %282 : vector<20x1xf32> to vector<20x32xf32>
    %284 = arith.mulf %279, %283 : vector<20x32xf32>
    %285 = vector.broadcast %45 : vector<1x32xf32> to vector<20x32xf32>
    %286 = arith.mulf %284, %285 : vector<20x32xf32>
    %287 = vector.broadcast %46 : vector<1x32xf32> to vector<20x32xf32>
    %288 = arith.addf %286, %287 : vector<20x32xf32>
    %c1_120 = arith.constant 1 : index
    %c0_121 = arith.constant 0 : index
    %c0_122 = arith.constant 0 : index
    %289 = vector.load %arg11[%c1_120, %c0_121, %c0_122] : memref<3x8x32xf32, #tpu.memory_space<vmem>>, vector<1x8x32xf32>
    %290 = vector.shape_cast %289 : vector<1x8x32xf32> to vector<8x32xf32>
    %291 = vector.extract_strided_slice %290 {offsets = [0, 0], sizes = [1, 32], strides = [1, 1]} : vector<8x32xf32> to vector<1x32xf32>
    %292 = vector.extract_strided_slice %290 {offsets = [1, 0], sizes = [1, 32], strides = [1, 1]} : vector<8x32xf32> to vector<1x32xf32>
    %293 = vector.extract_strided_slice %290 {offsets = [2, 0], sizes = [1, 32], strides = [1, 1]} : vector<8x32xf32> to vector<1x32xf32>
    %294 = vector.extract_strided_slice %290 {offsets = [3, 0], sizes = [1, 32], strides = [1, 1]} : vector<8x32xf32> to vector<1x32xf32>
    %295 = vector.extract_strided_slice %290 {offsets = [4, 0], sizes = [1, 32], strides = [1, 1]} : vector<8x32xf32> to vector<1x32xf32>
    %296 = vector.extract_strided_slice %290 {offsets = [5, 0], sizes = [1, 32], strides = [1, 1]} : vector<8x32xf32> to vector<1x32xf32>
    %c1_123 = arith.constant 1 : index
    %c0_124 = arith.constant 0 : index
    %c0_125 = arith.constant 0 : index
    %297 = vector.load %arg5[%c1_123, %c0_124, %c0_125] : memref<3x32x96xf32, #tpu.memory_space<vmem>>, vector<1x32x96xf32>
    %298 = vector.shape_cast %297 : vector<1x32x96xf32> to vector<32x96xf32>
    %cst_126 = arith.constant dense<0.000000e+00> : vector<20x96xf32>
    %299 = tpu.matmul %288, %298, %cst_126 {dimension_numbers = #tpu.dot_dimension_numbers<[1], [0], [0], [1], [0, 0, 1, 1], [], []>} : vector<20x32xf32>, vector<32x96xf32>, vector<20x96xf32> -> vector<20x96xf32>
    %c1_127 = arith.constant 1 : index
    %c0_128 = arith.constant 0 : index
    %c0_129 = arith.constant 0 : index
    %300 = vector.load %arg6[%c1_127, %c0_128, %c0_129] : memref<3x1x96xf32, #tpu.memory_space<vmem>>, vector<1x1x96xf32>
    %301 = vector.shape_cast %300 : vector<1x1x96xf32> to vector<1x96xf32>
    %302 = vector.broadcast %301 : vector<1x96xf32> to vector<20x96xf32>
    %303 = arith.addf %299, %302 : vector<20x96xf32>
    %304 = vector.extract_strided_slice %303 {offsets = [0, 0], sizes = [20, 32], strides = [1, 1]} : vector<20x96xf32> to vector<20x32xf32>
    %305 = vector.extract_strided_slice %303 {offsets = [0, 32], sizes = [20, 32], strides = [1, 1]} : vector<20x96xf32> to vector<20x32xf32>
    %306 = vector.extract_strided_slice %303 {offsets = [0, 64], sizes = [20, 32], strides = [1, 1]} : vector<20x96xf32> to vector<20x32xf32>
    %307 = vector.extract_strided_slice %304 {offsets = [0, 0], sizes = [10, 32], strides = [1, 1]} : vector<20x32xf32> to vector<10x32xf32>
    %308 = vector.extract_strided_slice %305 {offsets = [0, 0], sizes = [10, 32], strides = [1, 1]} : vector<20x32xf32> to vector<10x32xf32>
    %309 = vector.extract_strided_slice %306 {offsets = [0, 0], sizes = [10, 32], strides = [1, 1]} : vector<20x32xf32> to vector<10x32xf32>
    %cst_130 = arith.constant 0.000000e+00 : f32
    %310 = vector.broadcast %cst_130 : f32 to vector<10x32xf32>
    %cst_131 = arith.constant 0.000000e+00 : f32
    %311 = vector.broadcast %cst_131 : f32 to vector<10x10xf32>
    %cst_132 = arith.constant 0.000000e+00 : f32
    %312 = vector.broadcast %cst_132 : f32 to vector<10x32xf32>
    %313 = arith.select %23, %307, %312 : vector<10x32xi1>, vector<10x32xf32>
    %cst_133 = arith.constant dense<0.000000e+00> : vector<10x10xf32>
    %314 = tpu.matmul %313, %308, %cst_133 {dimension_numbers = #tpu.dot_dimension_numbers<[1], [1], [0], [0], [0, 0, 1, 0], [], []>} : vector<10x32xf32>, vector<10x32xf32>, vector<10x10xf32> -> vector<10x10xf32>
    %cst_134 = arith.constant dense<0xFF800000> : vector<10xf32>
    %315 = vector.multi_reduction <maximumf>, %314, %cst_134 [1] : vector<10x10xf32> to vector<10xf32>
    %316 = vector.shape_cast %315 : vector<10xf32> to vector<10x1xf32>
    %317 = vector.broadcast %316 : vector<10x1xf32> to vector<10x10xf32>
    %318 = arith.subf %314, %317 : vector<10x10xf32>
    %319 = math.exp %318 : vector<10x10xf32>
    %cst_135 = arith.constant dense<0.000000e+00> : vector<10xf32>
    %320 = vector.multi_reduction <add>, %319, %cst_135 [1] : vector<10x10xf32> to vector<10xf32>
    %321 = vector.shape_cast %320 : vector<10xf32> to vector<10x1xf32>
    %322 = tpu.reciprocal %321 : vector<10x1xf32> -> vector<10x1xf32>
    %323 = vector.broadcast %322 : vector<10x1xf32> to vector<10x10xf32>
    %324 = arith.mulf %319, %323 : vector<10x10xf32>
    %cst_136 = arith.constant 0.000000e+00 : f32
    %325 = vector.broadcast %cst_136 : f32 to vector<10x32xf32>
    %326 = arith.select %23, %309, %325 : vector<10x32xi1>, vector<10x32xf32>
    %cst_137 = arith.constant dense<0.000000e+00> : vector<10x32xf32>
    %327 = tpu.matmul %324, %326, %cst_137 {dimension_numbers = #tpu.dot_dimension_numbers<[1], [0], [0], [1], [0, 0, 1, 1], [], []>} : vector<10x10xf32>, vector<10x32xf32>, vector<10x32xf32> -> vector<10x32xf32>
    %328 = arith.addf %310, %327 : vector<10x32xf32>
    %329 = arith.addf %311, %324 : vector<10x10xf32>
    %cst_138 = arith.constant 0.000000e+00 : f32
    %330 = vector.broadcast %cst_138 : f32 to vector<10x32xf32>
    %331 = arith.select %28, %307, %330 : vector<10x32xi1>, vector<10x32xf32>
    %cst_139 = arith.constant dense<0.000000e+00> : vector<10x10xf32>
    %332 = tpu.matmul %331, %308, %cst_139 {dimension_numbers = #tpu.dot_dimension_numbers<[1], [1], [0], [0], [0, 0, 1, 0], [], []>} : vector<10x32xf32>, vector<10x32xf32>, vector<10x10xf32> -> vector<10x10xf32>
    %cst_140 = arith.constant dense<0xFF800000> : vector<10xf32>
    %333 = vector.multi_reduction <maximumf>, %332, %cst_140 [1] : vector<10x10xf32> to vector<10xf32>
    %334 = vector.shape_cast %333 : vector<10xf32> to vector<10x1xf32>
    %335 = vector.broadcast %334 : vector<10x1xf32> to vector<10x10xf32>
    %336 = arith.subf %332, %335 : vector<10x10xf32>
    %337 = math.exp %336 : vector<10x10xf32>
    %cst_141 = arith.constant dense<0.000000e+00> : vector<10xf32>
    %338 = vector.multi_reduction <add>, %337, %cst_141 [1] : vector<10x10xf32> to vector<10xf32>
    %339 = vector.shape_cast %338 : vector<10xf32> to vector<10x1xf32>
    %340 = tpu.reciprocal %339 : vector<10x1xf32> -> vector<10x1xf32>
    %341 = vector.broadcast %340 : vector<10x1xf32> to vector<10x10xf32>
    %342 = arith.mulf %337, %341 : vector<10x10xf32>
    %cst_142 = arith.constant 0.000000e+00 : f32
    %343 = vector.broadcast %cst_142 : f32 to vector<10x32xf32>
    %344 = arith.select %28, %309, %343 : vector<10x32xi1>, vector<10x32xf32>
    %cst_143 = arith.constant dense<0.000000e+00> : vector<10x32xf32>
    %345 = tpu.matmul %342, %344, %cst_143 {dimension_numbers = #tpu.dot_dimension_numbers<[1], [0], [0], [1], [0, 0, 1, 1], [], []>} : vector<10x10xf32>, vector<10x32xf32>, vector<10x32xf32> -> vector<10x32xf32>
    %346 = arith.addf %328, %345 : vector<10x32xf32>
    %347 = arith.addf %329, %342 : vector<10x10xf32>
    %cst_144 = arith.constant 0.000000e+00 : f32
    %348 = vector.broadcast %cst_144 : f32 to vector<10x32xf32>
    %349 = arith.select %33, %307, %348 : vector<10x32xi1>, vector<10x32xf32>
    %cst_145 = arith.constant dense<0.000000e+00> : vector<10x10xf32>
    %350 = tpu.matmul %349, %308, %cst_145 {dimension_numbers = #tpu.dot_dimension_numbers<[1], [1], [0], [0], [0, 0, 1, 0], [], []>} : vector<10x32xf32>, vector<10x32xf32>, vector<10x10xf32> -> vector<10x10xf32>
    %cst_146 = arith.constant dense<0xFF800000> : vector<10xf32>
    %351 = vector.multi_reduction <maximumf>, %350, %cst_146 [1] : vector<10x10xf32> to vector<10xf32>
    %352 = vector.shape_cast %351 : vector<10xf32> to vector<10x1xf32>
    %353 = vector.broadcast %352 : vector<10x1xf32> to vector<10x10xf32>
    %354 = arith.subf %350, %353 : vector<10x10xf32>
    %355 = math.exp %354 : vector<10x10xf32>
    %cst_147 = arith.constant dense<0.000000e+00> : vector<10xf32>
    %356 = vector.multi_reduction <add>, %355, %cst_147 [1] : vector<10x10xf32> to vector<10xf32>
    %357 = vector.shape_cast %356 : vector<10xf32> to vector<10x1xf32>
    %358 = tpu.reciprocal %357 : vector<10x1xf32> -> vector<10x1xf32>
    %359 = vector.broadcast %358 : vector<10x1xf32> to vector<10x10xf32>
    %360 = arith.mulf %355, %359 : vector<10x10xf32>
    %cst_148 = arith.constant 0.000000e+00 : f32
    %361 = vector.broadcast %cst_148 : f32 to vector<10x32xf32>
    %362 = arith.select %33, %309, %361 : vector<10x32xi1>, vector<10x32xf32>
    %cst_149 = arith.constant dense<0.000000e+00> : vector<10x32xf32>
    %363 = tpu.matmul %360, %362, %cst_149 {dimension_numbers = #tpu.dot_dimension_numbers<[1], [0], [0], [1], [0, 0, 1, 1], [], []>} : vector<10x10xf32>, vector<10x32xf32>, vector<10x32xf32> -> vector<10x32xf32>
    %364 = arith.addf %346, %363 : vector<10x32xf32>
    %365 = arith.addf %347, %360 : vector<10x10xf32>
    %cst_150 = arith.constant 0.000000e+00 : f32
    %366 = vector.broadcast %cst_150 : f32 to vector<10x32xf32>
    %367 = arith.select %38, %307, %366 : vector<10x32xi1>, vector<10x32xf32>
    %cst_151 = arith.constant dense<0.000000e+00> : vector<10x10xf32>
    %368 = tpu.matmul %367, %308, %cst_151 {dimension_numbers = #tpu.dot_dimension_numbers<[1], [1], [0], [0], [0, 0, 1, 0], [], []>} : vector<10x32xf32>, vector<10x32xf32>, vector<10x10xf32> -> vector<10x10xf32>
    %cst_152 = arith.constant dense<0xFF800000> : vector<10xf32>
    %369 = vector.multi_reduction <maximumf>, %368, %cst_152 [1] : vector<10x10xf32> to vector<10xf32>
    %370 = vector.shape_cast %369 : vector<10xf32> to vector<10x1xf32>
    %371 = vector.broadcast %370 : vector<10x1xf32> to vector<10x10xf32>
    %372 = arith.subf %368, %371 : vector<10x10xf32>
    %373 = math.exp %372 : vector<10x10xf32>
    %cst_153 = arith.constant dense<0.000000e+00> : vector<10xf32>
    %374 = vector.multi_reduction <add>, %373, %cst_153 [1] : vector<10x10xf32> to vector<10xf32>
    %375 = vector.shape_cast %374 : vector<10xf32> to vector<10x1xf32>
    %376 = tpu.reciprocal %375 : vector<10x1xf32> -> vector<10x1xf32>
    %377 = vector.broadcast %376 : vector<10x1xf32> to vector<10x10xf32>
    %378 = arith.mulf %373, %377 : vector<10x10xf32>
    %cst_154 = arith.constant 0.000000e+00 : f32
    %379 = vector.broadcast %cst_154 : f32 to vector<10x32xf32>
    %380 = arith.select %38, %309, %379 : vector<10x32xi1>, vector<10x32xf32>
    %cst_155 = arith.constant dense<0.000000e+00> : vector<10x32xf32>
    %381 = tpu.matmul %378, %380, %cst_155 {dimension_numbers = #tpu.dot_dimension_numbers<[1], [0], [0], [1], [0, 0, 1, 1], [], []>} : vector<10x10xf32>, vector<10x32xf32>, vector<10x32xf32> -> vector<10x32xf32>
    %382 = arith.addf %364, %381 : vector<10x32xf32>
    %383 = arith.addf %365, %378 : vector<10x10xf32>
    %c0_156 = arith.constant 0 : index
    %c0_157 = arith.constant 0 : index
    %384 = vector.load %arg17[%c0_156, %c0_157] : memref<20x32xf32, #tpu.memory_space<vmem>>, vector<10x32xf32>
    tpu.vector_store %arg17[%c0_156, %c0_157], %382 {strides = array<i32>} : memref<20x32xf32, #tpu.memory_space<vmem>>, vector<10x32xf32>,
    %cst_158 = arith.constant 2.500000e-01 : f32
    %385 = vector.broadcast %cst_158 : f32 to vector<10x10xf32>
    %386 = arith.mulf %383, %385 : vector<10x10xf32>
    %c2 = arith.constant 2 : index
    %c0_159 = arith.constant 0 : index
    %c0_160 = arith.constant 0 : index
    %387 = vector.load %arg15[%c2, %c0_159, %c0_160] : memref<6x10x10xf32, #tpu.memory_space<vmem>>, vector<1x10x10xf32>
    %388 = vector.shape_cast %387 : vector<1x10x10xf32> to vector<10x10xf32>
    %389 = vector.shape_cast %386 : vector<10x10xf32> to vector<1x10x10xf32>
    tpu.vector_store %arg15[%c2, %c0_159, %c0_160], %389 {strides = array<i32>} : memref<6x10x10xf32, #tpu.memory_space<vmem>>, vector<1x10x10xf32>,
    %390 = vector.extract_strided_slice %304 {offsets = [10, 0], sizes = [10, 32], strides = [1, 1]} : vector<20x32xf32> to vector<10x32xf32>
    %391 = vector.extract_strided_slice %305 {offsets = [10, 0], sizes = [10, 32], strides = [1, 1]} : vector<20x32xf32> to vector<10x32xf32>
    %392 = vector.extract_strided_slice %306 {offsets = [10, 0], sizes = [10, 32], strides = [1, 1]} : vector<20x32xf32> to vector<10x32xf32>
    %cst_161 = arith.constant 0.000000e+00 : f32
    %393 = vector.broadcast %cst_161 : f32 to vector<10x32xf32>
    %cst_162 = arith.constant 0.000000e+00 : f32
    %394 = vector.broadcast %cst_162 : f32 to vector<10x10xf32>
    %cst_163 = arith.constant 0.000000e+00 : f32
    %395 = vector.broadcast %cst_163 : f32 to vector<10x32xf32>
    %396 = arith.select %23, %390, %395 : vector<10x32xi1>, vector<10x32xf32>
    %cst_164 = arith.constant dense<0.000000e+00> : vector<10x10xf32>
    %397 = tpu.matmul %396, %391, %cst_164 {dimension_numbers = #tpu.dot_dimension_numbers<[1], [1], [0], [0], [0, 0, 1, 0], [], []>} : vector<10x32xf32>, vector<10x32xf32>, vector<10x10xf32> -> vector<10x10xf32>
    %cst_165 = arith.constant dense<0xFF800000> : vector<10xf32>
    %398 = vector.multi_reduction <maximumf>, %397, %cst_165 [1] : vector<10x10xf32> to vector<10xf32>
    %399 = vector.shape_cast %398 : vector<10xf32> to vector<10x1xf32>
    %400 = vector.broadcast %399 : vector<10x1xf32> to vector<10x10xf32>
    %401 = arith.subf %397, %400 : vector<10x10xf32>
    %402 = math.exp %401 : vector<10x10xf32>
    %cst_166 = arith.constant dense<0.000000e+00> : vector<10xf32>
    %403 = vector.multi_reduction <add>, %402, %cst_166 [1] : vector<10x10xf32> to vector<10xf32>
    %404 = vector.shape_cast %403 : vector<10xf32> to vector<10x1xf32>
    %405 = tpu.reciprocal %404 : vector<10x1xf32> -> vector<10x1xf32>
    %406 = vector.broadcast %405 : vector<10x1xf32> to vector<10x10xf32>
    %407 = arith.mulf %402, %406 : vector<10x10xf32>
    %cst_167 = arith.constant 0.000000e+00 : f32
    %408 = vector.broadcast %cst_167 : f32 to vector<10x32xf32>
    %409 = arith.select %23, %392, %408 : vector<10x32xi1>, vector<10x32xf32>
    %cst_168 = arith.constant dense<0.000000e+00> : vector<10x32xf32>
    %410 = tpu.matmul %407, %409, %cst_168 {dimension_numbers = #tpu.dot_dimension_numbers<[1], [0], [0], [1], [0, 0, 1, 1], [], []>} : vector<10x10xf32>, vector<10x32xf32>, vector<10x32xf32> -> vector<10x32xf32>
    %411 = arith.addf %393, %410 : vector<10x32xf32>
    %412 = arith.addf %394, %407 : vector<10x10xf32>
    %cst_169 = arith.constant 0.000000e+00 : f32
    %413 = vector.broadcast %cst_169 : f32 to vector<10x32xf32>
    %414 = arith.select %28, %390, %413 : vector<10x32xi1>, vector<10x32xf32>
    %cst_170 = arith.constant dense<0.000000e+00> : vector<10x10xf32>
    %415 = tpu.matmul %414, %391, %cst_170 {dimension_numbers = #tpu.dot_dimension_numbers<[1], [1], [0], [0], [0, 0, 1, 0], [], []>} : vector<10x32xf32>, vector<10x32xf32>, vector<10x10xf32> -> vector<10x10xf32>
    %cst_171 = arith.constant dense<0xFF800000> : vector<10xf32>
    %416 = vector.multi_reduction <maximumf>, %415, %cst_171 [1] : vector<10x10xf32> to vector<10xf32>
    %417 = vector.shape_cast %416 : vector<10xf32> to vector<10x1xf32>
    %418 = vector.broadcast %417 : vector<10x1xf32> to vector<10x10xf32>
    %419 = arith.subf %415, %418 : vector<10x10xf32>
    %420 = math.exp %419 : vector<10x10xf32>
    %cst_172 = arith.constant dense<0.000000e+00> : vector<10xf32>
    %421 = vector.multi_reduction <add>, %420, %cst_172 [1] : vector<10x10xf32> to vector<10xf32>
    %422 = vector.shape_cast %421 : vector<10xf32> to vector<10x1xf32>
    %423 = tpu.reciprocal %422 : vector<10x1xf32> -> vector<10x1xf32>
    %424 = vector.broadcast %423 : vector<10x1xf32> to vector<10x10xf32>
    %425 = arith.mulf %420, %424 : vector<10x10xf32>
    %cst_173 = arith.constant 0.000000e+00 : f32
    %426 = vector.broadcast %cst_173 : f32 to vector<10x32xf32>
    %427 = arith.select %28, %392, %426 : vector<10x32xi1>, vector<10x32xf32>
    %cst_174 = arith.constant dense<0.000000e+00> : vector<10x32xf32>
    %428 = tpu.matmul %425, %427, %cst_174 {dimension_numbers = #tpu.dot_dimension_numbers<[1], [0], [0], [1], [0, 0, 1, 1], [], []>} : vector<10x10xf32>, vector<10x32xf32>, vector<10x32xf32> -> vector<10x32xf32>
    %429 = arith.addf %411, %428 : vector<10x32xf32>
    %430 = arith.addf %412, %425 : vector<10x10xf32>
    %cst_175 = arith.constant 0.000000e+00 : f32
    %431 = vector.broadcast %cst_175 : f32 to vector<10x32xf32>
    %432 = arith.select %33, %390, %431 : vector<10x32xi1>, vector<10x32xf32>
    %cst_176 = arith.constant dense<0.000000e+00> : vector<10x10xf32>
    %433 = tpu.matmul %432, %391, %cst_176 {dimension_numbers = #tpu.dot_dimension_numbers<[1], [1], [0], [0], [0, 0, 1, 0], [], []>} : vector<10x32xf32>, vector<10x32xf32>, vector<10x10xf32> -> vector<10x10xf32>
    %cst_177 = arith.constant dense<0xFF800000> : vector<10xf32>
    %434 = vector.multi_reduction <maximumf>, %433, %cst_177 [1] : vector<10x10xf32> to vector<10xf32>
    %435 = vector.shape_cast %434 : vector<10xf32> to vector<10x1xf32>
    %436 = vector.broadcast %435 : vector<10x1xf32> to vector<10x10xf32>
    %437 = arith.subf %433, %436 : vector<10x10xf32>
    %438 = math.exp %437 : vector<10x10xf32>
    %cst_178 = arith.constant dense<0.000000e+00> : vector<10xf32>
    %439 = vector.multi_reduction <add>, %438, %cst_178 [1] : vector<10x10xf32> to vector<10xf32>
    %440 = vector.shape_cast %439 : vector<10xf32> to vector<10x1xf32>
    %441 = tpu.reciprocal %440 : vector<10x1xf32> -> vector<10x1xf32>
    %442 = vector.broadcast %441 : vector<10x1xf32> to vector<10x10xf32>
    %443 = arith.mulf %438, %442 : vector<10x10xf32>
    %cst_179 = arith.constant 0.000000e+00 : f32
    %444 = vector.broadcast %cst_179 : f32 to vector<10x32xf32>
    %445 = arith.select %33, %392, %444 : vector<10x32xi1>, vector<10x32xf32>
    %cst_180 = arith.constant dense<0.000000e+00> : vector<10x32xf32>
    %446 = tpu.matmul %443, %445, %cst_180 {dimension_numbers = #tpu.dot_dimension_numbers<[1], [0], [0], [1], [0, 0, 1, 1], [], []>} : vector<10x10xf32>, vector<10x32xf32>, vector<10x32xf32> -> vector<10x32xf32>
    %447 = arith.addf %429, %446 : vector<10x32xf32>
    %448 = arith.addf %430, %443 : vector<10x10xf32>
    %cst_181 = arith.constant 0.000000e+00 : f32
    %449 = vector.broadcast %cst_181 : f32 to vector<10x32xf32>
    %450 = arith.select %38, %390, %449 : vector<10x32xi1>, vector<10x32xf32>
    %cst_182 = arith.constant dense<0.000000e+00> : vector<10x10xf32>
    %451 = tpu.matmul %450, %391, %cst_182 {dimension_numbers = #tpu.dot_dimension_numbers<[1], [1], [0], [0], [0, 0, 1, 0], [], []>} : vector<10x32xf32>, vector<10x32xf32>, vector<10x10xf32> -> vector<10x10xf32>
    %cst_183 = arith.constant dense<0xFF800000> : vector<10xf32>
    %452 = vector.multi_reduction <maximumf>, %451, %cst_183 [1] : vector<10x10xf32> to vector<10xf32>
    %453 = vector.shape_cast %452 : vector<10xf32> to vector<10x1xf32>
    %454 = vector.broadcast %453 : vector<10x1xf32> to vector<10x10xf32>
    %455 = arith.subf %451, %454 : vector<10x10xf32>
    %456 = math.exp %455 : vector<10x10xf32>
    %cst_184 = arith.constant dense<0.000000e+00> : vector<10xf32>
    %457 = vector.multi_reduction <add>, %456, %cst_184 [1] : vector<10x10xf32> to vector<10xf32>
    %458 = vector.shape_cast %457 : vector<10xf32> to vector<10x1xf32>
    %459 = tpu.reciprocal %458 : vector<10x1xf32> -> vector<10x1xf32>
    %460 = vector.broadcast %459 : vector<10x1xf32> to vector<10x10xf32>
    %461 = arith.mulf %456, %460 : vector<10x10xf32>
    %cst_185 = arith.constant 0.000000e+00 : f32
    %462 = vector.broadcast %cst_185 : f32 to vector<10x32xf32>
    %463 = arith.select %38, %392, %462 : vector<10x32xi1>, vector<10x32xf32>
    %cst_186 = arith.constant dense<0.000000e+00> : vector<10x32xf32>
    %464 = tpu.matmul %461, %463, %cst_186 {dimension_numbers = #tpu.dot_dimension_numbers<[1], [0], [0], [1], [0, 0, 1, 1], [], []>} : vector<10x10xf32>, vector<10x32xf32>, vector<10x32xf32> -> vector<10x32xf32>
    %465 = arith.addf %447, %464 : vector<10x32xf32>
    %466 = arith.addf %448, %461 : vector<10x10xf32>
    %c10_187 = arith.constant 10 : index
    %c0_188 = arith.constant 0 : index
    %467 = vector.load %arg17[%c10_187, %c0_188] : memref<20x32xf32, #tpu.memory_space<vmem>>, vector<10x32xf32>
    tpu.vector_store %arg17[%c10_187, %c0_188], %465 {strides = array<i32>} : memref<20x32xf32, #tpu.memory_space<vmem>>, vector<10x32xf32>,
    %cst_189 = arith.constant 2.500000e-01 : f32
    %468 = vector.broadcast %cst_189 : f32 to vector<10x10xf32>
    %469 = arith.mulf %466, %468 : vector<10x10xf32>
    %c3 = arith.constant 3 : index
    %c0_190 = arith.constant 0 : index
    %c0_191 = arith.constant 0 : index
    %470 = vector.load %arg15[%c3, %c0_190, %c0_191] : memref<6x10x10xf32, #tpu.memory_space<vmem>>, vector<1x10x10xf32>
    %471 = vector.shape_cast %470 : vector<1x10x10xf32> to vector<10x10xf32>
    %472 = vector.shape_cast %469 : vector<10x10xf32> to vector<1x10x10xf32>
    tpu.vector_store %arg15[%c3, %c0_190, %c0_191], %472 {strides = array<i32>} : memref<6x10x10xf32, #tpu.memory_space<vmem>>, vector<1x10x10xf32>,
    %c0_192 = arith.constant 0 : index
    %c0_193 = arith.constant 0 : index
    %473 = vector.load %arg17[%c0_192, %c0_193] : memref<20x32xf32, #tpu.memory_space<vmem>>, vector<20x32xf32>
    %c1_194 = arith.constant 1 : index
    %c0_195 = arith.constant 0 : index
    %c0_196 = arith.constant 0 : index
    %474 = vector.load %arg7[%c1_194, %c0_195, %c0_196] : memref<3x32x32xf32, #tpu.memory_space<vmem>>, vector<1x32x32xf32>
    %475 = vector.shape_cast %474 : vector<1x32x32xf32> to vector<32x32xf32>
    %cst_197 = arith.constant dense<0.000000e+00> : vector<20x32xf32>
    %476 = tpu.matmul %473, %475, %cst_197 {dimension_numbers = #tpu.dot_dimension_numbers<[1], [0], [0], [1], [0, 0, 1, 1], [], []>} : vector<20x32xf32>, vector<32x32xf32>, vector<20x32xf32> -> vector<20x32xf32>
    %477 = vector.broadcast %291 : vector<1x32xf32> to vector<20x32xf32>
    %478 = arith.addf %476, %477 : vector<20x32xf32>
    %479 = arith.addf %288, %478 : vector<20x32xf32>
    %cst_198 = arith.constant dense<0.000000e+00> : vector<20xf32>
    %480 = vector.multi_reduction <add>, %479, %cst_198 [1] : vector<20x32xf32> to vector<20xf32>
    %481 = vector.shape_cast %480 : vector<20xf32> to vector<20x1xf32>
    %cst_199 = arith.constant 3.200000e+01 : f32
    %482 = vector.broadcast %cst_199 : f32 to vector<20x1xf32>
    %483 = arith.divf %481, %482 : vector<20x1xf32>
    %484 = vector.broadcast %483 : vector<20x1xf32> to vector<20x32xf32>
    %485 = arith.subf %479, %484 : vector<20x32xf32>
    %486 = arith.mulf %485, %485 : vector<20x32xf32>
    %cst_200 = arith.constant dense<0.000000e+00> : vector<20xf32>
    %487 = vector.multi_reduction <add>, %486, %cst_200 [1] : vector<20x32xf32> to vector<20xf32>
    %488 = vector.shape_cast %487 : vector<20xf32> to vector<20x1xf32>
    %cst_201 = arith.constant 3.200000e+01 : f32
    %489 = vector.broadcast %cst_201 : f32 to vector<20x1xf32>
    %490 = arith.divf %488, %489 : vector<20x1xf32>
    %491 = vector.broadcast %483 : vector<20x1xf32> to vector<20x32xf32>
    %492 = arith.subf %479, %491 : vector<20x32xf32>
    %cst_202 = arith.constant 9.99999974E-6 : f32
    %493 = vector.broadcast %cst_202 : f32 to vector<20x1xf32>
    %494 = arith.addf %490, %493 : vector<20x1xf32>
    %495 = math.rsqrt %494 : vector<20x1xf32>
    %496 = vector.broadcast %495 : vector<20x1xf32> to vector<20x32xf32>
    %497 = arith.mulf %492, %496 : vector<20x32xf32>
    %498 = vector.broadcast %293 : vector<1x32xf32> to vector<20x32xf32>
    %499 = arith.mulf %497, %498 : vector<20x32xf32>
    %500 = vector.broadcast %294 : vector<1x32xf32> to vector<20x32xf32>
    %501 = arith.addf %499, %500 : vector<20x32xf32>
    %c1_203 = arith.constant 1 : index
    %c0_204 = arith.constant 0 : index
    %c0_205 = arith.constant 0 : index
    %502 = vector.load %arg8[%c1_203, %c0_204, %c0_205] : memref<3x32x64xf32, #tpu.memory_space<vmem>>, vector<1x32x64xf32>
    %503 = vector.shape_cast %502 : vector<1x32x64xf32> to vector<32x64xf32>
    %cst_206 = arith.constant dense<0.000000e+00> : vector<20x64xf32>
    %504 = tpu.matmul %501, %503, %cst_206 {dimension_numbers = #tpu.dot_dimension_numbers<[1], [0], [0], [1], [0, 0, 1, 1], [], []>} : vector<20x32xf32>, vector<32x64xf32>, vector<20x64xf32> -> vector<20x64xf32>
    %c1_207 = arith.constant 1 : index
    %c0_208 = arith.constant 0 : index
    %c0_209 = arith.constant 0 : index
    %505 = vector.load %arg9[%c1_207, %c0_208, %c0_209] : memref<3x1x64xf32, #tpu.memory_space<vmem>>, vector<1x1x64xf32>
    %506 = vector.shape_cast %505 : vector<1x1x64xf32> to vector<1x64xf32>
    %507 = vector.broadcast %506 : vector<1x64xf32> to vector<20x64xf32>
    %508 = arith.addf %504, %507 : vector<20x64xf32>
    %cst_210 = arith.constant 0.000000e+00 : f32
    %509 = vector.broadcast %cst_210 : f32 to vector<20x64xf32>
    %510 = arith.maximumf %508, %509 : vector<20x64xf32>
    %c1_211 = arith.constant 1 : index
    %c0_212 = arith.constant 0 : index
    %c0_213 = arith.constant 0 : index
    %511 = vector.load %arg10[%c1_211, %c0_212, %c0_213] : memref<3x64x32xf32, #tpu.memory_space<vmem>>, vector<1x64x32xf32>
    %512 = vector.shape_cast %511 : vector<1x64x32xf32> to vector<64x32xf32>
    %cst_214 = arith.constant dense<0.000000e+00> : vector<20x32xf32>
    %513 = tpu.matmul %510, %512, %cst_214 {dimension_numbers = #tpu.dot_dimension_numbers<[1], [0], [0], [1], [0, 0, 1, 1], [], []>} : vector<20x64xf32>, vector<64x32xf32>, vector<20x32xf32> -> vector<20x32xf32>
    %514 = vector.broadcast %292 : vector<1x32xf32> to vector<20x32xf32>
    %515 = arith.addf %513, %514 : vector<20x32xf32>
    %516 = arith.addf %501, %515 : vector<20x32xf32>
    %cst_215 = arith.constant dense<0.000000e+00> : vector<20xf32>
    %517 = vector.multi_reduction <add>, %516, %cst_215 [1] : vector<20x32xf32> to vector<20xf32>
    %518 = vector.shape_cast %517 : vector<20xf32> to vector<20x1xf32>
    %cst_216 = arith.constant 3.200000e+01 : f32
    %519 = vector.broadcast %cst_216 : f32 to vector<20x1xf32>
    %520 = arith.divf %518, %519 : vector<20x1xf32>
    %521 = vector.broadcast %520 : vector<20x1xf32> to vector<20x32xf32>
    %522 = arith.subf %516, %521 : vector<20x32xf32>
    %523 = arith.mulf %522, %522 : vector<20x32xf32>
    %cst_217 = arith.constant dense<0.000000e+00> : vector<20xf32>
    %524 = vector.multi_reduction <add>, %523, %cst_217 [1] : vector<20x32xf32> to vector<20xf32>
    %525 = vector.shape_cast %524 : vector<20xf32> to vector<20x1xf32>
    %cst_218 = arith.constant 3.200000e+01 : f32
    %526 = vector.broadcast %cst_218 : f32 to vector<20x1xf32>
    %527 = arith.divf %525, %526 : vector<20x1xf32>
    %528 = vector.broadcast %520 : vector<20x1xf32> to vector<20x32xf32>
    %529 = arith.subf %516, %528 : vector<20x32xf32>
    %cst_219 = arith.constant 9.99999974E-6 : f32
    %530 = vector.broadcast %cst_219 : f32 to vector<20x1xf32>
    %531 = arith.addf %527, %530 : vector<20x1xf32>
    %532 = math.rsqrt %531 : vector<20x1xf32>
    %533 = vector.broadcast %532 : vector<20x1xf32> to vector<20x32xf32>
    %534 = arith.mulf %529, %533 : vector<20x32xf32>
    %535 = vector.broadcast %295 : vector<1x32xf32> to vector<20x32xf32>
    %536 = arith.mulf %534, %535 : vector<20x32xf32>
    %537 = vector.broadcast %296 : vector<1x32xf32> to vector<20x32xf32>
    %538 = arith.addf %536, %537 : vector<20x32xf32>
    %c2_220 = arith.constant 2 : index
    %c0_221 = arith.constant 0 : index
    %c0_222 = arith.constant 0 : index
    %539 = vector.load %arg11[%c2_220, %c0_221, %c0_222] : memref<3x8x32xf32, #tpu.memory_space<vmem>>, vector<1x8x32xf32>
    %540 = vector.shape_cast %539 : vector<1x8x32xf32> to vector<8x32xf32>
    %541 = vector.extract_strided_slice %540 {offsets = [0, 0], sizes = [1, 32], strides = [1, 1]} : vector<8x32xf32> to vector<1x32xf32>
    %542 = vector.extract_strided_slice %540 {offsets = [1, 0], sizes = [1, 32], strides = [1, 1]} : vector<8x32xf32> to vector<1x32xf32>
    %543 = vector.extract_strided_slice %540 {offsets = [2, 0], sizes = [1, 32], strides = [1, 1]} : vector<8x32xf32> to vector<1x32xf32>
    %544 = vector.extract_strided_slice %540 {offsets = [3, 0], sizes = [1, 32], strides = [1, 1]} : vector<8x32xf32> to vector<1x32xf32>
    %545 = vector.extract_strided_slice %540 {offsets = [4, 0], sizes = [1, 32], strides = [1, 1]} : vector<8x32xf32> to vector<1x32xf32>
    %546 = vector.extract_strided_slice %540 {offsets = [5, 0], sizes = [1, 32], strides = [1, 1]} : vector<8x32xf32> to vector<1x32xf32>
    %c2_223 = arith.constant 2 : index
    %c0_224 = arith.constant 0 : index
    %c0_225 = arith.constant 0 : index
    %547 = vector.load %arg5[%c2_223, %c0_224, %c0_225] : memref<3x32x96xf32, #tpu.memory_space<vmem>>, vector<1x32x96xf32>
    %548 = vector.shape_cast %547 : vector<1x32x96xf32> to vector<32x96xf32>
    %cst_226 = arith.constant dense<0.000000e+00> : vector<20x96xf32>
    %549 = tpu.matmul %538, %548, %cst_226 {dimension_numbers = #tpu.dot_dimension_numbers<[1], [0], [0], [1], [0, 0, 1, 1], [], []>} : vector<20x32xf32>, vector<32x96xf32>, vector<20x96xf32> -> vector<20x96xf32>
    %c2_227 = arith.constant 2 : index
    %c0_228 = arith.constant 0 : index
    %c0_229 = arith.constant 0 : index
    %550 = vector.load %arg6[%c2_227, %c0_228, %c0_229] : memref<3x1x96xf32, #tpu.memory_space<vmem>>, vector<1x1x96xf32>
    %551 = vector.shape_cast %550 : vector<1x1x96xf32> to vector<1x96xf32>
    %552 = vector.broadcast %551 : vector<1x96xf32> to vector<20x96xf32>
    %553 = arith.addf %549, %552 : vector<20x96xf32>
    %554 = vector.extract_strided_slice %553 {offsets = [0, 0], sizes = [20, 32], strides = [1, 1]} : vector<20x96xf32> to vector<20x32xf32>
    %555 = vector.extract_strided_slice %553 {offsets = [0, 32], sizes = [20, 32], strides = [1, 1]} : vector<20x96xf32> to vector<20x32xf32>
    %556 = vector.extract_strided_slice %553 {offsets = [0, 64], sizes = [20, 32], strides = [1, 1]} : vector<20x96xf32> to vector<20x32xf32>
    %557 = vector.extract_strided_slice %554 {offsets = [0, 0], sizes = [10, 32], strides = [1, 1]} : vector<20x32xf32> to vector<10x32xf32>
    %558 = vector.extract_strided_slice %555 {offsets = [0, 0], sizes = [10, 32], strides = [1, 1]} : vector<20x32xf32> to vector<10x32xf32>
    %559 = vector.extract_strided_slice %556 {offsets = [0, 0], sizes = [10, 32], strides = [1, 1]} : vector<20x32xf32> to vector<10x32xf32>
    %cst_230 = arith.constant 0.000000e+00 : f32
    %560 = vector.broadcast %cst_230 : f32 to vector<10x32xf32>
    %cst_231 = arith.constant 0.000000e+00 : f32
    %561 = vector.broadcast %cst_231 : f32 to vector<10x10xf32>
    %cst_232 = arith.constant 0.000000e+00 : f32
    %562 = vector.broadcast %cst_232 : f32 to vector<10x32xf32>
    %563 = arith.select %23, %557, %562 : vector<10x32xi1>, vector<10x32xf32>
    %cst_233 = arith.constant dense<0.000000e+00> : vector<10x10xf32>
    %564 = tpu.matmul %563, %558, %cst_233 {dimension_numbers = #tpu.dot_dimension_numbers<[1], [1], [0], [0], [0, 0, 1, 0], [], []>} : vector<10x32xf32>, vector<10x32xf32>, vector<10x10xf32> -> vector<10x10xf32>
    %cst_234 = arith.constant dense<0xFF800000> : vector<10xf32>
    %565 = vector.multi_reduction <maximumf>, %564, %cst_234 [1] : vector<10x10xf32> to vector<10xf32>
    %566 = vector.shape_cast %565 : vector<10xf32> to vector<10x1xf32>
    %567 = vector.broadcast %566 : vector<10x1xf32> to vector<10x10xf32>
    %568 = arith.subf %564, %567 : vector<10x10xf32>
    %569 = math.exp %568 : vector<10x10xf32>
    %cst_235 = arith.constant dense<0.000000e+00> : vector<10xf32>
    %570 = vector.multi_reduction <add>, %569, %cst_235 [1] : vector<10x10xf32> to vector<10xf32>
    %571 = vector.shape_cast %570 : vector<10xf32> to vector<10x1xf32>
    %572 = tpu.reciprocal %571 : vector<10x1xf32> -> vector<10x1xf32>
    %573 = vector.broadcast %572 : vector<10x1xf32> to vector<10x10xf32>
    %574 = arith.mulf %569, %573 : vector<10x10xf32>
    %cst_236 = arith.constant 0.000000e+00 : f32
    %575 = vector.broadcast %cst_236 : f32 to vector<10x32xf32>
    %576 = arith.select %23, %559, %575 : vector<10x32xi1>, vector<10x32xf32>
    %cst_237 = arith.constant dense<0.000000e+00> : vector<10x32xf32>
    %577 = tpu.matmul %574, %576, %cst_237 {dimension_numbers = #tpu.dot_dimension_numbers<[1], [0], [0], [1], [0, 0, 1, 1], [], []>} : vector<10x10xf32>, vector<10x32xf32>, vector<10x32xf32> -> vector<10x32xf32>
    %578 = arith.addf %560, %577 : vector<10x32xf32>
    %579 = arith.addf %561, %574 : vector<10x10xf32>
    %cst_238 = arith.constant 0.000000e+00 : f32
    %580 = vector.broadcast %cst_238 : f32 to vector<10x32xf32>
    %581 = arith.select %28, %557, %580 : vector<10x32xi1>, vector<10x32xf32>
    %cst_239 = arith.constant dense<0.000000e+00> : vector<10x10xf32>
    %582 = tpu.matmul %581, %558, %cst_239 {dimension_numbers = #tpu.dot_dimension_numbers<[1], [1], [0], [0], [0, 0, 1, 0], [], []>} : vector<10x32xf32>, vector<10x32xf32>, vector<10x10xf32> -> vector<10x10xf32>
    %cst_240 = arith.constant dense<0xFF800000> : vector<10xf32>
    %583 = vector.multi_reduction <maximumf>, %582, %cst_240 [1] : vector<10x10xf32> to vector<10xf32>
    %584 = vector.shape_cast %583 : vector<10xf32> to vector<10x1xf32>
    %585 = vector.broadcast %584 : vector<10x1xf32> to vector<10x10xf32>
    %586 = arith.subf %582, %585 : vector<10x10xf32>
    %587 = math.exp %586 : vector<10x10xf32>
    %cst_241 = arith.constant dense<0.000000e+00> : vector<10xf32>
    %588 = vector.multi_reduction <add>, %587, %cst_241 [1] : vector<10x10xf32> to vector<10xf32>
    %589 = vector.shape_cast %588 : vector<10xf32> to vector<10x1xf32>
    %590 = tpu.reciprocal %589 : vector<10x1xf32> -> vector<10x1xf32>
    %591 = vector.broadcast %590 : vector<10x1xf32> to vector<10x10xf32>
    %592 = arith.mulf %587, %591 : vector<10x10xf32>
    %cst_242 = arith.constant 0.000000e+00 : f32
    %593 = vector.broadcast %cst_242 : f32 to vector<10x32xf32>
    %594 = arith.select %28, %559, %593 : vector<10x32xi1>, vector<10x32xf32>
    %cst_243 = arith.constant dense<0.000000e+00> : vector<10x32xf32>
    %595 = tpu.matmul %592, %594, %cst_243 {dimension_numbers = #tpu.dot_dimension_numbers<[1], [0], [0], [1], [0, 0, 1, 1], [], []>} : vector<10x10xf32>, vector<10x32xf32>, vector<10x32xf32> -> vector<10x32xf32>
    %596 = arith.addf %578, %595 : vector<10x32xf32>
    %597 = arith.addf %579, %592 : vector<10x10xf32>
    %cst_244 = arith.constant 0.000000e+00 : f32
    %598 = vector.broadcast %cst_244 : f32 to vector<10x32xf32>
    %599 = arith.select %33, %557, %598 : vector<10x32xi1>, vector<10x32xf32>
    %cst_245 = arith.constant dense<0.000000e+00> : vector<10x10xf32>
    %600 = tpu.matmul %599, %558, %cst_245 {dimension_numbers = #tpu.dot_dimension_numbers<[1], [1], [0], [0], [0, 0, 1, 0], [], []>} : vector<10x32xf32>, vector<10x32xf32>, vector<10x10xf32> -> vector<10x10xf32>
    %cst_246 = arith.constant dense<0xFF800000> : vector<10xf32>
    %601 = vector.multi_reduction <maximumf>, %600, %cst_246 [1] : vector<10x10xf32> to vector<10xf32>
    %602 = vector.shape_cast %601 : vector<10xf32> to vector<10x1xf32>
    %603 = vector.broadcast %602 : vector<10x1xf32> to vector<10x10xf32>
    %604 = arith.subf %600, %603 : vector<10x10xf32>
    %605 = math.exp %604 : vector<10x10xf32>
    %cst_247 = arith.constant dense<0.000000e+00> : vector<10xf32>
    %606 = vector.multi_reduction <add>, %605, %cst_247 [1] : vector<10x10xf32> to vector<10xf32>
    %607 = vector.shape_cast %606 : vector<10xf32> to vector<10x1xf32>
    %608 = tpu.reciprocal %607 : vector<10x1xf32> -> vector<10x1xf32>
    %609 = vector.broadcast %608 : vector<10x1xf32> to vector<10x10xf32>
    %610 = arith.mulf %605, %609 : vector<10x10xf32>
    %cst_248 = arith.constant 0.000000e+00 : f32
    %611 = vector.broadcast %cst_248 : f32 to vector<10x32xf32>
    %612 = arith.select %33, %559, %611 : vector<10x32xi1>, vector<10x32xf32>
    %cst_249 = arith.constant dense<0.000000e+00> : vector<10x32xf32>
    %613 = tpu.matmul %610, %612, %cst_249 {dimension_numbers = #tpu.dot_dimension_numbers<[1], [0], [0], [1], [0, 0, 1, 1], [], []>} : vector<10x10xf32>, vector<10x32xf32>, vector<10x32xf32> -> vector<10x32xf32>
    %614 = arith.addf %596, %613 : vector<10x32xf32>
    %615 = arith.addf %597, %610 : vector<10x10xf32>
    %cst_250 = arith.constant 0.000000e+00 : f32
    %616 = vector.broadcast %cst_250 : f32 to vector<10x32xf32>
    %617 = arith.select %38, %557, %616 : vector<10x32xi1>, vector<10x32xf32>
    %cst_251 = arith.constant dense<0.000000e+00> : vector<10x10xf32>
    %618 = tpu.matmul %617, %558, %cst_251 {dimension_numbers = #tpu.dot_dimension_numbers<[1], [1], [0], [0], [0, 0, 1, 0], [], []>} : vector<10x32xf32>, vector<10x32xf32>, vector<10x10xf32> -> vector<10x10xf32>
    %cst_252 = arith.constant dense<0xFF800000> : vector<10xf32>
    %619 = vector.multi_reduction <maximumf>, %618, %cst_252 [1] : vector<10x10xf32> to vector<10xf32>
    %620 = vector.shape_cast %619 : vector<10xf32> to vector<10x1xf32>
    %621 = vector.broadcast %620 : vector<10x1xf32> to vector<10x10xf32>
    %622 = arith.subf %618, %621 : vector<10x10xf32>
    %623 = math.exp %622 : vector<10x10xf32>
    %cst_253 = arith.constant dense<0.000000e+00> : vector<10xf32>
    %624 = vector.multi_reduction <add>, %623, %cst_253 [1] : vector<10x10xf32> to vector<10xf32>
    %625 = vector.shape_cast %624 : vector<10xf32> to vector<10x1xf32>
    %626 = tpu.reciprocal %625 : vector<10x1xf32> -> vector<10x1xf32>
    %627 = vector.broadcast %626 : vector<10x1xf32> to vector<10x10xf32>
    %628 = arith.mulf %623, %627 : vector<10x10xf32>
    %cst_254 = arith.constant 0.000000e+00 : f32
    %629 = vector.broadcast %cst_254 : f32 to vector<10x32xf32>
    %630 = arith.select %38, %559, %629 : vector<10x32xi1>, vector<10x32xf32>
    %cst_255 = arith.constant dense<0.000000e+00> : vector<10x32xf32>
    %631 = tpu.matmul %628, %630, %cst_255 {dimension_numbers = #tpu.dot_dimension_numbers<[1], [0], [0], [1], [0, 0, 1, 1], [], []>} : vector<10x10xf32>, vector<10x32xf32>, vector<10x32xf32> -> vector<10x32xf32>
    %632 = arith.addf %614, %631 : vector<10x32xf32>
    %633 = arith.addf %615, %628 : vector<10x10xf32>
    %c0_256 = arith.constant 0 : index
    %c0_257 = arith.constant 0 : index
    %634 = vector.load %arg17[%c0_256, %c0_257] : memref<20x32xf32, #tpu.memory_space<vmem>>, vector<10x32xf32>
    tpu.vector_store %arg17[%c0_256, %c0_257], %632 {strides = array<i32>} : memref<20x32xf32, #tpu.memory_space<vmem>>, vector<10x32xf32>,
    %cst_258 = arith.constant 2.500000e-01 : f32
    %635 = vector.broadcast %cst_258 : f32 to vector<10x10xf32>
    %636 = arith.mulf %633, %635 : vector<10x10xf32>
    %c4 = arith.constant 4 : index
    %c0_259 = arith.constant 0 : index
    %c0_260 = arith.constant 0 : index
    %637 = vector.load %arg15[%c4, %c0_259, %c0_260] : memref<6x10x10xf32, #tpu.memory_space<vmem>>, vector<1x10x10xf32>
    %638 = vector.shape_cast %637 : vector<1x10x10xf32> to vector<10x10xf32>
    %639 = vector.shape_cast %636 : vector<10x10xf32> to vector<1x10x10xf32>
    tpu.vector_store %arg15[%c4, %c0_259, %c0_260], %639 {strides = array<i32>} : memref<6x10x10xf32, #tpu.memory_space<vmem>>, vector<1x10x10xf32>,
    %640 = vector.extract_strided_slice %554 {offsets = [10, 0], sizes = [10, 32], strides = [1, 1]} : vector<20x32xf32> to vector<10x32xf32>
    %641 = vector.extract_strided_slice %555 {offsets = [10, 0], sizes = [10, 32], strides = [1, 1]} : vector<20x32xf32> to vector<10x32xf32>
    %642 = vector.extract_strided_slice %556 {offsets = [10, 0], sizes = [10, 32], strides = [1, 1]} : vector<20x32xf32> to vector<10x32xf32>
    %cst_261 = arith.constant 0.000000e+00 : f32
    %643 = vector.broadcast %cst_261 : f32 to vector<10x32xf32>
    %cst_262 = arith.constant 0.000000e+00 : f32
    %644 = vector.broadcast %cst_262 : f32 to vector<10x10xf32>
    %cst_263 = arith.constant 0.000000e+00 : f32
    %645 = vector.broadcast %cst_263 : f32 to vector<10x32xf32>
    %646 = arith.select %23, %640, %645 : vector<10x32xi1>, vector<10x32xf32>
    %cst_264 = arith.constant dense<0.000000e+00> : vector<10x10xf32>
    %647 = tpu.matmul %646, %641, %cst_264 {dimension_numbers = #tpu.dot_dimension_numbers<[1], [1], [0], [0], [0, 0, 1, 0], [], []>} : vector<10x32xf32>, vector<10x32xf32>, vector<10x10xf32> -> vector<10x10xf32>
    %cst_265 = arith.constant dense<0xFF800000> : vector<10xf32>
    %648 = vector.multi_reduction <maximumf>, %647, %cst_265 [1] : vector<10x10xf32> to vector<10xf32>
    %649 = vector.shape_cast %648 : vector<10xf32> to vector<10x1xf32>
    %650 = vector.broadcast %649 : vector<10x1xf32> to vector<10x10xf32>
    %651 = arith.subf %647, %650 : vector<10x10xf32>
    %652 = math.exp %651 : vector<10x10xf32>
    %cst_266 = arith.constant dense<0.000000e+00> : vector<10xf32>
    %653 = vector.multi_reduction <add>, %652, %cst_266 [1] : vector<10x10xf32> to vector<10xf32>
    %654 = vector.shape_cast %653 : vector<10xf32> to vector<10x1xf32>
    %655 = tpu.reciprocal %654 : vector<10x1xf32> -> vector<10x1xf32>
    %656 = vector.broadcast %655 : vector<10x1xf32> to vector<10x10xf32>
    %657 = arith.mulf %652, %656 : vector<10x10xf32>
    %cst_267 = arith.constant 0.000000e+00 : f32
    %658 = vector.broadcast %cst_267 : f32 to vector<10x32xf32>
    %659 = arith.select %23, %642, %658 : vector<10x32xi1>, vector<10x32xf32>
    %cst_268 = arith.constant dense<0.000000e+00> : vector<10x32xf32>
    %660 = tpu.matmul %657, %659, %cst_268 {dimension_numbers = #tpu.dot_dimension_numbers<[1], [0], [0], [1], [0, 0, 1, 1], [], []>} : vector<10x10xf32>, vector<10x32xf32>, vector<10x32xf32> -> vector<10x32xf32>
    %661 = arith.addf %643, %660 : vector<10x32xf32>
    %662 = arith.addf %644, %657 : vector<10x10xf32>
    %cst_269 = arith.constant 0.000000e+00 : f32
    %663 = vector.broadcast %cst_269 : f32 to vector<10x32xf32>
    %664 = arith.select %28, %640, %663 : vector<10x32xi1>, vector<10x32xf32>
    %cst_270 = arith.constant dense<0.000000e+00> : vector<10x10xf32>
    %665 = tpu.matmul %664, %641, %cst_270 {dimension_numbers = #tpu.dot_dimension_numbers<[1], [1], [0], [0], [0, 0, 1, 0], [], []>} : vector<10x32xf32>, vector<10x32xf32>, vector<10x10xf32> -> vector<10x10xf32>
    %cst_271 = arith.constant dense<0xFF800000> : vector<10xf32>
    %666 = vector.multi_reduction <maximumf>, %665, %cst_271 [1] : vector<10x10xf32> to vector<10xf32>
    %667 = vector.shape_cast %666 : vector<10xf32> to vector<10x1xf32>
    %668 = vector.broadcast %667 : vector<10x1xf32> to vector<10x10xf32>
    %669 = arith.subf %665, %668 : vector<10x10xf32>
    %670 = math.exp %669 : vector<10x10xf32>
    %cst_272 = arith.constant dense<0.000000e+00> : vector<10xf32>
    %671 = vector.multi_reduction <add>, %670, %cst_272 [1] : vector<10x10xf32> to vector<10xf32>
    %672 = vector.shape_cast %671 : vector<10xf32> to vector<10x1xf32>
    %673 = tpu.reciprocal %672 : vector<10x1xf32> -> vector<10x1xf32>
    %674 = vector.broadcast %673 : vector<10x1xf32> to vector<10x10xf32>
    %675 = arith.mulf %670, %674 : vector<10x10xf32>
    %cst_273 = arith.constant 0.000000e+00 : f32
    %676 = vector.broadcast %cst_273 : f32 to vector<10x32xf32>
    %677 = arith.select %28, %642, %676 : vector<10x32xi1>, vector<10x32xf32>
    %cst_274 = arith.constant dense<0.000000e+00> : vector<10x32xf32>
    %678 = tpu.matmul %675, %677, %cst_274 {dimension_numbers = #tpu.dot_dimension_numbers<[1], [0], [0], [1], [0, 0, 1, 1], [], []>} : vector<10x10xf32>, vector<10x32xf32>, vector<10x32xf32> -> vector<10x32xf32>
    %679 = arith.addf %661, %678 : vector<10x32xf32>
    %680 = arith.addf %662, %675 : vector<10x10xf32>
    %cst_275 = arith.constant 0.000000e+00 : f32
    %681 = vector.broadcast %cst_275 : f32 to vector<10x32xf32>
    %682 = arith.select %33, %640, %681 : vector<10x32xi1>, vector<10x32xf32>
    %cst_276 = arith.constant dense<0.000000e+00> : vector<10x10xf32>
    %683 = tpu.matmul %682, %641, %cst_276 {dimension_numbers = #tpu.dot_dimension_numbers<[1], [1], [0], [0], [0, 0, 1, 0], [], []>} : vector<10x32xf32>, vector<10x32xf32>, vector<10x10xf32> -> vector<10x10xf32>
    %cst_277 = arith.constant dense<0xFF800000> : vector<10xf32>
    %684 = vector.multi_reduction <maximumf>, %683, %cst_277 [1] : vector<10x10xf32> to vector<10xf32>
    %685 = vector.shape_cast %684 : vector<10xf32> to vector<10x1xf32>
    %686 = vector.broadcast %685 : vector<10x1xf32> to vector<10x10xf32>
    %687 = arith.subf %683, %686 : vector<10x10xf32>
    %688 = math.exp %687 : vector<10x10xf32>
    %cst_278 = arith.constant dense<0.000000e+00> : vector<10xf32>
    %689 = vector.multi_reduction <add>, %688, %cst_278 [1] : vector<10x10xf32> to vector<10xf32>
    %690 = vector.shape_cast %689 : vector<10xf32> to vector<10x1xf32>
    %691 = tpu.reciprocal %690 : vector<10x1xf32> -> vector<10x1xf32>
    %692 = vector.broadcast %691 : vector<10x1xf32> to vector<10x10xf32>
    %693 = arith.mulf %688, %692 : vector<10x10xf32>
    %cst_279 = arith.constant 0.000000e+00 : f32
    %694 = vector.broadcast %cst_279 : f32 to vector<10x32xf32>
    %695 = arith.select %33, %642, %694 : vector<10x32xi1>, vector<10x32xf32>
    %cst_280 = arith.constant dense<0.000000e+00> : vector<10x32xf32>
    %696 = tpu.matmul %693, %695, %cst_280 {dimension_numbers = #tpu.dot_dimension_numbers<[1], [0], [0], [1], [0, 0, 1, 1], [], []>} : vector<10x10xf32>, vector<10x32xf32>, vector<10x32xf32> -> vector<10x32xf32>
    %697 = arith.addf %679, %696 : vector<10x32xf32>
    %698 = arith.addf %680, %693 : vector<10x10xf32>
    %cst_281 = arith.constant 0.000000e+00 : f32
    %699 = vector.broadcast %cst_281 : f32 to vector<10x32xf32>
    %700 = arith.select %38, %640, %699 : vector<10x32xi1>, vector<10x32xf32>
    %cst_282 = arith.constant dense<0.000000e+00> : vector<10x10xf32>
    %701 = tpu.matmul %700, %641, %cst_282 {dimension_numbers = #tpu.dot_dimension_numbers<[1], [1], [0], [0], [0, 0, 1, 0], [], []>} : vector<10x32xf32>, vector<10x32xf32>, vector<10x10xf32> -> vector<10x10xf32>
    %cst_283 = arith.constant dense<0xFF800000> : vector<10xf32>
    %702 = vector.multi_reduction <maximumf>, %701, %cst_283 [1] : vector<10x10xf32> to vector<10xf32>
    %703 = vector.shape_cast %702 : vector<10xf32> to vector<10x1xf32>
    %704 = vector.broadcast %703 : vector<10x1xf32> to vector<10x10xf32>
    %705 = arith.subf %701, %704 : vector<10x10xf32>
    %706 = math.exp %705 : vector<10x10xf32>
    %cst_284 = arith.constant dense<0.000000e+00> : vector<10xf32>
    %707 = vector.multi_reduction <add>, %706, %cst_284 [1] : vector<10x10xf32> to vector<10xf32>
    %708 = vector.shape_cast %707 : vector<10xf32> to vector<10x1xf32>
    %709 = tpu.reciprocal %708 : vector<10x1xf32> -> vector<10x1xf32>
    %710 = vector.broadcast %709 : vector<10x1xf32> to vector<10x10xf32>
    %711 = arith.mulf %706, %710 : vector<10x10xf32>
    %cst_285 = arith.constant 0.000000e+00 : f32
    %712 = vector.broadcast %cst_285 : f32 to vector<10x32xf32>
    %713 = arith.select %38, %642, %712 : vector<10x32xi1>, vector<10x32xf32>
    %cst_286 = arith.constant dense<0.000000e+00> : vector<10x32xf32>
    %714 = tpu.matmul %711, %713, %cst_286 {dimension_numbers = #tpu.dot_dimension_numbers<[1], [0], [0], [1], [0, 0, 1, 1], [], []>} : vector<10x10xf32>, vector<10x32xf32>, vector<10x32xf32> -> vector<10x32xf32>
    %715 = arith.addf %697, %714 : vector<10x32xf32>
    %716 = arith.addf %698, %711 : vector<10x10xf32>
    %c10_287 = arith.constant 10 : index
    %c0_288 = arith.constant 0 : index
    %717 = vector.load %arg17[%c10_287, %c0_288] : memref<20x32xf32, #tpu.memory_space<vmem>>, vector<10x32xf32>
    tpu.vector_store %arg17[%c10_287, %c0_288], %715 {strides = array<i32>} : memref<20x32xf32, #tpu.memory_space<vmem>>, vector<10x32xf32>,
    %cst_289 = arith.constant 2.500000e-01 : f32
    %718 = vector.broadcast %cst_289 : f32 to vector<10x10xf32>
    %719 = arith.mulf %716, %718 : vector<10x10xf32>
    %c5 = arith.constant 5 : index
    %c0_290 = arith.constant 0 : index
    %c0_291 = arith.constant 0 : index
    %720 = vector.load %arg15[%c5, %c0_290, %c0_291] : memref<6x10x10xf32, #tpu.memory_space<vmem>>, vector<1x10x10xf32>
    %721 = vector.shape_cast %720 : vector<1x10x10xf32> to vector<10x10xf32>
    %722 = vector.shape_cast %719 : vector<10x10xf32> to vector<1x10x10xf32>
    tpu.vector_store %arg15[%c5, %c0_290, %c0_291], %722 {strides = array<i32>} : memref<6x10x10xf32, #tpu.memory_space<vmem>>, vector<1x10x10xf32>,
    %723 = vector.extract_strided_slice %538 {offsets = [0, 0], sizes = [1, 32], strides = [1, 1]} : vector<20x32xf32> to vector<1x32xf32>
    %c0_292 = arith.constant 0 : index
    %c0_293 = arith.constant 0 : index
    %724 = vector.load %arg16[%c0_292, %c0_293] : memref<20x32xf32, #tpu.memory_space<vmem>>, vector<1x32xf32>
    tpu.vector_store %arg16[%c0_292, %c0_293], %723 {strides = array<i32>} : memref<20x32xf32, #tpu.memory_space<vmem>>, vector<1x32xf32>,
    %c0_294 = arith.constant 0 : index
    %c0_295 = arith.constant 0 : index
    %725 = vector.load %arg17[%c0_294, %c0_295] : memref<20x32xf32, #tpu.memory_space<vmem>>, vector<1x32xf32>
    %c2_296 = arith.constant 2 : index
    %c0_297 = arith.constant 0 : index
    %726 = vector.load %arg16[%c2_296, %c0_297] : memref<20x32xf32, #tpu.memory_space<vmem>>, vector<1x32xf32>
    tpu.vector_store %arg16[%c2_296, %c0_297], %725 {strides = array<i32>} : memref<20x32xf32, #tpu.memory_space<vmem>>, vector<1x32xf32>,
    %727 = vector.extract_strided_slice %538 {offsets = [10, 0], sizes = [1, 32], strides = [1, 1]} : vector<20x32xf32> to vector<1x32xf32>
    %c1_298 = arith.constant 1 : index
    %c0_299 = arith.constant 0 : index
    %728 = vector.load %arg16[%c1_298, %c0_299] : memref<20x32xf32, #tpu.memory_space<vmem>>, vector<1x32xf32>
    tpu.vector_store %arg16[%c1_298, %c0_299], %727 {strides = array<i32>} : memref<20x32xf32, #tpu.memory_space<vmem>>, vector<1x32xf32>,
    %c10_300 = arith.constant 10 : index
    %c0_301 = arith.constant 0 : index
    %729 = vector.load %arg17[%c10_300, %c0_301] : memref<20x32xf32, #tpu.memory_space<vmem>>, vector<1x32xf32>
    %c3_302 = arith.constant 3 : index
    %c0_303 = arith.constant 0 : index
    %730 = vector.load %arg16[%c3_302, %c0_303] : memref<20x32xf32, #tpu.memory_space<vmem>>, vector<1x32xf32>
    tpu.vector_store %arg16[%c3_302, %c0_303], %729 {strides = array<i32>} : memref<20x32xf32, #tpu.memory_space<vmem>>, vector<1x32xf32>,
    %c0_304 = arith.constant 0 : index
    %c0_305 = arith.constant 0 : index
    %731 = vector.load %arg16[%c0_304, %c0_305] : memref<20x32xf32, #tpu.memory_space<vmem>>, vector<2x32xf32>
    %c2_306 = arith.constant 2 : index
    %c0_307 = arith.constant 0 : index
    %732 = vector.load %arg16[%c2_306, %c0_307] : memref<20x32xf32, #tpu.memory_space<vmem>>, vector<2x32xf32>
    %c2_308 = arith.constant 2 : index
    %c0_309 = arith.constant 0 : index
    %c0_310 = arith.constant 0 : index
    %733 = vector.load %arg7[%c2_308, %c0_309, %c0_310] : memref<3x32x32xf32, #tpu.memory_space<vmem>>, vector<1x32x32xf32>
    %734 = vector.shape_cast %733 : vector<1x32x32xf32> to vector<32x32xf32>
    %cst_311 = arith.constant dense<0.000000e+00> : vector<2x32xf32>
    %735 = tpu.matmul %732, %734, %cst_311 {dimension_numbers = #tpu.dot_dimension_numbers<[1], [0], [0], [1], [0, 0, 1, 1], [], []>} : vector<2x32xf32>, vector<32x32xf32>, vector<2x32xf32> -> vector<2x32xf32>
    %736 = vector.broadcast %541 : vector<1x32xf32> to vector<2x32xf32>
    %737 = arith.addf %735, %736 : vector<2x32xf32>
    %738 = arith.addf %731, %737 : vector<2x32xf32>
    %cst_312 = arith.constant dense<0.000000e+00> : vector<2xf32>
    %739 = vector.multi_reduction <add>, %738, %cst_312 [1] : vector<2x32xf32> to vector<2xf32>
    %740 = vector.shape_cast %739 : vector<2xf32> to vector<2x1xf32>
    %cst_313 = arith.constant 3.200000e+01 : f32
    %741 = vector.broadcast %cst_313 : f32 to vector<2x1xf32>
    %742 = arith.divf %740, %741 : vector<2x1xf32>
    %743 = vector.broadcast %742 : vector<2x1xf32> to vector<2x32xf32>
    %744 = arith.subf %738, %743 : vector<2x32xf32>
    %745 = arith.mulf %744, %744 : vector<2x32xf32>
    %cst_314 = arith.constant dense<0.000000e+00> : vector<2xf32>
    %746 = vector.multi_reduction <add>, %745, %cst_314 [1] : vector<2x32xf32> to vector<2xf32>
    %747 = vector.shape_cast %746 : vector<2xf32> to vector<2x1xf32>
    %cst_315 = arith.constant 3.200000e+01 : f32
    %748 = vector.broadcast %cst_315 : f32 to vector<2x1xf32>
    %749 = arith.divf %747, %748 : vector<2x1xf32>
    %750 = vector.broadcast %742 : vector<2x1xf32> to vector<2x32xf32>
    %751 = arith.subf %738, %750 : vector<2x32xf32>
    %cst_316 = arith.constant 9.99999974E-6 : f32
    %752 = vector.broadcast %cst_316 : f32 to vector<2x1xf32>
    %753 = arith.addf %749, %752 : vector<2x1xf32>
    %754 = math.rsqrt %753 : vector<2x1xf32>
    %755 = vector.broadcast %754 : vector<2x1xf32> to vector<2x32xf32>
    %756 = arith.mulf %751, %755 : vector<2x32xf32>
    %757 = vector.broadcast %543 : vector<1x32xf32> to vector<2x32xf32>
    %758 = arith.mulf %756, %757 : vector<2x32xf32>
    %759 = vector.broadcast %544 : vector<1x32xf32> to vector<2x32xf32>
    %760 = arith.addf %758, %759 : vector<2x32xf32>
    %c2_317 = arith.constant 2 : index
    %c0_318 = arith.constant 0 : index
    %c0_319 = arith.constant 0 : index
    %761 = vector.load %arg8[%c2_317, %c0_318, %c0_319] : memref<3x32x64xf32, #tpu.memory_space<vmem>>, vector<1x32x64xf32>
    %762 = vector.shape_cast %761 : vector<1x32x64xf32> to vector<32x64xf32>
    %cst_320 = arith.constant dense<0.000000e+00> : vector<2x64xf32>
    %763 = tpu.matmul %760, %762, %cst_320 {dimension_numbers = #tpu.dot_dimension_numbers<[1], [0], [0], [1], [0, 0, 1, 1], [], []>} : vector<2x32xf32>, vector<32x64xf32>, vector<2x64xf32> -> vector<2x64xf32>
    %c2_321 = arith.constant 2 : index
    %c0_322 = arith.constant 0 : index
    %c0_323 = arith.constant 0 : index
    %764 = vector.load %arg9[%c2_321, %c0_322, %c0_323] : memref<3x1x64xf32, #tpu.memory_space<vmem>>, vector<1x1x64xf32>
    %765 = vector.shape_cast %764 : vector<1x1x64xf32> to vector<1x64xf32>
    %766 = vector.broadcast %765 : vector<1x64xf32> to vector<2x64xf32>
    %767 = arith.addf %763, %766 : vector<2x64xf32>
    %cst_324 = arith.constant 0.000000e+00 : f32
    %768 = vector.broadcast %cst_324 : f32 to vector<2x64xf32>
    %769 = arith.maximumf %767, %768 : vector<2x64xf32>
    %c2_325 = arith.constant 2 : index
    %c0_326 = arith.constant 0 : index
    %c0_327 = arith.constant 0 : index
    %770 = vector.load %arg10[%c2_325, %c0_326, %c0_327] : memref<3x64x32xf32, #tpu.memory_space<vmem>>, vector<1x64x32xf32>
    %771 = vector.shape_cast %770 : vector<1x64x32xf32> to vector<64x32xf32>
    %cst_328 = arith.constant dense<0.000000e+00> : vector<2x32xf32>
    %772 = tpu.matmul %769, %771, %cst_328 {dimension_numbers = #tpu.dot_dimension_numbers<[1], [0], [0], [1], [0, 0, 1, 1], [], []>} : vector<2x64xf32>, vector<64x32xf32>, vector<2x32xf32> -> vector<2x32xf32>
    %773 = vector.broadcast %542 : vector<1x32xf32> to vector<2x32xf32>
    %774 = arith.addf %772, %773 : vector<2x32xf32>
    %775 = arith.addf %760, %774 : vector<2x32xf32>
    %cst_329 = arith.constant dense<0.000000e+00> : vector<2xf32>
    %776 = vector.multi_reduction <add>, %775, %cst_329 [1] : vector<2x32xf32> to vector<2xf32>
    %777 = vector.shape_cast %776 : vector<2xf32> to vector<2x1xf32>
    %cst_330 = arith.constant 3.200000e+01 : f32
    %778 = vector.broadcast %cst_330 : f32 to vector<2x1xf32>
    %779 = arith.divf %777, %778 : vector<2x1xf32>
    %780 = vector.broadcast %779 : vector<2x1xf32> to vector<2x32xf32>
    %781 = arith.subf %775, %780 : vector<2x32xf32>
    %782 = arith.mulf %781, %781 : vector<2x32xf32>
    %cst_331 = arith.constant dense<0.000000e+00> : vector<2xf32>
    %783 = vector.multi_reduction <add>, %782, %cst_331 [1] : vector<2x32xf32> to vector<2xf32>
    %784 = vector.shape_cast %783 : vector<2xf32> to vector<2x1xf32>
    %cst_332 = arith.constant 3.200000e+01 : f32
    %785 = vector.broadcast %cst_332 : f32 to vector<2x1xf32>
    %786 = arith.divf %784, %785 : vector<2x1xf32>
    %787 = vector.broadcast %779 : vector<2x1xf32> to vector<2x32xf32>
    %788 = arith.subf %775, %787 : vector<2x32xf32>
    %cst_333 = arith.constant 9.99999974E-6 : f32
    %789 = vector.broadcast %cst_333 : f32 to vector<2x1xf32>
    %790 = arith.addf %786, %789 : vector<2x1xf32>
    %791 = math.rsqrt %790 : vector<2x1xf32>
    %792 = vector.broadcast %791 : vector<2x1xf32> to vector<2x32xf32>
    %793 = arith.mulf %788, %792 : vector<2x32xf32>
    %794 = vector.broadcast %545 : vector<1x32xf32> to vector<2x32xf32>
    %795 = arith.mulf %793, %794 : vector<2x32xf32>
    %796 = vector.broadcast %546 : vector<1x32xf32> to vector<2x32xf32>
    %797 = arith.addf %795, %796 : vector<2x32xf32>
    %cst_334 = arith.constant 0.000000e+00 : f32
    %798 = vector.broadcast %cst_334 : f32 to vector<2x32xf32>
    %799 = arith.maximumf %797, %798 : vector<2x32xf32>
    %c0_335 = arith.constant 0 : index
    %c0_336 = arith.constant 0 : index
    %800 = vector.load %arg12[%c0_335, %c0_336] : memref<32x3xf32, #tpu.memory_space<vmem>>, vector<32x3xf32>
    %cst_337 = arith.constant dense<0.000000e+00> : vector<2x3xf32>
    %801 = tpu.matmul %799, %800, %cst_337 {dimension_numbers = #tpu.dot_dimension_numbers<[1], [0], [0], [1], [0, 0, 1, 1], [], []>} : vector<2x32xf32>, vector<32x3xf32>, vector<2x3xf32> -> vector<2x3xf32>
    %c0_338 = arith.constant 0 : index
    %c0_339 = arith.constant 0 : index
    %802 = vector.load %arg13[%c0_338, %c0_339] : memref<1x3xf32, #tpu.memory_space<vmem>>, vector<1x3xf32>
    %803 = vector.broadcast %802 : vector<1x3xf32> to vector<2x3xf32>
    %804 = arith.addf %801, %803 : vector<2x3xf32>
    %c0_340 = arith.constant 0 : index
    %c0_341 = arith.constant 0 : index
    %805 = vector.load %arg14[%c0_340, %c0_341] : memref<2x3xf32, #tpu.memory_space<vmem>>, vector<2x3xf32>
    tpu.vector_store %arg14[%c0_340, %c0_341], %804 {strides = array<i32>} : memref<2x3xf32, #tpu.memory_space<vmem>>, vector<2x3xf32>,
    return
  }
  func.func @transform_0(%arg0: i32) -> (i32, i32) {
    %c0_i32 = arith.constant 0 : i32
    %c0_i32_0 = arith.constant 0 : i32
    %c0_i32_1 = arith.constant 0 : i32
    return %c0_i32, %c0_i32_0 : i32, i32
  }
  func.func @transform_1(%arg0: i32) -> (i32, i32) {
    %c0_i32 = arith.constant 0 : i32
    %c0_i32_0 = arith.constant 0 : i32
    %c0_i32_1 = arith.constant 0 : i32
    return %c0_i32, %c0_i32_0 : i32, i32
  }
  func.func @transform_2(%arg0: i32) -> (i32, i32) {
    %c0_i32 = arith.constant 0 : i32
    %c0_i32_0 = arith.constant 0 : i32
    %c0_i32_1 = arith.constant 0 : i32
    return %c0_i32, %c0_i32_0 : i32, i32
  }
  func.func @transform_3(%arg0: i32) -> (i32, i32) {
    %c0_i32 = arith.constant 0 : i32
    %c0_i32_0 = arith.constant 0 : i32
    %c0_i32_1 = arith.constant 0 : i32
    return %c0_i32, %c0_i32_0 : i32, i32
  }
  func.func @transform_4(%arg0: i32) -> (i32, i32, i32) {
    %c0_i32 = arith.constant 0 : i32
    %c0_i32_0 = arith.constant 0 : i32
    %c0_i32_1 = arith.constant 0 : i32
    %c0_i32_2 = arith.constant 0 : i32
    return %c0_i32, %c0_i32_0, %c0_i32_1 : i32, i32, i32
  }
  func.func @transform_5(%arg0: i32) -> (i32, i32, i32) {
    %c0_i32 = arith.constant 0 : i32
    %c0_i32_0 = arith.constant 0 : i32
    %c0_i32_1 = arith.constant 0 : i32
    %c0_i32_2 = arith.constant 0 : i32
    return %c0_i32, %c0_i32_0, %c0_i32_1 : i32, i32, i32
  }
  func.func @transform_6(%arg0: i32) -> (i32, i32, i32) {
    %c0_i32 = arith.constant 0 : i32
    %c0_i32_0 = arith.constant 0 : i32
    %c0_i32_1 = arith.constant 0 : i32
    %c0_i32_2 = arith.constant 0 : i32
    return %c0_i32, %c0_i32_0, %c0_i32_1 : i32, i32, i32
  }
  func.func @transform_7(%arg0: i32) -> (i32, i32, i32) {
    %c0_i32 = arith.constant 0 : i32
    %c0_i32_0 = arith.constant 0 : i32
    %c0_i32_1 = arith.constant 0 : i32
    %c0_i32_2 = arith.constant 0 : i32
    return %c0_i32, %c0_i32_0, %c0_i32_1 : i32, i32, i32
  }
  func.func @transform_8(%arg0: i32) -> (i32, i32, i32) {
    %c0_i32 = arith.constant 0 : i32
    %c0_i32_0 = arith.constant 0 : i32
    %c0_i32_1 = arith.constant 0 : i32
    %c0_i32_2 = arith.constant 0 : i32
    return %c0_i32, %c0_i32_0, %c0_i32_1 : i32, i32, i32
  }
  func.func @transform_9(%arg0: i32) -> (i32, i32, i32) {
    %c0_i32 = arith.constant 0 : i32
    %c0_i32_0 = arith.constant 0 : i32
    %c0_i32_1 = arith.constant 0 : i32
    %c0_i32_2 = arith.constant 0 : i32
    return %c0_i32, %c0_i32_0, %c0_i32_1 : i32, i32, i32
  }
  func.func @transform_10(%arg0: i32) -> (i32, i32, i32) {
    %c0_i32 = arith.constant 0 : i32
    %c0_i32_0 = arith.constant 0 : i32
    %c0_i32_1 = arith.constant 0 : i32
    %c0_i32_2 = arith.constant 0 : i32
    return %c0_i32, %c0_i32_0, %c0_i32_1 : i32, i32, i32
  }
  func.func @transform_11(%arg0: i32) -> (i32, i32) {
    %c0_i32 = arith.constant 0 : i32
    %c0_i32_0 = arith.constant 0 : i32
    %c0_i32_1 = arith.constant 0 : i32
    return %c0_i32, %c0_i32_0 : i32, i32
  }
  func.func @transform_12(%arg0: i32) -> (i32, i32) {
    %c0_i32 = arith.constant 0 : i32
    %c0_i32_0 = arith.constant 0 : i32
    %c0_i32_1 = arith.constant 0 : i32
    return %c0_i32, %c0_i32_0 : i32, i32
  }
  func.func @transform_13(%arg0: i32) -> (i32, i32) {
    %c0_i32 = arith.constant 0 : i32
    %c0_i32_0 = arith.constant 0 : i32
    %c0_i32_1 = arith.constant 0 : i32
    return %c0_i32, %c0_i32_0 : i32, i32
  }
  func.func @transform_14(%arg0: i32) -> (i32, i32, i32) {
    %c0_i32 = arith.constant 0 : i32
    %c0_i32_0 = arith.constant 0 : i32
    %c0_i32_1 = arith.constant 0 : i32
    %c0_i32_2 = arith.constant 0 : i32
    return %c0_i32, %c0_i32_0, %c0_i32_1 : i32, i32, i32
  }
}

</mosaic_0001>

<llo_original>
// kernel: forward.1
$region0: #{forward.1}
  #allocation0 [shape = 'u32[]', space=smem, size = 0x4, offset = 0x4, fixed_abs, tag = 'smem constant byte address 0x4 - core index']
  #allocation1 [shape = 'u32[144,128]{1,0:T(1,128)}', space=vmem, size = 0x12000, scoped, tag = 'internal scratch']
  #allocation2 [shape = 'f32[20,32]{1,0:T(8,128)}', space=vmem, size = 0x3000, scoped, tag = 'scratch operand']
  #allocation3 [shape = 'f32[20,32]{1,0:T(8,128)}', space=vmem, size = 0x3000, scoped, tag = 'scratch operand']
  %s0 = inlined_call_operand.vmem [shape: f32[18,24], index: 0, kind: input, shape index: {}]
  %s1 = inlined_call_operand.vmem [shape: f32[2,32], index: 1, kind: input, shape index: {}]
  %s2 = inlined_call_operand.vmem [shape: f32[24,32], index: 2, kind: input, shape index: {}]
  %s3 = inlined_call_operand.vmem [shape: f32[1,32], index: 3, kind: input, shape index: {}]
  %s4 = inlined_call_operand.vmem [shape: f32[3,32,96], index: 4, kind: input, shape index: {}]
  %s5 = inlined_call_operand.vmem [shape: f32[3,1,96], index: 5, kind: input, shape index: {}]
  %s6 = inlined_call_operand.vmem [shape: f32[3,32,32], index: 6, kind: input, shape index: {}]
  %s7 = inlined_call_operand.vmem [shape: f32[3,32,64], index: 7, kind: input, shape index: {}]
  %s8 = inlined_call_operand.vmem [shape: f32[3,1,64], index: 8, kind: input, shape index: {}]
  %s9 = inlined_call_operand.vmem [shape: f32[3,64,32], index: 9, kind: input, shape index: {}]
  %s10 = inlined_call_operand.vmem [shape: f32[3,8,32], index: 10, kind: input, shape index: {}]
  %s11 = inlined_call_operand.vmem [shape: f32[32,3], index: 11, kind: input, shape index: {}]
  %s12 = inlined_call_operand.vmem [shape: f32[1,3], index: 12, kind: input, shape index: {}]
  %s13 = inlined_call_operand.hbm [shape: f32[2,3], index: 13, kind: output, shape index: {0}]
  %s14 = inlined_call_operand.vmem [shape: f32[6,10,10], index: 14, kind: output, shape index: {1}]
  %15 = xla_tuple %s13, %s14
  %s16 = sld [smem:[#allocation0]]
  $region70: #{forward.1} parent=0
    _
  %s18 = ssub.s32 1, %s16
  %s19 = scalar_select 0, %s18, %s16
  $region1: #{forward.1} parent=0
    #allocation4 [shape = 'u8[1024]{0}', space=vmem, size = 0x400, scoped, tag = 'output window, operand 0, single buffered']
    #allocation5 [shape = 's32[1]{0}', space=sflag, size = 0x4, scoped, tag = 'scoped memory for forward.1']
    %20 = vsyncpa [#allocation5], 0
    // Predicated region
    $region2: #{forward.1} parent=1 // pred_check
      _
    $region3: #{forward.1} parent=1 // pred_check_branch
      %22 = sbr.rel (0) target = $region5
    $region4: #{forward.1} parent=1 // pred_region
      _
    $region5: #{forward.1} parent=1 // pred_fallthru
      _
    // Predicated region
    $region6: #{forward.1} parent=1 // pred_check
      _
    $region7: #{forward.1} parent=1 // pred_check_branch
      %24 = sbr.rel (0) target = $region9
    $region8: #{forward.1} parent=1 // pred_region
      _
    $region9: #{forward.1} parent=1 // pred_fallthru
      _
    // Predicated region
    $region10: #{forward.1} parent=1 // pred_check
      _
    $region11: #{forward.1} parent=1 // pred_check_branch
      %26 = sbr.rel (0) target = $region13
    $region12: #{forward.1} parent=1 // pred_region
      _
    $region13: #{forward.1} parent=1 // pred_fallthru
      _
    // Predicated region
    $region14: #{forward.1} parent=1 // pred_check
      _
    $region15: #{forward.1} parent=1 // pred_check_branch
      %28 = sbr.rel (0) target = $region17
    $region16: #{forward.1} parent=1 // pred_region
      _
    $region17: #{forward.1} parent=1 // pred_fallthru
      _
    // Predicated region
    $region18: #{forward.1} parent=1 // pred_check
      _
    $region19: #{forward.1} parent=1 // pred_check_branch
      %30 = sbr.rel (0) target = $region21
    $region20: #{forward.1} parent=1 // pred_region
      _
    $region21: #{forward.1} parent=1 // pred_fallthru
      _
    // Predicated region
    $region22: #{forward.1} parent=1 // pred_check
      _
    $region23: #{forward.1} parent=1 // pred_check_branch
      %32 = sbr.rel (0) target = $region25
    $region24: #{forward.1} parent=1 // pred_region
      _
    $region25: #{forward.1} parent=1 // pred_fallthru
      _
    // Predicated region
    $region26: #{forward.1} parent=1 // pred_check
      _
    $region27: #{forward.1} parent=1 // pred_check_branch
      %34 = sbr.rel (0) target = $region29
    $region28: #{forward.1} parent=1 // pred_region
      _
    $region29: #{forward.1} parent=1 // pred_fallthru
      _
    // Predicated region
    $region30: #{forward.1} parent=1 // pred_check
      _
    $region31: #{forward.1} parent=1 // pred_check_branch
      %36 = sbr.rel (0) target = $region33
    $region32: #{forward.1} parent=1 // pred_region
      _
    $region33: #{forward.1} parent=1 // pred_fallthru
      _
    // Predicated region
    $region34: #{forward.1} parent=1 // pred_check
      _
    $region35: #{forward.1} parent=1 // pred_check_branch
      %38 = sbr.rel (0) target = $region37
    $region36: #{forward.1} parent=1 // pred_region
      _
    $region37: #{forward.1} parent=1 // pred_fallthru
      _
    // Predicated region
    $region38: #{forward.1} parent=1 // pred_check
      _
    $region39: #{forward.1} parent=1 // pred_check_branch
      %40 = sbr.rel (0) target = $region41
    $region40: #{forward.1} parent=1 // pred_region
      _
    $region41: #{forward.1} parent=1 // pred_fallthru
      _
    // Predicated region
    $region42: #{forward.1} parent=1 // pred_check
      _
    $region43: #{forward.1} parent=1 // pred_check_branch
      %42 = sbr.rel (0) target = $region45
    $region44: #{forward.1} parent=1 // pred_region
      _
    $region45: #{forward.1} parent=1 // pred_fallthru
      _
    // Predicated region
    $region46: #{forward.1} parent=1 // pred_check
      _
    $region47: #{forward.1} parent=1 // pred_check_branch
      %44 = sbr.rel (0) target = $region49
    $region48: #{forward.1} parent=1 // pred_region
      _
    $region49: #{forward.1} parent=1 // pred_fallthru
      _
    // Predicated region
    $region50: #{forward.1} parent=1 // pred_check
      _
    $region51: #{forward.1} parent=1 // pred_check_branch
      %46 = sbr.rel (0) target = $region53
    $region52: #{forward.1} parent=1 // pred_region
      _
    $region53: #{forward.1} parent=1 // pred_fallthru
      _
    %v47 = vld [vmem:[%s0] sm:$0xff]
    %v48 = vld [vmem:[%s0 + $0x8] sm:$0xff]
    %v49 = vld [vmem:[%s0 + $0x10] sm:$0x3]
    %v50 = vld [vmem:[%s2] sm:$0xff]
    %v51 = vld [vmem:[%s2 + $0x8] sm:$0xff]
    %v52 = vld [vmem:[%s2 + $0x10] sm:$0xff]
    %v53 = vld [vmem:[%s3] sm:$0x1]
    %v55 = vlaneseq
    %v56 = vshrl.u32 %v55, 7
    %v57 = vsub.s32 0, %v56
    %v58 = vrot.slane %v53, %v57
    %vm60 = vcmask 195584
    %v62 = vsel %vm60, %v47, 0
    %v65 = vsel %vm60, %v48, 0
    %v68 = vsel %vm60, %v49, 0
    %70 = vmatprep.subr.mxu0 0.0
    %71 = vmatpush1.msra.mxu0 %v50
    %72 = vmatprep.subr.mxu0 0.0
    %73 = vmatpush1.msra.mxu0 %v51
    %74 = vmatprep.subr.mxu0 0.0
    %75 = vmatpush1.msra.mxu0 %v52
    %76 = vmatprep.subr.mxu0 0.0
    %77 = vmatpush1.msra.mxu0 0.0
    %78 = vmatprep.subr.mxu0 0.0
    %79 = vmatpush1.msra.mxu0 0.0
    %80 = vmatprep.subr.mxu0 0.0
    %81 = vmatpush1.msra.mxu0 0.0
    %82 = vmatprep.subr.mxu0 0.0
    %83 = vmatpush1.msra.mxu0 0.0
    %84 = vmatprep.subr.mxu0 0.0
    %85 = vmatpush1.msra.mxu0 0.0
    %86 = vmatprep.subr.mxu0 0.0
    %87 = vmatpush1.msra.mxu0 0.0
    %88 = vmatprep.subr.mxu0 0.0
    %89 = vmatpush1.msra.mxu0 0.0
    %90 = vmatprep.subr.mxu0 0.0
    %91 = vmatpush1.msra.mxu0 0.0
    %92 = vmatprep.subr.mxu0 0.0
    %93 = vmatpush1.msra.mxu0 0.0
    %94 = vmatprep.subr.mxu0 0.0
    %95 = vmatpush1.msra.mxu0 0.0
    %96 = vmatprep.subr.mxu0 0.0
    %97 = vmatpush1.msra.mxu0 0.0
    %98 = vmatprep.subr.mxu0 0.0
    %99 = vmatpush1.msra.mxu0 0.0
    %100 = vmatprep.subr.mxu0 0.0
    %101 = vmatpush1.msra.mxu0 0.0
    %102 = vmatprep.subr.mxu0 0.0
    %103 = vmatpush1.msra.mxu0 0.0
    %104 = vmatprep.subr.mxu0 0.0
    %105 = vmatpush1.msra.mxu0 0.0
    %106 = vmatprep.subr.mxu0 0.0
    %107 = vmatpush1.msra.mxu0 0.0
    %108 = vmatprep.subr.mxu0 0.0
    %109 = vmatpush1.msra.mxu0 0.0
    %110 = vmatprep.subr.mxu0 0.0
    %111 = vmatpush1.msra.mxu0 0.0
    %112 = vmatprep.subr.mxu0 0.0
    %113 = vmatpush1.msra.mxu0 0.0
    %114 = vmatprep.subr.mxu0 0.0
    %115 = vmatpush1.msra.mxu0 0.0
    %116 = vmatprep.subr.mxu0 0.0
    %117 = vmatpush1.msra.mxu0 0.0
    %118 = vmatprep.subr.mxu0 0.0
    %119 = vmatpush1.msra.mxu0 0.0
    %120 = vmatprep.subr.mxu0 0.0
    %121 = vmatpush1.msra.mxu0 0.0
    %122 = vmatprep.subr.mxu0 0.0
    %123 = vmatpush1.msra.mxu0 0.0
    %124 = vmatprep.subr.mxu0 0.0
    %125 = vmatpush1.msra.mxu0 0.0
    %126 = vmatprep.subr.mxu0 0.0
    %127 = vmatpush1.msra.mxu0 0.0
    %128 = vmatprep.subr.mxu0 0.0
    %129 = vmatpush1.msra.mxu0 0.0
    %130 = vmatprep.subr.mxu0 0.0
    %131 = vmatpush1.msra.mxu0 0.0
    %132 = vmatprep.subr.mxu0 0.0
    %133 = vmatpush1.msra.mxu0 0.0
    %134 = vmatprep.mubr.f32.mxu0 0.0
    %135 = vmatmul.mubr.f32.gmra.mrb[0].mxu0 %v62
    %v136 = vpop.f32.mrb[0].mxu0
    %v137 = vadd.f32 %v58, %v136
    %v138 = vpop.f32.mrb[0].mxu0
    %139 = vmatprep.mubr.f32.mxu0 0.0
    %140 = vmatmul.mubr.f32.gmra.mrb[0].mxu0 %v65
    %v141 = vpop.f32.mrb[0].mxu0
    %v142 = vadd.f32 %v58, %v141
    %v143 = vpop.f32.mrb[0].mxu0
    %144 = vmatprep.mubr.f32.mxu0 0.0
    %145 = vmatmul.mubr.f32.gmra.mrb[0].mxu0 %v68
    %v146 = vpop.f32.mrb[0].mxu0
    %v147 = vadd.f32 %v58, %v146
    %v148 = vpop.f32.mrb[0].mxu0
    %149 = vdwg.mxu0
    %v150 = vmax.f32 %v137, 0.0
    %v151 = vmax.f32 %v142, 0.0
    %v152 = vmax.f32 %v147, 0.0
    %v153 = vld [vmem:[%s1] sm:$0x3]
    %vm154 = vcmask 253952
    %155 = vst.msk [vmem:[#allocation2] sm:$0x1] %vm154, %v153
    %vm156 = vcmask 261120
    %157 = vst.msk [vmem:[#allocation2 + $0x1] sm:$0xff] %vm156, %v150
    %158 = vst.msk [vmem:[#allocation2 + $0x9] sm:$0x1] %vm154, %v151
    %vm159 = vcmask 254977
    %160 = vst.msk [vmem:[#allocation2 + $0x9] sm:$0x2] %vm159, %v153
    %vm161 = vcmask 261121
    %162 = vst.msk [vmem:[#allocation2 + $0xa] sm:$0xfe] %vm161, %v151
    %vm163 = vcmask 254976
    %164 = vst.msk [vmem:[#allocation2 + $0x12] sm:$0x3] %vm163, %v152
    %v165 = vld [vmem:[#allocation2] sm:$0xff]
    %v166 = vld [vmem:[#allocation2 + $0x8] sm:$0xff]
    %v167 = vld [vmem:[#allocation2 + $0x10] sm:$0xf]
    %v168 = vlaneseq
    %v169 = vand.u32 %v168, 127
    %vm170 = vcmp.ge.s32.totalorder %v169, 0
    %vm171 = vcmp.lt.s32.totalorder %v169, 8
    %vm172 = vmand %vm170, %vm171
    %vm173 = vcmp.ge.s32.totalorder %v169, 8
    %vm174 = vcmp.lt.s32.totalorder %v169, 16
    %vm175 = vmand %vm173, %vm174
    %vm176 = vcmp.ge.s32.totalorder %v169, 16
    %vm177 = vcmp.lt.s32.totalorder %v169, 24
    %vm178 = vmand %vm176, %vm177
    %vm179 = vcmp.ge.s32.totalorder %v169, 24
    %vm180 = vcmp.lt.s32.totalorder %v169, 32
    %vm181 = vmand %vm179, %vm180
    %v182 = vld [vmem:[%s10] sm:$0xff]
    %v183 = vld [vmem:[%s4] sm:$0xff]
    %v184 = vld [vmem:[%s4 + $0x8] sm:$0xff]
    %v185 = vld [vmem:[%s4 + $0x10] sm:$0xff]
    %v186 = vld [vmem:[%s4 + $0x18] sm:$0xff]
    %v187 = vld [vmem:[%s5] sm:$0x1]
    %v189 = vlaneseq
    %v190 = vshrl.u32 %v189, 7
    %v191 = vsub.s32 0, %v190
    %v192 = vrot.slane %v187, %v191
    %v195 = vsel %vm156, %v165, 0
    %v198 = vsel %vm156, %v166, 0
    %v201 = vsel %vm156, %v167, 0
    %203 = vmatprep.subr.mxu0 0.0
    %204 = vmatpush1.msra.mxu0 %v183
    %205 = vmatprep.subr.mxu0 0.0
    %206 = vmatpush1.msra.mxu0 %v184
    %207 = vmatprep.subr.mxu0 0.0
    %208 = vmatpush1.msra.mxu0 %v185
    %209 = vmatprep.subr.mxu0 0.0
    %210 = vmatpush1.msra.mxu0 %v186
    %211 = vmatprep.subr.mxu0 0.0
    %212 = vmatpush1.msra.mxu0 0.0
    %213 = vmatprep.subr.mxu0 0.0
    %214 = vmatpush1.msra.mxu0 0.0
    %215 = vmatprep.subr.mxu0 0.0
    %216 = vmatpush1.msra.mxu0 0.0
    %217 = vmatprep.subr.mxu0 0.0
    %218 = vmatpush1.msra.mxu0 0.0
    %219 = vmatprep.subr.mxu0 0.0
    %220 = vmatpush1.msra.mxu0 0.0
    %221 = vmatprep.subr.mxu0 0.0
    %222 = vmatpush1.msra.mxu0 0.0
    %223 = vmatprep.subr.mxu0 0.0
    %224 = vmatpush1.msra.mxu0 0.0
    %225 = vmatprep.subr.mxu0 0.0
    %226 = vmatpush1.msra.mxu0 0.0
    %227 = vmatprep.subr.mxu0 0.0
    %228 = vmatpush1.msra.mxu0 0.0
    %229 = vmatprep.subr.mxu0 0.0
    %230 = vmatpush1.msra.mxu0 0.0
    %231 = vmatprep.subr.mxu0 0.0
    %232 = vmatpush1.msra.mxu0 0.0
    %233 = vmatprep.subr.mxu0 0.0
    %234 = vmatpush1.msra.mxu0 0.0
    %235 = vmatprep.subr.mxu0 0.0
    %236 = vmatpush1.msra.mxu0 0.0
    %237 = vmatprep.subr.mxu0 0.0
    %238 = vmatpush1.msra.mxu0 0.0
    %239 = vmatprep.subr.mxu0 0.0
    %240 = vmatpush1.msra.mxu0 0.0
    %241 = vmatprep.subr.mxu0 0.0
    %242 = vmatpush1.msra.mxu0 0.0
    %243 = vmatprep.subr.mxu0 0.0
    %244 = vmatpush1.msra.mxu0 0.0
    %245 = vmatprep.subr.mxu0 0.0
    %246 = vmatpush1.msra.mxu0 0.0
    %247 = vmatprep.subr.mxu0 0.0
    %248 = vmatpush1.msra.mxu0 0.0
    %249 = vmatprep.subr.mxu0 0.0
    %250 = vmatpush1.msra.mxu0 0.0
    %251 = vmatprep.subr.mxu0 0.0
    %252 = vmatpush1.msra.mxu0 0.0
    %253 = vmatprep.subr.mxu0 0.0
    %254 = vmatpush1.msra.mxu0 0.0
    %255 = vmatprep.subr.mxu0 0.0
    %256 = vmatpush1.msra.mxu0 0.0
    %257 = vmatprep.subr.mxu0 0.0
    %258 = vmatpush1.msra.mxu0 0.0
    %259 = vmatprep.subr.mxu0 0.0
    %260 = vmatpush1.msra.mxu0 0.0
    %261 = vmatprep.subr.mxu0 0.0
    %262 = vmatpush1.msra.mxu0 0.0
    %263 = vmatprep.subr.mxu0 0.0
    %264 = vmatpush1.msra.mxu0 0.0
    %265 = vmatprep.subr.mxu0 0.0
    %266 = vmatpush1.msra.mxu0 0.0
    %267 = vmatprep.mubr.f32.mxu0 0.0
    %268 = vmatmul.mubr.f32.gmra.mrb[0].mxu0 %v195
    %v269 = vpop.f32.mrb[0].mxu0
    %v270 = vadd.f32 %v192, %v269
    %v271 = vpop.f32.mrb[0].mxu0
    %272 = vmatprep.mubr.f32.mxu0 0.0
    %273 = vmatmul.mubr.f32.gmra.mrb[0].mxu0 %v198
    %v274 = vpop.f32.mrb[0].mxu0
    %v275 = vadd.f32 %v192, %v274
    %v276 = vpop.f32.mrb[0].mxu0
    %277 = vmatprep.mubr.f32.mxu0 0.0
    %278 = vmatmul.mubr.f32.gmra.mrb[0].mxu0 %v201
    %v279 = vpop.f32.mrb[0].mxu0
    %v280 = vadd.f32 %v192, %v279
    %v281 = vpop.f32.mrb[0].mxu0
    %282 = vdwg.mxu0
    %v283 = vsel %vm172, %v270, 0.0
    %v284 = vsel %vm172, %v275, 0.0
    %287 = vrot.lane.b32.xlu0 %v270, 96
    %v288 = vpop.permute.xlu0 %287
    %289 = vrot.lane.b32.xlu0 %v275, 96
    %v290 = vpop.permute.xlu0 %289
    %v292 = vsel %vm156, %v283, 0
    %v295 = vsel %vm156, %v284, 0
    %v297 = vsel %vm156, %v288, 0
    %v299 = vsel %vm156, %v290, 0
    %301 = vmatprep.subr.mxu0 0.0
    %302 = vmatpush1.xpose.msra.mxu0 %v297
    %303 = vmatprep.subr.mxu0 0.0
    %304 = vmatpush1.xpose.msra.mxu0 %v299
    %305 = vmatprep.subr.mxu0 0.0
    %306 = vmatpush1.xpose.msra.mxu0 0.0
    %307 = vmatprep.subr.mxu0 0.0
    %308 = vmatpush1.xpose.msra.mxu0 0.0
    %309 = vmatprep.subr.mxu0 0.0
    %310 = vmatpush1.xpose.msra.mxu0 0.0
    %311 = vmatprep.subr.mxu0 0.0
    %312 = vmatpush1.xpose.msra.mxu0 0.0
    %313 = vmatprep.subr.mxu0 0.0
    %314 = vmatpush1.xpose.msra.mxu0 0.0
    %315 = vmatprep.subr.mxu0 0.0
    %316 = vmatpush1.xpose.msra.mxu0 0.0
    %317 = vmatprep.subr.mxu0 0.0
    %318 = vmatpush1.xpose.msra.mxu0 0.0
    %319 = vmatprep.subr.mxu0 0.0
    %320 = vmatpush1.xpose.msra.mxu0 0.0
    %321 = vmatprep.subr.mxu0 0.0
    %322 = vmatpush1.xpose.msra.mxu0 0.0
    %323 = vmatprep.subr.mxu0 0.0
    %324 = vmatpush1.xpose.msra.mxu0 0.0
    %325 = vmatprep.subr.mxu0 0.0
    %326 = vmatpush1.xpose.msra.mxu0 0.0
    %327 = vmatprep.subr.mxu0 0.0
    %328 = vmatpush1.xpose.msra.mxu0 0.0
    %329 = vmatprep.subr.mxu0 0.0
    %330 = vmatpush1.xpose.msra.mxu0 0.0
    %331 = vmatprep.subr.mxu0 0.0
    %332 = vmatpush1.xpose.msra.mxu0 0.0
    %333 = vmatprep.subr.mxu0 0.0
    %334 = vmatpush1.xpose.msra.mxu0 0.0
    %335 = vmatprep.subr.mxu0 0.0
    %336 = vmatpush1.xpose.msra.mxu0 0.0
    %337 = vmatprep.subr.mxu0 0.0
    %338 = vmatpush1.xpose.msra.mxu0 0.0
    %339 = vmatprep.subr.mxu0 0.0
    %340 = vmatpush1.xpose.msra.mxu0 0.0
    %341 = vmatprep.subr.mxu0 0.0
    %342 = vmatpush1.xpose.msra.mxu0 0.0
    %343 = vmatprep.subr.mxu0 0.0
    %344 = vmatpush1.xpose.msra.mxu0 0.0
    %345 = vmatprep.subr.mxu0 0.0
    %346 = vmatpush1.xpose.msra.mxu0 0.0
    %347 = vmatprep.subr.mxu0 0.0
    %348 = vmatpush1.xpose.msra.mxu0 0.0
    %349 = vmatprep.subr.mxu0 0.0
    %350 = vmatpush1.xpose.msra.mxu0 0.0
    %351 = vmatprep.subr.mxu0 0.0
    %352 = vmatpush1.xpose.msra.mxu0 0.0
    %353 = vmatprep.subr.mxu0 0.0
    %354 = vmatpush1.xpose.msra.mxu0 0.0
    %355 = vmatprep.subr.mxu0 0.0
    %356 = vmatpush1.xpose.msra.mxu0 0.0
    %357 = vmatprep.subr.mxu0 0.0
    %358 = vmatpush1.xpose.msra.mxu0 0.0
    %359 = vmatprep.subr.mxu0 0.0
    %360 = vmatpush1.xpose.msra.mxu0 0.0
    %361 = vmatprep.subr.mxu0 0.0
    %362 = vmatpush1.xpose.msra.mxu0 0.0
    %363 = vmatprep.subr.mxu0 0.0
    %364 = vmatpush1.xpose.msra.mxu0 0.0
    %365 = vmatprep.mubr.f32.mxu0 0.0
    %366 = vmatmul.mubr.f32.gmra.mrb[0].mxu0 %v292
    %v367 = vpop.f32.mrb[0].mxu0
    %v368 = vadd.f32 0.0, %v367
    %v369 = vpop.f32.mrb[0].mxu0
    %370 = vmatprep.mubr.f32.mxu0 0.0
    %371 = vmatmul.mubr.f32.gmra.mrb[0].mxu0 %v295
    %v372 = vpop.f32.mrb[0].mxu0
    %v373 = vadd.f32 0.0, %v372
    %v374 = vpop.f32.mrb[0].mxu0
    %375 = vdwg.mxu0
    %vm376 = vcmask 80896
    %v377 = vsel %vm376, %v368, -inf
    %378 = vmax.xlane.f32.xlu0 %v377
    %v379 = vpop.xlane.xlu0 %378
    %vm380 = vcmask 74752
    %v381 = vsel %vm380, %v373, -inf
    %382 = vmax.xlane.f32.xlu0 %v381
    %v383 = vpop.xlane.xlu0 %382
    %v384 = vsub.f32 %v368, %v379
    %v385 = vsub.f32 %v373, %v383
    %v386 = vmul.f32 %v384, 1.442695
    %v387 = vpow.pop %v386
    %v388 = vmul.f32 %v385, 1.442695
    %v389 = vpow.pop %v388
    %v390 = vsel %vm376, %v387, 0.0
    %391 = vadd.xlane.f32.xlu0 %v390
    %v392 = vpop.xlane.xlu0 %391
    %v393 = vsel %vm380, %v389, 0.0
    %394 = vadd.xlane.f32.xlu0 %v393
    %v395 = vpop.xlane.xlu0 %394
    %v396 = vrcp.pop %v392
    %v397 = vrcp.pop %v395
    %v398 = vmul.f32 %v387, %v396
    %v399 = vmul.f32 %v389, %v397
    %400 = vrot.lane.b32.xlu0 %v270, 64
    %v401 = vpop.permute.xlu0 %400
    %402 = vrot.lane.b32.xlu0 %v275, 64
    %v403 = vpop.permute.xlu0 %402
    %v406 = vsel %vm172, %v401, 0.0
    %v407 = vsel %vm172, %v403, 0.0
    %v408 = vadd.f32 %v398, 0.0
    %v409 = vadd.f32 %v399, 0.0
    %v410 = vsel %vm175, %v270, 0.0
    %v411 = vsel %vm175, %v275, 0.0
    %v413 = vsel %vm156, %v410, 0
    %v416 = vsel %vm156, %v411, 0
    %418 = vmatprep.subr.mxu0 0.0
    %419 = vmatpush1.xpose.msra.mxu0 %v297
    %420 = vmatprep.subr.mxu0 0.0
    %421 = vmatpush1.xpose.msra.mxu0 %v299
    %422 = vmatprep.subr.mxu0 0.0
    %423 = vmatpush1.xpose.msra.mxu0 0.0
    %424 = vmatprep.subr.mxu0 0.0
    %425 = vmatpush1.xpose.msra.mxu0 0.0
    %426 = vmatprep.subr.mxu0 0.0
    %427 = vmatpush1.xpose.msra.mxu0 0.0
    %428 = vmatprep.subr.mxu0 0.0
    %429 = vmatpush1.xpose.msra.mxu0 0.0
    %430 = vmatprep.subr.mxu0 0.0
    %431 = vmatpush1.xpose.msra.mxu0 0.0
    %432 = vmatprep.subr.mxu0 0.0
    %433 = vmatpush1.xpose.msra.mxu0 0.0
    %434 = vmatprep.subr.mxu0 0.0
    %435 = vmatpush1.xpose.msra.mxu0 0.0
    %436 = vmatprep.subr.mxu0 0.0
    %437 = vmatpush1.xpose.msra.mxu0 0.0
    %438 = vmatprep.subr.mxu0 0.0
    %439 = vmatpush1.xpose.msra.mxu0 0.0
    %440 = vmatprep.subr.mxu0 0.0
    %441 = vmatpush1.xpose.msra.mxu0 0.0
    %442 = vmatprep.subr.mxu0 0.0
    %443 = vmatpush1.xpose.msra.mxu0 0.0
    %444 = vmatprep.subr.mxu0 0.0
    %445 = vmatpush1.xpose.msra.mxu0 0.0
    %446 = vmatprep.subr.mxu0 0.0
    %447 = vmatpush1.xpose.msra.mxu0 0.0
    %448 = vmatprep.subr.mxu0 0.0
    %449 = vmatpush1.xpose.msra.mxu0 0.0
    %450 = vmatprep.subr.mxu0 0.0
    %451 = vmatpush1.xpose.msra.mxu0 0.0
    %452 = vmatprep.subr.mxu0 0.0
    %453 = vmatpush1.xpose.msra.mxu0 0.0
    %454 = vmatprep.subr.mxu0 0.0
    %455 = vmatpush1.xpose.msra.mxu0 0.0
    %456 = vmatprep.subr.mxu0 0.0
    %457 = vmatpush1.xpose.msra.mxu0 0.0
    %458 = vmatprep.subr.mxu0 0.0
    %459 = vmatpush1.xpose.msra.mxu0 0.0
    %460 = vmatprep.subr.mxu0 0.0
    %461 = vmatpush1.xpose.msra.mxu0 0.0
    %462 = vmatprep.subr.mxu0 0.0
    %463 = vmatpush1.xpose.msra.mxu0 0.0
    %464 = vmatprep.subr.mxu0 0.0
    %465 = vmatpush1.xpose.msra.mxu0 0.0
    %466 = vmatprep.subr.mxu0 0.0
    %467 = vmatpush1.xpose.msra.mxu0 0.0
    %468 = vmatprep.subr.mxu0 0.0
    %469 = vmatpush1.xpose.msra.mxu0 0.0
    %470 = vmatprep.subr.mxu0 0.0
    %471 = vmatpush1.xpose.msra.mxu0 0.0
    %472 = vmatprep.subr.mxu0 0.0
    %473 = vmatpush1.xpose.msra.mxu0 0.0
    %474 = vmatprep.subr.mxu0 0.0
    %475 = vmatpush1.xpose.msra.mxu0 0.0
    %476 = vmatprep.subr.mxu0 0.0
    %477 = vmatpush1.xpose.msra.mxu0 0.0
    %478 = vmatprep.subr.mxu0 0.0
    %479 = vmatpush1.xpose.msra.mxu0 0.0
    %480 = vmatprep.subr.mxu0 0.0
    %481 = vmatpush1.xpose.msra.mxu0 0.0
    %482 = vmatprep.mubr.f32.mxu0 0.0
    %483 = vmatmul.mubr.f32.gmra.mrb[0].mxu0 %v413
    %v484 = vpop.f32.mrb[0].mxu0
    %v485 = vadd.f32 0.0, %v484
    %v486 = vpop.f32.mrb[0].mxu0
    %487 = vmatprep.mubr.f32.mxu0 0.0
    %488 = vmatmul.mubr.f32.gmra.mrb[0].mxu0 %v416
    %v489 = vpop.f32.mrb[0].mxu0
    %v490 = vadd.f32 0.0, %v489
    %v491 = vpop.f32.mrb[0].mxu0
    %492 = vdwg.mxu0
    %v493 = vsel %vm376, %v485, -inf
    %494 = vmax.xlane.f32.xlu0 %v493
    %v495 = vpop.xlane.xlu0 %494
    %v496 = vsel %vm380, %v490, -inf
    %497 = vmax.xlane.f32.xlu0 %v496
    %v498 = vpop.xlane.xlu0 %497
    %v499 = vsub.f32 %v485, %v495
    %v500 = vsub.f32 %v490, %v498
    %v501 = vmul.f32 %v499, 1.442695
    %v502 = vpow.pop %v501
    %v503 = vmul.f32 %v500, 1.442695
    %v504 = vpow.pop %v503
    %v505 = vsel %vm376, %v502, 0.0
    %506 = vadd.xlane.f32.xlu0 %v505
    %v507 = vpop.xlane.xlu0 %506
    %v508 = vsel %vm380, %v504, 0.0
    %509 = vadd.xlane.f32.xlu0 %v508
    %v510 = vpop.xlane.xlu0 %509
    %v511 = vrcp.pop %v507
    %v512 = vrcp.pop %v510
    %v513 = vmul.f32 %v502, %v511
    %v514 = vmul.f32 %v504, %v512
    %v515 = vsel %vm175, %v401, 0.0
    %v516 = vsel %vm175, %v403, 0.0
    %v518 = vsel %vm376, %v513, 0
    %v521 = vsel %vm376, %v514, 0
    %vm523 = vcmask 1041408
    %v525 = vsel %vm523, %v516, 0
    %527 = vmatprep.subr.mxu0 0.0
    %528 = vmatpush1.msra.mxu0 %v515
    %529 = vmatprep.subr.mxu0 0.0
    %530 = vmatpush1.msra.mxu0 %v525
    %531 = vmatprep.subr.mxu0 0.0
    %532 = vmatpush1.msra.mxu0 0.0
    %533 = vmatprep.subr.mxu0 0.0
    %534 = vmatpush1.msra.mxu0 0.0
    %535 = vmatprep.subr.mxu0 0.0
    %536 = vmatpush1.msra.mxu0 0.0
    %537 = vmatprep.subr.mxu0 0.0
    %538 = vmatpush1.msra.mxu0 0.0
    %539 = vmatprep.subr.mxu0 0.0
    %540 = vmatpush1.msra.mxu0 0.0
    %541 = vmatprep.subr.mxu0 0.0
    %542 = vmatpush1.msra.mxu0 0.0
    %543 = vmatprep.subr.mxu0 0.0
    %544 = vmatpush1.msra.mxu0 0.0
    %545 = vmatprep.subr.mxu0 0.0
    %546 = vmatpush1.msra.mxu0 0.0
    %547 = vmatprep.subr.mxu0 0.0
    %548 = vmatpush1.msra.mxu0 0.0
    %549 = vmatprep.subr.mxu0 0.0
    %550 = vmatpush1.msra.mxu0 0.0
    %551 = vmatprep.subr.mxu0 0.0
    %552 = vmatpush1.msra.mxu0 0.0
    %553 = vmatprep.subr.mxu0 0.0
    %554 = vmatpush1.msra.mxu0 0.0
    %555 = vmatprep.subr.mxu0 0.0
    %556 = vmatpush1.msra.mxu0 0.0
    %557 = vmatprep.subr.mxu0 0.0
    %558 = vmatpush1.msra.mxu0 0.0
    %559 = vmatprep.subr.mxu0 0.0
    %560 = vmatpush1.msra.mxu0 0.0
    %561 = vmatprep.subr.mxu0 0.0
    %562 = vmatpush1.msra.mxu0 0.0
    %563 = vmatprep.subr.mxu0 0.0
    %564 = vmatpush1.msra.mxu0 0.0
    %565 = vmatprep.subr.mxu0 0.0
    %566 = vmatpush1.msra.mxu0 0.0
    %567 = vmatprep.subr.mxu0 0.0
    %568 = vmatpush1.msra.mxu0 0.0
    %569 = vmatprep.subr.mxu0 0.0
    %570 = vmatpush1.msra.mxu0 0.0
    %571 = vmatprep.subr.mxu0 0.0
    %572 = vmatpush1.msra.mxu0 0.0
    %573 = vmatprep.subr.mxu0 0.0
    %574 = vmatpush1.msra.mxu0 0.0
    %575 = vmatprep.subr.mxu0 0.0
    %576 = vmatpush1.msra.mxu0 0.0
    %577 = vmatprep.subr.mxu0 0.0
    %578 = vmatpush1.msra.mxu0 0.0
    %579 = vmatprep.subr.mxu0 0.0
    %580 = vmatpush1.msra.mxu0 0.0
    %581 = vmatprep.subr.mxu0 0.0
    %582 = vmatpush1.msra.mxu0 0.0
    %583 = vmatprep.subr.mxu0 0.0
    %584 = vmatpush1.msra.mxu0 0.0
    %585 = vmatprep.subr.mxu0 0.0
    %586 = vmatpush1.msra.mxu0 0.0
    %587 = vmatprep.subr.mxu0 0.0
    %588 = vmatpush1.msra.mxu0 0.0
    %589 = vmatprep.subr.mxu0 0.0
    %590 = vmatpush1.msra.mxu0 0.0
    %591 = vmatprep.mubr.f32.mxu0 0.0
    %592 = vmatmul.mubr.f32.gmra.mrb[0].mxu0 %v518
    %v593 = vpop.f32.mrb[0].mxu0
    %v594 = vadd.f32 0.0, %v593
    %v595 = vpop.f32.mrb[0].mxu0
    %596 = vmatprep.mubr.f32.mxu0 0.0
    %597 = vmatmul.mubr.f32.gmra.mrb[0].mxu0 %v521
    %v598 = vpop.f32.mrb[0].mxu0
    %v599 = vadd.f32 0.0, %v598
    %v600 = vpop.f32.mrb[0].mxu0
    %601 = vdwg.mxu0
    %v603 = vsel %vm376, %v398, 0
    %v606 = vsel %vm376, %v399, 0
    %v609 = vsel %vm523, %v407, 0
    %611 = vmatprep.subr.mxu0 0.0
    %612 = vmatpush1.msra.mxu0 %v406
    %613 = vmatprep.subr.mxu0 0.0
    %614 = vmatpush1.msra.mxu0 %v609
    %615 = vmatprep.subr.mxu0 0.0
    %616 = vmatpush1.msra.mxu0 0.0
    %617 = vmatprep.subr.mxu0 0.0
    %618 = vmatpush1.msra.mxu0 0.0
    %619 = vmatprep.subr.mxu0 0.0
    %620 = vmatpush1.msra.mxu0 0.0
    %621 = vmatprep.subr.mxu0 0.0
    %622 = vmatpush1.msra.mxu0 0.0
    %623 = vmatprep.subr.mxu0 0.0
    %624 = vmatpush1.msra.mxu0 0.0
    %625 = vmatprep.subr.mxu0 0.0
    %626 = vmatpush1.msra.mxu0 0.0
    %627 = vmatprep.subr.mxu0 0.0
    %628 = vmatpush1.msra.mxu0 0.0
    %629 = vmatprep.subr.mxu0 0.0
    %630 = vmatpush1.msra.mxu0 0.0
    %631 = vmatprep.subr.mxu0 0.0
    %632 = vmatpush1.msra.mxu0 0.0
    %633 = vmatprep.subr.mxu0 0.0
    %634 = vmatpush1.msra.mxu0 0.0
    %635 = vmatprep.subr.mxu0 0.0
    %636 = vmatpush1.msra.mxu0 0.0
    %637 = vmatprep.subr.mxu0 0.0
    %638 = vmatpush1.msra.mxu0 0.0
    %639 = vmatprep.subr.mxu0 0.0
    %640 = vmatpush1.msra.mxu0 0.0
    %641 = vmatprep.subr.mxu0 0.0
    %642 = vmatpush1.msra.mxu0 0.0
    %643 = vmatprep.subr.mxu0 0.0
    %644 = vmatpush1.msra.mxu0 0.0
    %645 = vmatprep.subr.mxu0 0.0
    %646 = vmatpush1.msra.mxu0 0.0
    %647 = vmatprep.subr.mxu0 0.0
    %648 = vmatpush1.msra.mxu0 0.0
    %649 = vmatprep.subr.mxu0 0.0
    %650 = vmatpush1.msra.mxu0 0.0
    %651 = vmatprep.subr.mxu0 0.0
    %652 = vmatpush1.msra.mxu0 0.0
    %653 = vmatprep.subr.mxu0 0.0
    %654 = vmatpush1.msra.mxu0 0.0
    %655 = vmatprep.subr.mxu0 0.0
    %656 = vmatpush1.msra.mxu0 0.0
    %657 = vmatprep.subr.mxu0 0.0
    %658 = vmatpush1.msra.mxu0 0.0
    %659 = vmatprep.subr.mxu0 0.0
    %660 = vmatpush1.msra.mxu0 0.0
    %661 = vmatprep.subr.mxu0 0.0
    %662 = vmatpush1.msra.mxu0 0.0
    %663 = vmatprep.subr.mxu0 0.0
    %664 = vmatpush1.msra.mxu0 0.0
    %665 = vmatprep.subr.mxu0 0.0
    %666 = vmatpush1.msra.mxu0 0.0
    %667 = vmatprep.subr.mxu0 0.0
    %668 = vmatpush1.msra.mxu0 0.0
    %669 = vmatprep.subr.mxu0 0.0
    %670 = vmatpush1.msra.mxu0 0.0
    %671 = vmatprep.subr.mxu0 0.0
    %672 = vmatpush1.msra.mxu0 0.0
    %673 = vmatprep.subr.mxu0 0.0
    %674 = vmatpush1.msra.mxu0 0.0
    %675 = vmatprep.mubr.f32.mxu0 0.0
    %676 = vmatmul.mubr.f32.gmra.mrb[0].mxu0 %v603
    %v677 = vpop.f32.mrb[0].mxu0
    %v678 = vadd.f32 %v594, %v677
    %v679 = vpop.f32.mrb[0].mxu0
    %680 = vmatprep.mubr.f32.mxu0 0.0
    %681 = vmatmul.mubr.f32.gmra.mrb[0].mxu0 %v606
    %v682 = vpop.f32.mrb[0].mxu0
    %v683 = vadd.f32 %v599, %v682
    %v684 = vpop.f32.mrb[0].mxu0
    %685 = vdwg.mxu0
    %v686 = vadd.f32 %v408, %v513
    %v687 = vadd.f32 %v409, %v514
    %v688 = vsel %vm178, %v270, 0.0
    %v689 = vsel %vm178, %v275, 0.0
    %v691 = vsel %vm156, %v688, 0
    %v694 = vsel %vm156, %v689, 0
    %696 = vmatprep.subr.mxu0 0.0
    %697 = vmatpush1.xpose.msra.mxu0 %v297
    %698 = vmatprep.subr.mxu0 0.0
    %699 = vmatpush1.xpose.msra.mxu0 %v299
    %700 = vmatprep.subr.mxu0 0.0
    %701 = vmatpush1.xpose.msra.mxu0 0.0
    %702 = vmatprep.subr.mxu0 0.0
    %703 = vmatpush1.xpose.msra.mxu0 0.0
    %704 = vmatprep.subr.mxu0 0.0
    %705 = vmatpush1.xpose.msra.mxu0 0.0
    %706 = vmatprep.subr.mxu0 0.0
    %707 = vmatpush1.xpose.msra.mxu0 0.0
    %708 = vmatprep.subr.mxu0 0.0
    %709 = vmatpush1.xpose.msra.mxu0 0.0
    %710 = vmatprep.subr.mxu0 0.0
    %711 = vmatpush1.xpose.msra.mxu0 0.0
    %712 = vmatprep.subr.mxu0 0.0
    %713 = vmatpush1.xpose.msra.mxu0 0.0
    %714 = vmatprep.subr.mxu0 0.0
    %715 = vmatpush1.xpose.msra.mxu0 0.0
    %716 = vmatprep.subr.mxu0 0.0
    %717 = vmatpush1.xpose.msra.mxu0 0.0
    %718 = vmatprep.subr.mxu0 0.0
    %719 = vmatpush1.xpose.msra.mxu0 0.0
    %720 = vmatprep.subr.mxu0 0.0
    %721 = vmatpush1.xpose.msra.mxu0 0.0
    %722 = vmatprep.subr.mxu0 0.0
    %723 = vmatpush1.xpose.msra.mxu0 0.0
    %724 = vmatprep.subr.mxu0 0.0
    %725 = vmatpush1.xpose.msra.mxu0 0.0
    %726 = vmatprep.subr.mxu0 0.0
    %727 = vmatpush1.xpose.msra.mxu0 0.0
    %728 = vmatprep.subr.mxu0 0.0
    %729 = vmatpush1.xpose.msra.mxu0 0.0
    %730 = vmatprep.subr.mxu0 0.0
    %731 = vmatpush1.xpose.msra.mxu0 0.0
    %732 = vmatprep.subr.mxu0 0.0
    %733 = vmatpush1.xpose.msra.mxu0 0.0
    %734 = vmatprep.subr.mxu0 0.0
    %735 = vmatpush1.xpose.msra.mxu0 0.0
    %736 = vmatprep.subr.mxu0 0.0
    %737 = vmatpush1.xpose.msra.mxu0 0.0
    %738 = vmatprep.subr.mxu0 0.0
    %739 = vmatpush1.xpose.msra.mxu0 0.0
    %740 = vmatprep.subr.mxu0 0.0
    %741 = vmatpush1.xpose.msra.mxu0 0.0
    %742 = vmatprep.subr.mxu0 0.0
    %743 = vmatpush1.xpose.msra.mxu0 0.0
    %744 = vmatprep.subr.mxu0 0.0
    %745 = vmatpush1.xpose.msra.mxu0 0.0
    %746 = vmatprep.subr.mxu0 0.0
    %747 = vmatpush1.xpose.msra.mxu0 0.0
    %748 = vmatprep.subr.mxu0 0.0
    %749 = vmatpush1.xpose.msra.mxu0 0.0
    %750 = vmatprep.subr.mxu0 0.0
    %751 = vmatpush1.xpose.msra.mxu0 0.0
    %752 = vmatprep.subr.mxu0 0.0
    %753 = vmatpush1.xpose.msra.mxu0 0.0
    %754 = vmatprep.subr.mxu0 0.0
    %755 = vmatpush1.xpose.msra.mxu0 0.0
    %756 = vmatprep.subr.mxu0 0.0
    %757 = vmatpush1.xpose.msra.mxu0 0.0
    %758 = vmatprep.subr.mxu0 0.0
    %759 = vmatpush1.xpose.msra.mxu0 0.0
    %760 = vmatprep.mubr.f32.mxu0 0.0
    %761 = vmatmul.mubr.f32.gmra.mrb[0].mxu0 %v691
    %v762 = vpop.f32.mrb[0].mxu0
    %v763 = vadd.f32 0.0, %v762
    %v764 = vpop.f32.mrb[0].mxu0
    %765 = vmatprep.mubr.f32.mxu0 0.0
    %766 = vmatmul.mubr.f32.gmra.mrb[0].mxu0 %v694
    %v767 = vpop.f32.mrb[0].mxu0
    %v768 = vadd.f32 0.0, %v767
    %v769 = vpop.f32.mrb[0].mxu0
    %770 = vdwg.mxu0
    %v771 = vsel %vm376, %v763, -inf
    %772 = vmax.xlane.f32.xlu0 %v771
    %v773 = vpop.xlane.xlu0 %772
    %v774 = vsel %vm380, %v768, -inf
    %775 = vmax.xlane.f32.xlu0 %v774
    %v776 = vpop.xlane.xlu0 %775
    %v777 = vsub.f32 %v763, %v773
    %v778 = vsub.f32 %v768, %v776
    %v779 = vmul.f32 %v777, 1.442695
    %v780 = vpow.pop %v779
    %v781 = vmul.f32 %v778, 1.442695
    %v782 = vpow.pop %v781
    %v783 = vsel %vm376, %v780, 0.0
    %784 = vadd.xlane.f32.xlu0 %v783
    %v785 = vpop.xlane.xlu0 %784
    %v786 = vsel %vm380, %v782, 0.0
    %787 = vadd.xlane.f32.xlu0 %v786
    %v788 = vpop.xlane.xlu0 %787
    %v789 = vrcp.pop %v785
    %v790 = vrcp.pop %v788
    %v791 = vmul.f32 %v780, %v789
    %v792 = vmul.f32 %v782, %v790
    %v793 = vsel %vm178, %v401, 0.0
    %v794 = vsel %vm178, %v403, 0.0
    %v796 = vsel %vm376, %v791, 0
    %v799 = vsel %vm376, %v792, 0
    %v802 = vsel %vm523, %v794, 0
    %804 = vmatprep.subr.mxu0 0.0
    %805 = vmatpush1.msra.mxu0 %v793
    %806 = vmatprep.subr.mxu0 0.0
    %807 = vmatpush1.msra.mxu0 %v802
    %808 = vmatprep.subr.mxu0 0.0
    %809 = vmatpush1.msra.mxu0 0.0
    %810 = vmatprep.subr.mxu0 0.0
    %811 = vmatpush1.msra.mxu0 0.0
    %812 = vmatprep.subr.mxu0 0.0
    %813 = vmatpush1.msra.mxu0 0.0
    %814 = vmatprep.subr.mxu0 0.0
    %815 = vmatpush1.msra.mxu0 0.0
    %816 = vmatprep.subr.mxu0 0.0
    %817 = vmatpush1.msra.mxu0 0.0
    %818 = vmatprep.subr.mxu0 0.0
    %819 = vmatpush1.msra.mxu0 0.0
    %820 = vmatprep.subr.mxu0 0.0
    %821 = vmatpush1.msra.mxu0 0.0
    %822 = vmatprep.subr.mxu0 0.0
    %823 = vmatpush1.msra.mxu0 0.0
    %824 = vmatprep.subr.mxu0 0.0
    %825 = vmatpush1.msra.mxu0 0.0
    %826 = vmatprep.subr.mxu0 0.0
    %827 = vmatpush1.msra.mxu0 0.0
    %828 = vmatprep.subr.mxu0 0.0
    %829 = vmatpush1.msra.mxu0 0.0
    %830 = vmatprep.subr.mxu0 0.0
    %831 = vmatpush1.msra.mxu0 0.0
    %832 = vmatprep.subr.mxu0 0.0
    %833 = vmatpush1.msra.mxu0 0.0
    %834 = vmatprep.subr.mxu0 0.0
    %835 = vmatpush1.msra.mxu0 0.0
    %836 = vmatprep.subr.mxu0 0.0
    %837 = vmatpush1.msra.mxu0 0.0
    %838 = vmatprep.subr.mxu0 0.0
    %839 = vmatpush1.msra.mxu0 0.0
    %840 = vmatprep.subr.mxu0 0.0
    %841 = vmatpush1.msra.mxu0 0.0
    %842 = vmatprep.subr.mxu0 0.0
    %843 = vmatpush1.msra.mxu0 0.0
    %844 = vmatprep.subr.mxu0 0.0
    %845 = vmatpush1.msra.mxu0 0.0
    %846 = vmatprep.subr.mxu0 0.0
    %847 = vmatpush1.msra.mxu0 0.0
    %848 = vmatprep.subr.mxu0 0.0
    %849 = vmatpush1.msra.mxu0 0.0
    %850 = vmatprep.subr.mxu0 0.0
    %851 = vmatpush1.msra.mxu0 0.0
    %852 = vmatprep.subr.mxu0 0.0
    %853 = vmatpush1.msra.mxu0 0.0
    %854 = vmatprep.subr.mxu0 0.0
    %855 = vmatpush1.msra.mxu0 0.0
    %856 = vmatprep.subr.mxu0 0.0
    %857 = vmatpush1.msra.mxu0 0.0
    %858 = vmatprep.subr.mxu0 0.0
    %859 = vmatpush1.msra.mxu0 0.0
    %860 = vmatprep.subr.mxu0 0.0
    %861 = vmatpush1.msra.mxu0 0.0
    %862 = vmatprep.subr.mxu0 0.0
    %863 = vmatpush1.msra.mxu0 0.0
    %864 = vmatprep.subr.mxu0 0.0
    %865 = vmatpush1.msra.mxu0 0.0
    %866 = vmatprep.subr.mxu0 0.0
    %867 = vmatpush1.msra.mxu0 0.0
    %868 = vmatprep.mubr.f32.mxu0 0.0
    %869 = vmatmul.mubr.f32.gmra.mrb[0].mxu0 %v796
    %v870 = vpop.f32.mrb[0].mxu0
    %v871 = vadd.f32 0.0, %v870
    %v872 = vpop.f32.mrb[0].mxu0
    %873 = vmatprep.mubr.f32.mxu0 0.0
    %874 = vmatmul.mubr.f32.gmra.mrb[0].mxu0 %v799
    %v875 = vpop.f32.mrb[0].mxu0
    %v876 = vadd.f32 0.0, %v875
    %v877 = vpop.f32.mrb[0].mxu0
    %878 = vdwg.mxu0
    %v879 = vadd.f32 %v678, %v871
    %v880 = vadd.f32 %v683, %v876
    %v881 = vadd.f32 %v686, %v791
    %v882 = vadd.f32 %v687, %v792
    %v883 = vsel %vm181, %v270, 0.0
    %v884 = vsel %vm181, %v275, 0.0
    %v886 = vsel %vm156, %v883, 0
    %v889 = vsel %vm156, %v884, 0
    %891 = vmatprep.subr.mxu0 0.0
    %892 = vmatpush1.xpose.msra.mxu0 %v297
    %893 = vmatprep.subr.mxu0 0.0
    %894 = vmatpush1.xpose.msra.mxu0 %v299
    %895 = vmatprep.subr.mxu0 0.0
    %896 = vmatpush1.xpose.msra.mxu0 0.0
    %897 = vmatprep.subr.mxu0 0.0
    %898 = vmatpush1.xpose.msra.mxu0 0.0
    %899 = vmatprep.subr.mxu0 0.0
    %900 = vmatpush1.xpose.msra.mxu0 0.0
    %901 = vmatprep.subr.mxu0 0.0
    %902 = vmatpush1.xpose.msra.mxu0 0.0
    %903 = vmatprep.subr.mxu0 0.0
    %904 = vmatpush1.xpose.msra.mxu0 0.0
    %905 = vmatprep.subr.mxu0 0.0
    %906 = vmatpush1.xpose.msra.mxu0 0.0
    %907 = vmatprep.subr.mxu0 0.0
    %908 = vmatpush1.xpose.msra.mxu0 0.0
    %909 = vmatprep.subr.mxu0 0.0
    %910 = vmatpush1.xpose.msra.mxu0 0.0
    %911 = vmatprep.subr.mxu0 0.0
    %912 = vmatpush1.xpose.msra.mxu0 0.0
    %913 = vmatprep.subr.mxu0 0.0
    %914 = vmatpush1.xpose.msra.mxu0 0.0
    %915 = vmatprep.subr.mxu0 0.0
    %916 = vmatpush1.xpose.msra.mxu0 0.0
    %917 = vmatprep.subr.mxu0 0.0
    %918 = vmatpush1.xpose.msra.mxu0 0.0
    %919 = vmatprep.subr.mxu0 0.0
    %920 = vmatpush1.xpose.msra.mxu0 0.0
    %921 = vmatprep.subr.mxu0 0.0
    %922 = vmatpush1.xpose.msra.mxu0 0.0
    %923 = vmatprep.subr.mxu0 0.0
    %924 = vmatpush1.xpose.msra.mxu0 0.0
    %925 = vmatprep.subr.mxu0 0.0
    %926 = vmatpush1.xpose.msra.mxu0 0.0
    %927 = vmatprep.subr.mxu0 0.0
    %928 = vmatpush1.xpose.msra.mxu0 0.0
    %929 = vmatprep.subr.mxu0 0.0
    %930 = vmatpush1.xpose.msra.mxu0 0.0
    %931 = vmatprep.subr.mxu0 0.0
    %932 = vmatpush1.xpose.msra.mxu0 0.0
    %933 = vmatprep.subr.mxu0 0.0
    %934 = vmatpush1.xpose.msra.mxu0 0.0
    %935 = vmatprep.subr.mxu0 0.0
    %936 = vmatpush1.xpose.msra.mxu0 0.0
    %937 = vmatprep.subr.mxu0 0.0
    %938 = vmatpush1.xpose.msra.mxu0 0.0
    %939 = vmatprep.subr.mxu0 0.0
    %940 = vmatpush1.xpose.msra.mxu0 0.0
    %941 = vmatprep.subr.mxu0 0.0
    %942 = vmatpush1.xpose.msra.mxu0 0.0
    %943 = vmatprep.subr.mxu0 0.0
    %944 = vmatpush1.xpose.msra.mxu0 0.0
    %945 = vmatprep.subr.mxu0 0.0
    %946 = vmatpush1.xpose.msra.mxu0 0.0
    %947 = vmatprep.subr.mxu0 0.0
    %948 = vmatpush1.xpose.msra.mxu0 0.0
    %949 = vmatprep.subr.mxu0 0.0
    %950 = vmatpush1.xpose.msra.mxu0 0.0
    %951 = vmatprep.subr.mxu0 0.0
    %952 = vmatpush1.xpose.msra.mxu0 0.0
    %953 = vmatprep.subr.mxu0 0.0
    %954 = vmatpush1.xpose.msra.mxu0 0.0
    %955 = vmatprep.mubr.f32.mxu0 0.0
    %956 = vmatmul.mubr.f32.gmra.mrb[0].mxu0 %v886
    %v957 = vpop.f32.mrb[0].mxu0
    %v958 = vadd.f32 0.0, %v957
    %v959 = vpop.f32.mrb[0].mxu0
    %960 = vmatprep.mubr.f32.mxu0 0.0
    %961 = vmatmul.mubr.f32.gmra.mrb[0].mxu0 %v889
    %v962 = vpop.f32.mrb[0].mxu0
    %v963 = vadd.f32 0.0, %v962
    %v964 = vpop.f32.mrb[0].mxu0
    %965 = vdwg.mxu0
    %v966 = vsel %vm376, %v958, -inf
    %967 = vmax.xlane.f32.xlu0 %v966
    %v968 = vpop.xlane.xlu0 %967
    %v969 = vsel %vm380, %v963, -inf
    %970 = vmax.xlane.f32.xlu0 %v969
    %v971 = vpop.xlane.xlu0 %970
    %v972 = vsub.f32 %v958, %v968
    %v973 = vsub.f32 %v963, %v971
    %v974 = vmul.f32 %v972, 1.442695
    %v975 = vpow.pop %v974
    %v976 = vmul.f32 %v973, 1.442695
    %v977 = vpow.pop %v976
    %v978 = vsel %vm376, %v975, 0.0
    %979 = vadd.xlane.f32.xlu0 %v978
    %v980 = vpop.xlane.xlu0 %979
    %v981 = vsel %vm380, %v977, 0.0
    %982 = vadd.xlane.f32.xlu0 %v981
    %v983 = vpop.xlane.xlu0 %982
    %v984 = vrcp.pop %v980
    %v985 = vrcp.pop %v983
    %v986 = vmul.f32 %v975, %v984
    %v987 = vmul.f32 %v977, %v985
    %v988 = vsel %vm181, %v401, 0.0
    %v989 = vsel %vm181, %v403, 0.0
    %v991 = vsel %vm376, %v986, 0
    %v994 = vsel %vm376, %v987, 0
    %v997 = vsel %vm523, %v989, 0
    %999 = vmatprep.subr.mxu0 0.0
    %1000 = vmatpush1.msra.mxu0 %v988
    %1001 = vmatprep.subr.mxu0 0.0
    %1002 = vmatpush1.msra.mxu0 %v997
    %1003 = vmatprep.subr.mxu0 0.0
    %1004 = vmatpush1.msra.mxu0 0.0
    %1005 = vmatprep.subr.mxu0 0.0
    %1006 = vmatpush1.msra.mxu0 0.0
    %1007 = vmatprep.subr.mxu0 0.0
    %1008 = vmatpush1.msra.mxu0 0.0
    %1009 = vmatprep.subr.mxu0 0.0
    %1010 = vmatpush1.msra.mxu0 0.0
    %1011 = vmatprep.subr.mxu0 0.0
    %1012 = vmatpush1.msra.mxu0 0.0
    %1013 = vmatprep.subr.mxu0 0.0
    %1014 = vmatpush1.msra.mxu0 0.0
    %1015 = vmatprep.subr.mxu0 0.0
    %1016 = vmatpush1.msra.mxu0 0.0
    %1017 = vmatprep.subr.mxu0 0.0
    %1018 = vmatpush1.msra.mxu0 0.0
    %1019 = vmatprep.subr.mxu0 0.0
    %1020 = vmatpush1.msra.mxu0 0.0
    %1021 = vmatprep.subr.mxu0 0.0
    %1022 = vmatpush1.msra.mxu0 0.0
    %1023 = vmatprep.subr.mxu0 0.0
    %1024 = vmatpush1.msra.mxu0 0.0
    %1025 = vmatprep.subr.mxu0 0.0
    %1026 = vmatpush1.msra.mxu0 0.0
    %1027 = vmatprep.subr.mxu0 0.0
    %1028 = vmatpush1.msra.mxu0 0.0
    %1029 = vmatprep.subr.mxu0 0.0
    %1030 = vmatpush1.msra.mxu0 0.0
    %1031 = vmatprep.subr.mxu0 0.0
    %1032 = vmatpush1.msra.mxu0 0.0
    %1033 = vmatprep.subr.mxu0 0.0
    %1034 = vmatpush1.msra.mxu0 0.0
    %1035 = vmatprep.subr.mxu0 0.0
    %1036 = vmatpush1.msra.mxu0 0.0
    %1037 = vmatprep.subr.mxu0 0.0
    %1038 = vmatpush1.msra.mxu0 0.0
    %1039 = vmatprep.subr.mxu0 0.0
    %1040 = vmatpush1.msra.mxu0 0.0
    %1041 = vmatprep.subr.mxu0 0.0
    %1042 = vmatpush1.msra.mxu0 0.0
    %1043 = vmatprep.subr.mxu0 0.0
    %1044 = vmatpush1.msra.mxu0 0.0
    %1045 = vmatprep.subr.mxu0 0.0
    %1046 = vmatpush1.msra.mxu0 0.0
    %1047 = vmatprep.subr.mxu0 0.0
    %1048 = vmatpush1.msra.mxu0 0.0
    %1049 = vmatprep.subr.mxu0 0.0
    %1050 = vmatpush1.msra.mxu0 0.0
    %1051 = vmatprep.subr.mxu0 0.0
    %1052 = vmatpush1.msra.mxu0 0.0
    %1053 = vmatprep.subr.mxu0 0.0
    %1054 = vmatpush1.msra.mxu0 0.0
    %1055 = vmatprep.subr.mxu0 0.0
    %1056 = vmatpush1.msra.mxu0 0.0
    %1057 = vmatprep.subr.mxu0 0.0
    %1058 = vmatpush1.msra.mxu0 0.0
    %1059 = vmatprep.subr.mxu0 0.0
    %1060 = vmatpush1.msra.mxu0 0.0
    %1061 = vmatprep.subr.mxu0 0.0
    %1062 = vmatpush1.msra.mxu0 0.0
    %1063 = vmatprep.mubr.f32.mxu0 0.0
    %1064 = vmatmul.mubr.f32.gmra.mrb[0].mxu0 %v991
    %v1065 = vpop.f32.mrb[0].mxu0
    %v1066 = vadd.f32 0.0, %v1065
    %v1067 = vpop.f32.mrb[0].mxu0
    %1068 = vmatprep.mubr.f32.mxu0 0.0
    %1069 = vmatmul.mubr.f32.gmra.mrb[0].mxu0 %v994
    %v1070 = vpop.f32.mrb[0].mxu0
    %v1071 = vadd.f32 0.0, %v1070
    %v1072 = vpop.f32.mrb[0].mxu0
    %1073 = vdwg.mxu0
    %v1074 = vadd.f32 %v879, %v1066
    %v1075 = vadd.f32 %v880, %v1071
    %v1076 = vadd.f32 %v881, %v986
    %v1077 = vadd.f32 %v882, %v987
    %1078 = vst.msk [vmem:[#allocation3] sm:$0xff] %vm156, %v1074
    %1079 = vst.msk [vmem:[#allocation3 + $0x8] sm:$0x3] %vm163, %v1075
    %v1080 = vmul.f32 %v1076, 0.25
    %v1081 = vmul.f32 %v1077, 0.25
    %1082 = vst.msk [vmem:[%s14] sm:$0xff] %vm376, %v1080
    %1083 = vst.msk [vmem:[%s14 + $0x8] sm:$0x3] %vm380, %v1081
    %v1084 = vsel %vm172, %v280, 0.0
    %vm1086 = vcmask 1045504
    %v1087 = vrot.slane %v284, 2
    %v1088 = vrot.slane %v1084, 2
    %v1089 = vsel %vm1086, %v1087, %v1088
    %v1091 = vrot.slane %v275, 2
    %v1092 = vrot.slane %v280, 2
    %v1093 = vsel %vm1086, %v1091, %v1092
    %1094 = vrot.lane.b32.xlu0 %v1093, 96
    %v1095 = vpop.permute.xlu0 %1094
    %1096 = vrot.lane.b32.xlu0 %v1092, 96
    %v1097 = vpop.permute.xlu0 %1096
    %v1098 = vsel %vm156, %v1089, 0
    %v1100 = vsel %vm156, %v1088, 0
    %v1102 = vsel %vm156, %v1095, 0
    %v1104 = vsel %vm156, %v1097, 0
    %1106 = vmatprep.subr.mxu0 0.0
    %1107 = vmatpush1.xpose.msra.mxu0 %v1102
    %1108 = vmatprep.subr.mxu0 0.0
    %1109 = vmatpush1.xpose.msra.mxu0 %v1104
    %1110 = vmatprep.subr.mxu0 0.0
    %1111 = vmatpush1.xpose.msra.mxu0 0.0
    %1112 = vmatprep.subr.mxu0 0.0
    %1113 = vmatpush1.xpose.msra.mxu0 0.0
    %1114 = vmatprep.subr.mxu0 0.0
    %1115 = vmatpush1.xpose.msra.mxu0 0.0
    %1116 = vmatprep.subr.mxu0 0.0
    %1117 = vmatpush1.xpose.msra.mxu0 0.0
    %1118 = vmatprep.subr.mxu0 0.0
    %1119 = vmatpush1.xpose.msra.mxu0 0.0
    %1120 = vmatprep.subr.mxu0 0.0
    %1121 = vmatpush1.xpose.msra.mxu0 0.0
    %1122 = vmatprep.subr.mxu0 0.0
    %1123 = vmatpush1.xpose.msra.mxu0 0.0
    %1124 = vmatprep.subr.mxu0 0.0
    %1125 = vmatpush1.xpose.msra.mxu0 0.0
    %1126 = vmatprep.subr.mxu0 0.0
    %1127 = vmatpush1.xpose.msra.mxu0 0.0
    %1128 = vmatprep.subr.mxu0 0.0
    %1129 = vmatpush1.xpose.msra.mxu0 0.0
    %1130 = vmatprep.subr.mxu0 0.0
    %1131 = vmatpush1.xpose.msra.mxu0 0.0
    %1132 = vmatprep.subr.mxu0 0.0
    %1133 = vmatpush1.xpose.msra.mxu0 0.0
    %1134 = vmatprep.subr.mxu0 0.0
    %1135 = vmatpush1.xpose.msra.mxu0 0.0
    %1136 = vmatprep.subr.mxu0 0.0
    %1137 = vmatpush1.xpose.msra.mxu0 0.0
    %1138 = vmatprep.subr.mxu0 0.0
    %1139 = vmatpush1.xpose.msra.mxu0 0.0
    %1140 = vmatprep.subr.mxu0 0.0
    %1141 = vmatpush1.xpose.msra.mxu0 0.0
    %1142 = vmatprep.subr.mxu0 0.0
    %1143 = vmatpush1.xpose.msra.mxu0 0.0
    %1144 = vmatprep.subr.mxu0 0.0
    %1145 = vmatpush1.xpose.msra.mxu0 0.0
    %1146 = vmatprep.subr.mxu0 0.0
    %1147 = vmatpush1.xpose.msra.mxu0 0.0
    %1148 = vmatprep.subr.mxu0 0.0
    %1149 = vmatpush1.xpose.msra.mxu0 0.0
    %1150 = vmatprep.subr.mxu0 0.0
    %1151 = vmatpush1.xpose.msra.mxu0 0.0
    %1152 = vmatprep.subr.mxu0 0.0
    %1153 = vmatpush1.xpose.msra.mxu0 0.0
    %1154 = vmatprep.subr.mxu0 0.0
    %1155 = vmatpush1.xpose.msra.mxu0 0.0
    %1156 = vmatprep.subr.mxu0 0.0
    %1157 = vmatpush1.xpose.msra.mxu0 0.0
    %1158 = vmatprep.subr.mxu0 0.0
    %1159 = vmatpush1.xpose.msra.mxu0 0.0
    %1160 = vmatprep.subr.mxu0 0.0
    %1161 = vmatpush1.xpose.msra.mxu0 0.0
    %1162 = vmatprep.subr.mxu0 0.0
    %1163 = vmatpush1.xpose.msra.mxu0 0.0
    %1164 = vmatprep.subr.mxu0 0.0
    %1165 = vmatpush1.xpose.msra.mxu0 0.0
    %1166 = vmatprep.subr.mxu0 0.0
    %1167 = vmatpush1.xpose.msra.mxu0 0.0
    %1168 = vmatprep.subr.mxu0 0.0
    %1169 = vmatpush1.xpose.msra.mxu0 0.0
    %1170 = vmatprep.mubr.f32.mxu0 0.0
    %1171 = vmatmul.mubr.f32.gmra.mrb[0].mxu0 %v1098
    %v1172 = vpop.f32.mrb[0].mxu0
    %v1173 = vadd.f32 0.0, %v1172
    %v1174 = vpop.f32.mrb[0].mxu0
    %1175 = vmatprep.mubr.f32.mxu0 0.0
    %1176 = vmatmul.mubr.f32.gmra.mrb[0].mxu0 %v1100
    %v1177 = vpop.f32.mrb[0].mxu0
    %v1178 = vadd.f32 0.0, %v1177
    %v1179 = vpop.f32.mrb[0].mxu0
    %1180 = vdwg.mxu0
    %v1181 = vsel %vm376, %v1173, -inf
    %1182 = vmax.xlane.f32.xlu0 %v1181
    %v1183 = vpop.xlane.xlu0 %1182
    %v1184 = vsel %vm380, %v1178, -inf
    %1185 = vmax.xlane.f32.xlu0 %v1184
    %v1186 = vpop.xlane.xlu0 %1185
    %v1187 = vsub.f32 %v1173, %v1183
    %v1188 = vsub.f32 %v1178, %v1186
    %v1189 = vmul.f32 %v1187, 1.442695
    %v1190 = vpow.pop %v1189
    %v1191 = vmul.f32 %v1188, 1.442695
    %v1192 = vpow.pop %v1191
    %v1193 = vsel %vm376, %v1190, 0.0
    %1194 = vadd.xlane.f32.xlu0 %v1193
    %v1195 = vpop.xlane.xlu0 %1194
    %v1196 = vsel %vm380, %v1192, 0.0
    %1197 = vadd.xlane.f32.xlu0 %v1196
    %v1198 = vpop.xlane.xlu0 %1197
    %v1199 = vrcp.pop %v1195
    %v1200 = vrcp.pop %v1198
    %v1201 = vmul.f32 %v1190, %v1199
    %v1202 = vmul.f32 %v1192, %v1200
    %1203 = vrot.lane.b32.xlu0 %v1093, 64
    %v1204 = vpop.permute.xlu0 %1203
    %1205 = vrot.lane.b32.xlu0 %v1092, 64
    %v1206 = vpop.permute.xlu0 %1205
    %v1209 = vsel %vm172, %v1204, 0.0
    %v1210 = vsel %vm172, %v1206, 0.0
    %v1211 = vadd.f32 %v1201, 0.0
    %v1212 = vadd.f32 %v1202, 0.0
    %v1213 = vsel %vm175, %v280, 0.0
    %v1215 = vrot.slane %v411, 2
    %v1216 = vrot.slane %v1213, 2
    %v1217 = vsel %vm1086, %v1215, %v1216
    %v1218 = vsel %vm156, %v1217, 0
    %v1220 = vsel %vm156, %v1216, 0
    %1222 = vmatprep.subr.mxu0 0.0
    %1223 = vmatpush1.xpose.msra.mxu0 %v1102
    %1224 = vmatprep.subr.mxu0 0.0
    %1225 = vmatpush1.xpose.msra.mxu0 %v1104
    %1226 = vmatprep.subr.mxu0 0.0
    %1227 = vmatpush1.xpose.msra.mxu0 0.0
    %1228 = vmatprep.subr.mxu0 0.0
    %1229 = vmatpush1.xpose.msra.mxu0 0.0
    %1230 = vmatprep.subr.mxu0 0.0
    %1231 = vmatpush1.xpose.msra.mxu0 0.0
    %1232 = vmatprep.subr.mxu0 0.0
    %1233 = vmatpush1.xpose.msra.mxu0 0.0
    %1234 = vmatprep.subr.mxu0 0.0
    %1235 = vmatpush1.xpose.msra.mxu0 0.0
    %1236 = vmatprep.subr.mxu0 0.0
    %1237 = vmatpush1.xpose.msra.mxu0 0.0
    %1238 = vmatprep.subr.mxu0 0.0
    %1239 = vmatpush1.xpose.msra.mxu0 0.0
    %1240 = vmatprep.subr.mxu0 0.0
    %1241 = vmatpush1.xpose.msra.mxu0 0.0
    %1242 = vmatprep.subr.mxu0 0.0
    %1243 = vmatpush1.xpose.msra.mxu0 0.0
    %1244 = vmatprep.subr.mxu0 0.0
    %1245 = vmatpush1.xpose.msra.mxu0 0.0
    %1246 = vmatprep.subr.mxu0 0.0
    %1247 = vmatpush1.xpose.msra.mxu0 0.0
    %1248 = vmatprep.subr.mxu0 0.0
    %1249 = vmatpush1.xpose.msra.mxu0 0.0
    %1250 = vmatprep.subr.mxu0 0.0
    %1251 = vmatpush1.xpose.msra.mxu0 0.0
    %1252 = vmatprep.subr.mxu0 0.0
    %1253 = vmatpush1.xpose.msra.mxu0 0.0
    %1254 = vmatprep.subr.mxu0 0.0
    %1255 = vmatpush1.xpose.msra.mxu0 0.0
    %1256 = vmatprep.subr.mxu0 0.0
    %1257 = vmatpush1.xpose.msra.mxu0 0.0
    %1258 = vmatprep.subr.mxu0 0.0
    %1259 = vmatpush1.xpose.msra.mxu0 0.0
    %1260 = vmatprep.subr.mxu0 0.0
    %1261 = vmatpush1.xpose.msra.mxu0 0.0
    %1262 = vmatprep.subr.mxu0 0.0
    %1263 = vmatpush1.xpose.msra.mxu0 0.0
    %1264 = vmatprep.subr.mxu0 0.0
    %1265 = vmatpush1.xpose.msra.mxu0 0.0
    %1266 = vmatprep.subr.mxu0 0.0
    %1267 = vmatpush1.xpose.msra.mxu0 0.0
    %1268 = vmatprep.subr.mxu0 0.0
    %1269 = vmatpush1.xpose.msra.mxu0 0.0
    %1270 = vmatprep.subr.mxu0 0.0
    %1271 = vmatpush1.xpose.msra.mxu0 0.0
    %1272 = vmatprep.subr.mxu0 0.0
    %1273 = vmatpush1.xpose.msra.mxu0 0.0
    %1274 = vmatprep.subr.mxu0 0.0
    %1275 = vmatpush1.xpose.msra.mxu0 0.0
    %1276 = vmatprep.subr.mxu0 0.0
    %1277 = vmatpush1.xpose.msra.mxu0 0.0
    %1278 = vmatprep.subr.mxu0 0.0
    %1279 = vmatpush1.xpose.msra.mxu0 0.0
    %1280 = vmatprep.subr.mxu0 0.0
    %1281 = vmatpush1.xpose.msra.mxu0 0.0
    %1282 = vmatprep.subr.mxu0 0.0
    %1283 = vmatpush1.xpose.msra.mxu0 0.0
    %1284 = vmatprep.subr.mxu0 0.0
    %1285 = vmatpush1.xpose.msra.mxu0 0.0
    %1286 = vmatprep.mubr.f32.mxu0 0.0
    %1287 = vmatmul.mubr.f32.gmra.mrb[0].mxu0 %v1218
    %v1288 = vpop.f32.mrb[0].mxu0
    %v1289 = vadd.f32 0.0, %v1288
    %v1290 = vpop.f32.mrb[0].mxu0
    %1291 = vmatprep.mubr.f32.mxu0 0.0
    %1292 = vmatmul.mubr.f32.gmra.mrb[0].mxu0 %v1220
    %v1293 = vpop.f32.mrb[0].mxu0
    %v1294 = vadd.f32 0.0, %v1293
    %v1295 = vpop.f32.mrb[0].mxu0
    %1296 = vdwg.mxu0
    %v1297 = vsel %vm376, %v1289, -inf
    %1298 = vmax.xlane.f32.xlu0 %v1297
    %v1299 = vpop.xlane.xlu0 %1298
    %v1300 = vsel %vm380, %v1294, -inf
    %1301 = vmax.xlane.f32.xlu0 %v1300
    %v1302 = vpop.xlane.xlu0 %1301
    %v1303 = vsub.f32 %v1289, %v1299
    %v1304 = vsub.f32 %v1294, %v1302
    %v1305 = vmul.f32 %v1303, 1.442695
    %v1306 = vpow.pop %v1305
    %v1307 = vmul.f32 %v1304, 1.442695
    %v1308 = vpow.pop %v1307
    %v1309 = vsel %vm376, %v1306, 0.0
    %1310 = vadd.xlane.f32.xlu0 %v1309
    %v1311 = vpop.xlane.xlu0 %1310
    %v1312 = vsel %vm380, %v1308, 0.0
    %1313 = vadd.xlane.f32.xlu0 %v1312
    %v1314 = vpop.xlane.xlu0 %1313
    %v1315 = vrcp.pop %v1311
    %v1316 = vrcp.pop %v1314
    %v1317 = vmul.f32 %v1306, %v1315
    %v1318 = vmul.f32 %v1308, %v1316
    %v1319 = vsel %vm175, %v1204, 0.0
    %v1320 = vsel %vm175, %v1206, 0.0
    %v1322 = vsel %vm376, %v1317, 0
    %v1325 = vsel %vm376, %v1318, 0
    %v1328 = vsel %vm523, %v1320, 0
    %1330 = vmatprep.subr.mxu0 0.0
    %1331 = vmatpush1.msra.mxu0 %v1319
    %1332 = vmatprep.subr.mxu0 0.0
    %1333 = vmatpush1.msra.mxu0 %v1328
    %1334 = vmatprep.subr.mxu0 0.0
    %1335 = vmatpush1.msra.mxu0 0.0
    %1336 = vmatprep.subr.mxu0 0.0
    %1337 = vmatpush1.msra.mxu0 0.0
    %1338 = vmatprep.subr.mxu0 0.0
    %1339 = vmatpush1.msra.mxu0 0.0
    %1340 = vmatprep.subr.mxu0 0.0
    %1341 = vmatpush1.msra.mxu0 0.0
    %1342 = vmatprep.subr.mxu0 0.0
    %1343 = vmatpush1.msra.mxu0 0.0
    %1344 = vmatprep.subr.mxu0 0.0
    %1345 = vmatpush1.msra.mxu0 0.0
    %1346 = vmatprep.subr.mxu0 0.0
    %1347 = vmatpush1.msra.mxu0 0.0
    %1348 = vmatprep.subr.mxu0 0.0
    %1349 = vmatpush1.msra.mxu0 0.0
    %1350 = vmatprep.subr.mxu0 0.0
    %1351 = vmatpush1.msra.mxu0 0.0
    %1352 = vmatprep.subr.mxu0 0.0
    %1353 = vmatpush1.msra.mxu0 0.0
    %1354 = vmatprep.subr.mxu0 0.0
    %1355 = vmatpush1.msra.mxu0 0.0
    %1356 = vmatprep.subr.mxu0 0.0
    %1357 = vmatpush1.msra.mxu0 0.0
    %1358 = vmatprep.subr.mxu0 0.0
    %1359 = vmatpush1.msra.mxu0 0.0
    %1360 = vmatprep.subr.mxu0 0.0
    %1361 = vmatpush1.msra.mxu0 0.0
    %1362 = vmatprep.subr.mxu0 0.0
    %1363 = vmatpush1.msra.mxu0 0.0
    %1364 = vmatprep.subr.mxu0 0.0
    %1365 = vmatpush1.msra.mxu0 0.0
    %1366 = vmatprep.subr.mxu0 0.0
    %1367 = vmatpush1.msra.mxu0 0.0
    %1368 = vmatprep.subr.mxu0 0.0
    %1369 = vmatpush1.msra.mxu0 0.0
    %1370 = vmatprep.subr.mxu0 0.0
    %1371 = vmatpush1.msra.mxu0 0.0
    %1372 = vmatprep.subr.mxu0 0.0
    %1373 = vmatpush1.msra.mxu0 0.0
    %1374 = vmatprep.subr.mxu0 0.0
    %1375 = vmatpush1.msra.mxu0 0.0
    %1376 = vmatprep.subr.mxu0 0.0
    %1377 = vmatpush1.msra.mxu0 0.0
    %1378 = vmatprep.subr.mxu0 0.0
    %1379 = vmatpush1.msra.mxu0 0.0
    %1380 = vmatprep.subr.mxu0 0.0
    %1381 = vmatpush1.msra.mxu0 0.0
    %1382 = vmatprep.subr.mxu0 0.0
    %1383 = vmatpush1.msra.mxu0 0.0
    %1384 = vmatprep.subr.mxu0 0.0
    %1385 = vmatpush1.msra.mxu0 0.0
    %1386 = vmatprep.subr.mxu0 0.0
    %1387 = vmatpush1.msra.mxu0 0.0
    %1388 = vmatprep.subr.mxu0 0.0
    %1389 = vmatpush1.msra.mxu0 0.0
    %1390 = vmatprep.subr.mxu0 0.0
    %1391 = vmatpush1.msra.mxu0 0.0
    %1392 = vmatprep.subr.mxu0 0.0
    %1393 = vmatpush1.msra.mxu0 0.0
    %1394 = vmatprep.mubr.f32.mxu0 0.0
    %1395 = vmatmul.mubr.f32.gmra.mrb[0].mxu0 %v1322
    %v1396 = vpop.f32.mrb[0].mxu0
    %v1397 = vadd.f32 0.0, %v1396
    %v1398 = vpop.f32.mrb[0].mxu0
    %1399 = vmatprep.mubr.f32.mxu0 0.0
    %1400 = vmatmul.mubr.f32.gmra.mrb[0].mxu0 %v1325
    %v1401 = vpop.f32.mrb[0].mxu0
    %v1402 = vadd.f32 0.0, %v1401
    %v1403 = vpop.f32.mrb[0].mxu0
    %1404 = vdwg.mxu0
    %v1406 = vsel %vm376, %v1201, 0
    %v1409 = vsel %vm376, %v1202, 0
    %v1412 = vsel %vm523, %v1210, 0
    %1414 = vmatprep.subr.mxu0 0.0
    %1415 = vmatpush1.msra.mxu0 %v1209
    %1416 = vmatprep.subr.mxu0 0.0
    %1417 = vmatpush1.msra.mxu0 %v1412
    %1418 = vmatprep.subr.mxu0 0.0
    %1419 = vmatpush1.msra.mxu0 0.0
    %1420 = vmatprep.subr.mxu0 0.0
    %1421 = vmatpush1.msra.mxu0 0.0
    %1422 = vmatprep.subr.mxu0 0.0
    %1423 = vmatpush1.msra.mxu0 0.0
    %1424 = vmatprep.subr.mxu0 0.0
    %1425 = vmatpush1.msra.mxu0 0.0
    %1426 = vmatprep.subr.mxu0 0.0
    %1427 = vmatpush1.msra.mxu0 0.0
    %1428 = vmatprep.subr.mxu0 0.0
    %1429 = vmatpush1.msra.mxu0 0.0
    %1430 = vmatprep.subr.mxu0 0.0
    %1431 = vmatpush1.msra.mxu0 0.0
    %1432 = vmatprep.subr.mxu0 0.0
    %1433 = vmatpush1.msra.mxu0 0.0
    %1434 = vmatprep.subr.mxu0 0.0
    %1435 = vmatpush1.msra.mxu0 0.0
    %1436 = vmatprep.subr.mxu0 0.0
    %1437 = vmatpush1.msra.mxu0 0.0
    %1438 = vmatprep.subr.mxu0 0.0
    %1439 = vmatpush1.msra.mxu0 0.0
    %1440 = vmatprep.subr.mxu0 0.0
    %1441 = vmatpush1.msra.mxu0 0.0
    %1442 = vmatprep.subr.mxu0 0.0
    %1443 = vmatpush1.msra.mxu0 0.0
    %1444 = vmatprep.subr.mxu0 0.0
    %1445 = vmatpush1.msra.mxu0 0.0
    %1446 = vmatprep.subr.mxu0 0.0
    %1447 = vmatpush1.msra.mxu0 0.0
    %1448 = vmatprep.subr.mxu0 0.0
    %1449 = vmatpush1.msra.mxu0 0.0
    %1450 = vmatprep.subr.mxu0 0.0
    %1451 = vmatpush1.msra.mxu0 0.0
    %1452 = vmatprep.subr.mxu0 0.0
    %1453 = vmatpush1.msra.mxu0 0.0
    %1454 = vmatprep.subr.mxu0 0.0
    %1455 = vmatpush1.msra.mxu0 0.0
    %1456 = vmatprep.subr.mxu0 0.0
    %1457 = vmatpush1.msra.mxu0 0.0
    %1458 = vmatprep.subr.mxu0 0.0
    %1459 = vmatpush1.msra.mxu0 0.0
    %1460 = vmatprep.subr.mxu0 0.0
    %1461 = vmatpush1.msra.mxu0 0.0
    %1462 = vmatprep.subr.mxu0 0.0
    %1463 = vmatpush1.msra.mxu0 0.0
    %1464 = vmatprep.subr.mxu0 0.0
    %1465 = vmatpush1.msra.mxu0 0.0
    %1466 = vmatprep.subr.mxu0 0.0
    %1467 = vmatpush1.msra.mxu0 0.0
    %1468 = vmatprep.subr.mxu0 0.0
    %1469 = vmatpush1.msra.mxu0 0.0
    %1470 = vmatprep.subr.mxu0 0.0
    %1471 = vmatpush1.msra.mxu0 0.0
    %1472 = vmatprep.subr.mxu0 0.0
    %1473 = vmatpush1.msra.mxu0 0.0
    %1474 = vmatprep.subr.mxu0 0.0
    %1475 = vmatpush1.msra.mxu0 0.0
    %1476 = vmatprep.subr.mxu0 0.0
    %1477 = vmatpush1.msra.mxu0 0.0
    %1478 = vmatprep.mubr.f32.mxu0 0.0
    %1479 = vmatmul.mubr.f32.gmra.mrb[0].mxu0 %v1406
    %v1480 = vpop.f32.mrb[0].mxu0
    %v1481 = vadd.f32 %v1397, %v1480
    %v1482 = vpop.f32.mrb[0].mxu0
    %1483 = vmatprep.mubr.f32.mxu0 0.0
    %1484 = vmatmul.mubr.f32.gmra.mrb[0].mxu0 %v1409
    %v1485 = vpop.f32.mrb[0].mxu0
    %v1486 = vadd.f32 %v1402, %v1485
    %v1487 = vpop.f32.mrb[0].mxu0
    %1488 = vdwg.mxu0
    %v1489 = vadd.f32 %v1211, %v1317
    %v1490 = vadd.f32 %v1212, %v1318
    %v1491 = vsel %vm178, %v280, 0.0
    %v1493 = vrot.slane %v689, 2
    %v1494 = vrot.slane %v1491, 2
    %v1495 = vsel %vm1086, %v1493, %v1494
    %v1496 = vsel %vm156, %v1495, 0
    %v1498 = vsel %vm156, %v1494, 0
    %1500 = vmatprep.subr.mxu0 0.0
    %1501 = vmatpush1.xpose.msra.mxu0 %v1102
    %1502 = vmatprep.subr.mxu0 0.0
    %1503 = vmatpush1.xpose.msra.mxu0 %v1104
    %1504 = vmatprep.subr.mxu0 0.0
    %1505 = vmatpush1.xpose.msra.mxu0 0.0
    %1506 = vmatprep.subr.mxu0 0.0
    %1507 = vmatpush1.xpose.msra.mxu0 0.0
    %1508 = vmatprep.subr.mxu0 0.0
    %1509 = vmatpush1.xpose.msra.mxu0 0.0
    %1510 = vmatprep.subr.mxu0 0.0
    %1511 = vmatpush1.xpose.msra.mxu0 0.0
    %1512 = vmatprep.subr.mxu0 0.0
    %1513 = vmatpush1.xpose.msra.mxu0 0.0
    %1514 = vmatprep.subr.mxu0 0.0
    %1515 = vmatpush1.xpose.msra.mxu0 0.0
    %1516 = vmatprep.subr.mxu0 0.0
    %1517 = vmatpush1.xpose.msra.mxu0 0.0
    %1518 = vmatprep.subr.mxu0 0.0
    %1519 = vmatpush1.xpose.msra.mxu0 0.0
    %1520 = vmatprep.subr.mxu0 0.0
    %1521 = vmatpush1.xpose.msra.mxu0 0.0
    %1522 = vmatprep.subr.mxu0 0.0
    %1523 = vmatpush1.xpose.msra.mxu0 0.0
    %1524 = vmatprep.subr.mxu0 0.0
    %1525 = vmatpush1.xpose.msra.mxu0 0.0
    %1526 = vmatprep.subr.mxu0 0.0
    %1527 = vmatpush1.xpose.msra.mxu0 0.0
    %1528 = vmatprep.subr.mxu0 0.0
    %1529 = vmatpush1.xpose.msra.mxu0 0.0
    %1530 = vmatprep.subr.mxu0 0.0
    %1531 = vmatpush1.xpose.msra.mxu0 0.0
    %1532 = vmatprep.subr.mxu0 0.0
    %1533 = vmatpush1.xpose.msra.mxu0 0.0
    %1534 = vmatprep.subr.mxu0 0.0
    %1535 = vmatpush1.xpose.msra.mxu0 0.0
    %1536 = vmatprep.subr.mxu0 0.0
    %1537 = vmatpush1.xpose.msra.mxu0 0.0
    %1538 = vmatprep.subr.mxu0 0.0
    %1539 = vmatpush1.xpose.msra.mxu0 0.0
    %1540 = vmatprep.subr.mxu0 0.0
    %1541 = vmatpush1.xpose.msra.mxu0 0.0
    %1542 = vmatprep.subr.mxu0 0.0
    %1543 = vmatpush1.xpose.msra.mxu0 0.0
    %1544 = vmatprep.subr.mxu0 0.0
    %1545 = vmatpush1.xpose.msra.mxu0 0.0
    %1546 = vmatprep.subr.mxu0 0.0
    %1547 = vmatpush1.xpose.msra.mxu0 0.0
    %1548 = vmatprep.subr.mxu0 0.0
    %1549 = vmatpush1.xpose.msra.mxu0 0.0
    %1550 = vmatprep.subr.mxu0 0.0
    %1551 = vmatpush1.xpose.msra.mxu0 0.0
    %1552 = vmatprep.subr.mxu0 0.0
    %1553 = vmatpush1.xpose.msra.mxu0 0.0
    %1554 = vmatprep.subr.mxu0 0.0
    %1555 = vmatpush1.xpose.msra.mxu0 0.0
    %1556 = vmatprep.subr.mxu0 0.0
    %1557 = vmatpush1.xpose.msra.mxu0 0.0
    %1558 = vmatprep.subr.mxu0 0.0
    %1559 = vmatpush1.xpose.msra.mxu0 0.0
    %1560 = vmatprep.subr.mxu0 0.0
    %1561 = vmatpush1.xpose.msra.mxu0 0.0
    %1562 = vmatprep.subr.mxu0 0.0
    %1563 = vmatpush1.xpose.msra.mxu0 0.0
    %1564 = vmatprep.mubr.f32.mxu0 0.0
    %1565 = vmatmul.mubr.f32.gmra.mrb[0].mxu0 %v1496
    %v1566 = vpop.f32.mrb[0].mxu0
    %v1567 = vadd.f32 0.0, %v1566
    %v1568 = vpop.f32.mrb[0].mxu0
    %1569 = vmatprep.mubr.f32.mxu0 0.0
    %1570 = vmatmul.mubr.f32.gmra.mrb[0].mxu0 %v1498
    %v1571 = vpop.f32.mrb[0].mxu0
    %v1572 = vadd.f32 0.0, %v1571
    %v1573 = vpop.f32.mrb[0].mxu0
    %1574 = vdwg.mxu0
    %v1575 = vsel %vm376, %v1567, -inf
    %1576 = vmax.xlane.f32.xlu0 %v1575
    %v1577 = vpop.xlane.xlu0 %1576
    %v1578 = vsel %vm380, %v1572, -inf
    %1579 = vmax.xlane.f32.xlu0 %v1578
    %v1580 = vpop.xlane.xlu0 %1579
    %v1581 = vsub.f32 %v1567, %v1577
    %v1582 = vsub.f32 %v1572, %v1580
    %v1583 = vmul.f32 %v1581, 1.442695
    %v1584 = vpow.pop %v1583
    %v1585 = vmul.f32 %v1582, 1.442695
    %v1586 = vpow.pop %v1585
    %v1587 = vsel %vm376, %v1584, 0.0
    %1588 = vadd.xlane.f32.xlu0 %v1587
    %v1589 = vpop.xlane.xlu0 %1588
    %v1590 = vsel %vm380, %v1586, 0.0
    %1591 = vadd.xlane.f32.xlu0 %v1590
    %v1592 = vpop.xlane.xlu0 %1591
    %v1593 = vrcp.pop %v1589
    %v1594 = vrcp.pop %v1592
    %v1595 = vmul.f32 %v1584, %v1593
    %v1596 = vmul.f32 %v1586, %v1594
    %v1597 = vsel %vm178, %v1204, 0.0
    %v1598 = vsel %vm178, %v1206, 0.0
    %v1600 = vsel %vm376, %v1595, 0
    %v1603 = vsel %vm376, %v1596, 0
    %v1606 = vsel %vm523, %v1598, 0
    %1608 = vmatprep.subr.mxu0 0.0
    %1609 = vmatpush1.msra.mxu0 %v1597
    %1610 = vmatprep.subr.mxu0 0.0
    %1611 = vmatpush1.msra.mxu0 %v1606
    %1612 = vmatprep.subr.mxu0 0.0
    %1613 = vmatpush1.msra.mxu0 0.0
    %1614 = vmatprep.subr.mxu0 0.0
    %1615 = vmatpush1.msra.mxu0 0.0
    %1616 = vmatprep.subr.mxu0 0.0
    %1617 = vmatpush1.msra.mxu0 0.0
    %1618 = vmatprep.subr.mxu0 0.0
    %1619 = vmatpush1.msra.mxu0 0.0
    %1620 = vmatprep.subr.mxu0 0.0
    %1621 = vmatpush1.msra.mxu0 0.0
    %1622 = vmatprep.subr.mxu0 0.0
    %1623 = vmatpush1.msra.mxu0 0.0
    %1624 = vmatprep.subr.mxu0 0.0
    %1625 = vmatpush1.msra.mxu0 0.0
    %1626 = vmatprep.subr.mxu0 0.0
    %1627 = vmatpush1.msra.mxu0 0.0
    %1628 = vmatprep.subr.mxu0 0.0
    %1629 = vmatpush1.msra.mxu0 0.0
    %1630 = vmatprep.subr.mxu0 0.0
    %1631 = vmatpush1.msra.mxu0 0.0
    %1632 = vmatprep.subr.mxu0 0.0
    %1633 = vmatpush1.msra.mxu0 0.0
    %1634 = vmatprep.subr.mxu0 0.0
    %1635 = vmatpush1.msra.mxu0 0.0
    %1636 = vmatprep.subr.mxu0 0.0
    %1637 = vmatpush1.msra.mxu0 0.0
    %1638 = vmatprep.subr.mxu0 0.0
    %1639 = vmatpush1.msra.mxu0 0.0
    %1640 = vmatprep.subr.mxu0 0.0
    %1641 = vmatpush1.msra.mxu0 0.0
    %1642 = vmatprep.subr.mxu0 0.0
    %1643 = vmatpush1.msra.mxu0 0.0
    %1644 = vmatprep.subr.mxu0 0.0
    %1645 = vmatpush1.msra.mxu0 0.0
    %1646 = vmatprep.subr.mxu0 0.0
    %1647 = vmatpush1.msra.mxu0 0.0
    %1648 = vmatprep.subr.mxu0 0.0
    %1649 = vmatpush1.msra.mxu0 0.0
    %1650 = vmatprep.subr.mxu0 0.0
    %1651 = vmatpush1.msra.mxu0 0.0
    %1652 = vmatprep.subr.mxu0 0.0
    %1653 = vmatpush1.msra.mxu0 0.0
    %1654 = vmatprep.subr.mxu0 0.0
    %1655 = vmatpush1.msra.mxu0 0.0
    %1656 = vmatprep.subr.mxu0 0.0
    %1657 = vmatpush1.msra.mxu0 0.0
    %1658 = vmatprep.subr.mxu0 0.0
    %1659 = vmatpush1.msra.mxu0 0.0
    %1660 = vmatprep.subr.mxu0 0.0
    %1661 = vmatpush1.msra.mxu0 0.0
    %1662 = vmatprep.subr.mxu0 0.0
    %1663 = vmatpush1.msra.mxu0 0.0
    %1664 = vmatprep.subr.mxu0 0.0
    %1665 = vmatpush1.msra.mxu0 0.0
    %1666 = vmatprep.subr.mxu0 0.0
    %1667 = vmatpush1.msra.mxu0 0.0
    %1668 = vmatprep.subr.mxu0 0.0
    %1669 = vmatpush1.msra.mxu0 0.0
    %1670 = vmatprep.subr.mxu0 0.0
    %1671 = vmatpush1.msra.mxu0 0.0
    %1672 = vmatprep.mubr.f32.mxu0 0.0
    %1673 = vmatmul.mubr.f32.gmra.mrb[0].mxu0 %v1600
    %v1674 = vpop.f32.mrb[0].mxu0
    %v1675 = vadd.f32 0.0, %v1674
    %v1676 = vpop.f32.mrb[0].mxu0
    %1677 = vmatprep.mubr.f32.mxu0 0.0
    %1678 = vmatmul.mubr.f32.gmra.mrb[0].mxu0 %v1603
    %v1679 = vpop.f32.mrb[0].mxu0
    %v1680 = vadd.f32 0.0, %v1679
    %v1681 = vpop.f32.mrb[0].mxu0
    %1682 = vdwg.mxu0
    %v1683 = vadd.f32 %v1481, %v1675
    %v1684 = vadd.f32 %v1486, %v1680
    %v1685 = vadd.f32 %v1489, %v1595
    %v1686 = vadd.f32 %v1490, %v1596
    %v1687 = vsel %vm181, %v280, 0.0
    %v1689 = vrot.slane %v884, 2
    %v1690 = vrot.slane %v1687, 2
    %v1691 = vsel %vm1086, %v1689, %v1690
    %v1692 = vsel %vm156, %v1691, 0
    %v1694 = vsel %vm156, %v1690, 0
    %1696 = vmatprep.subr.mxu0 0.0
    %1697 = vmatpush1.xpose.msra.mxu0 %v1102
    %1698 = vmatprep.subr.mxu0 0.0
    %1699 = vmatpush1.xpose.msra.mxu0 %v1104
    %1700 = vmatprep.subr.mxu0 0.0
    %1701 = vmatpush1.xpose.msra.mxu0 0.0
    %1702 = vmatprep.subr.mxu0 0.0
    %1703 = vmatpush1.xpose.msra.mxu0 0.0
    %1704 = vmatprep.subr.mxu0 0.0
    %1705 = vmatpush1.xpose.msra.mxu0 0.0
    %1706 = vmatprep.subr.mxu0 0.0
    %1707 = vmatpush1.xpose.msra.mxu0 0.0
    %1708 = vmatprep.subr.mxu0 0.0
    %1709 = vmatpush1.xpose.msra.mxu0 0.0
    %1710 = vmatprep.subr.mxu0 0.0
    %1711 = vmatpush1.xpose.msra.mxu0 0.0
    %1712 = vmatprep.subr.mxu0 0.0
    %1713 = vmatpush1.xpose.msra.mxu0 0.0
    %1714 = vmatprep.subr.mxu0 0.0
    %1715 = vmatpush1.xpose.msra.mxu0 0.0
    %1716 = vmatprep.subr.mxu0 0.0
    %1717 = vmatpush1.xpose.msra.mxu0 0.0
    %1718 = vmatprep.subr.mxu0 0.0
    %1719 = vmatpush1.xpose.msra.mxu0 0.0
    %1720 = vmatprep.subr.mxu0 0.0
    %1721 = vmatpush1.xpose.msra.mxu0 0.0
    %1722 = vmatprep.subr.mxu0 0.0
    %1723 = vmatpush1.xpose.msra.mxu0 0.0
    %1724 = vmatprep.subr.mxu0 0.0
    %1725 = vmatpush1.xpose.msra.mxu0 0.0
    %1726 = vmatprep.subr.mxu0 0.0
    %1727 = vmatpush1.xpose.msra.mxu0 0.0
    %1728 = vmatprep.subr.mxu0 0.0
    %1729 = vmatpush1.xpose.msra.mxu0 0.0
    %1730 = vmatprep.subr.mxu0 0.0
    %1731 = vmatpush1.xpose.msra.mxu0 0.0
    %1732 = vmatprep.subr.mxu0 0.0
    %1733 = vmatpush1.xpose.msra.mxu0 0.0
    %1734 = vmatprep.subr.mxu0 0.0
    %1735 = vmatpush1.xpose.msra.mxu0 0.0
    %1736 = vmatprep.subr.mxu0 0.0
    %1737 = vmatpush1.xpose.msra.mxu0 0.0
    %1738 = vmatprep.subr.mxu0 0.0
    %1739 = vmatpush1.xpose.msra.mxu0 0.0
    %1740 = vmatprep.subr.mxu0 0.0
    %1741 = vmatpush1.xpose.msra.mxu0 0.0
    %1742 = vmatprep.subr.mxu0 0.0
    %1743 = vmatpush1.xpose.msra.mxu0 0.0
    %1744 = vmatprep.subr.mxu0 0.0
    %1745 = vmatpush1.xpose.msra.mxu0 0.0
    %1746 = vmatprep.subr.mxu0 0.0
    %1747 = vmatpush1.xpose.msra.mxu0 0.0
    %1748 = vmatprep.subr.mxu0 0.0
    %1749 = vmatpush1.xpose.msra.mxu0 0.0
    %1750 = vmatprep.subr.mxu0 0.0
    %1751 = vmatpush1.xpose.msra.mxu0 0.0
    %1752 = vmatprep.subr.mxu0 0.0
    %1753 = vmatpush1.xpose.msra.mxu0 0.0
    %1754 = vmatprep.subr.mxu0 0.0
    %1755 = vmatpush1.xpose.msra.mxu0 0.0
    %1756 = vmatprep.subr.mxu0 0.0
    %1757 = vmatpush1.xpose.msra.mxu0 0.0
    %1758 = vmatprep.subr.mxu0 0.0
    %1759 = vmatpush1.xpose.msra.mxu0 0.0
    %1760 = vmatprep.mubr.f32.mxu0 0.0
    %1761 = vmatmul.mubr.f32.gmra.mrb[0].mxu0 %v1692
    %v1762 = vpop.f32.mrb[0].mxu0
    %v1763 = vadd.f32 0.0, %v1762
    %v1764 = vpop.f32.mrb[0].mxu0
    %1765 = vmatprep.mubr.f32.mxu0 0.0
    %1766 = vmatmul.mubr.f32.gmra.mrb[0].mxu0 %v1694
    %v1767 = vpop.f32.mrb[0].mxu0
    %v1768 = vadd.f32 0.0, %v1767
    %v1769 = vpop.f32.mrb[0].mxu0
    %1770 = vdwg.mxu0
    %v1771 = vsel %vm376, %v1763, -inf
    %1772 = vmax.xlane.f32.xlu0 %v1771
    %v1773 = vpop.xlane.xlu0 %1772
    %v1774 = vsel %vm380, %v1768, -inf
    %1775 = vmax.xlane.f32.xlu0 %v1774
    %v1776 = vpop.xlane.xlu0 %1775
    %v1777 = vsub.f32 %v1763, %v1773
    %v1778 = vsub.f32 %v1768, %v1776
    %v1779 = vmul.f32 %v1777, 1.442695
    %v1780 = vpow.pop %v1779
    %v1781 = vmul.f32 %v1778, 1.442695
    %v1782 = vpow.pop %v1781
    %v1783 = vsel %vm376, %v1780, 0.0
    %1784 = vadd.xlane.f32.xlu0 %v1783
    %v1785 = vpop.xlane.xlu0 %1784
    %v1786 = vsel %vm380, %v1782, 0.0
    %1787 = vadd.xlane.f32.xlu0 %v1786
    %v1788 = vpop.xlane.xlu0 %1787
    %v1789 = vrcp.pop %v1785
    %v1790 = vrcp.pop %v1788
    %v1791 = vmul.f32 %v1780, %v1789
    %v1792 = vmul.f32 %v1782, %v1790
    %v1793 = vsel %vm181, %v1204, 0.0
    %v1794 = vsel %vm181, %v1206, 0.0
    %v1796 = vsel %vm376, %v1791, 0
    %v1799 = vsel %vm376, %v1792, 0
    %v1802 = vsel %vm523, %v1794, 0
    %1804 = vmatprep.subr.mxu0 0.0
    %1805 = vmatpush1.msra.mxu0 %v1793
    %1806 = vmatprep.subr.mxu0 0.0
    %1807 = vmatpush1.msra.mxu0 %v1802
    %1808 = vmatprep.subr.mxu0 0.0
    %1809 = vmatpush1.msra.mxu0 0.0
    %1810 = vmatprep.subr.mxu0 0.0
    %1811 = vmatpush1.msra.mxu0 0.0
    %1812 = vmatprep.subr.mxu0 0.0
    %1813 = vmatpush1.msra.mxu0 0.0
    %1814 = vmatprep.subr.mxu0 0.0
    %1815 = vmatpush1.msra.mxu0 0.0
    %1816 = vmatprep.subr.mxu0 0.0
    %1817 = vmatpush1.msra.mxu0 0.0
    %1818 = vmatprep.subr.mxu0 0.0
    %1819 = vmatpush1.msra.mxu0 0.0
    %1820 = vmatprep.subr.mxu0 0.0
    %1821 = vmatpush1.msra.mxu0 0.0
    %1822 = vmatprep.subr.mxu0 0.0
    %1823 = vmatpush1.msra.mxu0 0.0
    %1824 = vmatprep.subr.mxu0 0.0
    %1825 = vmatpush1.msra.mxu0 0.0
    %1826 = vmatprep.subr.mxu0 0.0
    %1827 = vmatpush1.msra.mxu0 0.0
    %1828 = vmatprep.subr.mxu0 0.0
    %1829 = vmatpush1.msra.mxu0 0.0
    %1830 = vmatprep.subr.mxu0 0.0
    %1831 = vmatpush1.msra.mxu0 0.0
    %1832 = vmatprep.subr.mxu0 0.0
    %1833 = vmatpush1.msra.mxu0 0.0
    %1834 = vmatprep.subr.mxu0 0.0
    %1835 = vmatpush1.msra.mxu0 0.0
    %1836 = vmatprep.subr.mxu0 0.0
    %1837 = vmatpush1.msra.mxu0 0.0
    %1838 = vmatprep.subr.mxu0 0.0
    %1839 = vmatpush1.msra.mxu0 0.0
    %1840 = vmatprep.subr.mxu0 0.0
    %1841 = vmatpush1.msra.mxu0 0.0
    %1842 = vmatprep.subr.mxu0 0.0
    %1843 = vmatpush1.msra.mxu0 0.0
    %1844 = vmatprep.subr.mxu0 0.0
    %1845 = vmatpush1.msra.mxu0 0.0
    %1846 = vmatprep.subr.mxu0 0.0
    %1847 = vmatpush1.msra.mxu0 0.0
    %1848 = vmatprep.subr.mxu0 0.0
    %1849 = vmatpush1.msra.mxu0 0.0
    %1850 = vmatprep.subr.mxu0 0.0
    %1851 = vmatpush1.msra.mxu0 0.0
    %1852 = vmatprep.subr.mxu0 0.0
    %1853 = vmatpush1.msra.mxu0 0.0
    %1854 = vmatprep.subr.mxu0 0.0
    %1855 = vmatpush1.msra.mxu0 0.0
    %1856 = vmatprep.subr.mxu0 0.0
    %1857 = vmatpush1.msra.mxu0 0.0
    %1858 = vmatprep.subr.mxu0 0.0
    %1859 = vmatpush1.msra.mxu0 0.0
    %1860 = vmatprep.subr.mxu0 0.0
    %1861 = vmatpush1.msra.mxu0 0.0
    %1862 = vmatprep.subr.mxu0 0.0
    %1863 = vmatpush1.msra.mxu0 0.0
    %1864 = vmatprep.subr.mxu0 0.0
    %1865 = vmatpush1.msra.mxu0 0.0
    %1866 = vmatprep.subr.mxu0 0.0
    %1867 = vmatpush1.msra.mxu0 0.0
    %1868 = vmatprep.mubr.f32.mxu0 0.0
    %1869 = vmatmul.mubr.f32.gmra.mrb[0].mxu0 %v1796
    %v1870 = vpop.f32.mrb[0].mxu0
    %v1871 = vadd.f32 0.0, %v1870
    %v1872 = vpop.f32.mrb[0].mxu0
    %1873 = vmatprep.mubr.f32.mxu0 0.0
    %1874 = vmatmul.mubr.f32.gmra.mrb[0].mxu0 %v1799
    %v1875 = vpop.f32.mrb[0].mxu0
    %v1876 = vadd.f32 0.0, %v1875
    %v1877 = vpop.f32.mrb[0].mxu0
    %1878 = vdwg.mxu0
    %v1879 = vadd.f32 %v1683, %v1871
    %v1880 = vadd.f32 %v1684, %v1876
    %v1881 = vadd.f32 %v1685, %v1791
    %v1882 = vadd.f32 %v1686, %v1792
    %1883 = vst.msk [vmem:[#allocation3 + $0xa] sm:$0xff] %vm156, %v1879
    %1884 = vst.msk [vmem:[#allocation3 + $0x12] sm:$0x3] %vm163, %v1880
    %v1885 = vmul.f32 %v1881, 0.25
    %v1886 = vmul.f32 %v1882, 0.25
    %s1887 = scalar_lea.vmem %s14, 16
    %1888 = vst.msk [vmem:[%s1887] sm:$0xff] %vm376, %v1885
    %1889 = vst.msk [vmem:[%s1887 + $0x8] sm:$0x3] %vm380, %v1886
    %v1890 = vld [vmem:[#allocation3] sm:$0xff]
    %v1891 = vld [vmem:[#allocation3 + $0x8] sm:$0xff]
    %v1892 = vld [vmem:[#allocation3 + $0x10] sm:$0xf]
    %v1893 = vld [vmem:[%s6] sm:$0xff]
    %v1894 = vld [vmem:[%s6 + $0x8] sm:$0xff]
    %v1895 = vld [vmem:[%s6 + $0x10] sm:$0xff]
    %v1896 = vld [vmem:[%s6 + $0x18] sm:$0xff]
    %v1897 = vlaneseq
    %v1898 = vshrl.u32 %v1897, 7
    %v1899 = vsub.s32 0, %v1898
    %v1900 = vrot.slane %v182, %v1899
    %v1902 = vsel %vm156, %v1890, 0
    %v1905 = vsel %vm156, %v1891, 0
    %v1908 = vsel %vm156, %v1892, 0
    %1910 = vmatprep.subr.mxu0 0.0
    %1911 = vmatpush1.msra.mxu0 %v1893
    %1912 = vmatprep.subr.mxu0 0.0
    %1913 = vmatpush1.msra.mxu0 %v1894
    %1914 = vmatprep.subr.mxu0 0.0
    %1915 = vmatpush1.msra.mxu0 %v1895
    %1916 = vmatprep.subr.mxu0 0.0
    %1917 = vmatpush1.msra.mxu0 %v1896
    %1918 = vmatprep.subr.mxu0 0.0
    %1919 = vmatpush1.msra.mxu0 0.0
    %1920 = vmatprep.subr.mxu0 0.0
    %1921 = vmatpush1.msra.mxu0 0.0
    %1922 = vmatprep.subr.mxu0 0.0
    %1923 = vmatpush1.msra.mxu0 0.0
    %1924 = vmatprep.subr.mxu0 0.0
    %1925 = vmatpush1.msra.mxu0 0.0
    %1926 = vmatprep.subr.mxu0 0.0
    %1927 = vmatpush1.msra.mxu0 0.0
    %1928 = vmatprep.subr.mxu0 0.0
    %1929 = vmatpush1.msra.mxu0 0.0
    %1930 = vmatprep.subr.mxu0 0.0
    %1931 = vmatpush1.msra.mxu0 0.0
    %1932 = vmatprep.subr.mxu0 0.0
    %1933 = vmatpush1.msra.mxu0 0.0
    %1934 = vmatprep.subr.mxu0 0.0
    %1935 = vmatpush1.msra.mxu0 0.0
    %1936 = vmatprep.subr.mxu0 0.0
    %1937 = vmatpush1.msra.mxu0 0.0
    %1938 = vmatprep.subr.mxu0 0.0
    %1939 = vmatpush1.msra.mxu0 0.0
    %1940 = vmatprep.subr.mxu0 0.0
    %1941 = vmatpush1.msra.mxu0 0.0
    %1942 = vmatprep.subr.mxu0 0.0
    %1943 = vmatpush1.msra.mxu0 0.0
    %1944 = vmatprep.subr.mxu0 0.0
    %1945 = vmatpush1.msra.mxu0 0.0
    %1946 = vmatprep.subr.mxu0 0.0
    %1947 = vmatpush1.msra.mxu0 0.0
    %1948 = vmatprep.subr.mxu0 0.0
    %1949 = vmatpush1.msra.mxu0 0.0
    %1950 = vmatprep.subr.mxu0 0.0
    %1951 = vmatpush1.msra.mxu0 0.0
    %1952 = vmatprep.subr.mxu0 0.0
    %1953 = vmatpush1.msra.mxu0 0.0
    %1954 = vmatprep.subr.mxu0 0.0
    %1955 = vmatpush1.msra.mxu0 0.0
    %1956 = vmatprep.subr.mxu0 0.0
    %1957 = vmatpush1.msra.mxu0 0.0
    %1958 = vmatprep.subr.mxu0 0.0
    %1959 = vmatpush1.msra.mxu0 0.0
    %1960 = vmatprep.subr.mxu0 0.0
    %1961 = vmatpush1.msra.mxu0 0.0
    %1962 = vmatprep.subr.mxu0 0.0
    %1963 = vmatpush1.msra.mxu0 0.0
    %1964 = vmatprep.subr.mxu0 0.0
    %1965 = vmatpush1.msra.mxu0 0.0
    %1966 = vmatprep.subr.mxu0 0.0
    %1967 = vmatpush1.msra.mxu0 0.0
    %1968 = vmatprep.subr.mxu0 0.0
    %1969 = vmatpush1.msra.mxu0 0.0
    %1970 = vmatprep.subr.mxu0 0.0
    %1971 = vmatpush1.msra.mxu0 0.0
    %1972 = vmatprep.subr.mxu0 0.0
    %1973 = vmatpush1.msra.mxu0 0.0
    %1974 = vmatprep.mubr.f32.mxu0 0.0
    %1975 = vmatmul.mubr.f32.gmra.mrb[0].mxu0 %v1902
    %v1976 = vpop.f32.mrb[0].mxu0
    %v1977 = vadd.f32 %v1900, %v1976
    %v1978 = vpop.f32.mrb[0].mxu0
    %1979 = vmatprep.mubr.f32.mxu0 0.0
    %1980 = vmatmul.mubr.f32.gmra.mrb[0].mxu0 %v1905
    %v1981 = vpop.f32.mrb[0].mxu0
    %v1982 = vadd.f32 %v1900, %v1981
    %v1983 = vpop.f32.mrb[0].mxu0
    %1984 = vmatprep.mubr.f32.mxu0 0.0
    %1985 = vmatmul.mubr.f32.gmra.mrb[0].mxu0 %v1908
    %v1986 = vpop.f32.mrb[0].mxu0
    %v1987 = vadd.f32 %v1900, %v1986
    %v1988 = vpop.f32.mrb[0].mxu0
    %1989 = vdwg.mxu0
    %v1990 = vadd.f32 %v165, %v1977
    %v1991 = vadd.f32 %v166, %v1982
    %v1992 = vadd.f32 %v167, %v1987
    %v1993 = vsel %vm156, %v1990, 0.0
    %1994 = vadd.xlane.f32.xlu0 %v1993
    %v1995 = vpop.xlane.xlu0 %1994
    %v1996 = vsel %vm156, %v1991, 0.0
    %1997 = vadd.xlane.f32.xlu0 %v1996
    %v1998 = vpop.xlane.xlu0 %1997
    %vm1999 = vcmask 257024
    %v2000 = vsel %vm1999, %v1992, 0.0
    %2001 = vadd.xlane.f32.xlu0 %v2000
    %v2002 = vpop.xlane.xlu0 %2001
    %v2003 = vrcp.pop 32.0
    %v2004 = vmul.f32 %v1995, %v2003
    %v2005 = vmul.f32 %v1998, %v2003
    %v2006 = vmul.f32 %v2002, %v2003
    %v2007 = vsub.f32 %v1990, %v2004
    %v2008 = vsub.f32 %v1991, %v2005
    %v2009 = vsub.f32 %v1992, %v2006
    %v2010 = vmul.f32 %v2007, %v2007
    %v2011 = vmul.f32 %v2008, %v2008
    %v2012 = vmul.f32 %v2009, %v2009
    %v2013 = vsel %vm156, %v2010, 0.0
    %2014 = vadd.xlane.f32.xlu0 %v2013
    %v2015 = vpop.xlane.xlu0 %2014
    %v2016 = vsel %vm156, %v2011, 0.0
    %2017 = vadd.xlane.f32.xlu0 %v2016
    %v2018 = vpop.xlane.xlu0 %2017
    %v2019 = vsel %vm1999, %v2012, 0.0
    %2020 = vadd.xlane.f32.xlu0 %v2019
    %v2021 = vpop.xlane.xlu0 %2020
    %v2022 = vmul.f32 %v2015, %v2003
    %v2023 = vmul.f32 %v2018, %v2003
    %v2024 = vmul.f32 %v2021, %v2003
    %v2025 = vadd.f32 %v2022, 1e-05
    %v2026 = vadd.f32 %v2023, 1e-05
    %v2027 = vadd.f32 %v2024, 1e-05
    %v2028 = vrsqrt.pop %v2025
    %v2029 = vrsqrt.pop %v2026
    %v2030 = vrsqrt.pop %v2027
    %v2031 = vmul.f32 %v2007, %v2028
    %v2032 = vmul.f32 %v2008, %v2029
    %v2033 = vmul.f32 %v2009, %v2030
    %v2034 = vlaneseq
    %v2035 = vshrl.u32 %v2034, 7
    %v2036 = vsub.s32 2, %v2035
    %v2037 = vrot.slane %v182, %v2036
    %v2038 = vmul.f32 %v2031, %v2037
    %v2039 = vmul.f32 %v2032, %v2037
    %v2040 = vmul.f32 %v2033, %v2037
    %v2041 = vlaneseq
    %v2042 = vshrl.u32 %v2041, 7
    %v2043 = vsub.s32 3, %v2042
    %v2044 = vrot.slane %v182, %v2043
    %v2045 = vadd.f32 %v2038, %v2044
    %v2046 = vadd.f32 %v2039, %v2044
    %v2047 = vadd.f32 %v2040, %v2044
    %v2048 = vld [vmem:[%s7] sm:$0xff]
    %v2049 = vld [vmem:[%s7 + $0x8] sm:$0xff]
    %v2050 = vld [vmem:[%s7 + $0x10] sm:$0xff]
    %v2051 = vld [vmem:[%s7 + $0x18] sm:$0xff]
    %v2052 = vld [vmem:[%s8] sm:$0x1]
    %v2054 = vlaneseq
    %v2055 = vshrl.u32 %v2054, 7
    %v2056 = vsub.s32 0, %v2055
    %v2057 = vrot.slane %v2052, %v2056
    %v2060 = vsel %vm156, %v2045, 0
    %v2063 = vsel %vm156, %v2046, 0
    %v2066 = vsel %vm156, %v2047, 0
    %2068 = vmatprep.subr.mxu0 0.0
    %2069 = vmatpush1.msra.mxu0 %v2048
    %2070 = vmatprep.subr.mxu0 0.0
    %2071 = vmatpush1.msra.mxu0 %v2049
    %2072 = vmatprep.subr.mxu0 0.0
    %2073 = vmatpush1.msra.mxu0 %v2050
    %2074 = vmatprep.subr.mxu0 0.0
    %2075 = vmatpush1.msra.mxu0 %v2051
    %2076 = vmatprep.subr.mxu0 0.0
    %2077 = vmatpush1.msra.mxu0 0.0
    %2078 = vmatprep.subr.mxu0 0.0
    %2079 = vmatpush1.msra.mxu0 0.0
    %2080 = vmatprep.subr.mxu0 0.0
    %2081 = vmatpush1.msra.mxu0 0.0
    %2082 = vmatprep.subr.mxu0 0.0
    %2083 = vmatpush1.msra.mxu0 0.0
    %2084 = vmatprep.subr.mxu0 0.0
    %2085 = vmatpush1.msra.mxu0 0.0
    %2086 = vmatprep.subr.mxu0 0.0
    %2087 = vmatpush1.msra.mxu0 0.0
    %2088 = vmatprep.subr.mxu0 0.0
    %2089 = vmatpush1.msra.mxu0 0.0
    %2090 = vmatprep.subr.mxu0 0.0
    %2091 = vmatpush1.msra.mxu0 0.0
    %2092 = vmatprep.subr.mxu0 0.0
    %2093 = vmatpush1.msra.mxu0 0.0
    %2094 = vmatprep.subr.mxu0 0.0
    %2095 = vmatpush1.msra.mxu0 0.0
    %2096 = vmatprep.subr.mxu0 0.0
    %2097 = vmatpush1.msra.mxu0 0.0
    %2098 = vmatprep.subr.mxu0 0.0
    %2099 = vmatpush1.msra.mxu0 0.0
    %2100 = vmatprep.subr.mxu0 0.0
    %2101 = vmatpush1.msra.mxu0 0.0
    %2102 = vmatprep.subr.mxu0 0.0
    %2103 = vmatpush1.msra.mxu0 0.0
    %2104 = vmatprep.subr.mxu0 0.0
    %2105 = vmatpush1.msra.mxu0 0.0
    %2106 = vmatprep.subr.mxu0 0.0
    %2107 = vmatpush1.msra.mxu0 0.0
    %2108 = vmatprep.subr.mxu0 0.0
    %2109 = vmatpush1.msra.mxu0 0.0
    %2110 = vmatprep.subr.mxu0 0.0
    %2111 = vmatpush1.msra.mxu0 0.0
    %2112 = vmatprep.subr.mxu0 0.0
    %2113 = vmatpush1.msra.mxu0 0.0
    %2114 = vmatprep.subr.mxu0 0.0
    %2115 = vmatpush1.msra.mxu0 0.0
    %2116 = vmatprep.subr.mxu0 0.0
    %2117 = vmatpush1.msra.mxu0 0.0
    %2118 = vmatprep.subr.mxu0 0.0
    %2119 = vmatpush1.msra.mxu0 0.0
    %2120 = vmatprep.subr.mxu0 0.0
    %2121 = vmatpush1.msra.mxu0 0.0
    %2122 = vmatprep.subr.mxu0 0.0
    %2123 = vmatpush1.msra.mxu0 0.0
    %2124 = vmatprep.subr.mxu0 0.0
    %2125 = vmatpush1.msra.mxu0 0.0
    %2126 = vmatprep.subr.mxu0 0.0
    %2127 = vmatpush1.msra.mxu0 0.0
    %2128 = vmatprep.subr.mxu0 0.0
    %2129 = vmatpush1.msra.mxu0 0.0
    %2130 = vmatprep.subr.mxu0 0.0
    %2131 = vmatpush1.msra.mxu0 0.0
    %2132 = vmatprep.mubr.f32.mxu0 0.0
    %2133 = vmatmul.mubr.f32.gmra.mrb[0].mxu0 %v2060
    %v2134 = vpop.f32.mrb[0].mxu0
    %v2135 = vadd.f32 %v2057, %v2134
    %v2136 = vpop.f32.mrb[0].mxu0
    %2137 = vmatprep.mubr.f32.mxu0 0.0
    %2138 = vmatmul.mubr.f32.gmra.mrb[0].mxu0 %v2063
    %v2139 = vpop.f32.mrb[0].mxu0
    %v2140 = vadd.f32 %v2057, %v2139
    %v2141 = vpop.f32.mrb[0].mxu0
    %2142 = vmatprep.mubr.f32.mxu0 0.0
    %2143 = vmatmul.mubr.f32.gmra.mrb[0].mxu0 %v2066
    %v2144 = vpop.f32.mrb[0].mxu0
    %v2145 = vadd.f32 %v2057, %v2144
    %v2146 = vpop.f32.mrb[0].mxu0
    %2147 = vdwg.mxu0
    %v2148 = vmax.f32 %v2135, 0.0
    %v2149 = vmax.f32 %v2140, 0.0
    %v2150 = vmax.f32 %v2145, 0.0
    %v2151 = vld [vmem:[%s9] sm:$0xff]
    %v2152 = vld [vmem:[%s9 + $0x8] sm:$0xff]
    %v2153 = vld [vmem:[%s9 + $0x10] sm:$0xff]
    %v2154 = vld [vmem:[%s9 + $0x18] sm:$0xff]
    %v2155 = vld [vmem:[%s9 + $0x20] sm:$0xff]
    %v2156 = vld [vmem:[%s9 + $0x28] sm:$0xff]
    %v2157 = vld [vmem:[%s9 + $0x30] sm:$0xff]
    %v2158 = vld [vmem:[%s9 + $0x38] sm:$0xff]
    %v2159 = vlaneseq
    %v2160 = vshrl.u32 %v2159, 7
    %v2161 = vsub.s32 1, %v2160
    %v2162 = vrot.slane %v182, %v2161
    %vm2163 = vcmask 523264
    %v2165 = vsel %vm2163, %v2148, 0
    %v2168 = vsel %vm2163, %v2149, 0
    %v2171 = vsel %vm2163, %v2150, 0
    %2173 = vmatprep.subr.mxu0 0.0
    %2174 = vmatpush1.msra.mxu0 %v2151
    %2175 = vmatprep.subr.mxu0 0.0
    %2176 = vmatpush1.msra.mxu0 %v2152
    %2177 = vmatprep.subr.mxu0 0.0
    %2178 = vmatpush1.msra.mxu0 %v2153
    %2179 = vmatprep.subr.mxu0 0.0
    %2180 = vmatpush1.msra.mxu0 %v2154
    %2181 = vmatprep.subr.mxu0 0.0
    %2182 = vmatpush1.msra.mxu0 %v2155
    %2183 = vmatprep.subr.mxu0 0.0
    %2184 = vmatpush1.msra.mxu0 %v2156
    %2185 = vmatprep.subr.mxu0 0.0
    %2186 = vmatpush1.msra.mxu0 %v2157
    %2187 = vmatprep.subr.mxu0 0.0
    %2188 = vmatpush1.msra.mxu0 %v2158
    %2189 = vmatprep.subr.mxu0 0.0
    %2190 = vmatpush1.msra.mxu0 0.0
    %2191 = vmatprep.subr.mxu0 0.0
    %2192 = vmatpush1.msra.mxu0 0.0
    %2193 = vmatprep.subr.mxu0 0.0
    %2194 = vmatpush1.msra.mxu0 0.0
    %2195 = vmatprep.subr.mxu0 0.0
    %2196 = vmatpush1.msra.mxu0 0.0
    %2197 = vmatprep.subr.mxu0 0.0
    %2198 = vmatpush1.msra.mxu0 0.0
    %2199 = vmatprep.subr.mxu0 0.0
    %2200 = vmatpush1.msra.mxu0 0.0
    %2201 = vmatprep.subr.mxu0 0.0
    %2202 = vmatpush1.msra.mxu0 0.0
    %2203 = vmatprep.subr.mxu0 0.0
    %2204 = vmatpush1.msra.mxu0 0.0
    %2205 = vmatprep.subr.mxu0 0.0
    %2206 = vmatpush1.msra.mxu0 0.0
    %2207 = vmatprep.subr.mxu0 0.0
    %2208 = vmatpush1.msra.mxu0 0.0
    %2209 = vmatprep.subr.mxu0 0.0
    %2210 = vmatpush1.msra.mxu0 0.0
    %2211 = vmatprep.subr.mxu0 0.0
    %2212 = vmatpush1.msra.mxu0 0.0
    %2213 = vmatprep.subr.mxu0 0.0
    %2214 = vmatpush1.msra.mxu0 0.0
    %2215 = vmatprep.subr.mxu0 0.0
    %2216 = vmatpush1.msra.mxu0 0.0
    %2217 = vmatprep.subr.mxu0 0.0
    %2218 = vmatpush1.msra.mxu0 0.0
    %2219 = vmatprep.subr.mxu0 0.0
    %2220 = vmatpush1.msra.mxu0 0.0
    %2221 = vmatprep.subr.mxu0 0.0
    %2222 = vmatpush1.msra.mxu0 0.0
    %2223 = vmatprep.subr.mxu0 0.0
    %2224 = vmatpush1.msra.mxu0 0.0
    %2225 = vmatprep.subr.mxu0 0.0
    %2226 = vmatpush1.msra.mxu0 0.0
    %2227 = vmatprep.subr.mxu0 0.0
    %2228 = vmatpush1.msra.mxu0 0.0
    %2229 = vmatprep.subr.mxu0 0.0
    %2230 = vmatpush1.msra.mxu0 0.0
    %2231 = vmatprep.subr.mxu0 0.0
    %2232 = vmatpush1.msra.mxu0 0.0
    %2233 = vmatprep.subr.mxu0 0.0
    %2234 = vmatpush1.msra.mxu0 0.0
    %2235 = vmatprep.subr.mxu0 0.0
    %2236 = vmatpush1.msra.mxu0 0.0
    %2237 = vmatprep.mubr.f32.mxu0 0.0
    %2238 = vmatmul.mubr.f32.gmra.mrb[0].mxu0 %v2165
    %v2239 = vpop.f32.mrb[0].mxu0
    %v2240 = vadd.f32 %v2162, %v2239
    %v2241 = vpop.f32.mrb[0].mxu0
    %2242 = vmatprep.mubr.f32.mxu0 0.0
    %2243 = vmatmul.mubr.f32.gmra.mrb[0].mxu0 %v2168
    %v2244 = vpop.f32.mrb[0].mxu0
    %v2245 = vadd.f32 %v2162, %v2244
    %v2246 = vpop.f32.mrb[0].mxu0
    %2247 = vmatprep.mubr.f32.mxu0 0.0
    %2248 = vmatmul.mubr.f32.gmra.mrb[0].mxu0 %v2171
    %v2249 = vpop.f32.mrb[0].mxu0
    %v2250 = vadd.f32 %v2162, %v2249
    %v2251 = vpop.f32.mrb[0].mxu0
    %2252 = vdwg.mxu0
    %v2253 = vadd.f32 %v2045, %v2240
    %v2254 = vadd.f32 %v2046, %v2245
    %v2255 = vadd.f32 %v2047, %v2250
    %v2256 = vsel %vm156, %v2253, 0.0
    %2257 = vadd.xlane.f32.xlu0 %v2256
    %v2258 = vpop.xlane.xlu0 %2257
    %v2259 = vsel %vm156, %v2254, 0.0
    %2260 = vadd.xlane.f32.xlu0 %v2259
    %v2261 = vpop.xlane.xlu0 %2260
    %v2262 = vsel %vm1999, %v2255, 0.0
    %2263 = vadd.xlane.f32.xlu0 %v2262
    %v2264 = vpop.xlane.xlu0 %2263
    %v2265 = vmul.f32 %v2258, %v2003
    %v2266 = vmul.f32 %v2261, %v2003
    %v2267 = vmul.f32 %v2264, %v2003
    %v2268 = vsub.f32 %v2253, %v2265
    %v2269 = vsub.f32 %v2254, %v2266
    %v2270 = vsub.f32 %v2255, %v2267
    %v2271 = vmul.f32 %v2268, %v2268
    %v2272 = vmul.f32 %v2269, %v2269
    %v2273 = vmul.f32 %v2270, %v2270
    %v2274 = vsel %vm156, %v2271, 0.0
    %2275 = vadd.xlane.f32.xlu0 %v2274
    %v2276 = vpop.xlane.xlu0 %2275
    %v2277 = vsel %vm156, %v2272, 0.0
    %2278 = vadd.xlane.f32.xlu0 %v2277
    %v2279 = vpop.xlane.xlu0 %2278
    %v2280 = vsel %vm1999, %v2273, 0.0
    %2281 = vadd.xlane.f32.xlu0 %v2280
    %v2282 = vpop.xlane.xlu0 %2281
    %v2283 = vmul.f32 %v2276, %v2003
    %v2284 = vmul.f32 %v2279, %v2003
    %v2285 = vmul.f32 %v2282, %v2003
    %v2286 = vadd.f32 %v2283, 1e-05
    %v2287 = vadd.f32 %v2284, 1e-05
    %v2288 = vadd.f32 %v2285, 1e-05
    %v2289 = vrsqrt.pop %v2286
    %v2290 = vrsqrt.pop %v2287
    %v2291 = vrsqrt.pop %v2288
    %v2292 = vmul.f32 %v2268, %v2289
    %v2293 = vmul.f32 %v2269, %v2290
    %v2294 = vmul.f32 %v2270, %v2291
    %v2295 = vlaneseq
    %v2296 = vshrl.u32 %v2295, 7
    %v2297 = vsub.s32 4, %v2296
    %v2298 = vrot.slane %v182, %v2297
    %v2299 = vmul.f32 %v2292, %v2298
    %v2300 = vmul.f32 %v2293, %v2298
    %v2301 = vmul.f32 %v2294, %v2298
    %v2302 = vlaneseq
    %v2303 = vshrl.u32 %v2302, 7
    %v2304 = vsub.s32 5, %v2303
    %v2305 = vrot.slane %v182, %v2304
    %v2306 = vadd.f32 %v2299, %v2305
    %v2307 = vadd.f32 %v2300, %v2305
    %v2308 = vadd.f32 %v2301, %v2305
    %s2309 = scalar_lea.vmem %s10, 8
    %v2310 = vld [vmem:[%s2309] sm:$0xff]
    %s2311 = scalar_lea.vmem %s4, 32
    %v2312 = vld [vmem:[%s2311] sm:$0xff]
    %v2313 = vld [vmem:[%s2311 + $0x8] sm:$0xff]
    %v2314 = vld [vmem:[%s2311 + $0x10] sm:$0xff]
    %v2315 = vld [vmem:[%s2311 + $0x18] sm:$0xff]
    %s2316 = scalar_lea.vmem %s5, 1
    %v2317 = vld [vmem:[%s2316] sm:$0x1]
    %v2319 = vlaneseq
    %v2320 = vshrl.u32 %v2319, 7
    %v2321 = vsub.s32 0, %v2320
    %v2322 = vrot.slane %v2317, %v2321
    %v2325 = vsel %vm156, %v2306, 0
    %v2328 = vsel %vm156, %v2307, 0
    %v2331 = vsel %vm156, %v2308, 0
    %2333 = vmatprep.subr.mxu0 0.0
    %2334 = vmatpush1.msra.mxu0 %v2312
    %2335 = vmatprep.subr.mxu0 0.0
    %2336 = vmatpush1.msra.mxu0 %v2313
    %2337 = vmatprep.subr.mxu0 0.0
    %2338 = vmatpush1.msra.mxu0 %v2314
    %2339 = vmatprep.subr.mxu0 0.0
    %2340 = vmatpush1.msra.mxu0 %v2315
    %2341 = vmatprep.subr.mxu0 0.0
    %2342 = vmatpush1.msra.mxu0 0.0
    %2343 = vmatprep.subr.mxu0 0.0
    %2344 = vmatpush1.msra.mxu0 0.0
    %2345 = vmatprep.subr.mxu0 0.0
    %2346 = vmatpush1.msra.mxu0 0.0
    %2347 = vmatprep.subr.mxu0 0.0
    %2348 = vmatpush1.msra.mxu0 0.0
    %2349 = vmatprep.subr.mxu0 0.0
    %2350 = vmatpush1.msra.mxu0 0.0
    %2351 = vmatprep.subr.mxu0 0.0
    %2352 = vmatpush1.msra.mxu0 0.0
    %2353 = vmatprep.subr.mxu0 0.0
    %2354 = vmatpush1.msra.mxu0 0.0
    %2355 = vmatprep.subr.mxu0 0.0
    %2356 = vmatpush1.msra.mxu0 0.0
    %2357 = vmatprep.subr.mxu0 0.0
    %2358 = vmatpush1.msra.mxu0 0.0
    %2359 = vmatprep.subr.mxu0 0.0
    %2360 = vmatpush1.msra.mxu0 0.0
    %2361 = vmatprep.subr.mxu0 0.0
    %2362 = vmatpush1.msra.mxu0 0.0
    %2363 = vmatprep.subr.mxu0 0.0
    %2364 = vmatpush1.msra.mxu0 0.0
    %2365 = vmatprep.subr.mxu0 0.0
    %2366 = vmatpush1.msra.mxu0 0.0
    %2367 = vmatprep.subr.mxu0 0.0
    %2368 = vmatpush1.msra.mxu0 0.0
    %2369 = vmatprep.subr.mxu0 0.0
    %2370 = vmatpush1.msra.mxu0 0.0
    %2371 = vmatprep.subr.mxu0 0.0
    %2372 = vmatpush1.msra.mxu0 0.0
    %2373 = vmatprep.subr.mxu0 0.0
    %2374 = vmatpush1.msra.mxu0 0.0
    %2375 = vmatprep.subr.mxu0 0.0
    %2376 = vmatpush1.msra.mxu0 0.0
    %2377 = vmatprep.subr.mxu0 0.0
    %2378 = vmatpush1.msra.mxu0 0.0
    %2379 = vmatprep.subr.mxu0 0.0
    %2380 = vmatpush1.msra.mxu0 0.0
    %2381 = vmatprep.subr.mxu0 0.0
    %2382 = vmatpush1.msra.mxu0 0.0
    %2383 = vmatprep.subr.mxu0 0.0
    %2384 = vmatpush1.msra.mxu0 0.0
    %2385 = vmatprep.subr.mxu0 0.0
    %2386 = vmatpush1.msra.mxu0 0.0
    %2387 = vmatprep.subr.mxu0 0.0
    %2388 = vmatpush1.msra.mxu0 0.0
    %2389 = vmatprep.subr.mxu0 0.0
    %2390 = vmatpush1.msra.mxu0 0.0
    %2391 = vmatprep.subr.mxu0 0.0
    %2392 = vmatpush1.msra.mxu0 0.0
    %2393 = vmatprep.subr.mxu0 0.0
    %2394 = vmatpush1.msra.mxu0 0.0
    %2395 = vmatprep.subr.mxu0 0.0
    %2396 = vmatpush1.msra.mxu0 0.0
    %2397 = vmatprep.mubr.f32.mxu0 0.0
    %2398 = vmatmul.mubr.f32.gmra.mrb[0].mxu0 %v2325
    %v2399 = vpop.f32.mrb[0].mxu0
    %v2400 = vadd.f32 %v2322, %v2399
    %v2401 = vpop.f32.mrb[0].mxu0
    %2402 = vmatprep.mubr.f32.mxu0 0.0
    %2403 = vmatmul.mubr.f32.gmra.mrb[0].mxu0 %v2328
    %v2404 = vpop.f32.mrb[0].mxu0
    %v2405 = vadd.f32 %v2322, %v2404
    %v2406 = vpop.f32.mrb[0].mxu0
    %2407 = vmatprep.mubr.f32.mxu0 0.0
    %2408 = vmatmul.mubr.f32.gmra.mrb[0].mxu0 %v2331
    %v2409 = vpop.f32.mrb[0].mxu0
    %v2410 = vadd.f32 %v2322, %v2409
    %v2411 = vpop.f32.mrb[0].mxu0
    %2412 = vdwg.mxu0
    %v2413 = vsel %vm172, %v2400, 0.0
    %v2414 = vsel %vm172, %v2405, 0.0
    %2417 = vrot.lane.b32.xlu0 %v2400, 96
    %v2418 = vpop.permute.xlu0 %2417
    %2419 = vrot.lane.b32.xlu0 %v2405, 96
    %v2420 = vpop.permute.xlu0 %2419
    %v2422 = vsel %vm156, %v2413, 0
    %v2425 = vsel %vm156, %v2414, 0
    %v2427 = vsel %vm156, %v2418, 0
    %v2429 = vsel %vm156, %v2420, 0
    %2431 = vmatprep.subr.mxu0 0.0
    %2432 = vmatpush1.xpose.msra.mxu0 %v2427
    %2433 = vmatprep.subr.mxu0 0.0
    %2434 = vmatpush1.xpose.msra.mxu0 %v2429
    %2435 = vmatprep.subr.mxu0 0.0
    %2436 = vmatpush1.xpose.msra.mxu0 0.0
    %2437 = vmatprep.subr.mxu0 0.0
    %2438 = vmatpush1.xpose.msra.mxu0 0.0
    %2439 = vmatprep.subr.mxu0 0.0
    %2440 = vmatpush1.xpose.msra.mxu0 0.0
    %2441 = vmatprep.subr.mxu0 0.0
    %2442 = vmatpush1.xpose.msra.mxu0 0.0
    %2443 = vmatprep.subr.mxu0 0.0
    %2444 = vmatpush1.xpose.msra.mxu0 0.0
    %2445 = vmatprep.subr.mxu0 0.0
    %2446 = vmatpush1.xpose.msra.mxu0 0.0
    %2447 = vmatprep.subr.mxu0 0.0
    %2448 = vmatpush1.xpose.msra.mxu0 0.0
    %2449 = vmatprep.subr.mxu0 0.0
    %2450 = vmatpush1.xpose.msra.mxu0 0.0
    %2451 = vmatprep.subr.mxu0 0.0
    %2452 = vmatpush1.xpose.msra.mxu0 0.0
    %2453 = vmatprep.subr.mxu0 0.0
    %2454 = vmatpush1.xpose.msra.mxu0 0.0
    %2455 = vmatprep.subr.mxu0 0.0
    %2456 = vmatpush1.xpose.msra.mxu0 0.0
    %2457 = vmatprep.subr.mxu0 0.0
    %2458 = vmatpush1.xpose.msra.mxu0 0.0
    %2459 = vmatprep.subr.mxu0 0.0
    %2460 = vmatpush1.xpose.msra.mxu0 0.0
    %2461 = vmatprep.subr.mxu0 0.0
    %2462 = vmatpush1.xpose.msra.mxu0 0.0
    %2463 = vmatprep.subr.mxu0 0.0
    %2464 = vmatpush1.xpose.msra.mxu0 0.0
    %2465 = vmatprep.subr.mxu0 0.0
    %2466 = vmatpush1.xpose.msra.mxu0 0.0
    %2467 = vmatprep.subr.mxu0 0.0
    %2468 = vmatpush1.xpose.msra.mxu0 0.0
    %2469 = vmatprep.subr.mxu0 0.0
    %2470 = vmatpush1.xpose.msra.mxu0 0.0
    %2471 = vmatprep.subr.mxu0 0.0
    %2472 = vmatpush1.xpose.msra.mxu0 0.0
    %2473 = vmatprep.subr.mxu0 0.0
    %2474 = vmatpush1.xpose.msra.mxu0 0.0
    %2475 = vmatprep.subr.mxu0 0.0
    %2476 = vmatpush1.xpose.msra.mxu0 0.0
    %2477 = vmatprep.subr.mxu0 0.0
    %2478 = vmatpush1.xpose.msra.mxu0 0.0
    %2479 = vmatprep.subr.mxu0 0.0
    %2480 = vmatpush1.xpose.msra.mxu0 0.0
    %2481 = vmatprep.subr.mxu0 0.0
    %2482 = vmatpush1.xpose.msra.mxu0 0.0
    %2483 = vmatprep.subr.mxu0 0.0
    %2484 = vmatpush1.xpose.msra.mxu0 0.0
    %2485 = vmatprep.subr.mxu0 0.0
    %2486 = vmatpush1.xpose.msra.mxu0 0.0
    %2487 = vmatprep.subr.mxu0 0.0
    %2488 = vmatpush1.xpose.msra.mxu0 0.0
    %2489 = vmatprep.subr.mxu0 0.0
    %2490 = vmatpush1.xpose.msra.mxu0 0.0
    %2491 = vmatprep.subr.mxu0 0.0
    %2492 = vmatpush1.xpose.msra.mxu0 0.0
    %2493 = vmatprep.subr.mxu0 0.0
    %2494 = vmatpush1.xpose.msra.mxu0 0.0
    %2495 = vmatprep.mubr.f32.mxu0 0.0
    %2496 = vmatmul.mubr.f32.gmra.mrb[0].mxu0 %v2422
    %v2497 = vpop.f32.mrb[0].mxu0
    %v2498 = vadd.f32 0.0, %v2497
    %v2499 = vpop.f32.mrb[0].mxu0
    %2500 = vmatprep.mubr.f32.mxu0 0.0
    %2501 = vmatmul.mubr.f32.gmra.mrb[0].mxu0 %v2425
    %v2502 = vpop.f32.mrb[0].mxu0
    %v2503 = vadd.f32 0.0, %v2502
    %v2504 = vpop.f32.mrb[0].mxu0
    %2505 = vdwg.mxu0
    %v2506 = vsel %vm376, %v2498, -inf
    %2507 = vmax.xlane.f32.xlu0 %v2506
    %v2508 = vpop.xlane.xlu0 %2507
    %v2509 = vsel %vm380, %v2503, -inf
    %2510 = vmax.xlane.f32.xlu0 %v2509
    %v2511 = vpop.xlane.xlu0 %2510
    %v2512 = vsub.f32 %v2498, %v2508
    %v2513 = vsub.f32 %v2503, %v2511
    %v2514 = vmul.f32 %v2512, 1.442695
    %v2515 = vpow.pop %v2514
    %v2516 = vmul.f32 %v2513, 1.442695
    %v2517 = vpow.pop %v2516
    %v2518 = vsel %vm376, %v2515, 0.0
    %2519 = vadd.xlane.f32.xlu0 %v2518
    %v2520 = vpop.xlane.xlu0 %2519
    %v2521 = vsel %vm380, %v2517, 0.0
    %2522 = vadd.xlane.f32.xlu0 %v2521
    %v2523 = vpop.xlane.xlu0 %2522
    %v2524 = vrcp.pop %v2520
    %v2525 = vrcp.pop %v2523
    %v2526 = vmul.f32 %v2515, %v2524
    %v2527 = vmul.f32 %v2517, %v2525
    %2528 = vrot.lane.b32.xlu0 %v2400, 64
    %v2529 = vpop.permute.xlu0 %2528
    %2530 = vrot.lane.b32.xlu0 %v2405, 64
    %v2531 = vpop.permute.xlu0 %2530
    %v2534 = vsel %vm172, %v2529, 0.0
    %v2535 = vsel %vm172, %v2531, 0.0
    %v2536 = vadd.f32 %v2526, 0.0
    %v2537 = vadd.f32 %v2527, 0.0
    %v2538 = vsel %vm175, %v2400, 0.0
    %v2539 = vsel %vm175, %v2405, 0.0
    %v2541 = vsel %vm156, %v2538, 0
    %v2544 = vsel %vm156, %v2539, 0
    %2546 = vmatprep.subr.mxu0 0.0
    %2547 = vmatpush1.xpose.msra.mxu0 %v2427
    %2548 = vmatprep.subr.mxu0 0.0
    %2549 = vmatpush1.xpose.msra.mxu0 %v2429
    %2550 = vmatprep.subr.mxu0 0.0
    %2551 = vmatpush1.xpose.msra.mxu0 0.0
    %2552 = vmatprep.subr.mxu0 0.0
    %2553 = vmatpush1.xpose.msra.mxu0 0.0
    %2554 = vmatprep.subr.mxu0 0.0
    %2555 = vmatpush1.xpose.msra.mxu0 0.0
    %2556 = vmatprep.subr.mxu0 0.0
    %2557 = vmatpush1.xpose.msra.mxu0 0.0
    %2558 = vmatprep.subr.mxu0 0.0
    %2559 = vmatpush1.xpose.msra.mxu0 0.0
    %2560 = vmatprep.subr.mxu0 0.0
    %2561 = vmatpush1.xpose.msra.mxu0 0.0
    %2562 = vmatprep.subr.mxu0 0.0
    %2563 = vmatpush1.xpose.msra.mxu0 0.0
    %2564 = vmatprep.subr.mxu0 0.0
    %2565 = vmatpush1.xpose.msra.mxu0 0.0
    %2566 = vmatprep.subr.mxu0 0.0
    %2567 = vmatpush1.xpose.msra.mxu0 0.0
    %2568 = vmatprep.subr.mxu0 0.0
    %2569 = vmatpush1.xpose.msra.mxu0 0.0
    %2570 = vmatprep.subr.mxu0 0.0
    %2571 = vmatpush1.xpose.msra.mxu0 0.0
    %2572 = vmatprep.subr.mxu0 0.0
    %2573 = vmatpush1.xpose.msra.mxu0 0.0
    %2574 = vmatprep.subr.mxu0 0.0
    %2575 = vmatpush1.xpose.msra.mxu0 0.0
    %2576 = vmatprep.subr.mxu0 0.0
    %2577 = vmatpush1.xpose.msra.mxu0 0.0
    %2578 = vmatprep.subr.mxu0 0.0
    %2579 = vmatpush1.xpose.msra.mxu0 0.0
    %2580 = vmatprep.subr.mxu0 0.0
    %2581 = vmatpush1.xpose.msra.mxu0 0.0
    %2582 = vmatprep.subr.mxu0 0.0
    %2583 = vmatpush1.xpose.msra.mxu0 0.0
    %2584 = vmatprep.subr.mxu0 0.0
    %2585 = vmatpush1.xpose.msra.mxu0 0.0
    %2586 = vmatprep.subr.mxu0 0.0
    %2587 = vmatpush1.xpose.msra.mxu0 0.0
    %2588 = vmatprep.subr.mxu0 0.0
    %2589 = vmatpush1.xpose.msra.mxu0 0.0
    %2590 = vmatprep.subr.mxu0 0.0
    %2591 = vmatpush1.xpose.msra.mxu0 0.0
    %2592 = vmatprep.subr.mxu0 0.0
    %2593 = vmatpush1.xpose.msra.mxu0 0.0
    %2594 = vmatprep.subr.mxu0 0.0
    %2595 = vmatpush1.xpose.msra.mxu0 0.0
    %2596 = vmatprep.subr.mxu0 0.0
    %2597 = vmatpush1.xpose.msra.mxu0 0.0
    %2598 = vmatprep.subr.mxu0 0.0
    %2599 = vmatpush1.xpose.msra.mxu0 0.0
    %2600 = vmatprep.subr.mxu0 0.0
    %2601 = vmatpush1.xpose.msra.mxu0 0.0
    %2602 = vmatprep.subr.mxu0 0.0
    %2603 = vmatpush1.xpose.msra.mxu0 0.0
    %2604 = vmatprep.subr.mxu0 0.0
    %2605 = vmatpush1.xpose.msra.mxu0 0.0
    %2606 = vmatprep.subr.mxu0 0.0
    %2607 = vmatpush1.xpose.msra.mxu0 0.0
    %2608 = vmatprep.subr.mxu0 0.0
    %2609 = vmatpush1.xpose.msra.mxu0 0.0
    %2610 = vmatprep.mubr.f32.mxu0 0.0
    %2611 = vmatmul.mubr.f32.gmra.mrb[0].mxu0 %v2541
    %v2612 = vpop.f32.mrb[0].mxu0
    %v2613 = vadd.f32 0.0, %v2612
    %v2614 = vpop.f32.mrb[0].mxu0
    %2615 = vmatprep.mubr.f32.mxu0 0.0
    %2616 = vmatmul.mubr.f32.gmra.mrb[0].mxu0 %v2544
    %v2617 = vpop.f32.mrb[0].mxu0
    %v2618 = vadd.f32 0.0, %v2617
    %v2619 = vpop.f32.mrb[0].mxu0
    %2620 = vdwg.mxu0
    %v2621 = vsel %vm376, %v2613, -inf
    %2622 = vmax.xlane.f32.xlu0 %v2621
    %v2623 = vpop.xlane.xlu0 %2622
    %v2624 = vsel %vm380, %v2618, -inf
    %2625 = vmax.xlane.f32.xlu0 %v2624
    %v2626 = vpop.xlane.xlu0 %2625
    %v2627 = vsub.f32 %v2613, %v2623
    %v2628 = vsub.f32 %v2618, %v2626
    %v2629 = vmul.f32 %v2627, 1.442695
    %v2630 = vpow.pop %v2629
    %v2631 = vmul.f32 %v2628, 1.442695
    %v2632 = vpow.pop %v2631
    %v2633 = vsel %vm376, %v2630, 0.0
    %2634 = vadd.xlane.f32.xlu0 %v2633
    %v2635 = vpop.xlane.xlu0 %2634
    %v2636 = vsel %vm380, %v2632, 0.0
    %2637 = vadd.xlane.f32.xlu0 %v2636
    %v2638 = vpop.xlane.xlu0 %2637
    %v2639 = vrcp.pop %v2635
    %v2640 = vrcp.pop %v2638
    %v2641 = vmul.f32 %v2630, %v2639
    %v2642 = vmul.f32 %v2632, %v2640
    %v2643 = vsel %vm175, %v2529, 0.0
    %v2644 = vsel %vm175, %v2531, 0.0
    %v2646 = vsel %vm376, %v2641, 0
    %v2649 = vsel %vm376, %v2642, 0
    %v2652 = vsel %vm523, %v2644, 0
    %2654 = vmatprep.subr.mxu0 0.0
    %2655 = vmatpush1.msra.mxu0 %v2643
    %2656 = vmatprep.subr.mxu0 0.0
    %2657 = vmatpush1.msra.mxu0 %v2652
    %2658 = vmatprep.subr.mxu0 0.0
    %2659 = vmatpush1.msra.mxu0 0.0
    %2660 = vmatprep.subr.mxu0 0.0
    %2661 = vmatpush1.msra.mxu0 0.0
    %2662 = vmatprep.subr.mxu0 0.0
    %2663 = vmatpush1.msra.mxu0 0.0
    %2664 = vmatprep.subr.mxu0 0.0
    %2665 = vmatpush1.msra.mxu0 0.0
    %2666 = vmatprep.subr.mxu0 0.0
    %2667 = vmatpush1.msra.mxu0 0.0
    %2668 = vmatprep.subr.mxu0 0.0
    %2669 = vmatpush1.msra.mxu0 0.0
    %2670 = vmatprep.subr.mxu0 0.0
    %2671 = vmatpush1.msra.mxu0 0.0
    %2672 = vmatprep.subr.mxu0 0.0
    %2673 = vmatpush1.msra.mxu0 0.0
    %2674 = vmatprep.subr.mxu0 0.0
    %2675 = vmatpush1.msra.mxu0 0.0
    %2676 = vmatprep.subr.mxu0 0.0
    %2677 = vmatpush1.msra.mxu0 0.0
    %2678 = vmatprep.subr.mxu0 0.0
    %2679 = vmatpush1.msra.mxu0 0.0
    %2680 = vmatprep.subr.mxu0 0.0
    %2681 = vmatpush1.msra.mxu0 0.0
    %2682 = vmatprep.subr.mxu0 0.0
    %2683 = vmatpush1.msra.mxu0 0.0
    %2684 = vmatprep.subr.mxu0 0.0
    %2685 = vmatpush1.msra.mxu0 0.0
    %2686 = vmatprep.subr.mxu0 0.0
    %2687 = vmatpush1.msra.mxu0 0.0
    %2688 = vmatprep.subr.mxu0 0.0
    %2689 = vmatpush1.msra.mxu0 0.0
    %2690 = vmatprep.subr.mxu0 0.0
    %2691 = vmatpush1.msra.mxu0 0.0
    %2692 = vmatprep.subr.mxu0 0.0
    %2693 = vmatpush1.msra.mxu0 0.0
    %2694 = vmatprep.subr.mxu0 0.0
    %2695 = vmatpush1.msra.mxu0 0.0
    %2696 = vmatprep.subr.mxu0 0.0
    %2697 = vmatpush1.msra.mxu0 0.0
    %2698 = vmatprep.subr.mxu0 0.0
    %2699 = vmatpush1.msra.mxu0 0.0
    %2700 = vmatprep.subr.mxu0 0.0
    %2701 = vmatpush1.msra.mxu0 0.0
    %2702 = vmatprep.subr.mxu0 0.0
    %2703 = vmatpush1.msra.mxu0 0.0
    %2704 = vmatprep.subr.mxu0 0.0
    %2705 = vmatpush1.msra.mxu0 0.0
    %2706 = vmatprep.subr.mxu0 0.0
    %2707 = vmatpush1.msra.mxu0 0.0
    %2708 = vmatprep.subr.mxu0 0.0
    %2709 = vmatpush1.msra.mxu0 0.0
    %2710 = vmatprep.subr.mxu0 0.0
    %2711 = vmatpush1.msra.mxu0 0.0
    %2712 = vmatprep.subr.mxu0 0.0
    %2713 = vmatpush1.msra.mxu0 0.0
    %2714 = vmatprep.subr.mxu0 0.0
    %2715 = vmatpush1.msra.mxu0 0.0
    %2716 = vmatprep.subr.mxu0 0.0
    %2717 = vmatpush1.msra.mxu0 0.0
    %2718 = vmatprep.mubr.f32.mxu0 0.0
    %2719 = vmatmul.mubr.f32.gmra.mrb[0].mxu0 %v2646
    %v2720 = vpop.f32.mrb[0].mxu0
    %v2721 = vadd.f32 0.0, %v2720
    %v2722 = vpop.f32.mrb[0].mxu0
    %2723 = vmatprep.mubr.f32.mxu0 0.0
    %2724 = vmatmul.mubr.f32.gmra.mrb[0].mxu0 %v2649
    %v2725 = vpop.f32.mrb[0].mxu0
    %v2726 = vadd.f32 0.0, %v2725
    %v2727 = vpop.f32.mrb[0].mxu0
    %2728 = vdwg.mxu0
    %v2730 = vsel %vm376, %v2526, 0
    %v2733 = vsel %vm376, %v2527, 0
    %v2736 = vsel %vm523, %v2535, 0
    %2738 = vmatprep.subr.mxu0 0.0
    %2739 = vmatpush1.msra.mxu0 %v2534
    %2740 = vmatprep.subr.mxu0 0.0
    %2741 = vmatpush1.msra.mxu0 %v2736
    %2742 = vmatprep.subr.mxu0 0.0
    %2743 = vmatpush1.msra.mxu0 0.0
    %2744 = vmatprep.subr.mxu0 0.0
    %2745 = vmatpush1.msra.mxu0 0.0
    %2746 = vmatprep.subr.mxu0 0.0
    %2747 = vmatpush1.msra.mxu0 0.0
    %2748 = vmatprep.subr.mxu0 0.0
    %2749 = vmatpush1.msra.mxu0 0.0
    %2750 = vmatprep.subr.mxu0 0.0
    %2751 = vmatpush1.msra.mxu0 0.0
    %2752 = vmatprep.subr.mxu0 0.0
    %2753 = vmatpush1.msra.mxu0 0.0
    %2754 = vmatprep.subr.mxu0 0.0
    %2755 = vmatpush1.msra.mxu0 0.0
    %2756 = vmatprep.subr.mxu0 0.0
    %2757 = vmatpush1.msra.mxu0 0.0
    %2758 = vmatprep.subr.mxu0 0.0
    %2759 = vmatpush1.msra.mxu0 0.0
    %2760 = vmatprep.subr.mxu0 0.0
    %2761 = vmatpush1.msra.mxu0 0.0
    %2762 = vmatprep.subr.mxu0 0.0
    %2763 = vmatpush1.msra.mxu0 0.0
    %2764 = vmatprep.subr.mxu0 0.0
    %2765 = vmatpush1.msra.mxu0 0.0
    %2766 = vmatprep.subr.mxu0 0.0
    %2767 = vmatpush1.msra.mxu0 0.0
    %2768 = vmatprep.subr.mxu0 0.0
    %2769 = vmatpush1.msra.mxu0 0.0
    %2770 = vmatprep.subr.mxu0 0.0
    %2771 = vmatpush1.msra.mxu0 0.0
    %2772 = vmatprep.subr.mxu0 0.0
    %2773 = vmatpush1.msra.mxu0 0.0
    %2774 = vmatprep.subr.mxu0 0.0
    %2775 = vmatpush1.msra.mxu0 0.0
    %2776 = vmatprep.subr.mxu0 0.0
    %2777 = vmatpush1.msra.mxu0 0.0
    %2778 = vmatprep.subr.mxu0 0.0
    %2779 = vmatpush1.msra.mxu0 0.0
    %2780 = vmatprep.subr.mxu0 0.0
    %2781 = vmatpush1.msra.mxu0 0.0
    %2782 = vmatprep.subr.mxu0 0.0
    %2783 = vmatpush1.msra.mxu0 0.0
    %2784 = vmatprep.subr.mxu0 0.0
    %2785 = vmatpush1.msra.mxu0 0.0
    %2786 = vmatprep.subr.mxu0 0.0
    %2787 = vmatpush1.msra.mxu0 0.0
    %2788 = vmatprep.subr.mxu0 0.0
    %2789 = vmatpush1.msra.mxu0 0.0
    %2790 = vmatprep.subr.mxu0 0.0
    %2791 = vmatpush1.msra.mxu0 0.0
    %2792 = vmatprep.subr.mxu0 0.0
    %2793 = vmatpush1.msra.mxu0 0.0
    %2794 = vmatprep.subr.mxu0 0.0
    %2795 = vmatpush1.msra.mxu0 0.0
    %2796 = vmatprep.subr.mxu0 0.0
    %2797 = vmatpush1.msra.mxu0 0.0
    %2798 = vmatprep.subr.mxu0 0.0
    %2799 = vmatpush1.msra.mxu0 0.0
    %2800 = vmatprep.subr.mxu0 0.0
    %2801 = vmatpush1.msra.mxu0 0.0
    %2802 = vmatprep.mubr.f32.mxu0 0.0
    %2803 = vmatmul.mubr.f32.gmra.mrb[0].mxu0 %v2730
    %v2804 = vpop.f32.mrb[0].mxu0
    %v2805 = vadd.f32 %v2721, %v2804
    %v2806 = vpop.f32.mrb[0].mxu0
    %2807 = vmatprep.mubr.f32.mxu0 0.0
    %2808 = vmatmul.mubr.f32.gmra.mrb[0].mxu0 %v2733
    %v2809 = vpop.f32.mrb[0].mxu0
    %v2810 = vadd.f32 %v2726, %v2809
    %v2811 = vpop.f32.mrb[0].mxu0
    %2812 = vdwg.mxu0
    %v2813 = vadd.f32 %v2536, %v2641
    %v2814 = vadd.f32 %v2537, %v2642
    %v2815 = vsel %vm178, %v2400, 0.0
    %v2816 = vsel %vm178, %v2405, 0.0
    %v2818 = vsel %vm156, %v2815, 0
    %v2821 = vsel %vm156, %v2816, 0
    %2823 = vmatprep.subr.mxu0 0.0
    %2824 = vmatpush1.xpose.msra.mxu0 %v2427
    %2825 = vmatprep.subr.mxu0 0.0
    %2826 = vmatpush1.xpose.msra.mxu0 %v2429
    %2827 = vmatprep.subr.mxu0 0.0
    %2828 = vmatpush1.xpose.msra.mxu0 0.0
    %2829 = vmatprep.subr.mxu0 0.0
    %2830 = vmatpush1.xpose.msra.mxu0 0.0
    %2831 = vmatprep.subr.mxu0 0.0
    %2832 = vmatpush1.xpose.msra.mxu0 0.0
    %2833 = vmatprep.subr.mxu0 0.0
    %2834 = vmatpush1.xpose.msra.mxu0 0.0
    %2835 = vmatprep.subr.mxu0 0.0
    %2836 = vmatpush1.xpose.msra.mxu0 0.0
    %2837 = vmatprep.subr.mxu0 0.0
    %2838 = vmatpush1.xpose.msra.mxu0 0.0
    %2839 = vmatprep.subr.mxu0 0.0
    %2840 = vmatpush1.xpose.msra.mxu0 0.0
    %2841 = vmatprep.subr.mxu0 0.0
    %2842 = vmatpush1.xpose.msra.mxu0 0.0
    %2843 = vmatprep.subr.mxu0 0.0
    %2844 = vmatpush1.xpose.msra.mxu0 0.0
    %2845 = vmatprep.subr.mxu0 0.0
    %2846 = vmatpush1.xpose.msra.mxu0 0.0
    %2847 = vmatprep.subr.mxu0 0.0
    %2848 = vmatpush1.xpose.msra.mxu0 0.0
    %2849 = vmatprep.subr.mxu0 0.0
    %2850 = vmatpush1.xpose.msra.mxu0 0.0
    %2851 = vmatprep.subr.mxu0 0.0
    %2852 = vmatpush1.xpose.msra.mxu0 0.0
    %2853 = vmatprep.subr.mxu0 0.0
    %2854 = vmatpush1.xpose.msra.mxu0 0.0
    %2855 = vmatprep.subr.mxu0 0.0
    %2856 = vmatpush1.xpose.msra.mxu0 0.0
    %2857 = vmatprep.subr.mxu0 0.0
    %2858 = vmatpush1.xpose.msra.mxu0 0.0
    %2859 = vmatprep.subr.mxu0 0.0
    %2860 = vmatpush1.xpose.msra.mxu0 0.0
    %2861 = vmatprep.subr.mxu0 0.0
    %2862 = vmatpush1.xpose.msra.mxu0 0.0
    %2863 = vmatprep.subr.mxu0 0.0
    %2864 = vmatpush1.xpose.msra.mxu0 0.0
    %2865 = vmatprep.subr.mxu0 0.0
    %2866 = vmatpush1.xpose.msra.mxu0 0.0
    %2867 = vmatprep.subr.mxu0 0.0
    %2868 = vmatpush1.xpose.msra.mxu0 0.0
    %2869 = vmatprep.subr.mxu0 0.0
    %2870 = vmatpush1.xpose.msra.mxu0 0.0
    %2871 = vmatprep.subr.mxu0 0.0
    %2872 = vmatpush1.xpose.msra.mxu0 0.0
    %2873 = vmatprep.subr.mxu0 0.0
    %2874 = vmatpush1.xpose.msra.mxu0 0.0
    %2875 = vmatprep.subr.mxu0 0.0
    %2876 = vmatpush1.xpose.msra.mxu0 0.0
    %2877 = vmatprep.subr.mxu0 0.0
    %2878 = vmatpush1.xpose.msra.mxu0 0.0
    %2879 = vmatprep.subr.mxu0 0.0
    %2880 = vmatpush1.xpose.msra.mxu0 0.0
    %2881 = vmatprep.subr.mxu0 0.0
    %2882 = vmatpush1.xpose.msra.mxu0 0.0
    %2883 = vmatprep.subr.mxu0 0.0
    %2884 = vmatpush1.xpose.msra.mxu0 0.0
    %2885 = vmatprep.subr.mxu0 0.0
    %2886 = vmatpush1.xpose.msra.mxu0 0.0
    %2887 = vmatprep.mubr.f32.mxu0 0.0
    %2888 = vmatmul.mubr.f32.gmra.mrb[0].mxu0 %v2818
    %v2889 = vpop.f32.mrb[0].mxu0
    %v2890 = vadd.f32 0.0, %v2889
    %v2891 = vpop.f32.mrb[0].mxu0
    %2892 = vmatprep.mubr.f32.mxu0 0.0
    %2893 = vmatmul.mubr.f32.gmra.mrb[0].mxu0 %v2821
    %v2894 = vpop.f32.mrb[0].mxu0
    %v2895 = vadd.f32 0.0, %v2894
    %v2896 = vpop.f32.mrb[0].mxu0
    %2897 = vdwg.mxu0
    %v2898 = vsel %vm376, %v2890, -inf
    %2899 = vmax.xlane.f32.xlu0 %v2898
    %v2900 = vpop.xlane.xlu0 %2899
    %v2901 = vsel %vm380, %v2895, -inf
    %2902 = vmax.xlane.f32.xlu0 %v2901
    %v2903 = vpop.xlane.xlu0 %2902
    %v2904 = vsub.f32 %v2890, %v2900
    %v2905 = vsub.f32 %v2895, %v2903
    %v2906 = vmul.f32 %v2904, 1.442695
    %v2907 = vpow.pop %v2906
    %v2908 = vmul.f32 %v2905, 1.442695
    %v2909 = vpow.pop %v2908
    %v2910 = vsel %vm376, %v2907, 0.0
    %2911 = vadd.xlane.f32.xlu0 %v2910
    %v2912 = vpop.xlane.xlu0 %2911
    %v2913 = vsel %vm380, %v2909, 0.0
    %2914 = vadd.xlane.f32.xlu0 %v2913
    %v2915 = vpop.xlane.xlu0 %2914
    %v2916 = vrcp.pop %v2912
    %v2917 = vrcp.pop %v2915
    %v2918 = vmul.f32 %v2907, %v2916
    %v2919 = vmul.f32 %v2909, %v2917
    %v2920 = vsel %vm178, %v2529, 0.0
    %v2921 = vsel %vm178, %v2531, 0.0
    %v2923 = vsel %vm376, %v2918, 0
    %v2926 = vsel %vm376, %v2919, 0
    %v2929 = vsel %vm523, %v2921, 0
    %2931 = vmatprep.subr.mxu0 0.0
    %2932 = vmatpush1.msra.mxu0 %v2920
    %2933 = vmatprep.subr.mxu0 0.0
    %2934 = vmatpush1.msra.mxu0 %v2929
    %2935 = vmatprep.subr.mxu0 0.0
    %2936 = vmatpush1.msra.mxu0 0.0
    %2937 = vmatprep.subr.mxu0 0.0
    %2938 = vmatpush1.msra.mxu0 0.0
    %2939 = vmatprep.subr.mxu0 0.0
    %2940 = vmatpush1.msra.mxu0 0.0
    %2941 = vmatprep.subr.mxu0 0.0
    %2942 = vmatpush1.msra.mxu0 0.0
    %2943 = vmatprep.subr.mxu0 0.0
    %2944 = vmatpush1.msra.mxu0 0.0
    %2945 = vmatprep.subr.mxu0 0.0
    %2946 = vmatpush1.msra.mxu0 0.0
    %2947 = vmatprep.subr.mxu0 0.0
    %2948 = vmatpush1.msra.mxu0 0.0
    %2949 = vmatprep.subr.mxu0 0.0
    %2950 = vmatpush1.msra.mxu0 0.0
    %2951 = vmatprep.subr.mxu0 0.0
    %2952 = vmatpush1.msra.mxu0 0.0
    %2953 = vmatprep.subr.mxu0 0.0
    %2954 = vmatpush1.msra.mxu0 0.0
    %2955 = vmatprep.subr.mxu0 0.0
    %2956 = vmatpush1.msra.mxu0 0.0
    %2957 = vmatprep.subr.mxu0 0.0
    %2958 = vmatpush1.msra.mxu0 0.0
    %2959 = vmatprep.subr.mxu0 0.0
    %2960 = vmatpush1.msra.mxu0 0.0
    %2961 = vmatprep.subr.mxu0 0.0
    %2962 = vmatpush1.msra.mxu0 0.0
    %2963 = vmatprep.subr.mxu0 0.0
    %2964 = vmatpush1.msra.mxu0 0.0
    %2965 = vmatprep.subr.mxu0 0.0
    %2966 = vmatpush1.msra.mxu0 0.0
    %2967 = vmatprep.subr.mxu0 0.0
    %2968 = vmatpush1.msra.mxu0 0.0
    %2969 = vmatprep.subr.mxu0 0.0
    %2970 = vmatpush1.msra.mxu0 0.0
    %2971 = vmatprep.subr.mxu0 0.0
    %2972 = vmatpush1.msra.mxu0 0.0
    %2973 = vmatprep.subr.mxu0 0.0
    %2974 = vmatpush1.msra.mxu0 0.0
    %2975 = vmatprep.subr.mxu0 0.0
    %2976 = vmatpush1.msra.mxu0 0.0
    %2977 = vmatprep.subr.mxu0 0.0
    %2978 = vmatpush1.msra.mxu0 0.0
    %2979 = vmatprep.subr.mxu0 0.0
    %2980 = vmatpush1.msra.mxu0 0.0
    %2981 = vmatprep.subr.mxu0 0.0
    %2982 = vmatpush1.msra.mxu0 0.0
    %2983 = vmatprep.subr.mxu0 0.0
    %2984 = vmatpush1.msra.mxu0 0.0
    %2985 = vmatprep.subr.mxu0 0.0
    %2986 = vmatpush1.msra.mxu0 0.0
    %2987 = vmatprep.subr.mxu0 0.0
    %2988 = vmatpush1.msra.mxu0 0.0
    %2989 = vmatprep.subr.mxu0 0.0
    %2990 = vmatpush1.msra.mxu0 0.0
    %2991 = vmatprep.subr.mxu0 0.0
    %2992 = vmatpush1.msra.mxu0 0.0
    %2993 = vmatprep.subr.mxu0 0.0
    %2994 = vmatpush1.msra.mxu0 0.0
    %2995 = vmatprep.mubr.f32.mxu0 0.0
    %2996 = vmatmul.mubr.f32.gmra.mrb[0].mxu0 %v2923
    %v2997 = vpop.f32.mrb[0].mxu0
    %v2998 = vadd.f32 0.0, %v2997
    %v2999 = vpop.f32.mrb[0].mxu0
    %3000 = vmatprep.mubr.f32.mxu0 0.0
    %3001 = vmatmul.mubr.f32.gmra.mrb[0].mxu0 %v2926
    %v3002 = vpop.f32.mrb[0].mxu0
    %v3003 = vadd.f32 0.0, %v3002
    %v3004 = vpop.f32.mrb[0].mxu0
    %3005 = vdwg.mxu0
    %v3006 = vadd.f32 %v2805, %v2998
    %v3007 = vadd.f32 %v2810, %v3003
    %v3008 = vadd.f32 %v2813, %v2918
    %v3009 = vadd.f32 %v2814, %v2919
    %v3010 = vsel %vm181, %v2400, 0.0
    %v3011 = vsel %vm181, %v2405, 0.0
    %v3013 = vsel %vm156, %v3010, 0
    %v3016 = vsel %vm156, %v3011, 0
    %3018 = vmatprep.subr.mxu0 0.0
    %3019 = vmatpush1.xpose.msra.mxu0 %v2427
    %3020 = vmatprep.subr.mxu0 0.0
    %3021 = vmatpush1.xpose.msra.mxu0 %v2429
    %3022 = vmatprep.subr.mxu0 0.0
    %3023 = vmatpush1.xpose.msra.mxu0 0.0
    %3024 = vmatprep.subr.mxu0 0.0
    %3025 = vmatpush1.xpose.msra.mxu0 0.0
    %3026 = vmatprep.subr.mxu0 0.0
    %3027 = vmatpush1.xpose.msra.mxu0 0.0
    %3028 = vmatprep.subr.mxu0 0.0
    %3029 = vmatpush1.xpose.msra.mxu0 0.0
    %3030 = vmatprep.subr.mxu0 0.0
    %3031 = vmatpush1.xpose.msra.mxu0 0.0
    %3032 = vmatprep.subr.mxu0 0.0
    %3033 = vmatpush1.xpose.msra.mxu0 0.0
    %3034 = vmatprep.subr.mxu0 0.0
    %3035 = vmatpush1.xpose.msra.mxu0 0.0
    %3036 = vmatprep.subr.mxu0 0.0
    %3037 = vmatpush1.xpose.msra.mxu0 0.0
    %3038 = vmatprep.subr.mxu0 0.0
    %3039 = vmatpush1.xpose.msra.mxu0 0.0
    %3040 = vmatprep.subr.mxu0 0.0
    %3041 = vmatpush1.xpose.msra.mxu0 0.0
    %3042 = vmatprep.subr.mxu0 0.0
    %3043 = vmatpush1.xpose.msra.mxu0 0.0
    %3044 = vmatprep.subr.mxu0 0.0
    %3045 = vmatpush1.xpose.msra.mxu0 0.0
    %3046 = vmatprep.subr.mxu0 0.0
    %3047 = vmatpush1.xpose.msra.mxu0 0.0
    %3048 = vmatprep.subr.mxu0 0.0
    %3049 = vmatpush1.xpose.msra.mxu0 0.0
    %3050 = vmatprep.subr.mxu0 0.0
    %3051 = vmatpush1.xpose.msra.mxu0 0.0
    %3052 = vmatprep.subr.mxu0 0.0
    %3053 = vmatpush1.xpose.msra.mxu0 0.0
    %3054 = vmatprep.subr.mxu0 0.0
    %3055 = vmatpush1.xpose.msra.mxu0 0.0
    %3056 = vmatprep.subr.mxu0 0.0
    %3057 = vmatpush1.xpose.msra.mxu0 0.0
    %3058 = vmatprep.subr.mxu0 0.0
    %3059 = vmatpush1.xpose.msra.mxu0 0.0
    %3060 = vmatprep.subr.mxu0 0.0
    %3061 = vmatpush1.xpose.msra.mxu0 0.0
    %3062 = vmatprep.subr.mxu0 0.0
    %3063 = vmatpush1.xpose.msra.mxu0 0.0
    %3064 = vmatprep.subr.mxu0 0.0
    %3065 = vmatpush1.xpose.msra.mxu0 0.0
    %3066 = vmatprep.subr.mxu0 0.0
    %3067 = vmatpush1.xpose.msra.mxu0 0.0
    %3068 = vmatprep.subr.mxu0 0.0
    %3069 = vmatpush1.xpose.msra.mxu0 0.0
    %3070 = vmatprep.subr.mxu0 0.0
    %3071 = vmatpush1.xpose.msra.mxu0 0.0
    %3072 = vmatprep.subr.mxu0 0.0
    %3073 = vmatpush1.xpose.msra.mxu0 0.0
    %3074 = vmatprep.subr.mxu0 0.0
    %3075 = vmatpush1.xpose.msra.mxu0 0.0
    %3076 = vmatprep.subr.mxu0 0.0
    %3077 = vmatpush1.xpose.msra.mxu0 0.0
    %3078 = vmatprep.subr.mxu0 0.0
    %3079 = vmatpush1.xpose.msra.mxu0 0.0
    %3080 = vmatprep.subr.mxu0 0.0
    %3081 = vmatpush1.xpose.msra.mxu0 0.0
    %3082 = vmatprep.mubr.f32.mxu0 0.0
    %3083 = vmatmul.mubr.f32.gmra.mrb[0].mxu0 %v3013
    %v3084 = vpop.f32.mrb[0].mxu0
    %v3085 = vadd.f32 0.0, %v3084
    %v3086 = vpop.f32.mrb[0].mxu0
    %3087 = vmatprep.mubr.f32.mxu0 0.0
    %3088 = vmatmul.mubr.f32.gmra.mrb[0].mxu0 %v3016
    %v3089 = vpop.f32.mrb[0].mxu0
    %v3090 = vadd.f32 0.0, %v3089
    %v3091 = vpop.f32.mrb[0].mxu0
    %3092 = vdwg.mxu0
    %v3093 = vsel %vm376, %v3085, -inf
    %3094 = vmax.xlane.f32.xlu0 %v3093
    %v3095 = vpop.xlane.xlu0 %3094
    %v3096 = vsel %vm380, %v3090, -inf
    %3097 = vmax.xlane.f32.xlu0 %v3096
    %v3098 = vpop.xlane.xlu0 %3097
    %v3099 = vsub.f32 %v3085, %v3095
    %v3100 = vsub.f32 %v3090, %v3098
    %v3101 = vmul.f32 %v3099, 1.442695
    %v3102 = vpow.pop %v3101
    %v3103 = vmul.f32 %v3100, 1.442695
    %v3104 = vpow.pop %v3103
    %v3105 = vsel %vm376, %v3102, 0.0
    %3106 = vadd.xlane.f32.xlu0 %v3105
    %v3107 = vpop.xlane.xlu0 %3106
    %v3108 = vsel %vm380, %v3104, 0.0
    %3109 = vadd.xlane.f32.xlu0 %v3108
    %v3110 = vpop.xlane.xlu0 %3109
    %v3111 = vrcp.pop %v3107
    %v3112 = vrcp.pop %v3110
    %v3113 = vmul.f32 %v3102, %v3111
    %v3114 = vmul.f32 %v3104, %v3112
    %v3115 = vsel %vm181, %v2529, 0.0
    %v3116 = vsel %vm181, %v2531, 0.0
    %v3118 = vsel %vm376, %v3113, 0
    %v3121 = vsel %vm376, %v3114, 0
    %v3124 = vsel %vm523, %v3116, 0
    %3126 = vmatprep.subr.mxu0 0.0
    %3127 = vmatpush1.msra.mxu0 %v3115
    %3128 = vmatprep.subr.mxu0 0.0
    %3129 = vmatpush1.msra.mxu0 %v3124
    %3130 = vmatprep.subr.mxu0 0.0
    %3131 = vmatpush1.msra.mxu0 0.0
    %3132 = vmatprep.subr.mxu0 0.0
    %3133 = vmatpush1.msra.mxu0 0.0
    %3134 = vmatprep.subr.mxu0 0.0
    %3135 = vmatpush1.msra.mxu0 0.0
    %3136 = vmatprep.subr.mxu0 0.0
    %3137 = vmatpush1.msra.mxu0 0.0
    %3138 = vmatprep.subr.mxu0 0.0
    %3139 = vmatpush1.msra.mxu0 0.0
    %3140 = vmatprep.subr.mxu0 0.0
    %3141 = vmatpush1.msra.mxu0 0.0
    %3142 = vmatprep.subr.mxu0 0.0
    %3143 = vmatpush1.msra.mxu0 0.0
    %3144 = vmatprep.subr.mxu0 0.0
    %3145 = vmatpush1.msra.mxu0 0.0
    %3146 = vmatprep.subr.mxu0 0.0
    %3147 = vmatpush1.msra.mxu0 0.0
    %3148 = vmatprep.subr.mxu0 0.0
    %3149 = vmatpush1.msra.mxu0 0.0
    %3150 = vmatprep.subr.mxu0 0.0
    %3151 = vmatpush1.msra.mxu0 0.0
    %3152 = vmatprep.subr.mxu0 0.0
    %3153 = vmatpush1.msra.mxu0 0.0
    %3154 = vmatprep.subr.mxu0 0.0
    %3155 = vmatpush1.msra.mxu0 0.0
    %3156 = vmatprep.subr.mxu0 0.0
    %3157 = vmatpush1.msra.mxu0 0.0
    %3158 = vmatprep.subr.mxu0 0.0
    %3159 = vmatpush1.msra.mxu0 0.0
    %3160 = vmatprep.subr.mxu0 0.0
    %3161 = vmatpush1.msra.mxu0 0.0
    %3162 = vmatprep.subr.mxu0 0.0
    %3163 = vmatpush1.msra.mxu0 0.0
    %3164 = vmatprep.subr.mxu0 0.0
    %3165 = vmatpush1.msra.mxu0 0.0
    %3166 = vmatprep.subr.mxu0 0.0
    %3167 = vmatpush1.msra.mxu0 0.0
    %3168 = vmatprep.subr.mxu0 0.0
    %3169 = vmatpush1.msra.mxu0 0.0
    %3170 = vmatprep.subr.mxu0 0.0
    %3171 = vmatpush1.msra.mxu0 0.0
    %3172 = vmatprep.subr.mxu0 0.0
    %3173 = vmatpush1.msra.mxu0 0.0
    %3174 = vmatprep.subr.mxu0 0.0
    %3175 = vmatpush1.msra.mxu0 0.0
    %3176 = vmatprep.subr.mxu0 0.0
    %3177 = vmatpush1.msra.mxu0 0.0
    %3178 = vmatprep.subr.mxu0 0.0
    %3179 = vmatpush1.msra.mxu0 0.0
    %3180 = vmatprep.subr.mxu0 0.0
    %3181 = vmatpush1.msra.mxu0 0.0
    %3182 = vmatprep.subr.mxu0 0.0
    %3183 = vmatpush1.msra.mxu0 0.0
    %3184 = vmatprep.subr.mxu0 0.0
    %3185 = vmatpush1.msra.mxu0 0.0
    %3186 = vmatprep.subr.mxu0 0.0
    %3187 = vmatpush1.msra.mxu0 0.0
    %3188 = vmatprep.subr.mxu0 0.0
    %3189 = vmatpush1.msra.mxu0 0.0
    %3190 = vmatprep.mubr.f32.mxu0 0.0
    %3191 = vmatmul.mubr.f32.gmra.mrb[0].mxu0 %v3118
    %v3192 = vpop.f32.mrb[0].mxu0
    %v3193 = vadd.f32 0.0, %v3192
    %v3194 = vpop.f32.mrb[0].mxu0
    %3195 = vmatprep.mubr.f32.mxu0 0.0
    %3196 = vmatmul.mubr.f32.gmra.mrb[0].mxu0 %v3121
    %v3197 = vpop.f32.mrb[0].mxu0
    %v3198 = vadd.f32 0.0, %v3197
    %v3199 = vpop.f32.mrb[0].mxu0
    %3200 = vdwg.mxu0
    %v3201 = vadd.f32 %v3006, %v3193
    %v3202 = vadd.f32 %v3007, %v3198
    %v3203 = vadd.f32 %v3008, %v3113
    %v3204 = vadd.f32 %v3009, %v3114
    %3205 = vst.msk [vmem:[#allocation3] sm:$0xff] %vm156, %v3201
    %3206 = vst.msk [vmem:[#allocation3 + $0x8] sm:$0x3] %vm163, %v3202
    %v3207 = vmul.f32 %v3203, 0.25
    %v3208 = vmul.f32 %v3204, 0.25
    %s3209 = scalar_lea.vmem %s14, 32
    %3210 = vst.msk [vmem:[%s3209] sm:$0xff] %vm376, %v3207
    %3211 = vst.msk [vmem:[%s3209 + $0x8] sm:$0x3] %vm380, %v3208
    %v3212 = vsel %vm172, %v2410, 0.0
    %v3214 = vrot.slane %v2414, 2
    %v3215 = vrot.slane %v3212, 2
    %v3216 = vsel %vm1086, %v3214, %v3215
    %v3218 = vrot.slane %v2405, 2
    %v3219 = vrot.slane %v2410, 2
    %v3220 = vsel %vm1086, %v3218, %v3219
    %3221 = vrot.lane.b32.xlu0 %v3220, 96
    %v3222 = vpop.permute.xlu0 %3221
    %3223 = vrot.lane.b32.xlu0 %v3219, 96
    %v3224 = vpop.permute.xlu0 %3223
    %v3225 = vsel %vm156, %v3216, 0
    %v3227 = vsel %vm156, %v3215, 0
    %v3229 = vsel %vm156, %v3222, 0
    %v3231 = vsel %vm156, %v3224, 0
    %3233 = vmatprep.subr.mxu0 0.0
    %3234 = vmatpush1.xpose.msra.mxu0 %v3229
    %3235 = vmatprep.subr.mxu0 0.0
    %3236 = vmatpush1.xpose.msra.mxu0 %v3231
    %3237 = vmatprep.subr.mxu0 0.0
    %3238 = vmatpush1.xpose.msra.mxu0 0.0
    %3239 = vmatprep.subr.mxu0 0.0
    %3240 = vmatpush1.xpose.msra.mxu0 0.0
    %3241 = vmatprep.subr.mxu0 0.0
    %3242 = vmatpush1.xpose.msra.mxu0 0.0
    %3243 = vmatprep.subr.mxu0 0.0
    %3244 = vmatpush1.xpose.msra.mxu0 0.0
    %3245 = vmatprep.subr.mxu0 0.0
    %3246 = vmatpush1.xpose.msra.mxu0 0.0
    %3247 = vmatprep.subr.mxu0 0.0
    %3248 = vmatpush1.xpose.msra.mxu0 0.0
    %3249 = vmatprep.subr.mxu0 0.0
    %3250 = vmatpush1.xpose.msra.mxu0 0.0
    %3251 = vmatprep.subr.mxu0 0.0
    %3252 = vmatpush1.xpose.msra.mxu0 0.0
    %3253 = vmatprep.subr.mxu0 0.0
    %3254 = vmatpush1.xpose.msra.mxu0 0.0
    %3255 = vmatprep.subr.mxu0 0.0
    %3256 = vmatpush1.xpose.msra.mxu0 0.0
    %3257 = vmatprep.subr.mxu0 0.0
    %3258 = vmatpush1.xpose.msra.mxu0 0.0
    %3259 = vmatprep.subr.mxu0 0.0
    %3260 = vmatpush1.xpose.msra.mxu0 0.0
    %3261 = vmatprep.subr.mxu0 0.0
    %3262 = vmatpush1.xpose.msra.mxu0 0.0
    %3263 = vmatprep.subr.mxu0 0.0
    %3264 = vmatpush1.xpose.msra.mxu0 0.0
    %3265 = vmatprep.subr.mxu0 0.0
    %3266 = vmatpush1.xpose.msra.mxu0 0.0
    %3267 = vmatprep.subr.mxu0 0.0
    %3268 = vmatpush1.xpose.msra.mxu0 0.0
    %3269 = vmatprep.subr.mxu0 0.0
    %3270 = vmatpush1.xpose.msra.mxu0 0.0
    %3271 = vmatprep.subr.mxu0 0.0
    %3272 = vmatpush1.xpose.msra.mxu0 0.0
    %3273 = vmatprep.subr.mxu0 0.0
    %3274 = vmatpush1.xpose.msra.mxu0 0.0
    %3275 = vmatprep.subr.mxu0 0.0
    %3276 = vmatpush1.xpose.msra.mxu0 0.0
    %3277 = vmatprep.subr.mxu0 0.0
    %3278 = vmatpush1.xpose.msra.mxu0 0.0
    %3279 = vmatprep.subr.mxu0 0.0
    %3280 = vmatpush1.xpose.msra.mxu0 0.0
    %3281 = vmatprep.subr.mxu0 0.0
    %3282 = vmatpush1.xpose.msra.mxu0 0.0
    %3283 = vmatprep.subr.mxu0 0.0
    %3284 = vmatpush1.xpose.msra.mxu0 0.0
    %3285 = vmatprep.subr.mxu0 0.0
    %3286 = vmatpush1.xpose.msra.mxu0 0.0
    %3287 = vmatprep.subr.mxu0 0.0
    %3288 = vmatpush1.xpose.msra.mxu0 0.0
    %3289 = vmatprep.subr.mxu0 0.0
    %3290 = vmatpush1.xpose.msra.mxu0 0.0
    %3291 = vmatprep.subr.mxu0 0.0
    %3292 = vmatpush1.xpose.msra.mxu0 0.0
    %3293 = vmatprep.subr.mxu0 0.0
    %3294 = vmatpush1.xpose.msra.mxu0 0.0
    %3295 = vmatprep.subr.mxu0 0.0
    %3296 = vmatpush1.xpose.msra.mxu0 0.0
    %3297 = vmatprep.mubr.f32.mxu0 0.0
    %3298 = vmatmul.mubr.f32.gmra.mrb[0].mxu0 %v3225
    %v3299 = vpop.f32.mrb[0].mxu0
    %v3300 = vadd.f32 0.0, %v3299
    %v3301 = vpop.f32.mrb[0].mxu0
    %3302 = vmatprep.mubr.f32.mxu0 0.0
    %3303 = vmatmul.mubr.f32.gmra.mrb[0].mxu0 %v3227
    %v3304 = vpop.f32.mrb[0].mxu0
    %v3305 = vadd.f32 0.0, %v3304
    %v3306 = vpop.f32.mrb[0].mxu0
    %3307 = vdwg.mxu0
    %v3308 = vsel %vm376, %v3300, -inf
    %3309 = vmax.xlane.f32.xlu0 %v3308
    %v3310 = vpop.xlane.xlu0 %3309
    %v3311 = vsel %vm380, %v3305, -inf
    %3312 = vmax.xlane.f32.xlu0 %v3311
    %v3313 = vpop.xlane.xlu0 %3312
    %v3314 = vsub.f32 %v3300, %v3310
    %v3315 = vsub.f32 %v3305, %v3313
    %v3316 = vmul.f32 %v3314, 1.442695
    %v3317 = vpow.pop %v3316
    %v3318 = vmul.f32 %v3315, 1.442695
    %v3319 = vpow.pop %v3318
    %v3320 = vsel %vm376, %v3317, 0.0
    %3321 = vadd.xlane.f32.xlu0 %v3320
    %v3322 = vpop.xlane.xlu0 %3321
    %v3323 = vsel %vm380, %v3319, 0.0
    %3324 = vadd.xlane.f32.xlu0 %v3323
    %v3325 = vpop.xlane.xlu0 %3324
    %v3326 = vrcp.pop %v3322
    %v3327 = vrcp.pop %v3325
    %v3328 = vmul.f32 %v3317, %v3326
    %v3329 = vmul.f32 %v3319, %v3327
    %3330 = vrot.lane.b32.xlu0 %v3220, 64
    %v3331 = vpop.permute.xlu0 %3330
    %3332 = vrot.lane.b32.xlu0 %v3219, 64
    %v3333 = vpop.permute.xlu0 %3332
    %v3336 = vsel %vm172, %v3331, 0.0
    %v3337 = vsel %vm172, %v3333, 0.0
    %v3338 = vadd.f32 %v3328, 0.0
    %v3339 = vadd.f32 %v3329, 0.0
    %v3340 = vsel %vm175, %v2410, 0.0
    %v3342 = vrot.slane %v2539, 2
    %v3343 = vrot.slane %v3340, 2
    %v3344 = vsel %vm1086, %v3342, %v3343
    %v3345 = vsel %vm156, %v3344, 0
    %v3347 = vsel %vm156, %v3343, 0
    %3349 = vmatprep.subr.mxu0 0.0
    %3350 = vmatpush1.xpose.msra.mxu0 %v3229
    %3351 = vmatprep.subr.mxu0 0.0
    %3352 = vmatpush1.xpose.msra.mxu0 %v3231
    %3353 = vmatprep.subr.mxu0 0.0
    %3354 = vmatpush1.xpose.msra.mxu0 0.0
    %3355 = vmatprep.subr.mxu0 0.0
    %3356 = vmatpush1.xpose.msra.mxu0 0.0
    %3357 = vmatprep.subr.mxu0 0.0
    %3358 = vmatpush1.xpose.msra.mxu0 0.0
    %3359 = vmatprep.subr.mxu0 0.0
    %3360 = vmatpush1.xpose.msra.mxu0 0.0
    %3361 = vmatprep.subr.mxu0 0.0
    %3362 = vmatpush1.xpose.msra.mxu0 0.0
    %3363 = vmatprep.subr.mxu0 0.0
    %3364 = vmatpush1.xpose.msra.mxu0 0.0
    %3365 = vmatprep.subr.mxu0 0.0
    %3366 = vmatpush1.xpose.msra.mxu0 0.0
    %3367 = vmatprep.subr.mxu0 0.0
    %3368 = vmatpush1.xpose.msra.mxu0 0.0
    %3369 = vmatprep.subr.mxu0 0.0
    %3370 = vmatpush1.xpose.msra.mxu0 0.0
    %3371 = vmatprep.subr.mxu0 0.0
    %3372 = vmatpush1.xpose.msra.mxu0 0.0
    %3373 = vmatprep.subr.mxu0 0.0
    %3374 = vmatpush1.xpose.msra.mxu0 0.0
    %3375 = vmatprep.subr.mxu0 0.0
    %3376 = vmatpush1.xpose.msra.mxu0 0.0
    %3377 = vmatprep.subr.mxu0 0.0
    %3378 = vmatpush1.xpose.msra.mxu0 0.0
    %3379 = vmatprep.subr.mxu0 0.0
    %3380 = vmatpush1.xpose.msra.mxu0 0.0
    %3381 = vmatprep.subr.mxu0 0.0
    %3382 = vmatpush1.xpose.msra.mxu0 0.0
    %3383 = vmatprep.subr.mxu0 0.0
    %3384 = vmatpush1.xpose.msra.mxu0 0.0
    %3385 = vmatprep.subr.mxu0 0.0
    %3386 = vmatpush1.xpose.msra.mxu0 0.0
    %3387 = vmatprep.subr.mxu0 0.0
    %3388 = vmatpush1.xpose.msra.mxu0 0.0
    %3389 = vmatprep.subr.mxu0 0.0
    %3390 = vmatpush1.xpose.msra.mxu0 0.0
    %3391 = vmatprep.subr.mxu0 0.0
    %3392 = vmatpush1.xpose.msra.mxu0 0.0
    %3393 = vmatprep.subr.mxu0 0.0
    %3394 = vmatpush1.xpose.msra.mxu0 0.0
    %3395 = vmatprep.subr.mxu0 0.0
    %3396 = vmatpush1.xpose.msra.mxu0 0.0
    %3397 = vmatprep.subr.mxu0 0.0
    %3398 = vmatpush1.xpose.msra.mxu0 0.0
    %3399 = vmatprep.subr.mxu0 0.0
    %3400 = vmatpush1.xpose.msra.mxu0 0.0
    %3401 = vmatprep.subr.mxu0 0.0
    %3402 = vmatpush1.xpose.msra.mxu0 0.0
    %3403 = vmatprep.subr.mxu0 0.0
    %3404 = vmatpush1.xpose.msra.mxu0 0.0
    %3405 = vmatprep.subr.mxu0 0.0
    %3406 = vmatpush1.xpose.msra.mxu0 0.0
    %3407 = vmatprep.subr.mxu0 0.0
    %3408 = vmatpush1.xpose.msra.mxu0 0.0
    %3409 = vmatprep.subr.mxu0 0.0
    %3410 = vmatpush1.xpose.msra.mxu0 0.0
    %3411 = vmatprep.subr.mxu0 0.0
    %3412 = vmatpush1.xpose.msra.mxu0 0.0
    %3413 = vmatprep.mubr.f32.mxu0 0.0
    %3414 = vmatmul.mubr.f32.gmra.mrb[0].mxu0 %v3345
    %v3415 = vpop.f32.mrb[0].mxu0
    %v3416 = vadd.f32 0.0, %v3415
    %v3417 = vpop.f32.mrb[0].mxu0
    %3418 = vmatprep.mubr.f32.mxu0 0.0
    %3419 = vmatmul.mubr.f32.gmra.mrb[0].mxu0 %v3347
    %v3420 = vpop.f32.mrb[0].mxu0
    %v3421 = vadd.f32 0.0, %v3420
    %v3422 = vpop.f32.mrb[0].mxu0
    %3423 = vdwg.mxu0
    %v3424 = vsel %vm376, %v3416, -inf
    %3425 = vmax.xlane.f32.xlu0 %v3424
    %v3426 = vpop.xlane.xlu0 %3425
    %v3427 = vsel %vm380, %v3421, -inf
    %3428 = vmax.xlane.f32.xlu0 %v3427
    %v3429 = vpop.xlane.xlu0 %3428
    %v3430 = vsub.f32 %v3416, %v3426
    %v3431 = vsub.f32 %v3421, %v3429
    %v3432 = vmul.f32 %v3430, 1.442695
    %v3433 = vpow.pop %v3432
    %v3434 = vmul.f32 %v3431, 1.442695
    %v3435 = vpow.pop %v3434
    %v3436 = vsel %vm376, %v3433, 0.0
    %3437 = vadd.xlane.f32.xlu0 %v3436
    %v3438 = vpop.xlane.xlu0 %3437
    %v3439 = vsel %vm380, %v3435, 0.0
    %3440 = vadd.xlane.f32.xlu0 %v3439
    %v3441 = vpop.xlane.xlu0 %3440
    %v3442 = vrcp.pop %v3438
    %v3443 = vrcp.pop %v3441
    %v3444 = vmul.f32 %v3433, %v3442
    %v3445 = vmul.f32 %v3435, %v3443
    %v3446 = vsel %vm175, %v3331, 0.0
    %v3447 = vsel %vm175, %v3333, 0.0
    %v3449 = vsel %vm376, %v3444, 0
    %v3452 = vsel %vm376, %v3445, 0
    %v3455 = vsel %vm523, %v3447, 0
    %3457 = vmatprep.subr.mxu0 0.0
    %3458 = vmatpush1.msra.mxu0 %v3446
    %3459 = vmatprep.subr.mxu0 0.0
    %3460 = vmatpush1.msra.mxu0 %v3455
    %3461 = vmatprep.subr.mxu0 0.0
    %3462 = vmatpush1.msra.mxu0 0.0
    %3463 = vmatprep.subr.mxu0 0.0
    %3464 = vmatpush1.msra.mxu0 0.0
    %3465 = vmatprep.subr.mxu0 0.0
    %3466 = vmatpush1.msra.mxu0 0.0
    %3467 = vmatprep.subr.mxu0 0.0
    %3468 = vmatpush1.msra.mxu0 0.0
    %3469 = vmatprep.subr.mxu0 0.0
    %3470 = vmatpush1.msra.mxu0 0.0
    %3471 = vmatprep.subr.mxu0 0.0
    %3472 = vmatpush1.msra.mxu0 0.0
    %3473 = vmatprep.subr.mxu0 0.0
    %3474 = vmatpush1.msra.mxu0 0.0
    %3475 = vmatprep.subr.mxu0 0.0
    %3476 = vmatpush1.msra.mxu0 0.0
    %3477 = vmatprep.subr.mxu0 0.0
    %3478 = vmatpush1.msra.mxu0 0.0
    %3479 = vmatprep.subr.mxu0 0.0
    %3480 = vmatpush1.msra.mxu0 0.0
    %3481 = vmatprep.subr.mxu0 0.0
    %3482 = vmatpush1.msra.mxu0 0.0
    %3483 = vmatprep.subr.mxu0 0.0
    %3484 = vmatpush1.msra.mxu0 0.0
    %3485 = vmatprep.subr.mxu0 0.0
    %3486 = vmatpush1.msra.mxu0 0.0
    %3487 = vmatprep.subr.mxu0 0.0
    %3488 = vmatpush1.msra.mxu0 0.0
    %3489 = vmatprep.subr.mxu0 0.0
    %3490 = vmatpush1.msra.mxu0 0.0
    %3491 = vmatprep.subr.mxu0 0.0
    %3492 = vmatpush1.msra.mxu0 0.0
    %3493 = vmatprep.subr.mxu0 0.0
    %3494 = vmatpush1.msra.mxu0 0.0
    %3495 = vmatprep.subr.mxu0 0.0
    %3496 = vmatpush1.msra.mxu0 0.0
    %3497 = vmatprep.subr.mxu0 0.0
    %3498 = vmatpush1.msra.mxu0 0.0
    %3499 = vmatprep.subr.mxu0 0.0
    %3500 = vmatpush1.msra.mxu0 0.0
    %3501 = vmatprep.subr.mxu0 0.0
    %3502 = vmatpush1.msra.mxu0 0.0
    %3503 = vmatprep.subr.mxu0 0.0
    %3504 = vmatpush1.msra.mxu0 0.0
    %3505 = vmatprep.subr.mxu0 0.0
    %3506 = vmatpush1.msra.mxu0 0.0
    %3507 = vmatprep.subr.mxu0 0.0
    %3508 = vmatpush1.msra.mxu0 0.0
    %3509 = vmatprep.subr.mxu0 0.0
    %3510 = vmatpush1.msra.mxu0 0.0
    %3511 = vmatprep.subr.mxu0 0.0
    %3512 = vmatpush1.msra.mxu0 0.0
    %3513 = vmatprep.subr.mxu0 0.0
    %3514 = vmatpush1.msra.mxu0 0.0
    %3515 = vmatprep.subr.mxu0 0.0
    %3516 = vmatpush1.msra.mxu0 0.0
    %3517 = vmatprep.subr.mxu0 0.0
    %3518 = vmatpush1.msra.mxu0 0.0
    %3519 = vmatprep.subr.mxu0 0.0
    %3520 = vmatpush1.msra.mxu0 0.0
    %3521 = vmatprep.mubr.f32.mxu0 0.0
    %3522 = vmatmul.mubr.f32.gmra.mrb[0].mxu0 %v3449
    %v3523 = vpop.f32.mrb[0].mxu0
    %v3524 = vadd.f32 0.0, %v3523
    %v3525 = vpop.f32.mrb[0].mxu0
    %3526 = vmatprep.mubr.f32.mxu0 0.0
    %3527 = vmatmul.mubr.f32.gmra.mrb[0].mxu0 %v3452
    %v3528 = vpop.f32.mrb[0].mxu0
    %v3529 = vadd.f32 0.0, %v3528
    %v3530 = vpop.f32.mrb[0].mxu0
    %3531 = vdwg.mxu0
    %v3533 = vsel %vm376, %v3328, 0
    %v3536 = vsel %vm376, %v3329, 0
    %v3539 = vsel %vm523, %v3337, 0
    %3541 = vmatprep.subr.mxu0 0.0
    %3542 = vmatpush1.msra.mxu0 %v3336
    %3543 = vmatprep.subr.mxu0 0.0
    %3544 = vmatpush1.msra.mxu0 %v3539
    %3545 = vmatprep.subr.mxu0 0.0
    %3546 = vmatpush1.msra.mxu0 0.0
    %3547 = vmatprep.subr.mxu0 0.0
    %3548 = vmatpush1.msra.mxu0 0.0
    %3549 = vmatprep.subr.mxu0 0.0
    %3550 = vmatpush1.msra.mxu0 0.0
    %3551 = vmatprep.subr.mxu0 0.0
    %3552 = vmatpush1.msra.mxu0 0.0
    %3553 = vmatprep.subr.mxu0 0.0
    %3554 = vmatpush1.msra.mxu0 0.0
    %3555 = vmatprep.subr.mxu0 0.0
    %3556 = vmatpush1.msra.mxu0 0.0
    %3557 = vmatprep.subr.mxu0 0.0
    %3558 = vmatpush1.msra.mxu0 0.0
    %3559 = vmatprep.subr.mxu0 0.0
    %3560 = vmatpush1.msra.mxu0 0.0
    %3561 = vmatprep.subr.mxu0 0.0
    %3562 = vmatpush1.msra.mxu0 0.0
    %3563 = vmatprep.subr.mxu0 0.0
    %3564 = vmatpush1.msra.mxu0 0.0
    %3565 = vmatprep.subr.mxu0 0.0
    %3566 = vmatpush1.msra.mxu0 0.0
    %3567 = vmatprep.subr.mxu0 0.0
    %3568 = vmatpush1.msra.mxu0 0.0
    %3569 = vmatprep.subr.mxu0 0.0
    %3570 = vmatpush1.msra.mxu0 0.0
    %3571 = vmatprep.subr.mxu0 0.0
    %3572 = vmatpush1.msra.mxu0 0.0
    %3573 = vmatprep.subr.mxu0 0.0
    %3574 = vmatpush1.msra.mxu0 0.0
    %3575 = vmatprep.subr.mxu0 0.0
    %3576 = vmatpush1.msra.mxu0 0.0
    %3577 = vmatprep.subr.mxu0 0.0
    %3578 = vmatpush1.msra.mxu0 0.0
    %3579 = vmatprep.subr.mxu0 0.0
    %3580 = vmatpush1.msra.mxu0 0.0
    %3581 = vmatprep.subr.mxu0 0.0
    %3582 = vmatpush1.msra.mxu0 0.0
    %3583 = vmatprep.subr.mxu0 0.0
    %3584 = vmatpush1.msra.mxu0 0.0
    %3585 = vmatprep.subr.mxu0 0.0
    %3586 = vmatpush1.msra.mxu0 0.0
    %3587 = vmatprep.subr.mxu0 0.0
    %3588 = vmatpush1.msra.mxu0 0.0
    %3589 = vmatprep.subr.mxu0 0.0
    %3590 = vmatpush1.msra.mxu0 0.0
    %3591 = vmatprep.subr.mxu0 0.0
    %3592 = vmatpush1.msra.mxu0 0.0
    %3593 = vmatprep.subr.mxu0 0.0
    %3594 = vmatpush1.msra.mxu0 0.0
    %3595 = vmatprep.subr.mxu0 0.0
    %3596 = vmatpush1.msra.mxu0 0.0
    %3597 = vmatprep.subr.mxu0 0.0
    %3598 = vmatpush1.msra.mxu0 0.0
    %3599 = vmatprep.subr.mxu0 0.0
    %3600 = vmatpush1.msra.mxu0 0.0
    %3601 = vmatprep.subr.mxu0 0.0
    %3602 = vmatpush1.msra.mxu0 0.0
    %3603 = vmatprep.subr.mxu0 0.0
    %3604 = vmatpush1.msra.mxu0 0.0
    %3605 = vmatprep.mubr.f32.mxu0 0.0
    %3606 = vmatmul.mubr.f32.gmra.mrb[0].mxu0 %v3533
    %v3607 = vpop.f32.mrb[0].mxu0
    %v3608 = vadd.f32 %v3524, %v3607
    %v3609 = vpop.f32.mrb[0].mxu0
    %3610 = vmatprep.mubr.f32.mxu0 0.0
    %3611 = vmatmul.mubr.f32.gmra.mrb[0].mxu0 %v3536
    %v3612 = vpop.f32.mrb[0].mxu0
    %v3613 = vadd.f32 %v3529, %v3612
    %v3614 = vpop.f32.mrb[0].mxu0
    %3615 = vdwg.mxu0
    %v3616 = vadd.f32 %v3338, %v3444
    %v3617 = vadd.f32 %v3339, %v3445
    %v3618 = vsel %vm178, %v2410, 0.0
    %v3620 = vrot.slane %v2816, 2
    %v3621 = vrot.slane %v3618, 2
    %v3622 = vsel %vm1086, %v3620, %v3621
    %v3623 = vsel %vm156, %v3622, 0
    %v3625 = vsel %vm156, %v3621, 0
    %3627 = vmatprep.subr.mxu0 0.0
    %3628 = vmatpush1.xpose.msra.mxu0 %v3229
    %3629 = vmatprep.subr.mxu0 0.0
    %3630 = vmatpush1.xpose.msra.mxu0 %v3231
    %3631 = vmatprep.subr.mxu0 0.0
    %3632 = vmatpush1.xpose.msra.mxu0 0.0
    %3633 = vmatprep.subr.mxu0 0.0
    %3634 = vmatpush1.xpose.msra.mxu0 0.0
    %3635 = vmatprep.subr.mxu0 0.0
    %3636 = vmatpush1.xpose.msra.mxu0 0.0
    %3637 = vmatprep.subr.mxu0 0.0
    %3638 = vmatpush1.xpose.msra.mxu0 0.0
    %3639 = vmatprep.subr.mxu0 0.0
    %3640 = vmatpush1.xpose.msra.mxu0 0.0
    %3641 = vmatprep.subr.mxu0 0.0
    %3642 = vmatpush1.xpose.msra.mxu0 0.0
    %3643 = vmatprep.subr.mxu0 0.0
    %3644 = vmatpush1.xpose.msra.mxu0 0.0
    %3645 = vmatprep.subr.mxu0 0.0
    %3646 = vmatpush1.xpose.msra.mxu0 0.0
    %3647 = vmatprep.subr.mxu0 0.0
    %3648 = vmatpush1.xpose.msra.mxu0 0.0
    %3649 = vmatprep.subr.mxu0 0.0
    %3650 = vmatpush1.xpose.msra.mxu0 0.0
    %3651 = vmatprep.subr.mxu0 0.0
    %3652 = vmatpush1.xpose.msra.mxu0 0.0
    %3653 = vmatprep.subr.mxu0 0.0
    %3654 = vmatpush1.xpose.msra.mxu0 0.0
    %3655 = vmatprep.subr.mxu0 0.0
    %3656 = vmatpush1.xpose.msra.mxu0 0.0
    %3657 = vmatprep.subr.mxu0 0.0
    %3658 = vmatpush1.xpose.msra.mxu0 0.0
    %3659 = vmatprep.subr.mxu0 0.0
    %3660 = vmatpush1.xpose.msra.mxu0 0.0
    %3661 = vmatprep.subr.mxu0 0.0
    %3662 = vmatpush1.xpose.msra.mxu0 0.0
    %3663 = vmatprep.subr.mxu0 0.0
    %3664 = vmatpush1.xpose.msra.mxu0 0.0
    %3665 = vmatprep.subr.mxu0 0.0
    %3666 = vmatpush1.xpose.msra.mxu0 0.0
    %3667 = vmatprep.subr.mxu0 0.0
    %3668 = vmatpush1.xpose.msra.mxu0 0.0
    %3669 = vmatprep.subr.mxu0 0.0
    %3670 = vmatpush1.xpose.msra.mxu0 0.0
    %3671 = vmatprep.subr.mxu0 0.0
    %3672 = vmatpush1.xpose.msra.mxu0 0.0
    %3673 = vmatprep.subr.mxu0 0.0
    %3674 = vmatpush1.xpose.msra.mxu0 0.0
    %3675 = vmatprep.subr.mxu0 0.0
    %3676 = vmatpush1.xpose.msra.mxu0 0.0
    %3677 = vmatprep.subr.mxu0 0.0
    %3678 = vmatpush1.xpose.msra.mxu0 0.0
    %3679 = vmatprep.subr.mxu0 0.0
    %3680 = vmatpush1.xpose.msra.mxu0 0.0
    %3681 = vmatprep.subr.mxu0 0.0
    %3682 = vmatpush1.xpose.msra.mxu0 0.0
    %3683 = vmatprep.subr.mxu0 0.0
    %3684 = vmatpush1.xpose.msra.mxu0 0.0
    %3685 = vmatprep.subr.mxu0 0.0
    %3686 = vmatpush1.xpose.msra.mxu0 0.0
    %3687 = vmatprep.subr.mxu0 0.0
    %3688 = vmatpush1.xpose.msra.mxu0 0.0
    %3689 = vmatprep.subr.mxu0 0.0
    %3690 = vmatpush1.xpose.msra.mxu0 0.0
    %3691 = vmatprep.mubr.f32.mxu0 0.0
    %3692 = vmatmul.mubr.f32.gmra.mrb[0].mxu0 %v3623
    %v3693 = vpop.f32.mrb[0].mxu0
    %v3694 = vadd.f32 0.0, %v3693
    %v3695 = vpop.f32.mrb[0].mxu0
    %3696 = vmatprep.mubr.f32.mxu0 0.0
    %3697 = vmatmul.mubr.f32.gmra.mrb[0].mxu0 %v3625
    %v3698 = vpop.f32.mrb[0].mxu0
    %v3699 = vadd.f32 0.0, %v3698
    %v3700 = vpop.f32.mrb[0].mxu0
    %3701 = vdwg.mxu0
    %v3702 = vsel %vm376, %v3694, -inf
    %3703 = vmax.xlane.f32.xlu0 %v3702
    %v3704 = vpop.xlane.xlu0 %3703
    %v3705 = vsel %vm380, %v3699, -inf
    %3706 = vmax.xlane.f32.xlu0 %v3705
    %v3707 = vpop.xlane.xlu0 %3706
    %v3708 = vsub.f32 %v3694, %v3704
    %v3709 = vsub.f32 %v3699, %v3707
    %v3710 = vmul.f32 %v3708, 1.442695
    %v3711 = vpow.pop %v3710
    %v3712 = vmul.f32 %v3709, 1.442695
    %v3713 = vpow.pop %v3712
    %v3714 = vsel %vm376, %v3711, 0.0
    %3715 = vadd.xlane.f32.xlu0 %v3714
    %v3716 = vpop.xlane.xlu0 %3715
    %v3717 = vsel %vm380, %v3713, 0.0
    %3718 = vadd.xlane.f32.xlu0 %v3717
    %v3719 = vpop.xlane.xlu0 %3718
    %v3720 = vrcp.pop %v3716
    %v3721 = vrcp.pop %v3719
    %v3722 = vmul.f32 %v3711, %v3720
    %v3723 = vmul.f32 %v3713, %v3721
    %v3724 = vsel %vm178, %v3331, 0.0
    %v3725 = vsel %vm178, %v3333, 0.0
    %v3727 = vsel %vm376, %v3722, 0
    %v3730 = vsel %vm376, %v3723, 0
    %v3733 = vsel %vm523, %v3725, 0
    %3735 = vmatprep.subr.mxu0 0.0
    %3736 = vmatpush1.msra.mxu0 %v3724
    %3737 = vmatprep.subr.mxu0 0.0
    %3738 = vmatpush1.msra.mxu0 %v3733
    %3739 = vmatprep.subr.mxu0 0.0
    %3740 = vmatpush1.msra.mxu0 0.0
    %3741 = vmatprep.subr.mxu0 0.0
    %3742 = vmatpush1.msra.mxu0 0.0
    %3743 = vmatprep.subr.mxu0 0.0
    %3744 = vmatpush1.msra.mxu0 0.0
    %3745 = vmatprep.subr.mxu0 0.0
    %3746 = vmatpush1.msra.mxu0 0.0
    %3747 = vmatprep.subr.mxu0 0.0
    %3748 = vmatpush1.msra.mxu0 0.0
    %3749 = vmatprep.subr.mxu0 0.0
    %3750 = vmatpush1.msra.mxu0 0.0
    %3751 = vmatprep.subr.mxu0 0.0
    %3752 = vmatpush1.msra.mxu0 0.0
    %3753 = vmatprep.subr.mxu0 0.0
    %3754 = vmatpush1.msra.mxu0 0.0
    %3755 = vmatprep.subr.mxu0 0.0
    %3756 = vmatpush1.msra.mxu0 0.0
    %3757 = vmatprep.subr.mxu0 0.0
    %3758 = vmatpush1.msra.mxu0 0.0
    %3759 = vmatprep.subr.mxu0 0.0
    %3760 = vmatpush1.msra.mxu0 0.0
    %3761 = vmatprep.subr.mxu0 0.0
    %3762 = vmatpush1.msra.mxu0 0.0
    %3763 = vmatprep.subr.mxu0 0.0
    %3764 = vmatpush1.msra.mxu0 0.0
    %3765 = vmatprep.subr.mxu0 0.0
    %3766 = vmatpush1.msra.mxu0 0.0
    %3767 = vmatprep.subr.mxu0 0.0
    %3768 = vmatpush1.msra.mxu0 0.0
    %3769 = vmatprep.subr.mxu0 0.0
    %3770 = vmatpush1.msra.mxu0 0.0
    %3771 = vmatprep.subr.mxu0 0.0
    %3772 = vmatpush1.msra.mxu0 0.0
    %3773 = vmatprep.subr.mxu0 0.0
    %3774 = vmatpush1.msra.mxu0 0.0
    %3775 = vmatprep.subr.mxu0 0.0
    %3776 = vmatpush1.msra.mxu0 0.0
    %3777 = vmatprep.subr.mxu0 0.0
    %3778 = vmatpush1.msra.mxu0 0.0
    %3779 = vmatprep.subr.mxu0 0.0
    %3780 = vmatpush1.msra.mxu0 0.0
    %3781 = vmatprep.subr.mxu0 0.0
    %3782 = vmatpush1.msra.mxu0 0.0
    %3783 = vmatprep.subr.mxu0 0.0
    %3784 = vmatpush1.msra.mxu0 0.0
    %3785 = vmatprep.subr.mxu0 0.0
    %3786 = vmatpush1.msra.mxu0 0.0
    %3787 = vmatprep.subr.mxu0 0.0
    %3788 = vmatpush1.msra.mxu0 0.0
    %3789 = vmatprep.subr.mxu0 0.0
    %3790 = vmatpush1.msra.mxu0 0.0
    %3791 = vmatprep.subr.mxu0 0.0
    %3792 = vmatpush1.msra.mxu0 0.0
    %3793 = vmatprep.subr.mxu0 0.0
    %3794 = vmatpush1.msra.mxu0 0.0
    %3795 = vmatprep.subr.mxu0 0.0
    %3796 = vmatpush1.msra.mxu0 0.0
    %3797 = vmatprep.subr.mxu0 0.0
    %3798 = vmatpush1.msra.mxu0 0.0
    %3799 = vmatprep.mubr.f32.mxu0 0.0
    %3800 = vmatmul.mubr.f32.gmra.mrb[0].mxu0 %v3727
    %v3801 = vpop.f32.mrb[0].mxu0
    %v3802 = vadd.f32 0.0, %v3801
    %v3803 = vpop.f32.mrb[0].mxu0
    %3804 = vmatprep.mubr.f32.mxu0 0.0
    %3805 = vmatmul.mubr.f32.gmra.mrb[0].mxu0 %v3730
    %v3806 = vpop.f32.mrb[0].mxu0
    %v3807 = vadd.f32 0.0, %v3806
    %v3808 = vpop.f32.mrb[0].mxu0
    %3809 = vdwg.mxu0
    %v3810 = vadd.f32 %v3608, %v3802
    %v3811 = vadd.f32 %v3613, %v3807
    %v3812 = vadd.f32 %v3616, %v3722
    %v3813 = vadd.f32 %v3617, %v3723
    %v3814 = vsel %vm181, %v2410, 0.0
    %v3816 = vrot.slane %v3011, 2
    %v3817 = vrot.slane %v3814, 2
    %v3818 = vsel %vm1086, %v3816, %v3817
    %v3819 = vsel %vm156, %v3818, 0
    %v3821 = vsel %vm156, %v3817, 0
    %3823 = vmatprep.subr.mxu0 0.0
    %3824 = vmatpush1.xpose.msra.mxu0 %v3229
    %3825 = vmatprep.subr.mxu0 0.0
    %3826 = vmatpush1.xpose.msra.mxu0 %v3231
    %3827 = vmatprep.subr.mxu0 0.0
    %3828 = vmatpush1.xpose.msra.mxu0 0.0
    %3829 = vmatprep.subr.mxu0 0.0
    %3830 = vmatpush1.xpose.msra.mxu0 0.0
    %3831 = vmatprep.subr.mxu0 0.0
    %3832 = vmatpush1.xpose.msra.mxu0 0.0
    %3833 = vmatprep.subr.mxu0 0.0
    %3834 = vmatpush1.xpose.msra.mxu0 0.0
    %3835 = vmatprep.subr.mxu0 0.0
    %3836 = vmatpush1.xpose.msra.mxu0 0.0
    %3837 = vmatprep.subr.mxu0 0.0
    %3838 = vmatpush1.xpose.msra.mxu0 0.0
    %3839 = vmatprep.subr.mxu0 0.0
    %3840 = vmatpush1.xpose.msra.mxu0 0.0
    %3841 = vmatprep.subr.mxu0 0.0
    %3842 = vmatpush1.xpose.msra.mxu0 0.0
    %3843 = vmatprep.subr.mxu0 0.0
    %3844 = vmatpush1.xpose.msra.mxu0 0.0
    %3845 = vmatprep.subr.mxu0 0.0
    %3846 = vmatpush1.xpose.msra.mxu0 0.0
    %3847 = vmatprep.subr.mxu0 0.0
    %3848 = vmatpush1.xpose.msra.mxu0 0.0
    %3849 = vmatprep.subr.mxu0 0.0
    %3850 = vmatpush1.xpose.msra.mxu0 0.0
    %3851 = vmatprep.subr.mxu0 0.0
    %3852 = vmatpush1.xpose.msra.mxu0 0.0
    %3853 = vmatprep.subr.mxu0 0.0
    %3854 = vmatpush1.xpose.msra.mxu0 0.0
    %3855 = vmatprep.subr.mxu0 0.0
    %3856 = vmatpush1.xpose.msra.mxu0 0.0
    %3857 = vmatprep.subr.mxu0 0.0
    %3858 = vmatpush1.xpose.msra.mxu0 0.0
    %3859 = vmatprep.subr.mxu0 0.0
    %3860 = vmatpush1.xpose.msra.mxu0 0.0
    %3861 = vmatprep.subr.mxu0 0.0
    %3862 = vmatpush1.xpose.msra.mxu0 0.0
    %3863 = vmatprep.subr.mxu0 0.0
    %3864 = vmatpush1.xpose.msra.mxu0 0.0
    %3865 = vmatprep.subr.mxu0 0.0
    %3866 = vmatpush1.xpose.msra.mxu0 0.0
    %3867 = vmatprep.subr.mxu0 0.0
    %3868 = vmatpush1.xpose.msra.mxu0 0.0
    %3869 = vmatprep.subr.mxu0 0.0
    %3870 = vmatpush1.xpose.msra.mxu0 0.0
    %3871 = vmatprep.subr.mxu0 0.0
    %3872 = vmatpush1.xpose.msra.mxu0 0.0
    %3873 = vmatprep.subr.mxu0 0.0
    %3874 = vmatpush1.xpose.msra.mxu0 0.0
    %3875 = vmatprep.subr.mxu0 0.0
    %3876 = vmatpush1.xpose.msra.mxu0 0.0
    %3877 = vmatprep.subr.mxu0 0.0
    %3878 = vmatpush1.xpose.msra.mxu0 0.0
    %3879 = vmatprep.subr.mxu0 0.0
    %3880 = vmatpush1.xpose.msra.mxu0 0.0
    %3881 = vmatprep.subr.mxu0 0.0
    %3882 = vmatpush1.xpose.msra.mxu0 0.0
    %3883 = vmatprep.subr.mxu0 0.0
    %3884 = vmatpush1.xpose.msra.mxu0 0.0
    %3885 = vmatprep.subr.mxu0 0.0
    %3886 = vmatpush1.xpose.msra.mxu0 0.0
    %3887 = vmatprep.mubr.f32.mxu0 0.0
    %3888 = vmatmul.mubr.f32.gmra.mrb[0].mxu0 %v3819
    %v3889 = vpop.f32.mrb[0].mxu0
    %v3890 = vadd.f32 0.0, %v3889
    %v3891 = vpop.f32.mrb[0].mxu0
    %3892 = vmatprep.mubr.f32.mxu0 0.0
    %3893 = vmatmul.mubr.f32.gmra.mrb[0].mxu0 %v3821
    %v3894 = vpop.f32.mrb[0].mxu0
    %v3895 = vadd.f32 0.0, %v3894
    %v3896 = vpop.f32.mrb[0].mxu0
    %3897 = vdwg.mxu0
    %v3898 = vsel %vm376, %v3890, -inf
    %3899 = vmax.xlane.f32.xlu0 %v3898
    %v3900 = vpop.xlane.xlu0 %3899
    %v3901 = vsel %vm380, %v3895, -inf
    %3902 = vmax.xlane.f32.xlu0 %v3901
    %v3903 = vpop.xlane.xlu0 %3902
    %v3904 = vsub.f32 %v3890, %v3900
    %v3905 = vsub.f32 %v3895, %v3903
    %v3906 = vmul.f32 %v3904, 1.442695
    %v3907 = vpow.pop %v3906
    %v3908 = vmul.f32 %v3905, 1.442695
    %v3909 = vpow.pop %v3908
    %v3910 = vsel %vm376, %v3907, 0.0
    %3911 = vadd.xlane.f32.xlu0 %v3910
    %v3912 = vpop.xlane.xlu0 %3911
    %v3913 = vsel %vm380, %v3909, 0.0
    %3914 = vadd.xlane.f32.xlu0 %v3913
    %v3915 = vpop.xlane.xlu0 %3914
    %v3916 = vrcp.pop %v3912
    %v3917 = vrcp.pop %v3915
    %v3918 = vmul.f32 %v3907, %v3916
    %v3919 = vmul.f32 %v3909, %v3917
    %v3920 = vsel %vm181, %v3331, 0.0
    %v3921 = vsel %vm181, %v3333, 0.0
    %v3923 = vsel %vm376, %v3918, 0
    %v3926 = vsel %vm376, %v3919, 0
    %v3929 = vsel %vm523, %v3921, 0
    %3931 = vmatprep.subr.mxu0 0.0
    %3932 = vmatpush1.msra.mxu0 %v3920
    %3933 = vmatprep.subr.mxu0 0.0
    %3934 = vmatpush1.msra.mxu0 %v3929
    %3935 = vmatprep.subr.mxu0 0.0
    %3936 = vmatpush1.msra.mxu0 0.0
    %3937 = vmatprep.subr.mxu0 0.0
    %3938 = vmatpush1.msra.mxu0 0.0
    %3939 = vmatprep.subr.mxu0 0.0
    %3940 = vmatpush1.msra.mxu0 0.0
    %3941 = vmatprep.subr.mxu0 0.0
    %3942 = vmatpush1.msra.mxu0 0.0
    %3943 = vmatprep.subr.mxu0 0.0
    %3944 = vmatpush1.msra.mxu0 0.0
    %3945 = vmatprep.subr.mxu0 0.0
    %3946 = vmatpush1.msra.mxu0 0.0
    %3947 = vmatprep.subr.mxu0 0.0
    %3948 = vmatpush1.msra.mxu0 0.0
    %3949 = vmatprep.subr.mxu0 0.0
    %3950 = vmatpush1.msra.mxu0 0.0
    %3951 = vmatprep.subr.mxu0 0.0
    %3952 = vmatpush1.msra.mxu0 0.0
    %3953 = vmatprep.subr.mxu0 0.0
    %3954 = vmatpush1.msra.mxu0 0.0
    %3955 = vmatprep.subr.mxu0 0.0
    %3956 = vmatpush1.msra.mxu0 0.0
    %3957 = vmatprep.subr.mxu0 0.0
    %3958 = vmatpush1.msra.mxu0 0.0
    %3959 = vmatprep.subr.mxu0 0.0
    %3960 = vmatpush1.msra.mxu0 0.0
    %3961 = vmatprep.subr.mxu0 0.0
    %3962 = vmatpush1.msra.mxu0 0.0
    %3963 = vmatprep.subr.mxu0 0.0
    %3964 = vmatpush1.msra.mxu0 0.0
    %3965 = vmatprep.subr.mxu0 0.0
    %3966 = vmatpush1.msra.mxu0 0.0
    %3967 = vmatprep.subr.mxu0 0.0
    %3968 = vmatpush1.msra.mxu0 0.0
    %3969 = vmatprep.subr.mxu0 0.0
    %3970 = vmatpush1.msra.mxu0 0.0
    %3971 = vmatprep.subr.mxu0 0.0
    %3972 = vmatpush1.msra.mxu0 0.0
    %3973 = vmatprep.subr.mxu0 0.0
    %3974 = vmatpush1.msra.mxu0 0.0
    %3975 = vmatprep.subr.mxu0 0.0
    %3976 = vmatpush1.msra.mxu0 0.0
    %3977 = vmatprep.subr.mxu0 0.0
    %3978 = vmatpush1.msra.mxu0 0.0
    %3979 = vmatprep.subr.mxu0 0.0
    %3980 = vmatpush1.msra.mxu0 0.0
    %3981 = vmatprep.subr.mxu0 0.0
    %3982 = vmatpush1.msra.mxu0 0.0
    %3983 = vmatprep.subr.mxu0 0.0
    %3984 = vmatpush1.msra.mxu0 0.0
    %3985 = vmatprep.subr.mxu0 0.0
    %3986 = vmatpush1.msra.mxu0 0.0
    %3987 = vmatprep.subr.mxu0 0.0
    %3988 = vmatpush1.msra.mxu0 0.0
    %3989 = vmatprep.subr.mxu0 0.0
    %3990 = vmatpush1.msra.mxu0 0.0
    %3991 = vmatprep.subr.mxu0 0.0
    %3992 = vmatpush1.msra.mxu0 0.0
    %3993 = vmatprep.subr.mxu0 0.0
    %3994 = vmatpush1.msra.mxu0 0.0
    %3995 = vmatprep.mubr.f32.mxu0 0.0
    %3996 = vmatmul.mubr.f32.gmra.mrb[0].mxu0 %v3923
    %v3997 = vpop.f32.mrb[0].mxu0
    %v3998 = vadd.f32 0.0, %v3997
    %v3999 = vpop.f32.mrb[0].mxu0
    %4000 = vmatprep.mubr.f32.mxu0 0.0
    %4001 = vmatmul.mubr.f32.gmra.mrb[0].mxu0 %v3926
    %v4002 = vpop.f32.mrb[0].mxu0
    %v4003 = vadd.f32 0.0, %v4002
    %v4004 = vpop.f32.mrb[0].mxu0
    %4005 = vdwg.mxu0
    %v4006 = vadd.f32 %v3810, %v3998
    %v4007 = vadd.f32 %v3811, %v4003
    %v4008 = vadd.f32 %v3812, %v3918
    %v4009 = vadd.f32 %v3813, %v3919
    %4010 = vst.msk [vmem:[#allocation3 + $0xa] sm:$0xff] %vm156, %v4006
    %4011 = vst.msk [vmem:[#allocation3 + $0x12] sm:$0x3] %vm163, %v4007
    %v4012 = vmul.f32 %v4008, 0.25
    %v4013 = vmul.f32 %v4009, 0.25
    %s4014 = scalar_lea.vmem %s14, 48
    %4015 = vst.msk [vmem:[%s4014] sm:$0xff] %vm376, %v4012
    %4016 = vst.msk [vmem:[%s4014 + $0x8] sm:$0x3] %vm380, %v4013
    %v4017 = vld [vmem:[#allocation3] sm:$0xff]
    %v4018 = vld [vmem:[#allocation3 + $0x8] sm:$0xff]
    %v4019 = vld [vmem:[#allocation3 + $0x10] sm:$0xf]
    %s4020 = scalar_lea.vmem %s6, 32
    %v4021 = vld [vmem:[%s4020] sm:$0xff]
    %v4022 = vld [vmem:[%s4020 + $0x8] sm:$0xff]
    %v4023 = vld [vmem:[%s4020 + $0x10] sm:$0xff]
    %v4024 = vld [vmem:[%s4020 + $0x18] sm:$0xff]
    %v4025 = vlaneseq
    %v4026 = vshrl.u32 %v4025, 7
    %v4027 = vsub.s32 0, %v4026
    %v4028 = vrot.slane %v2310, %v4027
    %v4030 = vsel %vm156, %v4017, 0
    %v4033 = vsel %vm156, %v4018, 0
    %v4036 = vsel %vm156, %v4019, 0
    %4038 = vmatprep.subr.mxu0 0.0
    %4039 = vmatpush1.msra.mxu0 %v4021
    %4040 = vmatprep.subr.mxu0 0.0
    %4041 = vmatpush1.msra.mxu0 %v4022
    %4042 = vmatprep.subr.mxu0 0.0
    %4043 = vmatpush1.msra.mxu0 %v4023
    %4044 = vmatprep.subr.mxu0 0.0
    %4045 = vmatpush1.msra.mxu0 %v4024
    %4046 = vmatprep.subr.mxu0 0.0
    %4047 = vmatpush1.msra.mxu0 0.0
    %4048 = vmatprep.subr.mxu0 0.0
    %4049 = vmatpush1.msra.mxu0 0.0
    %4050 = vmatprep.subr.mxu0 0.0
    %4051 = vmatpush1.msra.mxu0 0.0
    %4052 = vmatprep.subr.mxu0 0.0
    %4053 = vmatpush1.msra.mxu0 0.0
    %4054 = vmatprep.subr.mxu0 0.0
    %4055 = vmatpush1.msra.mxu0 0.0
    %4056 = vmatprep.subr.mxu0 0.0
    %4057 = vmatpush1.msra.mxu0 0.0
    %4058 = vmatprep.subr.mxu0 0.0
    %4059 = vmatpush1.msra.mxu0 0.0
    %4060 = vmatprep.subr.mxu0 0.0
    %4061 = vmatpush1.msra.mxu0 0.0
    %4062 = vmatprep.subr.mxu0 0.0
    %4063 = vmatpush1.msra.mxu0 0.0
    %4064 = vmatprep.subr.mxu0 0.0
    %4065 = vmatpush1.msra.mxu0 0.0
    %4066 = vmatprep.subr.mxu0 0.0
    %4067 = vmatpush1.msra.mxu0 0.0
    %4068 = vmatprep.subr.mxu0 0.0
    %4069 = vmatpush1.msra.mxu0 0.0
    %4070 = vmatprep.subr.mxu0 0.0
    %4071 = vmatpush1.msra.mxu0 0.0
    %4072 = vmatprep.subr.mxu0 0.0
    %4073 = vmatpush1.msra.mxu0 0.0
    %4074 = vmatprep.subr.mxu0 0.0
    %4075 = vmatpush1.msra.mxu0 0.0
    %4076 = vmatprep.subr.mxu0 0.0
    %4077 = vmatpush1.msra.mxu0 0.0
    %4078 = vmatprep.subr.mxu0 0.0
    %4079 = vmatpush1.msra.mxu0 0.0
    %4080 = vmatprep.subr.mxu0 0.0
    %4081 = vmatpush1.msra.mxu0 0.0
    %4082 = vmatprep.subr.mxu0 0.0
    %4083 = vmatpush1.msra.mxu0 0.0
    %4084 = vmatprep.subr.mxu0 0.0
    %4085 = vmatpush1.msra.mxu0 0.0
    %4086 = vmatprep.subr.mxu0 0.0
    %4087 = vmatpush1.msra.mxu0 0.0
    %4088 = vmatprep.subr.mxu0 0.0
    %4089 = vmatpush1.msra.mxu0 0.0
    %4090 = vmatprep.subr.mxu0 0.0
    %4091 = vmatpush1.msra.mxu0 0.0
    %4092 = vmatprep.subr.mxu0 0.0
    %4093 = vmatpush1.msra.mxu0 0.0
    %4094 = vmatprep.subr.mxu0 0.0
    %4095 = vmatpush1.msra.mxu0 0.0
    %4096 = vmatprep.subr.mxu0 0.0
    %4097 = vmatpush1.msra.mxu0 0.0
    %4098 = vmatprep.subr.mxu0 0.0
    %4099 = vmatpush1.msra.mxu0 0.0
    %4100 = vmatprep.subr.mxu0 0.0
    %4101 = vmatpush1.msra.mxu0 0.0
    %4102 = vmatprep.mubr.f32.mxu0 0.0
    %4103 = vmatmul.mubr.f32.gmra.mrb[0].mxu0 %v4030
    %v4104 = vpop.f32.mrb[0].mxu0
    %v4105 = vadd.f32 %v4028, %v4104
    %v4106 = vpop.f32.mrb[0].mxu0
    %4107 = vmatprep.mubr.f32.mxu0 0.0
    %4108 = vmatmul.mubr.f32.gmra.mrb[0].mxu0 %v4033
    %v4109 = vpop.f32.mrb[0].mxu0
    %v4110 = vadd.f32 %v4028, %v4109
    %v4111 = vpop.f32.mrb[0].mxu0
    %4112 = vmatprep.mubr.f32.mxu0 0.0
    %4113 = vmatmul.mubr.f32.gmra.mrb[0].mxu0 %v4036
    %v4114 = vpop.f32.mrb[0].mxu0
    %v4115 = vadd.f32 %v4028, %v4114
    %v4116 = vpop.f32.mrb[0].mxu0
    %4117 = vdwg.mxu0
    %v4118 = vadd.f32 %v2306, %v4105
    %v4119 = vadd.f32 %v2307, %v4110
    %v4120 = vadd.f32 %v2308, %v4115
    %v4121 = vsel %vm156, %v4118, 0.0
    %4122 = vadd.xlane.f32.xlu0 %v4121
    %v4123 = vpop.xlane.xlu0 %4122
    %v4124 = vsel %vm156, %v4119, 0.0
    %4125 = vadd.xlane.f32.xlu0 %v4124
    %v4126 = vpop.xlane.xlu0 %4125
    %v4127 = vsel %vm1999, %v4120, 0.0
    %4128 = vadd.xlane.f32.xlu0 %v4127
    %v4129 = vpop.xlane.xlu0 %4128
    %v4130 = vmul.f32 %v4123, %v2003
    %v4131 = vmul.f32 %v4126, %v2003
    %v4132 = vmul.f32 %v4129, %v2003
    %v4133 = vsub.f32 %v4118, %v4130
    %v4134 = vsub.f32 %v4119, %v4131
    %v4135 = vsub.f32 %v4120, %v4132
    %v4136 = vmul.f32 %v4133, %v4133
    %v4137 = vmul.f32 %v4134, %v4134
    %v4138 = vmul.f32 %v4135, %v4135
    %v4139 = vsel %vm156, %v4136, 0.0
    %4140 = vadd.xlane.f32.xlu0 %v4139
    %v4141 = vpop.xlane.xlu0 %4140
    %v4142 = vsel %vm156, %v4137, 0.0
    %4143 = vadd.xlane.f32.xlu0 %v4142
    %v4144 = vpop.xlane.xlu0 %4143
    %v4145 = vsel %vm1999, %v4138, 0.0
    %4146 = vadd.xlane.f32.xlu0 %v4145
    %v4147 = vpop.xlane.xlu0 %4146
    %v4148 = vmul.f32 %v4141, %v2003
    %v4149 = vmul.f32 %v4144, %v2003
    %v4150 = vmul.f32 %v4147, %v2003
    %v4151 = vadd.f32 %v4148, 1e-05
    %v4152 = vadd.f32 %v4149, 1e-05
    %v4153 = vadd.f32 %v4150, 1e-05
    %v4154 = vrsqrt.pop %v4151
    %v4155 = vrsqrt.pop %v4152
    %v4156 = vrsqrt.pop %v4153
    %v4157 = vmul.f32 %v4133, %v4154
    %v4158 = vmul.f32 %v4134, %v4155
    %v4159 = vmul.f32 %v4135, %v4156
    %v4160 = vlaneseq
    %v4161 = vshrl.u32 %v4160, 7
    %v4162 = vsub.s32 2, %v4161
    %v4163 = vrot.slane %v2310, %v4162
    %v4164 = vmul.f32 %v4157, %v4163
    %v4165 = vmul.f32 %v4158, %v4163
    %v4166 = vmul.f32 %v4159, %v4163
    %v4167 = vlaneseq
    %v4168 = vshrl.u32 %v4167, 7
    %v4169 = vsub.s32 3, %v4168
    %v4170 = vrot.slane %v2310, %v4169
    %v4171 = vadd.f32 %v4164, %v4170
    %v4172 = vadd.f32 %v4165, %v4170
    %v4173 = vadd.f32 %v4166, %v4170
    %s4174 = scalar_lea.vmem %s7, 32
    %v4175 = vld [vmem:[%s4174] sm:$0xff]
    %v4176 = vld [vmem:[%s4174 + $0x8] sm:$0xff]
    %v4177 = vld [vmem:[%s4174 + $0x10] sm:$0xff]
    %v4178 = vld [vmem:[%s4174 + $0x18] sm:$0xff]
    %s4179 = scalar_lea.vmem %s8, 1
    %v4180 = vld [vmem:[%s4179] sm:$0x1]
    %v4182 = vlaneseq
    %v4183 = vshrl.u32 %v4182, 7
    %v4184 = vsub.s32 0, %v4183
    %v4185 = vrot.slane %v4180, %v4184
    %v4188 = vsel %vm156, %v4171, 0
    %v4191 = vsel %vm156, %v4172, 0
    %v4194 = vsel %vm156, %v4173, 0
    %4196 = vmatprep.subr.mxu0 0.0
    %4197 = vmatpush1.msra.mxu0 %v4175
    %4198 = vmatprep.subr.mxu0 0.0
    %4199 = vmatpush1.msra.mxu0 %v4176
    %4200 = vmatprep.subr.mxu0 0.0
    %4201 = vmatpush1.msra.mxu0 %v4177
    %4202 = vmatprep.subr.mxu0 0.0
    %4203 = vmatpush1.msra.mxu0 %v4178
    %4204 = vmatprep.subr.mxu0 0.0
    %4205 = vmatpush1.msra.mxu0 0.0
    %4206 = vmatprep.subr.mxu0 0.0
    %4207 = vmatpush1.msra.mxu0 0.0
    %4208 = vmatprep.subr.mxu0 0.0
    %4209 = vmatpush1.msra.mxu0 0.0
    %4210 = vmatprep.subr.mxu0 0.0
    %4211 = vmatpush1.msra.mxu0 0.0
    %4212 = vmatprep.subr.mxu0 0.0
    %4213 = vmatpush1.msra.mxu0 0.0
    %4214 = vmatprep.subr.mxu0 0.0
    %4215 = vmatpush1.msra.mxu0 0.0
    %4216 = vmatprep.subr.mxu0 0.0
    %4217 = vmatpush1.msra.mxu0 0.0
    %4218 = vmatprep.subr.mxu0 0.0
    %4219 = vmatpush1.msra.mxu0 0.0
    %4220 = vmatprep.subr.mxu0 0.0
    %4221 = vmatpush1.msra.mxu0 0.0
    %4222 = vmatprep.subr.mxu0 0.0
    %4223 = vmatpush1.msra.mxu0 0.0
    %4224 = vmatprep.subr.mxu0 0.0
    %4225 = vmatpush1.msra.mxu0 0.0
    %4226 = vmatprep.subr.mxu0 0.0
    %4227 = vmatpush1.msra.mxu0 0.0
    %4228 = vmatprep.subr.mxu0 0.0
    %4229 = vmatpush1.msra.mxu0 0.0
    %4230 = vmatprep.subr.mxu0 0.0
    %4231 = vmatpush1.msra.mxu0 0.0
    %4232 = vmatprep.subr.mxu0 0.0
    %4233 = vmatpush1.msra.mxu0 0.0
    %4234 = vmatprep.subr.mxu0 0.0
    %4235 = vmatpush1.msra.mxu0 0.0
    %4236 = vmatprep.subr.mxu0 0.0
    %4237 = vmatpush1.msra.mxu0 0.0
    %4238 = vmatprep.subr.mxu0 0.0
    %4239 = vmatpush1.msra.mxu0 0.0
    %4240 = vmatprep.subr.mxu0 0.0
    %4241 = vmatpush1.msra.mxu0 0.0
    %4242 = vmatprep.subr.mxu0 0.0
    %4243 = vmatpush1.msra.mxu0 0.0
    %4244 = vmatprep.subr.mxu0 0.0
    %4245 = vmatpush1.msra.mxu0 0.0
    %4246 = vmatprep.subr.mxu0 0.0
    %4247 = vmatpush1.msra.mxu0 0.0
    %4248 = vmatprep.subr.mxu0 0.0
    %4249 = vmatpush1.msra.mxu0 0.0
    %4250 = vmatprep.subr.mxu0 0.0
    %4251 = vmatpush1.msra.mxu0 0.0
    %4252 = vmatprep.subr.mxu0 0.0
    %4253 = vmatpush1.msra.mxu0 0.0
    %4254 = vmatprep.subr.mxu0 0.0
    %4255 = vmatpush1.msra.mxu0 0.0
    %4256 = vmatprep.subr.mxu0 0.0
    %4257 = vmatpush1.msra.mxu0 0.0
    %4258 = vmatprep.subr.mxu0 0.0
    %4259 = vmatpush1.msra.mxu0 0.0
    %4260 = vmatprep.mubr.f32.mxu0 0.0
    %4261 = vmatmul.mubr.f32.gmra.mrb[0].mxu0 %v4188
    %v4262 = vpop.f32.mrb[0].mxu0
    %v4263 = vadd.f32 %v4185, %v4262
    %v4264 = vpop.f32.mrb[0].mxu0
    %4265 = vmatprep.mubr.f32.mxu0 0.0
    %4266 = vmatmul.mubr.f32.gmra.mrb[0].mxu0 %v4191
    %v4267 = vpop.f32.mrb[0].mxu0
    %v4268 = vadd.f32 %v4185, %v4267
    %v4269 = vpop.f32.mrb[0].mxu0
    %4270 = vmatprep.mubr.f32.mxu0 0.0
    %4271 = vmatmul.mubr.f32.gmra.mrb[0].mxu0 %v4194
    %v4272 = vpop.f32.mrb[0].mxu0
    %v4273 = vadd.f32 %v4185, %v4272
    %v4274 = vpop.f32.mrb[0].mxu0
    %4275 = vdwg.mxu0
    %v4276 = vmax.f32 %v4263, 0.0
    %v4277 = vmax.f32 %v4268, 0.0
    %v4278 = vmax.f32 %v4273, 0.0
    %s4279 = scalar_lea.vmem %s9, 64
    %v4280 = vld [vmem:[%s4279] sm:$0xff]
    %v4281 = vld [vmem:[%s4279 + $0x8] sm:$0xff]
    %v4282 = vld [vmem:[%s4279 + $0x10] sm:$0xff]
    %v4283 = vld [vmem:[%s4279 + $0x18] sm:$0xff]
    %v4284 = vld [vmem:[%s4279 + $0x20] sm:$0xff]
    %v4285 = vld [vmem:[%s4279 + $0x28] sm:$0xff]
    %v4286 = vld [vmem:[%s4279 + $0x30] sm:$0xff]
    %v4287 = vld [vmem:[%s4279 + $0x38] sm:$0xff]
    %v4288 = vlaneseq
    %v4289 = vshrl.u32 %v4288, 7
    %v4290 = vsub.s32 1, %v4289
    %v4291 = vrot.slane %v2310, %v4290
    %v4293 = vsel %vm2163, %v4276, 0
    %v4296 = vsel %vm2163, %v4277, 0
    %v4299 = vsel %vm2163, %v4278, 0
    %4301 = vmatprep.subr.mxu0 0.0
    %4302 = vmatpush1.msra.mxu0 %v4280
    %4303 = vmatprep.subr.mxu0 0.0
    %4304 = vmatpush1.msra.mxu0 %v4281
    %4305 = vmatprep.subr.mxu0 0.0
    %4306 = vmatpush1.msra.mxu0 %v4282
    %4307 = vmatprep.subr.mxu0 0.0
    %4308 = vmatpush1.msra.mxu0 %v4283
    %4309 = vmatprep.subr.mxu0 0.0
    %4310 = vmatpush1.msra.mxu0 %v4284
    %4311 = vmatprep.subr.mxu0 0.0
    %4312 = vmatpush1.msra.mxu0 %v4285
    %4313 = vmatprep.subr.mxu0 0.0
    %4314 = vmatpush1.msra.mxu0 %v4286
    %4315 = vmatprep.subr.mxu0 0.0
    %4316 = vmatpush1.msra.mxu0 %v4287
    %4317 = vmatprep.subr.mxu0 0.0
    %4318 = vmatpush1.msra.mxu0 0.0
    %4319 = vmatprep.subr.mxu0 0.0
    %4320 = vmatpush1.msra.mxu0 0.0
    %4321 = vmatprep.subr.mxu0 0.0
    %4322 = vmatpush1.msra.mxu0 0.0
    %4323 = vmatprep.subr.mxu0 0.0
    %4324 = vmatpush1.msra.mxu0 0.0
    %4325 = vmatprep.subr.mxu0 0.0
    %4326 = vmatpush1.msra.mxu0 0.0
    %4327 = vmatprep.subr.mxu0 0.0
    %4328 = vmatpush1.msra.mxu0 0.0
    %4329 = vmatprep.subr.mxu0 0.0
    %4330 = vmatpush1.msra.mxu0 0.0
    %4331 = vmatprep.subr.mxu0 0.0
    %4332 = vmatpush1.msra.mxu0 0.0
    %4333 = vmatprep.subr.mxu0 0.0
    %4334 = vmatpush1.msra.mxu0 0.0
    %4335 = vmatprep.subr.mxu0 0.0
    %4336 = vmatpush1.msra.mxu0 0.0
    %4337 = vmatprep.subr.mxu0 0.0
    %4338 = vmatpush1.msra.mxu0 0.0
    %4339 = vmatprep.subr.mxu0 0.0
    %4340 = vmatpush1.msra.mxu0 0.0
    %4341 = vmatprep.subr.mxu0 0.0
    %4342 = vmatpush1.msra.mxu0 0.0
    %4343 = vmatprep.subr.mxu0 0.0
    %4344 = vmatpush1.msra.mxu0 0.0
    %4345 = vmatprep.subr.mxu0 0.0
    %4346 = vmatpush1.msra.mxu0 0.0
    %4347 = vmatprep.subr.mxu0 0.0
    %4348 = vmatpush1.msra.mxu0 0.0
    %4349 = vmatprep.subr.mxu0 0.0
    %4350 = vmatpush1.msra.mxu0 0.0
    %4351 = vmatprep.subr.mxu0 0.0
    %4352 = vmatpush1.msra.mxu0 0.0
    %4353 = vmatprep.subr.mxu0 0.0
    %4354 = vmatpush1.msra.mxu0 0.0
    %4355 = vmatprep.subr.mxu0 0.0
    %4356 = vmatpush1.msra.mxu0 0.0
    %4357 = vmatprep.subr.mxu0 0.0
    %4358 = vmatpush1.msra.mxu0 0.0
    %4359 = vmatprep.subr.mxu0 0.0
    %4360 = vmatpush1.msra.mxu0 0.0
    %4361 = vmatprep.subr.mxu0 0.0
    %4362 = vmatpush1.msra.mxu0 0.0
    %4363 = vmatprep.subr.mxu0 0.0
    %4364 = vmatpush1.msra.mxu0 0.0
    %4365 = vmatprep.mubr.f32.mxu0 0.0
    %4366 = vmatmul.mubr.f32.gmra.mrb[0].mxu0 %v4293
    %v4367 = vpop.f32.mrb[0].mxu0
    %v4368 = vadd.f32 %v4291, %v4367
    %v4369 = vpop.f32.mrb[0].mxu0
    %4370 = vmatprep.mubr.f32.mxu0 0.0
    %4371 = vmatmul.mubr.f32.gmra.mrb[0].mxu0 %v4296
    %v4372 = vpop.f32.mrb[0].mxu0
    %v4373 = vadd.f32 %v4291, %v4372
    %v4374 = vpop.f32.mrb[0].mxu0
    %4375 = vmatprep.mubr.f32.mxu0 0.0
    %4376 = vmatmul.mubr.f32.gmra.mrb[0].mxu0 %v4299
    %v4377 = vpop.f32.mrb[0].mxu0
    %v4378 = vadd.f32 %v4291, %v4377
    %v4379 = vpop.f32.mrb[0].mxu0
    %4380 = vdwg.mxu0
    %v4381 = vadd.f32 %v4171, %v4368
    %v4382 = vadd.f32 %v4172, %v4373
    %v4383 = vadd.f32 %v4173, %v4378
    %v4384 = vsel %vm156, %v4381, 0.0
    %4385 = vadd.xlane.f32.xlu0 %v4384
    %v4386 = vpop.xlane.xlu0 %4385
    %v4387 = vsel %vm156, %v4382, 0.0
    %4388 = vadd.xlane.f32.xlu0 %v4387
    %v4389 = vpop.xlane.xlu0 %4388
    %v4390 = vsel %vm1999, %v4383, 0.0
    %4391 = vadd.xlane.f32.xlu0 %v4390
    %v4392 = vpop.xlane.xlu0 %4391
    %v4393 = vmul.f32 %v4386, %v2003
    %v4394 = vmul.f32 %v4389, %v2003
    %v4395 = vmul.f32 %v4392, %v2003
    %v4396 = vsub.f32 %v4381, %v4393
    %v4397 = vsub.f32 %v4382, %v4394
    %v4398 = vsub.f32 %v4383, %v4395
    %v4399 = vmul.f32 %v4396, %v4396
    %v4400 = vmul.f32 %v4397, %v4397
    %v4401 = vmul.f32 %v4398, %v4398
    %v4402 = vsel %vm156, %v4399, 0.0
    %4403 = vadd.xlane.f32.xlu0 %v4402
    %v4404 = vpop.xlane.xlu0 %4403
    %v4405 = vsel %vm156, %v4400, 0.0
    %4406 = vadd.xlane.f32.xlu0 %v4405
    %v4407 = vpop.xlane.xlu0 %4406
    %v4408 = vsel %vm1999, %v4401, 0.0
    %4409 = vadd.xlane.f32.xlu0 %v4408
    %v4410 = vpop.xlane.xlu0 %4409
    %v4411 = vmul.f32 %v4404, %v2003
    %v4412 = vmul.f32 %v4407, %v2003
    %v4413 = vmul.f32 %v4410, %v2003
    %v4414 = vadd.f32 %v4411, 1e-05
    %v4415 = vadd.f32 %v4412, 1e-05
    %v4416 = vadd.f32 %v4413, 1e-05
    %v4417 = vrsqrt.pop %v4414
    %v4418 = vrsqrt.pop %v4415
    %v4419 = vrsqrt.pop %v4416
    %v4420 = vmul.f32 %v4396, %v4417
    %v4421 = vmul.f32 %v4397, %v4418
    %v4422 = vmul.f32 %v4398, %v4419
    %v4423 = vlaneseq
    %v4424 = vshrl.u32 %v4423, 7
    %v4425 = vsub.s32 4, %v4424
    %v4426 = vrot.slane %v2310, %v4425
    %v4427 = vmul.f32 %v4420, %v4426
    %v4428 = vmul.f32 %v4421, %v4426
    %v4429 = vmul.f32 %v4422, %v4426
    %v4430 = vlaneseq
    %v4431 = vshrl.u32 %v4430, 7
    %v4432 = vsub.s32 5, %v4431
    %v4433 = vrot.slane %v2310, %v4432
    %v4434 = vadd.f32 %v4427, %v4433
    %v4435 = vadd.f32 %v4428, %v4433
    %v4436 = vadd.f32 %v4429, %v4433
    %s4437 = scalar_lea.vmem %s10, 16
    %v4438 = vld [vmem:[%s4437] sm:$0xff]
    %s4439 = scalar_lea.vmem %s4, 64
    %v4440 = vld [vmem:[%s4439] sm:$0xff]
    %v4441 = vld [vmem:[%s4439 + $0x8] sm:$0xff]
    %v4442 = vld [vmem:[%s4439 + $0x10] sm:$0xff]
    %v4443 = vld [vmem:[%s4439 + $0x18] sm:$0xff]
    %s4444 = scalar_lea.vmem %s5, 2
    %v4445 = vld [vmem:[%s4444] sm:$0x1]
    %v4447 = vlaneseq
    %v4448 = vshrl.u32 %v4447, 7
    %v4449 = vsub.s32 0, %v4448
    %v4450 = vrot.slane %v4445, %v4449
    %v4453 = vsel %vm156, %v4434, 0
    %v4456 = vsel %vm156, %v4435, 0
    %v4459 = vsel %vm156, %v4436, 0
    %4461 = vmatprep.subr.mxu0 0.0
    %4462 = vmatpush1.msra.mxu0 %v4440
    %4463 = vmatprep.subr.mxu0 0.0
    %4464 = vmatpush1.msra.mxu0 %v4441
    %4465 = vmatprep.subr.mxu0 0.0
    %4466 = vmatpush1.msra.mxu0 %v4442
    %4467 = vmatprep.subr.mxu0 0.0
    %4468 = vmatpush1.msra.mxu0 %v4443
    %4469 = vmatprep.subr.mxu0 0.0
    %4470 = vmatpush1.msra.mxu0 0.0
    %4471 = vmatprep.subr.mxu0 0.0
    %4472 = vmatpush1.msra.mxu0 0.0
    %4473 = vmatprep.subr.mxu0 0.0
    %4474 = vmatpush1.msra.mxu0 0.0
    %4475 = vmatprep.subr.mxu0 0.0
    %4476 = vmatpush1.msra.mxu0 0.0
    %4477 = vmatprep.subr.mxu0 0.0
    %4478 = vmatpush1.msra.mxu0 0.0
    %4479 = vmatprep.subr.mxu0 0.0
    %4480 = vmatpush1.msra.mxu0 0.0
    %4481 = vmatprep.subr.mxu0 0.0
    %4482 = vmatpush1.msra.mxu0 0.0
    %4483 = vmatprep.subr.mxu0 0.0
    %4484 = vmatpush1.msra.mxu0 0.0
    %4485 = vmatprep.subr.mxu0 0.0
    %4486 = vmatpush1.msra.mxu0 0.0
    %4487 = vmatprep.subr.mxu0 0.0
    %4488 = vmatpush1.msra.mxu0 0.0
    %4489 = vmatprep.subr.mxu0 0.0
    %4490 = vmatpush1.msra.mxu0 0.0
    %4491 = vmatprep.subr.mxu0 0.0
    %4492 = vmatpush1.msra.mxu0 0.0
    %4493 = vmatprep.subr.mxu0 0.0
    %4494 = vmatpush1.msra.mxu0 0.0
    %4495 = vmatprep.subr.mxu0 0.0
    %4496 = vmatpush1.msra.mxu0 0.0
    %4497 = vmatprep.subr.mxu0 0.0
    %4498 = vmatpush1.msra.mxu0 0.0
    %4499 = vmatprep.subr.mxu0 0.0
    %4500 = vmatpush1.msra.mxu0 0.0
    %4501 = vmatprep.subr.mxu0 0.0
    %4502 = vmatpush1.msra.mxu0 0.0
    %4503 = vmatprep.subr.mxu0 0.0
    %4504 = vmatpush1.msra.mxu0 0.0
    %4505 = vmatprep.subr.mxu0 0.0
    %4506 = vmatpush1.msra.mxu0 0.0
    %4507 = vmatprep.subr.mxu0 0.0
    %4508 = vmatpush1.msra.mxu0 0.0
    %4509 = vmatprep.subr.mxu0 0.0
    %4510 = vmatpush1.msra.mxu0 0.0
    %4511 = vmatprep.subr.mxu0 0.0
    %4512 = vmatpush1.msra.mxu0 0.0
    %4513 = vmatprep.subr.mxu0 0.0
    %4514 = vmatpush1.msra.mxu0 0.0
    %4515 = vmatprep.subr.mxu0 0.0
    %4516 = vmatpush1.msra.mxu0 0.0
    %4517 = vmatprep.subr.mxu0 0.0
    %4518 = vmatpush1.msra.mxu0 0.0
    %4519 = vmatprep.subr.mxu0 0.0
    %4520 = vmatpush1.msra.mxu0 0.0
    %4521 = vmatprep.subr.mxu0 0.0
    %4522 = vmatpush1.msra.mxu0 0.0
    %4523 = vmatprep.subr.mxu0 0.0
    %4524 = vmatpush1.msra.mxu0 0.0
    %4525 = vmatprep.mubr.f32.mxu0 0.0
    %4526 = vmatmul.mubr.f32.gmra.mrb[0].mxu0 %v4453
    %v4527 = vpop.f32.mrb[0].mxu0
    %v4528 = vadd.f32 %v4450, %v4527
    %v4529 = vpop.f32.mrb[0].mxu0
    %4530 = vmatprep.mubr.f32.mxu0 0.0
    %4531 = vmatmul.mubr.f32.gmra.mrb[0].mxu0 %v4456
    %v4532 = vpop.f32.mrb[0].mxu0
    %v4533 = vadd.f32 %v4450, %v4532
    %v4534 = vpop.f32.mrb[0].mxu0
    %4535 = vmatprep.mubr.f32.mxu0 0.0
    %4536 = vmatmul.mubr.f32.gmra.mrb[0].mxu0 %v4459
    %v4537 = vpop.f32.mrb[0].mxu0
    %v4538 = vadd.f32 %v4450, %v4537
    %v4539 = vpop.f32.mrb[0].mxu0
    %4540 = vdwg.mxu0
    %v4541 = vsel %vm172, %v4528, 0.0
    %v4542 = vsel %vm172, %v4533, 0.0
    %4545 = vrot.lane.b32.xlu0 %v4528, 96
    %v4546 = vpop.permute.xlu0 %4545
    %4547 = vrot.lane.b32.xlu0 %v4533, 96
    %v4548 = vpop.permute.xlu0 %4547
    %v4550 = vsel %vm156, %v4541, 0
    %v4553 = vsel %vm156, %v4542, 0
    %v4555 = vsel %vm156, %v4546, 0
    %v4557 = vsel %vm156, %v4548, 0
    %4559 = vmatprep.subr.mxu0 0.0
    %4560 = vmatpush1.xpose.msra.mxu0 %v4555
    %4561 = vmatprep.subr.mxu0 0.0
    %4562 = vmatpush1.xpose.msra.mxu0 %v4557
    %4563 = vmatprep.subr.mxu0 0.0
    %4564 = vmatpush1.xpose.msra.mxu0 0.0
    %4565 = vmatprep.subr.mxu0 0.0
    %4566 = vmatpush1.xpose.msra.mxu0 0.0
    %4567 = vmatprep.subr.mxu0 0.0
    %4568 = vmatpush1.xpose.msra.mxu0 0.0
    %4569 = vmatprep.subr.mxu0 0.0
    %4570 = vmatpush1.xpose.msra.mxu0 0.0
    %4571 = vmatprep.subr.mxu0 0.0
    %4572 = vmatpush1.xpose.msra.mxu0 0.0
    %4573 = vmatprep.subr.mxu0 0.0
    %4574 = vmatpush1.xpose.msra.mxu0 0.0
    %4575 = vmatprep.subr.mxu0 0.0
    %4576 = vmatpush1.xpose.msra.mxu0 0.0
    %4577 = vmatprep.subr.mxu0 0.0
    %4578 = vmatpush1.xpose.msra.mxu0 0.0
    %4579 = vmatprep.subr.mxu0 0.0
    %4580 = vmatpush1.xpose.msra.mxu0 0.0
    %4581 = vmatprep.subr.mxu0 0.0
    %4582 = vmatpush1.xpose.msra.mxu0 0.0
    %4583 = vmatprep.subr.mxu0 0.0
    %4584 = vmatpush1.xpose.msra.mxu0 0.0
    %4585 = vmatprep.subr.mxu0 0.0
    %4586 = vmatpush1.xpose.msra.mxu0 0.0
    %4587 = vmatprep.subr.mxu0 0.0
    %4588 = vmatpush1.xpose.msra.mxu0 0.0
    %4589 = vmatprep.subr.mxu0 0.0
    %4590 = vmatpush1.xpose.msra.mxu0 0.0
    %4591 = vmatprep.subr.mxu0 0.0
    %4592 = vmatpush1.xpose.msra.mxu0 0.0
    %4593 = vmatprep.subr.mxu0 0.0
    %4594 = vmatpush1.xpose.msra.mxu0 0.0
    %4595 = vmatprep.subr.mxu0 0.0
    %4596 = vmatpush1.xpose.msra.mxu0 0.0
    %4597 = vmatprep.subr.mxu0 0.0
    %4598 = vmatpush1.xpose.msra.mxu0 0.0
    %4599 = vmatprep.subr.mxu0 0.0
    %4600 = vmatpush1.xpose.msra.mxu0 0.0
    %4601 = vmatprep.subr.mxu0 0.0
    %4602 = vmatpush1.xpose.msra.mxu0 0.0
    %4603 = vmatprep.subr.mxu0 0.0
    %4604 = vmatpush1.xpose.msra.mxu0 0.0
    %4605 = vmatprep.subr.mxu0 0.0
    %4606 = vmatpush1.xpose.msra.mxu0 0.0
    %4607 = vmatprep.subr.mxu0 0.0
    %4608 = vmatpush1.xpose.msra.mxu0 0.0
    %4609 = vmatprep.subr.mxu0 0.0
    %4610 = vmatpush1.xpose.msra.mxu0 0.0
    %4611 = vmatprep.subr.mxu0 0.0
    %4612 = vmatpush1.xpose.msra.mxu0 0.0
    %4613 = vmatprep.subr.mxu0 0.0
    %4614 = vmatpush1.xpose.msra.mxu0 0.0
    %4615 = vmatprep.subr.mxu0 0.0
    %4616 = vmatpush1.xpose.msra.mxu0 0.0
    %4617 = vmatprep.subr.mxu0 0.0
    %4618 = vmatpush1.xpose.msra.mxu0 0.0
    %4619 = vmatprep.subr.mxu0 0.0
    %4620 = vmatpush1.xpose.msra.mxu0 0.0
    %4621 = vmatprep.subr.mxu0 0.0
    %4622 = vmatpush1.xpose.msra.mxu0 0.0
    %4623 = vmatprep.mubr.f32.mxu0 0.0
    %4624 = vmatmul.mubr.f32.gmra.mrb[0].mxu0 %v4550
    %v4625 = vpop.f32.mrb[0].mxu0
    %v4626 = vadd.f32 0.0, %v4625
    %v4627 = vpop.f32.mrb[0].mxu0
    %4628 = vmatprep.mubr.f32.mxu0 0.0
    %4629 = vmatmul.mubr.f32.gmra.mrb[0].mxu0 %v4553
    %v4630 = vpop.f32.mrb[0].mxu0
    %v4631 = vadd.f32 0.0, %v4630
    %v4632 = vpop.f32.mrb[0].mxu0
    %4633 = vdwg.mxu0
    %v4634 = vsel %vm376, %v4626, -inf
    %4635 = vmax.xlane.f32.xlu0 %v4634
    %v4636 = vpop.xlane.xlu0 %4635
    %v4637 = vsel %vm380, %v4631, -inf
    %4638 = vmax.xlane.f32.xlu0 %v4637
    %v4639 = vpop.xlane.xlu0 %4638
    %v4640 = vsub.f32 %v4626, %v4636
    %v4641 = vsub.f32 %v4631, %v4639
    %v4642 = vmul.f32 %v4640, 1.442695
    %v4643 = vpow.pop %v4642
    %v4644 = vmul.f32 %v4641, 1.442695
    %v4645 = vpow.pop %v4644
    %v4646 = vsel %vm376, %v4643, 0.0
    %4647 = vadd.xlane.f32.xlu0 %v4646
    %v4648 = vpop.xlane.xlu0 %4647
    %v4649 = vsel %vm380, %v4645, 0.0
    %4650 = vadd.xlane.f32.xlu0 %v4649
    %v4651 = vpop.xlane.xlu0 %4650
    %v4652 = vrcp.pop %v4648
    %v4653 = vrcp.pop %v4651
    %v4654 = vmul.f32 %v4643, %v4652
    %v4655 = vmul.f32 %v4645, %v4653
    %4656 = vrot.lane.b32.xlu0 %v4528, 64
    %v4657 = vpop.permute.xlu0 %4656
    %4658 = vrot.lane.b32.xlu0 %v4533, 64
    %v4659 = vpop.permute.xlu0 %4658
    %v4662 = vsel %vm172, %v4657, 0.0
    %v4663 = vsel %vm172, %v4659, 0.0
    %v4664 = vadd.f32 %v4654, 0.0
    %v4665 = vadd.f32 %v4655, 0.0
    %v4666 = vsel %vm175, %v4528, 0.0
    %v4667 = vsel %vm175, %v4533, 0.0
    %v4669 = vsel %vm156, %v4666, 0
    %v4672 = vsel %vm156, %v4667, 0
    %4674 = vmatprep.subr.mxu0 0.0
    %4675 = vmatpush1.xpose.msra.mxu0 %v4555
    %4676 = vmatprep.subr.mxu0 0.0
    %4677 = vmatpush1.xpose.msra.mxu0 %v4557
    %4678 = vmatprep.subr.mxu0 0.0
    %4679 = vmatpush1.xpose.msra.mxu0 0.0
    %4680 = vmatprep.subr.mxu0 0.0
    %4681 = vmatpush1.xpose.msra.mxu0 0.0
    %4682 = vmatprep.subr.mxu0 0.0
    %4683 = vmatpush1.xpose.msra.mxu0 0.0
    %4684 = vmatprep.subr.mxu0 0.0
    %4685 = vmatpush1.xpose.msra.mxu0 0.0
    %4686 = vmatprep.subr.mxu0 0.0
    %4687 = vmatpush1.xpose.msra.mxu0 0.0
    %4688 = vmatprep.subr.mxu0 0.0
    %4689 = vmatpush1.xpose.msra.mxu0 0.0
    %4690 = vmatprep.subr.mxu0 0.0
    %4691 = vmatpush1.xpose.msra.mxu0 0.0
    %4692 = vmatprep.subr.mxu0 0.0
    %4693 = vmatpush1.xpose.msra.mxu0 0.0
    %4694 = vmatprep.subr.mxu0 0.0
    %4695 = vmatpush1.xpose.msra.mxu0 0.0
    %4696 = vmatprep.subr.mxu0 0.0
    %4697 = vmatpush1.xpose.msra.mxu0 0.0
    %4698 = vmatprep.subr.mxu0 0.0
    %4699 = vmatpush1.xpose.msra.mxu0 0.0
    %4700 = vmatprep.subr.mxu0 0.0
    %4701 = vmatpush1.xpose.msra.mxu0 0.0
    %4702 = vmatprep.subr.mxu0 0.0
    %4703 = vmatpush1.xpose.msra.mxu0 0.0
    %4704 = vmatprep.subr.mxu0 0.0
    %4705 = vmatpush1.xpose.msra.mxu0 0.0
    %4706 = vmatprep.subr.mxu0 0.0
    %4707 = vmatpush1.xpose.msra.mxu0 0.0
    %4708 = vmatprep.subr.mxu0 0.0
    %4709 = vmatpush1.xpose.msra.mxu0 0.0
    %4710 = vmatprep.subr.mxu0 0.0
    %4711 = vmatpush1.xpose.msra.mxu0 0.0
    %4712 = vmatprep.subr.mxu0 0.0
    %4713 = vmatpush1.xpose.msra.mxu0 0.0
    %4714 = vmatprep.subr.mxu0 0.0
    %4715 = vmatpush1.xpose.msra.mxu0 0.0
    %4716 = vmatprep.subr.mxu0 0.0
    %4717 = vmatpush1.xpose.msra.mxu0 0.0
    %4718 = vmatprep.subr.mxu0 0.0
    %4719 = vmatpush1.xpose.msra.mxu0 0.0
    %4720 = vmatprep.subr.mxu0 0.0
    %4721 = vmatpush1.xpose.msra.mxu0 0.0
    %4722 = vmatprep.subr.mxu0 0.0
    %4723 = vmatpush1.xpose.msra.mxu0 0.0
    %4724 = vmatprep.subr.mxu0 0.0
    %4725 = vmatpush1.xpose.msra.mxu0 0.0
    %4726 = vmatprep.subr.mxu0 0.0
    %4727 = vmatpush1.xpose.msra.mxu0 0.0
    %4728 = vmatprep.subr.mxu0 0.0
    %4729 = vmatpush1.xpose.msra.mxu0 0.0
    %4730 = vmatprep.subr.mxu0 0.0
    %4731 = vmatpush1.xpose.msra.mxu0 0.0
    %4732 = vmatprep.subr.mxu0 0.0
    %4733 = vmatpush1.xpose.msra.mxu0 0.0
    %4734 = vmatprep.subr.mxu0 0.0
    %4735 = vmatpush1.xpose.msra.mxu0 0.0
    %4736 = vmatprep.subr.mxu0 0.0
    %4737 = vmatpush1.xpose.msra.mxu0 0.0
    %4738 = vmatprep.mubr.f32.mxu0 0.0
    %4739 = vmatmul.mubr.f32.gmra.mrb[0].mxu0 %v4669
    %v4740 = vpop.f32.mrb[0].mxu0
    %v4741 = vadd.f32 0.0, %v4740
    %v4742 = vpop.f32.mrb[0].mxu0
    %4743 = vmatprep.mubr.f32.mxu0 0.0
    %4744 = vmatmul.mubr.f32.gmra.mrb[0].mxu0 %v4672
    %v4745 = vpop.f32.mrb[0].mxu0
    %v4746 = vadd.f32 0.0, %v4745
    %v4747 = vpop.f32.mrb[0].mxu0
    %4748 = vdwg.mxu0
    %v4749 = vsel %vm376, %v4741, -inf
    %4750 = vmax.xlane.f32.xlu0 %v4749
    %v4751 = vpop.xlane.xlu0 %4750
    %v4752 = vsel %vm380, %v4746, -inf
    %4753 = vmax.xlane.f32.xlu0 %v4752
    %v4754 = vpop.xlane.xlu0 %4753
    %v4755 = vsub.f32 %v4741, %v4751
    %v4756 = vsub.f32 %v4746, %v4754
    %v4757 = vmul.f32 %v4755, 1.442695
    %v4758 = vpow.pop %v4757
    %v4759 = vmul.f32 %v4756, 1.442695
    %v4760 = vpow.pop %v4759
    %v4761 = vsel %vm376, %v4758, 0.0
    %4762 = vadd.xlane.f32.xlu0 %v4761
    %v4763 = vpop.xlane.xlu0 %4762
    %v4764 = vsel %vm380, %v4760, 0.0
    %4765 = vadd.xlane.f32.xlu0 %v4764
    %v4766 = vpop.xlane.xlu0 %4765
    %v4767 = vrcp.pop %v4763
    %v4768 = vrcp.pop %v4766
    %v4769 = vmul.f32 %v4758, %v4767
    %v4770 = vmul.f32 %v4760, %v4768
    %v4771 = vsel %vm175, %v4657, 0.0
    %v4772 = vsel %vm175, %v4659, 0.0
    %v4774 = vsel %vm376, %v4769, 0
    %v4777 = vsel %vm376, %v4770, 0
    %v4780 = vsel %vm523, %v4772, 0
    %4782 = vmatprep.subr.mxu0 0.0
    %4783 = vmatpush1.msra.mxu0 %v4771
    %4784 = vmatprep.subr.mxu0 0.0
    %4785 = vmatpush1.msra.mxu0 %v4780
    %4786 = vmatprep.subr.mxu0 0.0
    %4787 = vmatpush1.msra.mxu0 0.0
    %4788 = vmatprep.subr.mxu0 0.0
    %4789 = vmatpush1.msra.mxu0 0.0
    %4790 = vmatprep.subr.mxu0 0.0
    %4791 = vmatpush1.msra.mxu0 0.0
    %4792 = vmatprep.subr.mxu0 0.0
    %4793 = vmatpush1.msra.mxu0 0.0
    %4794 = vmatprep.subr.mxu0 0.0
    %4795 = vmatpush1.msra.mxu0 0.0
    %4796 = vmatprep.subr.mxu0 0.0
    %4797 = vmatpush1.msra.mxu0 0.0
    %4798 = vmatprep.subr.mxu0 0.0
    %4799 = vmatpush1.msra.mxu0 0.0
    %4800 = vmatprep.subr.mxu0 0.0
    %4801 = vmatpush1.msra.mxu0 0.0
    %4802 = vmatprep.subr.mxu0 0.0
    %4803 = vmatpush1.msra.mxu0 0.0
    %4804 = vmatprep.subr.mxu0 0.0
    %4805 = vmatpush1.msra.mxu0 0.0
    %4806 = vmatprep.subr.mxu0 0.0
    %4807 = vmatpush1.msra.mxu0 0.0
    %4808 = vmatprep.subr.mxu0 0.0
    %4809 = vmatpush1.msra.mxu0 0.0
    %4810 = vmatprep.subr.mxu0 0.0
    %4811 = vmatpush1.msra.mxu0 0.0
    %4812 = vmatprep.subr.mxu0 0.0
    %4813 = vmatpush1.msra.mxu0 0.0
    %4814 = vmatprep.subr.mxu0 0.0
    %4815 = vmatpush1.msra.mxu0 0.0
    %4816 = vmatprep.subr.mxu0 0.0
    %4817 = vmatpush1.msra.mxu0 0.0
    %4818 = vmatprep.subr.mxu0 0.0
    %4819 = vmatpush1.msra.mxu0 0.0
    %4820 = vmatprep.subr.mxu0 0.0
    %4821 = vmatpush1.msra.mxu0 0.0
    %4822 = vmatprep.subr.mxu0 0.0
    %4823 = vmatpush1.msra.mxu0 0.0
    %4824 = vmatprep.subr.mxu0 0.0
    %4825 = vmatpush1.msra.mxu0 0.0
    %4826 = vmatprep.subr.mxu0 0.0
    %4827 = vmatpush1.msra.mxu0 0.0
    %4828 = vmatprep.subr.mxu0 0.0
    %4829 = vmatpush1.msra.mxu0 0.0
    %4830 = vmatprep.subr.mxu0 0.0
    %4831 = vmatpush1.msra.mxu0 0.0
    %4832 = vmatprep.subr.mxu0 0.0
    %4833 = vmatpush1.msra.mxu0 0.0
    %4834 = vmatprep.subr.mxu0 0.0
    %4835 = vmatpush1.msra.mxu0 0.0
    %4836 = vmatprep.subr.mxu0 0.0
    %4837 = vmatpush1.msra.mxu0 0.0
    %4838 = vmatprep.subr.mxu0 0.0
    %4839 = vmatpush1.msra.mxu0 0.0
    %4840 = vmatprep.subr.mxu0 0.0
    %4841 = vmatpush1.msra.mxu0 0.0
    %4842 = vmatprep.subr.mxu0 0.0
    %4843 = vmatpush1.msra.mxu0 0.0
    %4844 = vmatprep.subr.mxu0 0.0
    %4845 = vmatpush1.msra.mxu0 0.0
    %4846 = vmatprep.mubr.f32.mxu0 0.0
    %4847 = vmatmul.mubr.f32.gmra.mrb[0].mxu0 %v4774
    %v4848 = vpop.f32.mrb[0].mxu0
    %v4849 = vadd.f32 0.0, %v4848
    %v4850 = vpop.f32.mrb[0].mxu0
    %4851 = vmatprep.mubr.f32.mxu0 0.0
    %4852 = vmatmul.mubr.f32.gmra.mrb[0].mxu0 %v4777
    %v4853 = vpop.f32.mrb[0].mxu0
    %v4854 = vadd.f32 0.0, %v4853
    %v4855 = vpop.f32.mrb[0].mxu0
    %4856 = vdwg.mxu0
    %v4858 = vsel %vm376, %v4654, 0
    %v4861 = vsel %vm376, %v4655, 0
    %v4864 = vsel %vm523, %v4663, 0
    %4866 = vmatprep.subr.mxu0 0.0
    %4867 = vmatpush1.msra.mxu0 %v4662
    %4868 = vmatprep.subr.mxu0 0.0
    %4869 = vmatpush1.msra.mxu0 %v4864
    %4870 = vmatprep.subr.mxu0 0.0
    %4871 = vmatpush1.msra.mxu0 0.0
    %4872 = vmatprep.subr.mxu0 0.0
    %4873 = vmatpush1.msra.mxu0 0.0
    %4874 = vmatprep.subr.mxu0 0.0
    %4875 = vmatpush1.msra.mxu0 0.0
    %4876 = vmatprep.subr.mxu0 0.0
    %4877 = vmatpush1.msra.mxu0 0.0
    %4878 = vmatprep.subr.mxu0 0.0
    %4879 = vmatpush1.msra.mxu0 0.0
    %4880 = vmatprep.subr.mxu0 0.0
    %4881 = vmatpush1.msra.mxu0 0.0
    %4882 = vmatprep.subr.mxu0 0.0
    %4883 = vmatpush1.msra.mxu0 0.0
    %4884 = vmatprep.subr.mxu0 0.0
    %4885 = vmatpush1.msra.mxu0 0.0
    %4886 = vmatprep.subr.mxu0 0.0
    %4887 = vmatpush1.msra.mxu0 0.0
    %4888 = vmatprep.subr.mxu0 0.0
    %4889 = vmatpush1.msra.mxu0 0.0
    %4890 = vmatprep.subr.mxu0 0.0
    %4891 = vmatpush1.msra.mxu0 0.0
    %4892 = vmatprep.subr.mxu0 0.0
    %4893 = vmatpush1.msra.mxu0 0.0
    %4894 = vmatprep.subr.mxu0 0.0
    %4895 = vmatpush1.msra.mxu0 0.0
    %4896 = vmatprep.subr.mxu0 0.0
    %4897 = vmatpush1.msra.mxu0 0.0
    %4898 = vmatprep.subr.mxu0 0.0
    %4899 = vmatpush1.msra.mxu0 0.0
    %4900 = vmatprep.subr.mxu0 0.0
    %4901 = vmatpush1.msra.mxu0 0.0
    %4902 = vmatprep.subr.mxu0 0.0
    %4903 = vmatpush1.msra.mxu0 0.0
    %4904 = vmatprep.subr.mxu0 0.0
    %4905 = vmatpush1.msra.mxu0 0.0
    %4906 = vmatprep.subr.mxu0 0.0
    %4907 = vmatpush1.msra.mxu0 0.0
    %4908 = vmatprep.subr.mxu0 0.0
    %4909 = vmatpush1.msra.mxu0 0.0
    %4910 = vmatprep.subr.mxu0 0.0
    %4911 = vmatpush1.msra.mxu0 0.0
    %4912 = vmatprep.subr.mxu0 0.0
    %4913 = vmatpush1.msra.mxu0 0.0
    %4914 = vmatprep.subr.mxu0 0.0
    %4915 = vmatpush1.msra.mxu0 0.0
    %4916 = vmatprep.subr.mxu0 0.0
    %4917 = vmatpush1.msra.mxu0 0.0
    %4918 = vmatprep.subr.mxu0 0.0
    %4919 = vmatpush1.msra.mxu0 0.0
    %4920 = vmatprep.subr.mxu0 0.0
    %4921 = vmatpush1.msra.mxu0 0.0
    %4922 = vmatprep.subr.mxu0 0.0
    %4923 = vmatpush1.msra.mxu0 0.0
    %4924 = vmatprep.subr.mxu0 0.0
    %4925 = vmatpush1.msra.mxu0 0.0
    %4926 = vmatprep.subr.mxu0 0.0
    %4927 = vmatpush1.msra.mxu0 0.0
    %4928 = vmatprep.subr.mxu0 0.0
    %4929 = vmatpush1.msra.mxu0 0.0
    %4930 = vmatprep.mubr.f32.mxu0 0.0
    %4931 = vmatmul.mubr.f32.gmra.mrb[0].mxu0 %v4858
    %v4932 = vpop.f32.mrb[0].mxu0
    %v4933 = vadd.f32 %v4849, %v4932
    %v4934 = vpop.f32.mrb[0].mxu0
    %4935 = vmatprep.mubr.f32.mxu0 0.0
    %4936 = vmatmul.mubr.f32.gmra.mrb[0].mxu0 %v4861
    %v4937 = vpop.f32.mrb[0].mxu0
    %v4938 = vadd.f32 %v4854, %v4937
    %v4939 = vpop.f32.mrb[0].mxu0
    %4940 = vdwg.mxu0
    %v4941 = vadd.f32 %v4664, %v4769
    %v4942 = vadd.f32 %v4665, %v4770
    %v4943 = vsel %vm178, %v4528, 0.0
    %v4944 = vsel %vm178, %v4533, 0.0
    %v4946 = vsel %vm156, %v4943, 0
    %v4949 = vsel %vm156, %v4944, 0
    %4951 = vmatprep.subr.mxu0 0.0
    %4952 = vmatpush1.xpose.msra.mxu0 %v4555
    %4953 = vmatprep.subr.mxu0 0.0
    %4954 = vmatpush1.xpose.msra.mxu0 %v4557
    %4955 = vmatprep.subr.mxu0 0.0
    %4956 = vmatpush1.xpose.msra.mxu0 0.0
    %4957 = vmatprep.subr.mxu0 0.0
    %4958 = vmatpush1.xpose.msra.mxu0 0.0
    %4959 = vmatprep.subr.mxu0 0.0
    %4960 = vmatpush1.xpose.msra.mxu0 0.0
    %4961 = vmatprep.subr.mxu0 0.0
    %4962 = vmatpush1.xpose.msra.mxu0 0.0
    %4963 = vmatprep.subr.mxu0 0.0
    %4964 = vmatpush1.xpose.msra.mxu0 0.0
    %4965 = vmatprep.subr.mxu0 0.0
    %4966 = vmatpush1.xpose.msra.mxu0 0.0
    %4967 = vmatprep.subr.mxu0 0.0
    %4968 = vmatpush1.xpose.msra.mxu0 0.0
    %4969 = vmatprep.subr.mxu0 0.0
    %4970 = vmatpush1.xpose.msra.mxu0 0.0
    %4971 = vmatprep.subr.mxu0 0.0
    %4972 = vmatpush1.xpose.msra.mxu0 0.0
    %4973 = vmatprep.subr.mxu0 0.0
    %4974 = vmatpush1.xpose.msra.mxu0 0.0
    %4975 = vmatprep.subr.mxu0 0.0
    %4976 = vmatpush1.xpose.msra.mxu0 0.0
    %4977 = vmatprep.subr.mxu0 0.0
    %4978 = vmatpush1.xpose.msra.mxu0 0.0
    %4979 = vmatprep.subr.mxu0 0.0
    %4980 = vmatpush1.xpose.msra.mxu0 0.0
    %4981 = vmatprep.subr.mxu0 0.0
    %4982 = vmatpush1.xpose.msra.mxu0 0.0
    %4983 = vmatprep.subr.mxu0 0.0
    %4984 = vmatpush1.xpose.msra.mxu0 0.0
    %4985 = vmatprep.subr.mxu0 0.0
    %4986 = vmatpush1.xpose.msra.mxu0 0.0
    %4987 = vmatprep.subr.mxu0 0.0
    %4988 = vmatpush1.xpose.msra.mxu0 0.0
    %4989 = vmatprep.subr.mxu0 0.0
    %4990 = vmatpush1.xpose.msra.mxu0 0.0
    %4991 = vmatprep.subr.mxu0 0.0
    %4992 = vmatpush1.xpose.msra.mxu0 0.0
    %4993 = vmatprep.subr.mxu0 0.0
    %4994 = vmatpush1.xpose.msra.mxu0 0.0
    %4995 = vmatprep.subr.mxu0 0.0
    %4996 = vmatpush1.xpose.msra.mxu0 0.0
    %4997 = vmatprep.subr.mxu0 0.0
    %4998 = vmatpush1.xpose.msra.mxu0 0.0
    %4999 = vmatprep.subr.mxu0 0.0
    %5000 = vmatpush1.xpose.msra.mxu0 0.0
    %5001 = vmatprep.subr.mxu0 0.0
    %5002 = vmatpush1.xpose.msra.mxu0 0.0
    %5003 = vmatprep.subr.mxu0 0.0
    %5004 = vmatpush1.xpose.msra.mxu0 0.0
    %5005 = vmatprep.subr.mxu0 0.0
    %5006 = vmatpush1.xpose.msra.mxu0 0.0
    %5007 = vmatprep.subr.mxu0 0.0
    %5008 = vmatpush1.xpose.msra.mxu0 0.0
    %5009 = vmatprep.subr.mxu0 0.0
    %5010 = vmatpush1.xpose.msra.mxu0 0.0
    %5011 = vmatprep.subr.mxu0 0.0
    %5012 = vmatpush1.xpose.msra.mxu0 0.0
    %5013 = vmatprep.subr.mxu0 0.0
    %5014 = vmatpush1.xpose.msra.mxu0 0.0
    %5015 = vmatprep.mubr.f32.mxu0 0.0
    %5016 = vmatmul.mubr.f32.gmra.mrb[0].mxu0 %v4946
    %v5017 = vpop.f32.mrb[0].mxu0
    %v5018 = vadd.f32 0.0, %v5017
    %v5019 = vpop.f32.mrb[0].mxu0
    %5020 = vmatprep.mubr.f32.mxu0 0.0
    %5021 = vmatmul.mubr.f32.gmra.mrb[0].mxu0 %v4949
    %v5022 = vpop.f32.mrb[0].mxu0
    %v5023 = vadd.f32 0.0, %v5022
    %v5024 = vpop.f32.mrb[0].mxu0
    %5025 = vdwg.mxu0
    %v5026 = vsel %vm376, %v5018, -inf
    %5027 = vmax.xlane.f32.xlu0 %v5026
    %v5028 = vpop.xlane.xlu0 %5027
    %v5029 = vsel %vm380, %v5023, -inf
    %5030 = vmax.xlane.f32.xlu0 %v5029
    %v5031 = vpop.xlane.xlu0 %5030
    %v5032 = vsub.f32 %v5018, %v5028
    %v5033 = vsub.f32 %v5023, %v5031
    %v5034 = vmul.f32 %v5032, 1.442695
    %v5035 = vpow.pop %v5034
    %v5036 = vmul.f32 %v5033, 1.442695
    %v5037 = vpow.pop %v5036
    %v5038 = vsel %vm376, %v5035, 0.0
    %5039 = vadd.xlane.f32.xlu0 %v5038
    %v5040 = vpop.xlane.xlu0 %5039
    %v5041 = vsel %vm380, %v5037, 0.0
    %5042 = vadd.xlane.f32.xlu0 %v5041
    %v5043 = vpop.xlane.xlu0 %5042
    %v5044 = vrcp.pop %v5040
    %v5045 = vrcp.pop %v5043
    %v5046 = vmul.f32 %v5035, %v5044
    %v5047 = vmul.f32 %v5037, %v5045
    %v5048 = vsel %vm178, %v4657, 0.0
    %v5049 = vsel %vm178, %v4659, 0.0
    %v5051 = vsel %vm376, %v5046, 0
    %v5054 = vsel %vm376, %v5047, 0
    %v5057 = vsel %vm523, %v5049, 0
    %5059 = vmatprep.subr.mxu0 0.0
    %5060 = vmatpush1.msra.mxu0 %v5048
    %5061 = vmatprep.subr.mxu0 0.0
    %5062 = vmatpush1.msra.mxu0 %v5057
    %5063 = vmatprep.subr.mxu0 0.0
    %5064 = vmatpush1.msra.mxu0 0.0
    %5065 = vmatprep.subr.mxu0 0.0
    %5066 = vmatpush1.msra.mxu0 0.0
    %5067 = vmatprep.subr.mxu0 0.0
    %5068 = vmatpush1.msra.mxu0 0.0
    %5069 = vmatprep.subr.mxu0 0.0
    %5070 = vmatpush1.msra.mxu0 0.0
    %5071 = vmatprep.subr.mxu0 0.0
    %5072 = vmatpush1.msra.mxu0 0.0
    %5073 = vmatprep.subr.mxu0 0.0
    %5074 = vmatpush1.msra.mxu0 0.0
    %5075 = vmatprep.subr.mxu0 0.0
    %5076 = vmatpush1.msra.mxu0 0.0
    %5077 = vmatprep.subr.mxu0 0.0
    %5078 = vmatpush1.msra.mxu0 0.0
    %5079 = vmatprep.subr.mxu0 0.0
    %5080 = vmatpush1.msra.mxu0 0.0
    %5081 = vmatprep.subr.mxu0 0.0
    %5082 = vmatpush1.msra.mxu0 0.0
    %5083 = vmatprep.subr.mxu0 0.0
    %5084 = vmatpush1.msra.mxu0 0.0
    %5085 = vmatprep.subr.mxu0 0.0
    %5086 = vmatpush1.msra.mxu0 0.0
    %5087 = vmatprep.subr.mxu0 0.0
    %5088 = vmatpush1.msra.mxu0 0.0
    %5089 = vmatprep.subr.mxu0 0.0
    %5090 = vmatpush1.msra.mxu0 0.0
    %5091 = vmatprep.subr.mxu0 0.0
    %5092 = vmatpush1.msra.mxu0 0.0
    %5093 = vmatprep.subr.mxu0 0.0
    %5094 = vmatpush1.msra.mxu0 0.0
    %5095 = vmatprep.subr.mxu0 0.0
    %5096 = vmatpush1.msra.mxu0 0.0
    %5097 = vmatprep.subr.mxu0 0.0
    %5098 = vmatpush1.msra.mxu0 0.0
    %5099 = vmatprep.subr.mxu0 0.0
    %5100 = vmatpush1.msra.mxu0 0.0
    %5101 = vmatprep.subr.mxu0 0.0
    %5102 = vmatpush1.msra.mxu0 0.0
    %5103 = vmatprep.subr.mxu0 0.0
    %5104 = vmatpush1.msra.mxu0 0.0
    %5105 = vmatprep.subr.mxu0 0.0
    %5106 = vmatpush1.msra.mxu0 0.0
    %5107 = vmatprep.subr.mxu0 0.0
    %5108 = vmatpush1.msra.mxu0 0.0
    %5109 = vmatprep.subr.mxu0 0.0
    %5110 = vmatpush1.msra.mxu0 0.0
    %5111 = vmatprep.subr.mxu0 0.0
    %5112 = vmatpush1.msra.mxu0 0.0
    %5113 = vmatprep.subr.mxu0 0.0
    %5114 = vmatpush1.msra.mxu0 0.0
    %5115 = vmatprep.subr.mxu0 0.0
    %5116 = vmatpush1.msra.mxu0 0.0
    %5117 = vmatprep.subr.mxu0 0.0
    %5118 = vmatpush1.msra.mxu0 0.0
    %5119 = vmatprep.subr.mxu0 0.0
    %5120 = vmatpush1.msra.mxu0 0.0
    %5121 = vmatprep.subr.mxu0 0.0
    %5122 = vmatpush1.msra.mxu0 0.0
    %5123 = vmatprep.mubr.f32.mxu0 0.0
    %5124 = vmatmul.mubr.f32.gmra.mrb[0].mxu0 %v5051
    %v5125 = vpop.f32.mrb[0].mxu0
    %v5126 = vadd.f32 0.0, %v5125
    %v5127 = vpop.f32.mrb[0].mxu0
    %5128 = vmatprep.mubr.f32.mxu0 0.0
    %5129 = vmatmul.mubr.f32.gmra.mrb[0].mxu0 %v5054
    %v5130 = vpop.f32.mrb[0].mxu0
    %v5131 = vadd.f32 0.0, %v5130
    %v5132 = vpop.f32.mrb[0].mxu0
    %5133 = vdwg.mxu0
    %v5134 = vadd.f32 %v4933, %v5126
    %v5135 = vadd.f32 %v4938, %v5131
    %v5136 = vadd.f32 %v4941, %v5046
    %v5137 = vadd.f32 %v4942, %v5047
    %v5138 = vsel %vm181, %v4528, 0.0
    %v5139 = vsel %vm181, %v4533, 0.0
    %v5141 = vsel %vm156, %v5138, 0
    %v5144 = vsel %vm156, %v5139, 0
    %5146 = vmatprep.subr.mxu0 0.0
    %5147 = vmatpush1.xpose.msra.mxu0 %v4555
    %5148 = vmatprep.subr.mxu0 0.0
    %5149 = vmatpush1.xpose.msra.mxu0 %v4557
    %5150 = vmatprep.subr.mxu0 0.0
    %5151 = vmatpush1.xpose.msra.mxu0 0.0
    %5152 = vmatprep.subr.mxu0 0.0
    %5153 = vmatpush1.xpose.msra.mxu0 0.0
    %5154 = vmatprep.subr.mxu0 0.0
    %5155 = vmatpush1.xpose.msra.mxu0 0.0
    %5156 = vmatprep.subr.mxu0 0.0
    %5157 = vmatpush1.xpose.msra.mxu0 0.0
    %5158 = vmatprep.subr.mxu0 0.0
    %5159 = vmatpush1.xpose.msra.mxu0 0.0
    %5160 = vmatprep.subr.mxu0 0.0
    %5161 = vmatpush1.xpose.msra.mxu0 0.0
    %5162 = vmatprep.subr.mxu0 0.0
    %5163 = vmatpush1.xpose.msra.mxu0 0.0
    %5164 = vmatprep.subr.mxu0 0.0
    %5165 = vmatpush1.xpose.msra.mxu0 0.0
    %5166 = vmatprep.subr.mxu0 0.0
    %5167 = vmatpush1.xpose.msra.mxu0 0.0
    %5168 = vmatprep.subr.mxu0 0.0
    %5169 = vmatpush1.xpose.msra.mxu0 0.0
    %5170 = vmatprep.subr.mxu0 0.0
    %5171 = vmatpush1.xpose.msra.mxu0 0.0
    %5172 = vmatprep.subr.mxu0 0.0
    %5173 = vmatpush1.xpose.msra.mxu0 0.0
    %5174 = vmatprep.subr.mxu0 0.0
    %5175 = vmatpush1.xpose.msra.mxu0 0.0
    %5176 = vmatprep.subr.mxu0 0.0
    %5177 = vmatpush1.xpose.msra.mxu0 0.0
    %5178 = vmatprep.subr.mxu0 0.0
    %5179 = vmatpush1.xpose.msra.mxu0 0.0
    %5180 = vmatprep.subr.mxu0 0.0
    %5181 = vmatpush1.xpose.msra.mxu0 0.0
    %5182 = vmatprep.subr.mxu0 0.0
    %5183 = vmatpush1.xpose.msra.mxu0 0.0
    %5184 = vmatprep.subr.mxu0 0.0
    %5185 = vmatpush1.xpose.msra.mxu0 0.0
    %5186 = vmatprep.subr.mxu0 0.0
    %5187 = vmatpush1.xpose.msra.mxu0 0.0
    %5188 = vmatprep.subr.mxu0 0.0
    %5189 = vmatpush1.xpose.msra.mxu0 0.0
    %5190 = vmatprep.subr.mxu0 0.0
    %5191 = vmatpush1.xpose.msra.mxu0 0.0
    %5192 = vmatprep.subr.mxu0 0.0
    %5193 = vmatpush1.xpose.msra.mxu0 0.0
    %5194 = vmatprep.subr.mxu0 0.0
    %5195 = vmatpush1.xpose.msra.mxu0 0.0
    %5196 = vmatprep.subr.mxu0 0.0
    %5197 = vmatpush1.xpose.msra.mxu0 0.0
    %5198 = vmatprep.subr.mxu0 0.0
    %5199 = vmatpush1.xpose.msra.mxu0 0.0
    %5200 = vmatprep.subr.mxu0 0.0
    %5201 = vmatpush1.xpose.msra.mxu0 0.0
    %5202 = vmatprep.subr.mxu0 0.0
    %5203 = vmatpush1.xpose.msra.mxu0 0.0
    %5204 = vmatprep.subr.mxu0 0.0
    %5205 = vmatpush1.xpose.msra.mxu0 0.0
    %5206 = vmatprep.subr.mxu0 0.0
    %5207 = vmatpush1.xpose.msra.mxu0 0.0
    %5208 = vmatprep.subr.mxu0 0.0
    %5209 = vmatpush1.xpose.msra.mxu0 0.0
    %5210 = vmatprep.mubr.f32.mxu0 0.0
    %5211 = vmatmul.mubr.f32.gmra.mrb[0].mxu0 %v5141
    %v5212 = vpop.f32.mrb[0].mxu0
    %v5213 = vadd.f32 0.0, %v5212
    %v5214 = vpop.f32.mrb[0].mxu0
    %5215 = vmatprep.mubr.f32.mxu0 0.0
    %5216 = vmatmul.mubr.f32.gmra.mrb[0].mxu0 %v5144
    %v5217 = vpop.f32.mrb[0].mxu0
    %v5218 = vadd.f32 0.0, %v5217
    %v5219 = vpop.f32.mrb[0].mxu0
    %5220 = vdwg.mxu0
    %v5221 = vsel %vm376, %v5213, -inf
    %5222 = vmax.xlane.f32.xlu0 %v5221
    %v5223 = vpop.xlane.xlu0 %5222
    %v5224 = vsel %vm380, %v5218, -inf
    %5225 = vmax.xlane.f32.xlu0 %v5224
    %v5226 = vpop.xlane.xlu0 %5225
    %v5227 = vsub.f32 %v5213, %v5223
    %v5228 = vsub.f32 %v5218, %v5226
    %v5229 = vmul.f32 %v5227, 1.442695
    %v5230 = vpow.pop %v5229
    %v5231 = vmul.f32 %v5228, 1.442695
    %v5232 = vpow.pop %v5231
    %v5233 = vsel %vm376, %v5230, 0.0
    %5234 = vadd.xlane.f32.xlu0 %v5233
    %v5235 = vpop.xlane.xlu0 %5234
    %v5236 = vsel %vm380, %v5232, 0.0
    %5237 = vadd.xlane.f32.xlu0 %v5236
    %v5238 = vpop.xlane.xlu0 %5237
    %v5239 = vrcp.pop %v5235
    %v5240 = vrcp.pop %v5238
    %v5241 = vmul.f32 %v5230, %v5239
    %v5242 = vmul.f32 %v5232, %v5240
    %v5243 = vsel %vm181, %v4657, 0.0
    %v5244 = vsel %vm181, %v4659, 0.0
    %v5246 = vsel %vm376, %v5241, 0
    %v5249 = vsel %vm376, %v5242, 0
    %v5252 = vsel %vm523, %v5244, 0
    %5254 = vmatprep.subr.mxu0 0.0
    %5255 = vmatpush1.msra.mxu0 %v5243
    %5256 = vmatprep.subr.mxu0 0.0
    %5257 = vmatpush1.msra.mxu0 %v5252
    %5258 = vmatprep.subr.mxu0 0.0
    %5259 = vmatpush1.msra.mxu0 0.0
    %5260 = vmatprep.subr.mxu0 0.0
    %5261 = vmatpush1.msra.mxu0 0.0
    %5262 = vmatprep.subr.mxu0 0.0
    %5263 = vmatpush1.msra.mxu0 0.0
    %5264 = vmatprep.subr.mxu0 0.0
    %5265 = vmatpush1.msra.mxu0 0.0
    %5266 = vmatprep.subr.mxu0 0.0
    %5267 = vmatpush1.msra.mxu0 0.0
    %5268 = vmatprep.subr.mxu0 0.0
    %5269 = vmatpush1.msra.mxu0 0.0
    %5270 = vmatprep.subr.mxu0 0.0
    %5271 = vmatpush1.msra.mxu0 0.0
    %5272 = vmatprep.subr.mxu0 0.0
    %5273 = vmatpush1.msra.mxu0 0.0
    %5274 = vmatprep.subr.mxu0 0.0
    %5275 = vmatpush1.msra.mxu0 0.0
    %5276 = vmatprep.subr.mxu0 0.0
    %5277 = vmatpush1.msra.mxu0 0.0
    %5278 = vmatprep.subr.mxu0 0.0
    %5279 = vmatpush1.msra.mxu0 0.0
    %5280 = vmatprep.subr.mxu0 0.0
    %5281 = vmatpush1.msra.mxu0 0.0
    %5282 = vmatprep.subr.mxu0 0.0
    %5283 = vmatpush1.msra.mxu0 0.0
    %5284 = vmatprep.subr.mxu0 0.0
    %5285 = vmatpush1.msra.mxu0 0.0
    %5286 = vmatprep.subr.mxu0 0.0
    %5287 = vmatpush1.msra.mxu0 0.0
    %5288 = vmatprep.subr.mxu0 0.0
    %5289 = vmatpush1.msra.mxu0 0.0
    %5290 = vmatprep.subr.mxu0 0.0
    %5291 = vmatpush1.msra.mxu0 0.0
    %5292 = vmatprep.subr.mxu0 0.0
    %5293 = vmatpush1.msra.mxu0 0.0
    %5294 = vmatprep.subr.mxu0 0.0
    %5295 = vmatpush1.msra.mxu0 0.0
    %5296 = vmatprep.subr.mxu0 0.0
    %5297 = vmatpush1.msra.mxu0 0.0
    %5298 = vmatprep.subr.mxu0 0.0
    %5299 = vmatpush1.msra.mxu0 0.0
    %5300 = vmatprep.subr.mxu0 0.0
    %5301 = vmatpush1.msra.mxu0 0.0
    %5302 = vmatprep.subr.mxu0 0.0
    %5303 = vmatpush1.msra.mxu0 0.0
    %5304 = vmatprep.subr.mxu0 0.0
    %5305 = vmatpush1.msra.mxu0 0.0
    %5306 = vmatprep.subr.mxu0 0.0
    %5307 = vmatpush1.msra.mxu0 0.0
    %5308 = vmatprep.subr.mxu0 0.0
    %5309 = vmatpush1.msra.mxu0 0.0
    %5310 = vmatprep.subr.mxu0 0.0
    %5311 = vmatpush1.msra.mxu0 0.0
    %5312 = vmatprep.subr.mxu0 0.0
    %5313 = vmatpush1.msra.mxu0 0.0
    %5314 = vmatprep.subr.mxu0 0.0
    %5315 = vmatpush1.msra.mxu0 0.0
    %5316 = vmatprep.subr.mxu0 0.0
    %5317 = vmatpush1.msra.mxu0 0.0
    %5318 = vmatprep.mubr.f32.mxu0 0.0
    %5319 = vmatmul.mubr.f32.gmra.mrb[0].mxu0 %v5246
    %v5320 = vpop.f32.mrb[0].mxu0
    %v5321 = vadd.f32 0.0, %v5320
    %v5322 = vpop.f32.mrb[0].mxu0
    %5323 = vmatprep.mubr.f32.mxu0 0.0
    %5324 = vmatmul.mubr.f32.gmra.mrb[0].mxu0 %v5249
    %v5325 = vpop.f32.mrb[0].mxu0
    %v5326 = vadd.f32 0.0, %v5325
    %v5327 = vpop.f32.mrb[0].mxu0
    %5328 = vdwg.mxu0
    %v5329 = vadd.f32 %v5134, %v5321
    %v5330 = vadd.f32 %v5135, %v5326
    %v5331 = vadd.f32 %v5136, %v5241
    %v5332 = vadd.f32 %v5137, %v5242
    %5333 = vst.msk [vmem:[#allocation3] sm:$0xff] %vm156, %v5329
    %5334 = vst.msk [vmem:[#allocation3 + $0x8] sm:$0x3] %vm163, %v5330
    %v5335 = vmul.f32 %v5331, 0.25
    %v5336 = vmul.f32 %v5332, 0.25
    %s5337 = scalar_lea.vmem %s14, 64
    %5338 = vst.msk [vmem:[%s5337] sm:$0xff] %vm376, %v5335
    %5339 = vst.msk [vmem:[%s5337 + $0x8] sm:$0x3] %vm380, %v5336
    %v5340 = vsel %vm172, %v4538, 0.0
    %v5342 = vrot.slane %v4542, 2
    %v5343 = vrot.slane %v5340, 2
    %v5344 = vsel %vm1086, %v5342, %v5343
    %v5346 = vrot.slane %v4533, 2
    %v5347 = vrot.slane %v4538, 2
    %v5348 = vsel %vm1086, %v5346, %v5347
    %5349 = vrot.lane.b32.xlu0 %v5348, 96
    %v5350 = vpop.permute.xlu0 %5349
    %5351 = vrot.lane.b32.xlu0 %v5347, 96
    %v5352 = vpop.permute.xlu0 %5351
    %v5353 = vsel %vm156, %v5344, 0
    %v5355 = vsel %vm156, %v5343, 0
    %v5357 = vsel %vm156, %v5350, 0
    %v5359 = vsel %vm156, %v5352, 0
    %5361 = vmatprep.subr.mxu0 0.0
    %5362 = vmatpush1.xpose.msra.mxu0 %v5357
    %5363 = vmatprep.subr.mxu0 0.0
    %5364 = vmatpush1.xpose.msra.mxu0 %v5359
    %5365 = vmatprep.subr.mxu0 0.0
    %5366 = vmatpush1.xpose.msra.mxu0 0.0
    %5367 = vmatprep.subr.mxu0 0.0
    %5368 = vmatpush1.xpose.msra.mxu0 0.0
    %5369 = vmatprep.subr.mxu0 0.0
    %5370 = vmatpush1.xpose.msra.mxu0 0.0
    %5371 = vmatprep.subr.mxu0 0.0
    %5372 = vmatpush1.xpose.msra.mxu0 0.0
    %5373 = vmatprep.subr.mxu0 0.0
    %5374 = vmatpush1.xpose.msra.mxu0 0.0
    %5375 = vmatprep.subr.mxu0 0.0
    %5376 = vmatpush1.xpose.msra.mxu0 0.0
    %5377 = vmatprep.subr.mxu0 0.0
    %5378 = vmatpush1.xpose.msra.mxu0 0.0
    %5379 = vmatprep.subr.mxu0 0.0
    %5380 = vmatpush1.xpose.msra.mxu0 0.0
    %5381 = vmatprep.subr.mxu0 0.0
    %5382 = vmatpush1.xpose.msra.mxu0 0.0
    %5383 = vmatprep.subr.mxu0 0.0
    %5384 = vmatpush1.xpose.msra.mxu0 0.0
    %5385 = vmatprep.subr.mxu0 0.0
    %5386 = vmatpush1.xpose.msra.mxu0 0.0
    %5387 = vmatprep.subr.mxu0 0.0
    %5388 = vmatpush1.xpose.msra.mxu0 0.0
    %5389 = vmatprep.subr.mxu0 0.0
    %5390 = vmatpush1.xpose.msra.mxu0 0.0
    %5391 = vmatprep.subr.mxu0 0.0
    %5392 = vmatpush1.xpose.msra.mxu0 0.0
    %5393 = vmatprep.subr.mxu0 0.0
    %5394 = vmatpush1.xpose.msra.mxu0 0.0
    %5395 = vmatprep.subr.mxu0 0.0
    %5396 = vmatpush1.xpose.msra.mxu0 0.0
    %5397 = vmatprep.subr.mxu0 0.0
    %5398 = vmatpush1.xpose.msra.mxu0 0.0
    %5399 = vmatprep.subr.mxu0 0.0
    %5400 = vmatpush1.xpose.msra.mxu0 0.0
    %5401 = vmatprep.subr.mxu0 0.0
    %5402 = vmatpush1.xpose.msra.mxu0 0.0
    %5403 = vmatprep.subr.mxu0 0.0
    %5404 = vmatpush1.xpose.msra.mxu0 0.0
    %5405 = vmatprep.subr.mxu0 0.0
    %5406 = vmatpush1.xpose.msra.mxu0 0.0
    %5407 = vmatprep.subr.mxu0 0.0
    %5408 = vmatpush1.xpose.msra.mxu0 0.0
    %5409 = vmatprep.subr.mxu0 0.0
    %5410 = vmatpush1.xpose.msra.mxu0 0.0
    %5411 = vmatprep.subr.mxu0 0.0
    %5412 = vmatpush1.xpose.msra.mxu0 0.0
    %5413 = vmatprep.subr.mxu0 0.0
    %5414 = vmatpush1.xpose.msra.mxu0 0.0
    %5415 = vmatprep.subr.mxu0 0.0
    %5416 = vmatpush1.xpose.msra.mxu0 0.0
    %5417 = vmatprep.subr.mxu0 0.0
    %5418 = vmatpush1.xpose.msra.mxu0 0.0
    %5419 = vmatprep.subr.mxu0 0.0
    %5420 = vmatpush1.xpose.msra.mxu0 0.0
    %5421 = vmatprep.subr.mxu0 0.0
    %5422 = vmatpush1.xpose.msra.mxu0 0.0
    %5423 = vmatprep.subr.mxu0 0.0
    %5424 = vmatpush1.xpose.msra.mxu0 0.0
    %5425 = vmatprep.mubr.f32.mxu0 0.0
    %5426 = vmatmul.mubr.f32.gmra.mrb[0].mxu0 %v5353
    %v5427 = vpop.f32.mrb[0].mxu0
    %v5428 = vadd.f32 0.0, %v5427
    %v5429 = vpop.f32.mrb[0].mxu0
    %5430 = vmatprep.mubr.f32.mxu0 0.0
    %5431 = vmatmul.mubr.f32.gmra.mrb[0].mxu0 %v5355
    %v5432 = vpop.f32.mrb[0].mxu0
    %v5433 = vadd.f32 0.0, %v5432
    %v5434 = vpop.f32.mrb[0].mxu0
    %5435 = vdwg.mxu0
    %v5436 = vsel %vm376, %v5428, -inf
    %5437 = vmax.xlane.f32.xlu0 %v5436
    %v5438 = vpop.xlane.xlu0 %5437
    %v5439 = vsel %vm380, %v5433, -inf
    %5440 = vmax.xlane.f32.xlu0 %v5439
    %v5441 = vpop.xlane.xlu0 %5440
    %v5442 = vsub.f32 %v5428, %v5438
    %v5443 = vsub.f32 %v5433, %v5441
    %v5444 = vmul.f32 %v5442, 1.442695
    %v5445 = vpow.pop %v5444
    %v5446 = vmul.f32 %v5443, 1.442695
    %v5447 = vpow.pop %v5446
    %v5448 = vsel %vm376, %v5445, 0.0
    %5449 = vadd.xlane.f32.xlu0 %v5448
    %v5450 = vpop.xlane.xlu0 %5449
    %v5451 = vsel %vm380, %v5447, 0.0
    %5452 = vadd.xlane.f32.xlu0 %v5451
    %v5453 = vpop.xlane.xlu0 %5452
    %v5454 = vrcp.pop %v5450
    %v5455 = vrcp.pop %v5453
    %v5456 = vmul.f32 %v5445, %v5454
    %v5457 = vmul.f32 %v5447, %v5455
    %5458 = vrot.lane.b32.xlu0 %v5348, 64
    %v5459 = vpop.permute.xlu0 %5458
    %5460 = vrot.lane.b32.xlu0 %v5347, 64
    %v5461 = vpop.permute.xlu0 %5460
    %v5464 = vsel %vm172, %v5459, 0.0
    %v5465 = vsel %vm172, %v5461, 0.0
    %v5466 = vadd.f32 %v5456, 0.0
    %v5467 = vadd.f32 %v5457, 0.0
    %v5468 = vsel %vm175, %v4538, 0.0
    %v5470 = vrot.slane %v4667, 2
    %v5471 = vrot.slane %v5468, 2
    %v5472 = vsel %vm1086, %v5470, %v5471
    %v5473 = vsel %vm156, %v5472, 0
    %v5475 = vsel %vm156, %v5471, 0
    %5477 = vmatprep.subr.mxu0 0.0
    %5478 = vmatpush1.xpose.msra.mxu0 %v5357
    %5479 = vmatprep.subr.mxu0 0.0
    %5480 = vmatpush1.xpose.msra.mxu0 %v5359
    %5481 = vmatprep.subr.mxu0 0.0
    %5482 = vmatpush1.xpose.msra.mxu0 0.0
    %5483 = vmatprep.subr.mxu0 0.0
    %5484 = vmatpush1.xpose.msra.mxu0 0.0
    %5485 = vmatprep.subr.mxu0 0.0
    %5486 = vmatpush1.xpose.msra.mxu0 0.0
    %5487 = vmatprep.subr.mxu0 0.0
    %5488 = vmatpush1.xpose.msra.mxu0 0.0
    %5489 = vmatprep.subr.mxu0 0.0
    %5490 = vmatpush1.xpose.msra.mxu0 0.0
    %5491 = vmatprep.subr.mxu0 0.0
    %5492 = vmatpush1.xpose.msra.mxu0 0.0
    %5493 = vmatprep.subr.mxu0 0.0
    %5494 = vmatpush1.xpose.msra.mxu0 0.0
    %5495 = vmatprep.subr.mxu0 0.0
    %5496 = vmatpush1.xpose.msra.mxu0 0.0
    %5497 = vmatprep.subr.mxu0 0.0
    %5498 = vmatpush1.xpose.msra.mxu0 0.0
    %5499 = vmatprep.subr.mxu0 0.0
    %5500 = vmatpush1.xpose.msra.mxu0 0.0
    %5501 = vmatprep.subr.mxu0 0.0
    %5502 = vmatpush1.xpose.msra.mxu0 0.0
    %5503 = vmatprep.subr.mxu0 0.0
    %5504 = vmatpush1.xpose.msra.mxu0 0.0
    %5505 = vmatprep.subr.mxu0 0.0
    %5506 = vmatpush1.xpose.msra.mxu0 0.0
    %5507 = vmatprep.subr.mxu0 0.0
    %5508 = vmatpush1.xpose.msra.mxu0 0.0
    %5509 = vmatprep.subr.mxu0 0.0
    %5510 = vmatpush1.xpose.msra.mxu0 0.0
    %5511 = vmatprep.subr.mxu0 0.0
    %5512 = vmatpush1.xpose.msra.mxu0 0.0
    %5513 = vmatprep.subr.mxu0 0.0
    %5514 = vmatpush1.xpose.msra.mxu0 0.0
    %5515 = vmatprep.subr.mxu0 0.0
    %5516 = vmatpush1.xpose.msra.mxu0 0.0
    %5517 = vmatprep.subr.mxu0 0.0
    %5518 = vmatpush1.xpose.msra.mxu0 0.0
    %5519 = vmatprep.subr.mxu0 0.0
    %5520 = vmatpush1.xpose.msra.mxu0 0.0
    %5521 = vmatprep.subr.mxu0 0.0
    %5522 = vmatpush1.xpose.msra.mxu0 0.0
    %5523 = vmatprep.subr.mxu0 0.0
    %5524 = vmatpush1.xpose.msra.mxu0 0.0
    %5525 = vmatprep.subr.mxu0 0.0
    %5526 = vmatpush1.xpose.msra.mxu0 0.0
    %5527 = vmatprep.subr.mxu0 0.0
    %5528 = vmatpush1.xpose.msra.mxu0 0.0
    %5529 = vmatprep.subr.mxu0 0.0
    %5530 = vmatpush1.xpose.msra.mxu0 0.0
    %5531 = vmatprep.subr.mxu0 0.0
    %5532 = vmatpush1.xpose.msra.mxu0 0.0
    %5533 = vmatprep.subr.mxu0 0.0
    %5534 = vmatpush1.xpose.msra.mxu0 0.0
    %5535 = vmatprep.subr.mxu0 0.0
    %5536 = vmatpush1.xpose.msra.mxu0 0.0
    %5537 = vmatprep.subr.mxu0 0.0
    %5538 = vmatpush1.xpose.msra.mxu0 0.0
    %5539 = vmatprep.subr.mxu0 0.0
    %5540 = vmatpush1.xpose.msra.mxu0 0.0
    %5541 = vmatprep.mubr.f32.mxu0 0.0
    %5542 = vmatmul.mubr.f32.gmra.mrb[0].mxu0 %v5473
    %v5543 = vpop.f32.mrb[0].mxu0
    %v5544 = vadd.f32 0.0, %v5543
    %v5545 = vpop.f32.mrb[0].mxu0
    %5546 = vmatprep.mubr.f32.mxu0 0.0
    %5547 = vmatmul.mubr.f32.gmra.mrb[0].mxu0 %v5475
    %v5548 = vpop.f32.mrb[0].mxu0
    %v5549 = vadd.f32 0.0, %v5548
    %v5550 = vpop.f32.mrb[0].mxu0
    %5551 = vdwg.mxu0
    %v5552 = vsel %vm376, %v5544, -inf
    %5553 = vmax.xlane.f32.xlu0 %v5552
    %v5554 = vpop.xlane.xlu0 %5553
    %v5555 = vsel %vm380, %v5549, -inf
    %5556 = vmax.xlane.f32.xlu0 %v5555
    %v5557 = vpop.xlane.xlu0 %5556
    %v5558 = vsub.f32 %v5544, %v5554
    %v5559 = vsub.f32 %v5549, %v5557
    %v5560 = vmul.f32 %v5558, 1.442695
    %v5561 = vpow.pop %v5560
    %v5562 = vmul.f32 %v5559, 1.442695
    %v5563 = vpow.pop %v5562
    %v5564 = vsel %vm376, %v5561, 0.0
    %5565 = vadd.xlane.f32.xlu0 %v5564
    %v5566 = vpop.xlane.xlu0 %5565
    %v5567 = vsel %vm380, %v5563, 0.0
    %5568 = vadd.xlane.f32.xlu0 %v5567
    %v5569 = vpop.xlane.xlu0 %5568
    %v5570 = vrcp.pop %v5566
    %v5571 = vrcp.pop %v5569
    %v5572 = vmul.f32 %v5561, %v5570
    %v5573 = vmul.f32 %v5563, %v5571
    %v5574 = vsel %vm175, %v5459, 0.0
    %v5575 = vsel %vm175, %v5461, 0.0
    %v5577 = vsel %vm376, %v5572, 0
    %v5580 = vsel %vm376, %v5573, 0
    %v5583 = vsel %vm523, %v5575, 0
    %5585 = vmatprep.subr.mxu0 0.0
    %5586 = vmatpush1.msra.mxu0 %v5574
    %5587 = vmatprep.subr.mxu0 0.0
    %5588 = vmatpush1.msra.mxu0 %v5583
    %5589 = vmatprep.subr.mxu0 0.0
    %5590 = vmatpush1.msra.mxu0 0.0
    %5591 = vmatprep.subr.mxu0 0.0
    %5592 = vmatpush1.msra.mxu0 0.0
    %5593 = vmatprep.subr.mxu0 0.0
    %5594 = vmatpush1.msra.mxu0 0.0
    %5595 = vmatprep.subr.mxu0 0.0
    %5596 = vmatpush1.msra.mxu0 0.0
    %5597 = vmatprep.subr.mxu0 0.0
    %5598 = vmatpush1.msra.mxu0 0.0
    %5599 = vmatprep.subr.mxu0 0.0
    %5600 = vmatpush1.msra.mxu0 0.0
    %5601 = vmatprep.subr.mxu0 0.0
    %5602 = vmatpush1.msra.mxu0 0.0
    %5603 = vmatprep.subr.mxu0 0.0
    %5604 = vmatpush1.msra.mxu0 0.0
    %5605 = vmatprep.subr.mxu0 0.0
    %5606 = vmatpush1.msra.mxu0 0.0
    %5607 = vmatprep.subr.mxu0 0.0
    %5608 = vmatpush1.msra.mxu0 0.0
    %5609 = vmatprep.subr.mxu0 0.0
    %5610 = vmatpush1.msra.mxu0 0.0
    %5611 = vmatprep.subr.mxu0 0.0
    %5612 = vmatpush1.msra.mxu0 0.0
    %5613 = vmatprep.subr.mxu0 0.0
    %5614 = vmatpush1.msra.mxu0 0.0
    %5615 = vmatprep.subr.mxu0 0.0
    %5616 = vmatpush1.msra.mxu0 0.0
    %5617 = vmatprep.subr.mxu0 0.0
    %5618 = vmatpush1.msra.mxu0 0.0
    %5619 = vmatprep.subr.mxu0 0.0
    %5620 = vmatpush1.msra.mxu0 0.0
    %5621 = vmatprep.subr.mxu0 0.0
    %5622 = vmatpush1.msra.mxu0 0.0
    %5623 = vmatprep.subr.mxu0 0.0
    %5624 = vmatpush1.msra.mxu0 0.0
    %5625 = vmatprep.subr.mxu0 0.0
    %5626 = vmatpush1.msra.mxu0 0.0
    %5627 = vmatprep.subr.mxu0 0.0
    %5628 = vmatpush1.msra.mxu0 0.0
    %5629 = vmatprep.subr.mxu0 0.0
    %5630 = vmatpush1.msra.mxu0 0.0
    %5631 = vmatprep.subr.mxu0 0.0
    %5632 = vmatpush1.msra.mxu0 0.0
    %5633 = vmatprep.subr.mxu0 0.0
    %5634 = vmatpush1.msra.mxu0 0.0
    %5635 = vmatprep.subr.mxu0 0.0
    %5636 = vmatpush1.msra.mxu0 0.0
    %5637 = vmatprep.subr.mxu0 0.0
    %5638 = vmatpush1.msra.mxu0 0.0
    %5639 = vmatprep.subr.mxu0 0.0
    %5640 = vmatpush1.msra.mxu0 0.0
    %5641 = vmatprep.subr.mxu0 0.0
    %5642 = vmatpush1.msra.mxu0 0.0
    %5643 = vmatprep.subr.mxu0 0.0
    %5644 = vmatpush1.msra.mxu0 0.0
    %5645 = vmatprep.subr.mxu0 0.0
    %5646 = vmatpush1.msra.mxu0 0.0
    %5647 = vmatprep.subr.mxu0 0.0
    %5648 = vmatpush1.msra.mxu0 0.0
    %5649 = vmatprep.mubr.f32.mxu0 0.0
    %5650 = vmatmul.mubr.f32.gmra.mrb[0].mxu0 %v5577
    %v5651 = vpop.f32.mrb[0].mxu0
    %v5652 = vadd.f32 0.0, %v5651
    %v5653 = vpop.f32.mrb[0].mxu0
    %5654 = vmatprep.mubr.f32.mxu0 0.0
    %5655 = vmatmul.mubr.f32.gmra.mrb[0].mxu0 %v5580
    %v5656 = vpop.f32.mrb[0].mxu0
    %v5657 = vadd.f32 0.0, %v5656
    %v5658 = vpop.f32.mrb[0].mxu0
    %5659 = vdwg.mxu0
    %v5661 = vsel %vm376, %v5456, 0
    %v5664 = vsel %vm376, %v5457, 0
    %v5667 = vsel %vm523, %v5465, 0
    %5669 = vmatprep.subr.mxu0 0.0
    %5670 = vmatpush1.msra.mxu0 %v5464
    %5671 = vmatprep.subr.mxu0 0.0
    %5672 = vmatpush1.msra.mxu0 %v5667
    %5673 = vmatprep.subr.mxu0 0.0
    %5674 = vmatpush1.msra.mxu0 0.0
    %5675 = vmatprep.subr.mxu0 0.0
    %5676 = vmatpush1.msra.mxu0 0.0
    %5677 = vmatprep.subr.mxu0 0.0
    %5678 = vmatpush1.msra.mxu0 0.0
    %5679 = vmatprep.subr.mxu0 0.0
    %5680 = vmatpush1.msra.mxu0 0.0
    %5681 = vmatprep.subr.mxu0 0.0
    %5682 = vmatpush1.msra.mxu0 0.0
    %5683 = vmatprep.subr.mxu0 0.0
    %5684 = vmatpush1.msra.mxu0 0.0
    %5685 = vmatprep.subr.mxu0 0.0
    %5686 = vmatpush1.msra.mxu0 0.0
    %5687 = vmatprep.subr.mxu0 0.0
    %5688 = vmatpush1.msra.mxu0 0.0
    %5689 = vmatprep.subr.mxu0 0.0
    %5690 = vmatpush1.msra.mxu0 0.0
    %5691 = vmatprep.subr.mxu0 0.0
    %5692 = vmatpush1.msra.mxu0 0.0
    %5693 = vmatprep.subr.mxu0 0.0
    %5694 = vmatpush1.msra.mxu0 0.0
    %5695 = vmatprep.subr.mxu0 0.0
    %5696 = vmatpush1.msra.mxu0 0.0
    %5697 = vmatprep.subr.mxu0 0.0
    %5698 = vmatpush1.msra.mxu0 0.0
    %5699 = vmatprep.subr.mxu0 0.0
    %5700 = vmatpush1.msra.mxu0 0.0
    %5701 = vmatprep.subr.mxu0 0.0
    %5702 = vmatpush1.msra.mxu0 0.0
    %5703 = vmatprep.subr.mxu0 0.0
    %5704 = vmatpush1.msra.mxu0 0.0
    %5705 = vmatprep.subr.mxu0 0.0
    %5706 = vmatpush1.msra.mxu0 0.0
    %5707 = vmatprep.subr.mxu0 0.0
    %5708 = vmatpush1.msra.mxu0 0.0
    %5709 = vmatprep.subr.mxu0 0.0
    %5710 = vmatpush1.msra.mxu0 0.0
    %5711 = vmatprep.subr.mxu0 0.0
    %5712 = vmatpush1.msra.mxu0 0.0
    %5713 = vmatprep.subr.mxu0 0.0
    %5714 = vmatpush1.msra.mxu0 0.0
    %5715 = vmatprep.subr.mxu0 0.0
    %5716 = vmatpush1.msra.mxu0 0.0
    %5717 = vmatprep.subr.mxu0 0.0
    %5718 = vmatpush1.msra.mxu0 0.0
    %5719 = vmatprep.subr.mxu0 0.0
    %5720 = vmatpush1.msra.mxu0 0.0
    %5721 = vmatprep.subr.mxu0 0.0
    %5722 = vmatpush1.msra.mxu0 0.0
    %5723 = vmatprep.subr.mxu0 0.0
    %5724 = vmatpush1.msra.mxu0 0.0
    %5725 = vmatprep.subr.mxu0 0.0
    %5726 = vmatpush1.msra.mxu0 0.0
    %5727 = vmatprep.subr.mxu0 0.0
    %5728 = vmatpush1.msra.mxu0 0.0
    %5729 = vmatprep.subr.mxu0 0.0
    %5730 = vmatpush1.msra.mxu0 0.0
    %5731 = vmatprep.subr.mxu0 0.0
    %5732 = vmatpush1.msra.mxu0 0.0
    %5733 = vmatprep.mubr.f32.mxu0 0.0
    %5734 = vmatmul.mubr.f32.gmra.mrb[0].mxu0 %v5661
    %v5735 = vpop.f32.mrb[0].mxu0
    %v5736 = vadd.f32 %v5652, %v5735
    %v5737 = vpop.f32.mrb[0].mxu0
    %5738 = vmatprep.mubr.f32.mxu0 0.0
    %5739 = vmatmul.mubr.f32.gmra.mrb[0].mxu0 %v5664
    %v5740 = vpop.f32.mrb[0].mxu0
    %v5741 = vadd.f32 %v5657, %v5740
    %v5742 = vpop.f32.mrb[0].mxu0
    %5743 = vdwg.mxu0
    %v5744 = vadd.f32 %v5466, %v5572
    %v5745 = vadd.f32 %v5467, %v5573
    %v5746 = vsel %vm178, %v4538, 0.0
    %v5748 = vrot.slane %v4944, 2
    %v5749 = vrot.slane %v5746, 2
    %v5750 = vsel %vm1086, %v5748, %v5749
    %v5751 = vsel %vm156, %v5750, 0
    %v5753 = vsel %vm156, %v5749, 0
    %5755 = vmatprep.subr.mxu0 0.0
    %5756 = vmatpush1.xpose.msra.mxu0 %v5357
    %5757 = vmatprep.subr.mxu0 0.0
    %5758 = vmatpush1.xpose.msra.mxu0 %v5359
    %5759 = vmatprep.subr.mxu0 0.0
    %5760 = vmatpush1.xpose.msra.mxu0 0.0
    %5761 = vmatprep.subr.mxu0 0.0
    %5762 = vmatpush1.xpose.msra.mxu0 0.0
    %5763 = vmatprep.subr.mxu0 0.0
    %5764 = vmatpush1.xpose.msra.mxu0 0.0
    %5765 = vmatprep.subr.mxu0 0.0
    %5766 = vmatpush1.xpose.msra.mxu0 0.0
    %5767 = vmatprep.subr.mxu0 0.0
    %5768 = vmatpush1.xpose.msra.mxu0 0.0
    %5769 = vmatprep.subr.mxu0 0.0
    %5770 = vmatpush1.xpose.msra.mxu0 0.0
    %5771 = vmatprep.subr.mxu0 0.0
    %5772 = vmatpush1.xpose.msra.mxu0 0.0
    %5773 = vmatprep.subr.mxu0 0.0
    %5774 = vmatpush1.xpose.msra.mxu0 0.0
    %5775 = vmatprep.subr.mxu0 0.0
    %5776 = vmatpush1.xpose.msra.mxu0 0.0
    %5777 = vmatprep.subr.mxu0 0.0
    %5778 = vmatpush1.xpose.msra.mxu0 0.0
    %5779 = vmatprep.subr.mxu0 0.0
    %5780 = vmatpush1.xpose.msra.mxu0 0.0
    %5781 = vmatprep.subr.mxu0 0.0
    %5782 = vmatpush1.xpose.msra.mxu0 0.0
    %5783 = vmatprep.subr.mxu0 0.0
    %5784 = vmatpush1.xpose.msra.mxu0 0.0
    %5785 = vmatprep.subr.mxu0 0.0
    %5786 = vmatpush1.xpose.msra.mxu0 0.0
    %5787 = vmatprep.subr.mxu0 0.0
    %5788 = vmatpush1.xpose.msra.mxu0 0.0
    %5789 = vmatprep.subr.mxu0 0.0
    %5790 = vmatpush1.xpose.msra.mxu0 0.0
    %5791 = vmatprep.subr.mxu0 0.0
    %5792 = vmatpush1.xpose.msra.mxu0 0.0
    %5793 = vmatprep.subr.mxu0 0.0
    %5794 = vmatpush1.xpose.msra.mxu0 0.0
    %5795 = vmatprep.subr.mxu0 0.0
    %5796 = vmatpush1.xpose.msra.mxu0 0.0
    %5797 = vmatprep.subr.mxu0 0.0
    %5798 = vmatpush1.xpose.msra.mxu0 0.0
    %5799 = vmatprep.subr.mxu0 0.0
    %5800 = vmatpush1.xpose.msra.mxu0 0.0
    %5801 = vmatprep.subr.mxu0 0.0
    %5802 = vmatpush1.xpose.msra.mxu0 0.0
    %5803 = vmatprep.subr.mxu0 0.0
    %5804 = vmatpush1.xpose.msra.mxu0 0.0
    %5805 = vmatprep.subr.mxu0 0.0
    %5806 = vmatpush1.xpose.msra.mxu0 0.0
    %5807 = vmatprep.subr.mxu0 0.0
    %5808 = vmatpush1.xpose.msra.mxu0 0.0
    %5809 = vmatprep.subr.mxu0 0.0
    %5810 = vmatpush1.xpose.msra.mxu0 0.0
    %5811 = vmatprep.subr.mxu0 0.0
    %5812 = vmatpush1.xpose.msra.mxu0 0.0
    %5813 = vmatprep.subr.mxu0 0.0
    %5814 = vmatpush1.xpose.msra.mxu0 0.0
    %5815 = vmatprep.subr.mxu0 0.0
    %5816 = vmatpush1.xpose.msra.mxu0 0.0
    %5817 = vmatprep.subr.mxu0 0.0
    %5818 = vmatpush1.xpose.msra.mxu0 0.0
    %5819 = vmatprep.mubr.f32.mxu0 0.0
    %5820 = vmatmul.mubr.f32.gmra.mrb[0].mxu0 %v5751
    %v5821 = vpop.f32.mrb[0].mxu0
    %v5822 = vadd.f32 0.0, %v5821
    %v5823 = vpop.f32.mrb[0].mxu0
    %5824 = vmatprep.mubr.f32.mxu0 0.0
    %5825 = vmatmul.mubr.f32.gmra.mrb[0].mxu0 %v5753
    %v5826 = vpop.f32.mrb[0].mxu0
    %v5827 = vadd.f32 0.0, %v5826
    %v5828 = vpop.f32.mrb[0].mxu0
    %5829 = vdwg.mxu0
    %v5830 = vsel %vm376, %v5822, -inf
    %5831 = vmax.xlane.f32.xlu0 %v5830
    %v5832 = vpop.xlane.xlu0 %5831
    %v5833 = vsel %vm380, %v5827, -inf
    %5834 = vmax.xlane.f32.xlu0 %v5833
    %v5835 = vpop.xlane.xlu0 %5834
    %v5836 = vsub.f32 %v5822, %v5832
    %v5837 = vsub.f32 %v5827, %v5835
    %v5838 = vmul.f32 %v5836, 1.442695
    %v5839 = vpow.pop %v5838
    %v5840 = vmul.f32 %v5837, 1.442695
    %v5841 = vpow.pop %v5840
    %v5842 = vsel %vm376, %v5839, 0.0
    %5843 = vadd.xlane.f32.xlu0 %v5842
    %v5844 = vpop.xlane.xlu0 %5843
    %v5845 = vsel %vm380, %v5841, 0.0
    %5846 = vadd.xlane.f32.xlu0 %v5845
    %v5847 = vpop.xlane.xlu0 %5846
    %v5848 = vrcp.pop %v5844
    %v5849 = vrcp.pop %v5847
    %v5850 = vmul.f32 %v5839, %v5848
    %v5851 = vmul.f32 %v5841, %v5849
    %v5852 = vsel %vm178, %v5459, 0.0
    %v5853 = vsel %vm178, %v5461, 0.0
    %v5855 = vsel %vm376, %v5850, 0
    %v5858 = vsel %vm376, %v5851, 0
    %v5861 = vsel %vm523, %v5853, 0
    %5863 = vmatprep.subr.mxu0 0.0
    %5864 = vmatpush1.msra.mxu0 %v5852
    %5865 = vmatprep.subr.mxu0 0.0
    %5866 = vmatpush1.msra.mxu0 %v5861
    %5867 = vmatprep.subr.mxu0 0.0
    %5868 = vmatpush1.msra.mxu0 0.0
    %5869 = vmatprep.subr.mxu0 0.0
    %5870 = vmatpush1.msra.mxu0 0.0
    %5871 = vmatprep.subr.mxu0 0.0
    %5872 = vmatpush1.msra.mxu0 0.0
    %5873 = vmatprep.subr.mxu0 0.0
    %5874 = vmatpush1.msra.mxu0 0.0
    %5875 = vmatprep.subr.mxu0 0.0
    %5876 = vmatpush1.msra.mxu0 0.0
    %5877 = vmatprep.subr.mxu0 0.0
    %5878 = vmatpush1.msra.mxu0 0.0
    %5879 = vmatprep.subr.mxu0 0.0
    %5880 = vmatpush1.msra.mxu0 0.0
    %5881 = vmatprep.subr.mxu0 0.0
    %5882 = vmatpush1.msra.mxu0 0.0
    %5883 = vmatprep.subr.mxu0 0.0
    %5884 = vmatpush1.msra.mxu0 0.0
    %5885 = vmatprep.subr.mxu0 0.0
    %5886 = vmatpush1.msra.mxu0 0.0
    %5887 = vmatprep.subr.mxu0 0.0
    %5888 = vmatpush1.msra.mxu0 0.0
    %5889 = vmatprep.subr.mxu0 0.0
    %5890 = vmatpush1.msra.mxu0 0.0
    %5891 = vmatprep.subr.mxu0 0.0
    %5892 = vmatpush1.msra.mxu0 0.0
    %5893 = vmatprep.subr.mxu0 0.0
    %5894 = vmatpush1.msra.mxu0 0.0
    %5895 = vmatprep.subr.mxu0 0.0
    %5896 = vmatpush1.msra.mxu0 0.0
    %5897 = vmatprep.subr.mxu0 0.0
    %5898 = vmatpush1.msra.mxu0 0.0
    %5899 = vmatprep.subr.mxu0 0.0
    %5900 = vmatpush1.msra.mxu0 0.0
    %5901 = vmatprep.subr.mxu0 0.0
    %5902 = vmatpush1.msra.mxu0 0.0
    %5903 = vmatprep.subr.mxu0 0.0
    %5904 = vmatpush1.msra.mxu0 0.0
    %5905 = vmatprep.subr.mxu0 0.0
    %5906 = vmatpush1.msra.mxu0 0.0
    %5907 = vmatprep.subr.mxu0 0.0
    %5908 = vmatpush1.msra.mxu0 0.0
    %5909 = vmatprep.subr.mxu0 0.0
    %5910 = vmatpush1.msra.mxu0 0.0
    %5911 = vmatprep.subr.mxu0 0.0
    %5912 = vmatpush1.msra.mxu0 0.0
    %5913 = vmatprep.subr.mxu0 0.0
    %5914 = vmatpush1.msra.mxu0 0.0
    %5915 = vmatprep.subr.mxu0 0.0
    %5916 = vmatpush1.msra.mxu0 0.0
    %5917 = vmatprep.subr.mxu0 0.0
    %5918 = vmatpush1.msra.mxu0 0.0
    %5919 = vmatprep.subr.mxu0 0.0
    %5920 = vmatpush1.msra.mxu0 0.0
    %5921 = vmatprep.subr.mxu0 0.0
    %5922 = vmatpush1.msra.mxu0 0.0
    %5923 = vmatprep.subr.mxu0 0.0
    %5924 = vmatpush1.msra.mxu0 0.0
    %5925 = vmatprep.subr.mxu0 0.0
    %5926 = vmatpush1.msra.mxu0 0.0
    %5927 = vmatprep.mubr.f32.mxu0 0.0
    %5928 = vmatmul.mubr.f32.gmra.mrb[0].mxu0 %v5855
    %v5929 = vpop.f32.mrb[0].mxu0
    %v5930 = vadd.f32 0.0, %v5929
    %v5931 = vpop.f32.mrb[0].mxu0
    %5932 = vmatprep.mubr.f32.mxu0 0.0
    %5933 = vmatmul.mubr.f32.gmra.mrb[0].mxu0 %v5858
    %v5934 = vpop.f32.mrb[0].mxu0
    %v5935 = vadd.f32 0.0, %v5934
    %v5936 = vpop.f32.mrb[0].mxu0
    %5937 = vdwg.mxu0
    %v5938 = vadd.f32 %v5736, %v5930
    %v5939 = vadd.f32 %v5741, %v5935
    %v5940 = vadd.f32 %v5744, %v5850
    %v5941 = vadd.f32 %v5745, %v5851
    %v5942 = vsel %vm181, %v4538, 0.0
    %v5944 = vrot.slane %v5139, 2
    %v5945 = vrot.slane %v5942, 2
    %v5946 = vsel %vm1086, %v5944, %v5945
    %v5947 = vsel %vm156, %v5946, 0
    %v5949 = vsel %vm156, %v5945, 0
    %5951 = vmatprep.subr.mxu0 0.0
    %5952 = vmatpush1.xpose.msra.mxu0 %v5357
    %5953 = vmatprep.subr.mxu0 0.0
    %5954 = vmatpush1.xpose.msra.mxu0 %v5359
    %5955 = vmatprep.subr.mxu0 0.0
    %5956 = vmatpush1.xpose.msra.mxu0 0.0
    %5957 = vmatprep.subr.mxu0 0.0
    %5958 = vmatpush1.xpose.msra.mxu0 0.0
    %5959 = vmatprep.subr.mxu0 0.0
    %5960 = vmatpush1.xpose.msra.mxu0 0.0
    %5961 = vmatprep.subr.mxu0 0.0
    %5962 = vmatpush1.xpose.msra.mxu0 0.0
    %5963 = vmatprep.subr.mxu0 0.0
    %5964 = vmatpush1.xpose.msra.mxu0 0.0
    %5965 = vmatprep.subr.mxu0 0.0
    %5966 = vmatpush1.xpose.msra.mxu0 0.0
    %5967 = vmatprep.subr.mxu0 0.0
    %5968 = vmatpush1.xpose.msra.mxu0 0.0
    %5969 = vmatprep.subr.mxu0 0.0
    %5970 = vmatpush1.xpose.msra.mxu0 0.0
    %5971 = vmatprep.subr.mxu0 0.0
    %5972 = vmatpush1.xpose.msra.mxu0 0.0
    %5973 = vmatprep.subr.mxu0 0.0
    %5974 = vmatpush1.xpose.msra.mxu0 0.0
    %5975 = vmatprep.subr.mxu0 0.0
    %5976 = vmatpush1.xpose.msra.mxu0 0.0
    %5977 = vmatprep.subr.mxu0 0.0
    %5978 = vmatpush1.xpose.msra.mxu0 0.0
    %5979 = vmatprep.subr.mxu0 0.0
    %5980 = vmatpush1.xpose.msra.mxu0 0.0
    %5981 = vmatprep.subr.mxu0 0.0
    %5982 = vmatpush1.xpose.msra.mxu0 0.0
    %5983 = vmatprep.subr.mxu0 0.0
    %5984 = vmatpush1.xpose.msra.mxu0 0.0
    %5985 = vmatprep.subr.mxu0 0.0
    %5986 = vmatpush1.xpose.msra.mxu0 0.0
    %5987 = vmatprep.subr.mxu0 0.0
    %5988 = vmatpush1.xpose.msra.mxu0 0.0
    %5989 = vmatprep.subr.mxu0 0.0
    %5990 = vmatpush1.xpose.msra.mxu0 0.0
    %5991 = vmatprep.subr.mxu0 0.0
    %5992 = vmatpush1.xpose.msra.mxu0 0.0
    %5993 = vmatprep.subr.mxu0 0.0
    %5994 = vmatpush1.xpose.msra.mxu0 0.0
    %5995 = vmatprep.subr.mxu0 0.0
    %5996 = vmatpush1.xpose.msra.mxu0 0.0
    %5997 = vmatprep.subr.mxu0 0.0
    %5998 = vmatpush1.xpose.msra.mxu0 0.0
    %5999 = vmatprep.subr.mxu0 0.0
    %6000 = vmatpush1.xpose.msra.mxu0 0.0
    %6001 = vmatprep.subr.mxu0 0.0
    %6002 = vmatpush1.xpose.msra.mxu0 0.0
    %6003 = vmatprep.subr.mxu0 0.0
    %6004 = vmatpush1.xpose.msra.mxu0 0.0
    %6005 = vmatprep.subr.mxu0 0.0
    %6006 = vmatpush1.xpose.msra.mxu0 0.0
    %6007 = vmatprep.subr.mxu0 0.0
    %6008 = vmatpush1.xpose.msra.mxu0 0.0
    %6009 = vmatprep.subr.mxu0 0.0
    %6010 = vmatpush1.xpose.msra.mxu0 0.0
    %6011 = vmatprep.subr.mxu0 0.0
    %6012 = vmatpush1.xpose.msra.mxu0 0.0
    %6013 = vmatprep.subr.mxu0 0.0
    %6014 = vmatpush1.xpose.msra.mxu0 0.0
    %6015 = vmatprep.mubr.f32.mxu0 0.0
    %6016 = vmatmul.mubr.f32.gmra.mrb[0].mxu0 %v5947
    %v6017 = vpop.f32.mrb[0].mxu0
    %v6018 = vadd.f32 0.0, %v6017
    %v6019 = vpop.f32.mrb[0].mxu0
    %6020 = vmatprep.mubr.f32.mxu0 0.0
    %6021 = vmatmul.mubr.f32.gmra.mrb[0].mxu0 %v5949
    %v6022 = vpop.f32.mrb[0].mxu0
    %v6023 = vadd.f32 0.0, %v6022
    %v6024 = vpop.f32.mrb[0].mxu0
    %6025 = vdwg.mxu0
    %v6026 = vsel %vm376, %v6018, -inf
    %6027 = vmax.xlane.f32.xlu0 %v6026
    %v6028 = vpop.xlane.xlu0 %6027
    %v6029 = vsel %vm380, %v6023, -inf
    %6030 = vmax.xlane.f32.xlu0 %v6029
    %v6031 = vpop.xlane.xlu0 %6030
    %v6032 = vsub.f32 %v6018, %v6028
    %v6033 = vsub.f32 %v6023, %v6031
    %v6034 = vmul.f32 %v6032, 1.442695
    %v6035 = vpow.pop %v6034
    %v6036 = vmul.f32 %v6033, 1.442695
    %v6037 = vpow.pop %v6036
    %v6038 = vsel %vm376, %v6035, 0.0
    %6039 = vadd.xlane.f32.xlu0 %v6038
    %v6040 = vpop.xlane.xlu0 %6039
    %v6041 = vsel %vm380, %v6037, 0.0
    %6042 = vadd.xlane.f32.xlu0 %v6041
    %v6043 = vpop.xlane.xlu0 %6042
    %v6044 = vrcp.pop %v6040
    %v6045 = vrcp.pop %v6043
    %v6046 = vmul.f32 %v6035, %v6044
    %v6047 = vmul.f32 %v6037, %v6045
    %v6048 = vsel %vm181, %v5459, 0.0
    %v6049 = vsel %vm181, %v5461, 0.0
    %v6051 = vsel %vm376, %v6046, 0
    %v6054 = vsel %vm376, %v6047, 0
    %v6057 = vsel %vm523, %v6049, 0
    %6059 = vmatprep.subr.mxu0 0.0
    %6060 = vmatpush1.msra.mxu0 %v6048
    %6061 = vmatprep.subr.mxu0 0.0
    %6062 = vmatpush1.msra.mxu0 %v6057
    %6063 = vmatprep.subr.mxu0 0.0
    %6064 = vmatpush1.msra.mxu0 0.0
    %6065 = vmatprep.subr.mxu0 0.0
    %6066 = vmatpush1.msra.mxu0 0.0
    %6067 = vmatprep.subr.mxu0 0.0
    %6068 = vmatpush1.msra.mxu0 0.0
    %6069 = vmatprep.subr.mxu0 0.0
    %6070 = vmatpush1.msra.mxu0 0.0
    %6071 = vmatprep.subr.mxu0 0.0
    %6072 = vmatpush1.msra.mxu0 0.0
    %6073 = vmatprep.subr.mxu0 0.0
    %6074 = vmatpush1.msra.mxu0 0.0
    %6075 = vmatprep.subr.mxu0 0.0
    %6076 = vmatpush1.msra.mxu0 0.0
    %6077 = vmatprep.subr.mxu0 0.0
    %6078 = vmatpush1.msra.mxu0 0.0
    %6079 = vmatprep.subr.mxu0 0.0
    %6080 = vmatpush1.msra.mxu0 0.0
    %6081 = vmatprep.subr.mxu0 0.0
    %6082 = vmatpush1.msra.mxu0 0.0
    %6083 = vmatprep.subr.mxu0 0.0
    %6084 = vmatpush1.msra.mxu0 0.0
    %6085 = vmatprep.subr.mxu0 0.0
    %6086 = vmatpush1.msra.mxu0 0.0
    %6087 = vmatprep.subr.mxu0 0.0
    %6088 = vmatpush1.msra.mxu0 0.0
    %6089 = vmatprep.subr.mxu0 0.0
    %6090 = vmatpush1.msra.mxu0 0.0
    %6091 = vmatprep.subr.mxu0 0.0
    %6092 = vmatpush1.msra.mxu0 0.0
    %6093 = vmatprep.subr.mxu0 0.0
    %6094 = vmatpush1.msra.mxu0 0.0
    %6095 = vmatprep.subr.mxu0 0.0
    %6096 = vmatpush1.msra.mxu0 0.0
    %6097 = vmatprep.subr.mxu0 0.0
    %6098 = vmatpush1.msra.mxu0 0.0
    %6099 = vmatprep.subr.mxu0 0.0
    %6100 = vmatpush1.msra.mxu0 0.0
    %6101 = vmatprep.subr.mxu0 0.0
    %6102 = vmatpush1.msra.mxu0 0.0
    %6103 = vmatprep.subr.mxu0 0.0
    %6104 = vmatpush1.msra.mxu0 0.0
    %6105 = vmatprep.subr.mxu0 0.0
    %6106 = vmatpush1.msra.mxu0 0.0
    %6107 = vmatprep.subr.mxu0 0.0
    %6108 = vmatpush1.msra.mxu0 0.0
    %6109 = vmatprep.subr.mxu0 0.0
    %6110 = vmatpush1.msra.mxu0 0.0
    %6111 = vmatprep.subr.mxu0 0.0
    %6112 = vmatpush1.msra.mxu0 0.0
    %6113 = vmatprep.subr.mxu0 0.0
    %6114 = vmatpush1.msra.mxu0 0.0
    %6115 = vmatprep.subr.mxu0 0.0
    %6116 = vmatpush1.msra.mxu0 0.0
    %6117 = vmatprep.subr.mxu0 0.0
    %6118 = vmatpush1.msra.mxu0 0.0
    %6119 = vmatprep.subr.mxu0 0.0
    %6120 = vmatpush1.msra.mxu0 0.0
    %6121 = vmatprep.subr.mxu0 0.0
    %6122 = vmatpush1.msra.mxu0 0.0
    %6123 = vmatprep.mubr.f32.mxu0 0.0
    %6124 = vmatmul.mubr.f32.gmra.mrb[0].mxu0 %v6051
    %v6125 = vpop.f32.mrb[0].mxu0
    %v6126 = vadd.f32 0.0, %v6125
    %v6127 = vpop.f32.mrb[0].mxu0
    %6128 = vmatprep.mubr.f32.mxu0 0.0
    %6129 = vmatmul.mubr.f32.gmra.mrb[0].mxu0 %v6054
    %v6130 = vpop.f32.mrb[0].mxu0
    %v6131 = vadd.f32 0.0, %v6130
    %v6132 = vpop.f32.mrb[0].mxu0
    %6133 = vdwg.mxu0
    %v6134 = vadd.f32 %v5938, %v6126
    %v6135 = vadd.f32 %v5939, %v6131
    %v6136 = vadd.f32 %v5940, %v6046
    %v6137 = vadd.f32 %v5941, %v6047
    %6138 = vst.msk [vmem:[#allocation3 + $0xa] sm:$0xff] %vm156, %v6134
    %6139 = vst.msk [vmem:[#allocation3 + $0x12] sm:$0x3] %vm163, %v6135
    %v6140 = vmul.f32 %v6136, 0.25
    %v6141 = vmul.f32 %v6137, 0.25
    %s6142 = scalar_lea.vmem %s14, 80
    %6143 = vst.msk [vmem:[%s6142] sm:$0xff] %vm376, %v6140
    %6144 = vst.msk [vmem:[%s6142 + $0x8] sm:$0x3] %vm380, %v6141
    %6145 = vst.msk [vmem:[#allocation2] sm:$0x1] %vm154, %v4434
    %v6146 = vld [vmem:[#allocation3] sm:$0x1]
    %6147 = vst.msk [vmem:[#allocation2 + $0x2] sm:$0x1] %vm154, %v6146
    %vm6148 = vcmask 256002
    %6149 = vst.msk [vmem:[#allocation2 - $0x1] sm:$0x4] %vm6148, %v4435
    %v6150 = vld [vmem:[#allocation3 + $0xa] sm:$0x1]
    %6151 = vst.msk [vmem:[#allocation2 + $0x3] sm:$0x1] %vm154, %v6150
    %v6152 = vld [vmem:[#allocation2] sm:$0x3]
    %v6153 = vld [vmem:[#allocation2 + $0x2] sm:$0x3]
    %s6154 = scalar_lea.vmem %s6, 64
    %v6155 = vld [vmem:[%s6154] sm:$0xff]
    %v6156 = vld [vmem:[%s6154 + $0x8] sm:$0xff]
    %v6157 = vld [vmem:[%s6154 + $0x10] sm:$0xff]
    %v6158 = vld [vmem:[%s6154 + $0x18] sm:$0xff]
    %v6159 = vlaneseq
    %v6160 = vshrl.u32 %v6159, 7
    %v6161 = vsub.s32 0, %v6160
    %v6162 = vrot.slane %v4438, %v6161
    %v6164 = vsel %vm156, %v6153, 0
    %6166 = vmatprep.subr.mxu0 0.0
    %6167 = vmatpush1.msra.mxu0 %v6155
    %6168 = vmatprep.subr.mxu0 0.0
    %6169 = vmatpush1.msra.mxu0 %v6156
    %6170 = vmatprep.subr.mxu0 0.0
    %6171 = vmatpush1.msra.mxu0 %v6157
    %6172 = vmatprep.subr.mxu0 0.0
    %6173 = vmatpush1.msra.mxu0 %v6158
    %6174 = vmatprep.subr.mxu0 0.0
    %6175 = vmatpush1.msra.mxu0 0.0
    %6176 = vmatprep.subr.mxu0 0.0
    %6177 = vmatpush1.msra.mxu0 0.0
    %6178 = vmatprep.subr.mxu0 0.0
    %6179 = vmatpush1.msra.mxu0 0.0
    %6180 = vmatprep.subr.mxu0 0.0
    %6181 = vmatpush1.msra.mxu0 0.0
    %6182 = vmatprep.subr.mxu0 0.0
    %6183 = vmatpush1.msra.mxu0 0.0
    %6184 = vmatprep.subr.mxu0 0.0
    %6185 = vmatpush1.msra.mxu0 0.0
    %6186 = vmatprep.subr.mxu0 0.0
    %6187 = vmatpush1.msra.mxu0 0.0
    %6188 = vmatprep.subr.mxu0 0.0
    %6189 = vmatpush1.msra.mxu0 0.0
    %6190 = vmatprep.subr.mxu0 0.0
    %6191 = vmatpush1.msra.mxu0 0.0
    %6192 = vmatprep.subr.mxu0 0.0
    %6193 = vmatpush1.msra.mxu0 0.0
    %6194 = vmatprep.subr.mxu0 0.0
    %6195 = vmatpush1.msra.mxu0 0.0
    %6196 = vmatprep.subr.mxu0 0.0
    %6197 = vmatpush1.msra.mxu0 0.0
    %6198 = vmatprep.subr.mxu0 0.0
    %6199 = vmatpush1.msra.mxu0 0.0
    %6200 = vmatprep.subr.mxu0 0.0
    %6201 = vmatpush1.msra.mxu0 0.0
    %6202 = vmatprep.subr.mxu0 0.0
    %6203 = vmatpush1.msra.mxu0 0.0
    %6204 = vmatprep.subr.mxu0 0.0
    %6205 = vmatpush1.msra.mxu0 0.0
    %6206 = vmatprep.subr.mxu0 0.0
    %6207 = vmatpush1.msra.mxu0 0.0
    %6208 = vmatprep.subr.mxu0 0.0
    %6209 = vmatpush1.msra.mxu0 0.0
    %6210 = vmatprep.subr.mxu0 0.0
    %6211 = vmatpush1.msra.mxu0 0.0
    %6212 = vmatprep.subr.mxu0 0.0
    %6213 = vmatpush1.msra.mxu0 0.0
    %6214 = vmatprep.subr.mxu0 0.0
    %6215 = vmatpush1.msra.mxu0 0.0
    %6216 = vmatprep.subr.mxu0 0.0
    %6217 = vmatpush1.msra.mxu0 0.0
    %6218 = vmatprep.subr.mxu0 0.0
    %6219 = vmatpush1.msra.mxu0 0.0
    %6220 = vmatprep.subr.mxu0 0.0
    %6221 = vmatpush1.msra.mxu0 0.0
    %6222 = vmatprep.subr.mxu0 0.0
    %6223 = vmatpush1.msra.mxu0 0.0
    %6224 = vmatprep.subr.mxu0 0.0
    %6225 = vmatpush1.msra.mxu0 0.0
    %6226 = vmatprep.subr.mxu0 0.0
    %6227 = vmatpush1.msra.mxu0 0.0
    %6228 = vmatprep.subr.mxu0 0.0
    %6229 = vmatpush1.msra.mxu0 0.0
    %6230 = vmatprep.mubr.f32.mxu0 0.0
    %6231 = vmatmul.mubr.f32.gmra.mrb[0].mxu0 %v6164
    %v6232 = vpop.f32.mrb[0].mxu0
    %v6233 = vadd.f32 %v6162, %v6232
    %v6234 = vpop.f32.mrb[0].mxu0
    %6235 = vdwg.mxu0
    %v6236 = vadd.f32 %v6152, %v6233
    %v6237 = vsel %vm163, %v6236, 0.0
    %6238 = vadd.xlane.f32.xlu0 %v6237
    %v6239 = vpop.xlane.xlu0 %6238
    %v6240 = vmul.f32 %v6239, %v2003
    %v6241 = vsub.f32 %v6236, %v6240
    %v6242 = vmul.f32 %v6241, %v6241
    %v6243 = vsel %vm163, %v6242, 0.0
    %6244 = vadd.xlane.f32.xlu0 %v6243
    %v6245 = vpop.xlane.xlu0 %6244
    %v6246 = vmul.f32 %v6245, %v2003
    %v6247 = vadd.f32 %v6246, 1e-05
    %v6248 = vrsqrt.pop %v6247
    %v6249 = vmul.f32 %v6241, %v6248
    %v6250 = vlaneseq
    %v6251 = vshrl.u32 %v6250, 7
    %v6252 = vsub.s32 2, %v6251
    %v6253 = vrot.slane %v4438, %v6252
    %v6254 = vmul.f32 %v6249, %v6253
    %v6255 = vlaneseq
    %v6256 = vshrl.u32 %v6255, 7
    %v6257 = vsub.s32 3, %v6256
    %v6258 = vrot.slane %v4438, %v6257
    %v6259 = vadd.f32 %v6254, %v6258
    %s6260 = scalar_lea.vmem %s7, 64
    %v6261 = vld [vmem:[%s6260] sm:$0xff]
    %v6262 = vld [vmem:[%s6260 + $0x8] sm:$0xff]
    %v6263 = vld [vmem:[%s6260 + $0x10] sm:$0xff]
    %v6264 = vld [vmem:[%s6260 + $0x18] sm:$0xff]
    %s6265 = scalar_lea.vmem %s8, 2
    %v6266 = vld [vmem:[%s6265] sm:$0x1]
    %v6268 = vlaneseq
    %v6269 = vshrl.u32 %v6268, 7
    %v6270 = vsub.s32 0, %v6269
    %v6271 = vrot.slane %v6266, %v6270
    %v6274 = vsel %vm156, %v6259, 0
    %6276 = vmatprep.subr.mxu0 0.0
    %6277 = vmatpush1.msra.mxu0 %v6261
    %6278 = vmatprep.subr.mxu0 0.0
    %6279 = vmatpush1.msra.mxu0 %v6262
    %6280 = vmatprep.subr.mxu0 0.0
    %6281 = vmatpush1.msra.mxu0 %v6263
    %6282 = vmatprep.subr.mxu0 0.0
    %6283 = vmatpush1.msra.mxu0 %v6264
    %6284 = vmatprep.subr.mxu0 0.0
    %6285 = vmatpush1.msra.mxu0 0.0
    %6286 = vmatprep.subr.mxu0 0.0
    %6287 = vmatpush1.msra.mxu0 0.0
    %6288 = vmatprep.subr.mxu0 0.0
    %6289 = vmatpush1.msra.mxu0 0.0
    %6290 = vmatprep.subr.mxu0 0.0
    %6291 = vmatpush1.msra.mxu0 0.0
    %6292 = vmatprep.subr.mxu0 0.0
    %6293 = vmatpush1.msra.mxu0 0.0
    %6294 = vmatprep.subr.mxu0 0.0
    %6295 = vmatpush1.msra.mxu0 0.0
    %6296 = vmatprep.subr.mxu0 0.0
    %6297 = vmatpush1.msra.mxu0 0.0
    %6298 = vmatprep.subr.mxu0 0.0
    %6299 = vmatpush1.msra.mxu0 0.0
    %6300 = vmatprep.subr.mxu0 0.0
    %6301 = vmatpush1.msra.mxu0 0.0
    %6302 = vmatprep.subr.mxu0 0.0
    %6303 = vmatpush1.msra.mxu0 0.0
    %6304 = vmatprep.subr.mxu0 0.0
    %6305 = vmatpush1.msra.mxu0 0.0
    %6306 = vmatprep.subr.mxu0 0.0
    %6307 = vmatpush1.msra.mxu0 0.0
    %6308 = vmatprep.subr.mxu0 0.0
    %6309 = vmatpush1.msra.mxu0 0.0
    %6310 = vmatprep.subr.mxu0 0.0
    %6311 = vmatpush1.msra.mxu0 0.0
    %6312 = vmatprep.subr.mxu0 0.0
    %6313 = vmatpush1.msra.mxu0 0.0
    %6314 = vmatprep.subr.mxu0 0.0
    %6315 = vmatpush1.msra.mxu0 0.0
    %6316 = vmatprep.subr.mxu0 0.0
    %6317 = vmatpush1.msra.mxu0 0.0
    %6318 = vmatprep.subr.mxu0 0.0
    %6319 = vmatpush1.msra.mxu0 0.0
    %6320 = vmatprep.subr.mxu0 0.0
    %6321 = vmatpush1.msra.mxu0 0.0
    %6322 = vmatprep.subr.mxu0 0.0
    %6323 = vmatpush1.msra.mxu0 0.0
    %6324 = vmatprep.subr.mxu0 0.0
    %6325 = vmatpush1.msra.mxu0 0.0
    %6326 = vmatprep.subr.mxu0 0.0
    %6327 = vmatpush1.msra.mxu0 0.0
    %6328 = vmatprep.subr.mxu0 0.0
    %6329 = vmatpush1.msra.mxu0 0.0
    %6330 = vmatprep.subr.mxu0 0.0
    %6331 = vmatpush1.msra.mxu0 0.0
    %6332 = vmatprep.subr.mxu0 0.0
    %6333 = vmatpush1.msra.mxu0 0.0
    %6334 = vmatprep.subr.mxu0 0.0
    %6335 = vmatpush1.msra.mxu0 0.0
    %6336 = vmatprep.subr.mxu0 0.0
    %6337 = vmatpush1.msra.mxu0 0.0
    %6338 = vmatprep.subr.mxu0 0.0
    %6339 = vmatpush1.msra.mxu0 0.0
    %6340 = vmatprep.mubr.f32.mxu0 0.0
    %6341 = vmatmul.mubr.f32.gmra.mrb[0].mxu0 %v6274
    %v6342 = vpop.f32.mrb[0].mxu0
    %v6343 = vadd.f32 %v6271, %v6342
    %v6344 = vpop.f32.mrb[0].mxu0
    %6345 = vdwg.mxu0
    %v6346 = vmax.f32 %v6343, 0.0
    %s6347 = scalar_lea.vmem %s9, 128
    %v6348 = vld [vmem:[%s6347] sm:$0xff]
    %v6349 = vld [vmem:[%s6347 + $0x8] sm:$0xff]
    %v6350 = vld [vmem:[%s6347 + $0x10] sm:$0xff]
    %v6351 = vld [vmem:[%s6347 + $0x18] sm:$0xff]
    %v6352 = vld [vmem:[%s6347 + $0x20] sm:$0xff]
    %v6353 = vld [vmem:[%s6347 + $0x28] sm:$0xff]
    %v6354 = vld [vmem:[%s6347 + $0x30] sm:$0xff]
    %v6355 = vld [vmem:[%s6347 + $0x38] sm:$0xff]
    %v6356 = vlaneseq
    %v6357 = vshrl.u32 %v6356, 7
    %v6358 = vsub.s32 1, %v6357
    %v6359 = vrot.slane %v4438, %v6358
    %v6361 = vsel %vm2163, %v6346, 0
    %6363 = vmatprep.subr.mxu0 0.0
    %6364 = vmatpush1.msra.mxu0 %v6348
    %6365 = vmatprep.subr.mxu0 0.0
    %6366 = vmatpush1.msra.mxu0 %v6349
    %6367 = vmatprep.subr.mxu0 0.0
    %6368 = vmatpush1.msra.mxu0 %v6350
    %6369 = vmatprep.subr.mxu0 0.0
    %6370 = vmatpush1.msra.mxu0 %v6351
    %6371 = vmatprep.subr.mxu0 0.0
    %6372 = vmatpush1.msra.mxu0 %v6352
    %6373 = vmatprep.subr.mxu0 0.0
    %6374 = vmatpush1.msra.mxu0 %v6353
    %6375 = vmatprep.subr.mxu0 0.0
    %6376 = vmatpush1.msra.mxu0 %v6354
    %6377 = vmatprep.subr.mxu0 0.0
    %6378 = vmatpush1.msra.mxu0 %v6355
    %6379 = vmatprep.subr.mxu0 0.0
    %6380 = vmatpush1.msra.mxu0 0.0
    %6381 = vmatprep.subr.mxu0 0.0
    %6382 = vmatpush1.msra.mxu0 0.0
    %6383 = vmatprep.subr.mxu0 0.0
    %6384 = vmatpush1.msra.mxu0 0.0
    %6385 = vmatprep.subr.mxu0 0.0
    %6386 = vmatpush1.msra.mxu0 0.0
    %6387 = vmatprep.subr.mxu0 0.0
    %6388 = vmatpush1.msra.mxu0 0.0
    %6389 = vmatprep.subr.mxu0 0.0
    %6390 = vmatpush1.msra.mxu0 0.0
    %6391 = vmatprep.subr.mxu0 0.0
    %6392 = vmatpush1.msra.mxu0 0.0
    %6393 = vmatprep.subr.mxu0 0.0
    %6394 = vmatpush1.msra.mxu0 0.0
    %6395 = vmatprep.subr.mxu0 0.0
    %6396 = vmatpush1.msra.mxu0 0.0
    %6397 = vmatprep.subr.mxu0 0.0
    %6398 = vmatpush1.msra.mxu0 0.0
    %6399 = vmatprep.subr.mxu0 0.0
    %6400 = vmatpush1.msra.mxu0 0.0
    %6401 = vmatprep.subr.mxu0 0.0
    %6402 = vmatpush1.msra.mxu0 0.0
    %6403 = vmatprep.subr.mxu0 0.0
    %6404 = vmatpush1.msra.mxu0 0.0
    %6405 = vmatprep.subr.mxu0 0.0
    %6406 = vmatpush1.msra.mxu0 0.0
    %6407 = vmatprep.subr.mxu0 0.0
    %6408 = vmatpush1.msra.mxu0 0.0
    %6409 = vmatprep.subr.mxu0 0.0
    %6410 = vmatpush1.msra.mxu0 0.0
    %6411 = vmatprep.subr.mxu0 0.0
    %6412 = vmatpush1.msra.mxu0 0.0
    %6413 = vmatprep.subr.mxu0 0.0
    %6414 = vmatpush1.msra.mxu0 0.0
    %6415 = vmatprep.subr.mxu0 0.0
    %6416 = vmatpush1.msra.mxu0 0.0
    %6417 = vmatprep.subr.mxu0 0.0
    %6418 = vmatpush1.msra.mxu0 0.0
    %6419 = vmatprep.subr.mxu0 0.0
    %6420 = vmatpush1.msra.mxu0 0.0
    %6421 = vmatprep.subr.mxu0 0.0
    %6422 = vmatpush1.msra.mxu0 0.0
    %6423 = vmatprep.subr.mxu0 0.0
    %6424 = vmatpush1.msra.mxu0 0.0
    %6425 = vmatprep.subr.mxu0 0.0
    %6426 = vmatpush1.msra.mxu0 0.0
    %6427 = vmatprep.mubr.f32.mxu0 0.0
    %6428 = vmatmul.mubr.f32.gmra.mrb[0].mxu0 %v6361
    %v6429 = vpop.f32.mrb[0].mxu0
    %v6430 = vadd.f32 %v6359, %v6429
    %v6431 = vpop.f32.mrb[0].mxu0
    %6432 = vdwg.mxu0
    %v6433 = vadd.f32 %v6259, %v6430
    %v6434 = vsel %vm163, %v6433, 0.0
    %6435 = vadd.xlane.f32.xlu0 %v6434
    %v6436 = vpop.xlane.xlu0 %6435
    %v6437 = vmul.f32 %v6436, %v2003
    %v6438 = vsub.f32 %v6433, %v6437
    %v6439 = vmul.f32 %v6438, %v6438
    %v6440 = vsel %vm163, %v6439, 0.0
    %6441 = vadd.xlane.f32.xlu0 %v6440
    %v6442 = vpop.xlane.xlu0 %6441
    %v6443 = vmul.f32 %v6442, %v2003
    %v6444 = vadd.f32 %v6443, 1e-05
    %v6445 = vrsqrt.pop %v6444
    %v6446 = vmul.f32 %v6438, %v6445
    %v6447 = vlaneseq
    %v6448 = vshrl.u32 %v6447, 7
    %v6449 = vsub.s32 4, %v6448
    %v6450 = vrot.slane %v4438, %v6449
    %v6451 = vmul.f32 %v6446, %v6450
    %v6452 = vlaneseq
    %v6453 = vshrl.u32 %v6452, 7
    %v6454 = vsub.s32 5, %v6453
    %v6455 = vrot.slane %v4438, %v6454
    %v6456 = vadd.f32 %v6451, %v6455
    %v6457 = vmax.f32 %v6456, 0.0
    %v6458 = vld [vmem:[%s11] sm:$0xff]
    %v6459 = vld [vmem:[%s11 + $0x8] sm:$0xff]
    %v6460 = vld [vmem:[%s11 + $0x10] sm:$0xff]
    %v6461 = vld [vmem:[%s11 + $0x18] sm:$0xff]
    %v6462 = vld [vmem:[%s12] sm:$0x1]
    %v6464 = vlaneseq
    %v6465 = vshrl.u32 %v6464, 7
    %v6466 = vsub.s32 0, %v6465
    %v6467 = vrot.slane %v6462, %v6466
    %v6470 = vsel %vm156, %v6457, 0
    %6472 = vmatprep.subr.mxu0 0.0
    %6473 = vmatpush1.msra.mxu0 %v6458
    %6474 = vmatprep.subr.mxu0 0.0
    %6475 = vmatpush1.msra.mxu0 %v6459
    %6476 = vmatprep.subr.mxu0 0.0
    %6477 = vmatpush1.msra.mxu0 %v6460
    %6478 = vmatprep.subr.mxu0 0.0
    %6479 = vmatpush1.msra.mxu0 %v6461
    %6480 = vmatprep.subr.mxu0 0.0
    %6481 = vmatpush1.msra.mxu0 0.0
    %6482 = vmatprep.subr.mxu0 0.0
    %6483 = vmatpush1.msra.mxu0 0.0
    %6484 = vmatprep.subr.mxu0 0.0
    %6485 = vmatpush1.msra.mxu0 0.0
    %6486 = vmatprep.subr.mxu0 0.0
    %6487 = vmatpush1.msra.mxu0 0.0
    %6488 = vmatprep.subr.mxu0 0.0
    %6489 = vmatpush1.msra.mxu0 0.0
    %6490 = vmatprep.subr.mxu0 0.0
    %6491 = vmatpush1.msra.mxu0 0.0
    %6492 = vmatprep.subr.mxu0 0.0
    %6493 = vmatpush1.msra.mxu0 0.0
    %6494 = vmatprep.subr.mxu0 0.0
    %6495 = vmatpush1.msra.mxu0 0.0
    %6496 = vmatprep.subr.mxu0 0.0
    %6497 = vmatpush1.msra.mxu0 0.0
    %6498 = vmatprep.subr.mxu0 0.0
    %6499 = vmatpush1.msra.mxu0 0.0
    %6500 = vmatprep.subr.mxu0 0.0
    %6501 = vmatpush1.msra.mxu0 0.0
    %6502 = vmatprep.subr.mxu0 0.0
    %6503 = vmatpush1.msra.mxu0 0.0
    %6504 = vmatprep.subr.mxu0 0.0
    %6505 = vmatpush1.msra.mxu0 0.0
    %6506 = vmatprep.subr.mxu0 0.0
    %6507 = vmatpush1.msra.mxu0 0.0
    %6508 = vmatprep.subr.mxu0 0.0
    %6509 = vmatpush1.msra.mxu0 0.0
    %6510 = vmatprep.subr.mxu0 0.0
    %6511 = vmatpush1.msra.mxu0 0.0
    %6512 = vmatprep.subr.mxu0 0.0
    %6513 = vmatpush1.msra.mxu0 0.0
    %6514 = vmatprep.subr.mxu0 0.0
    %6515 = vmatpush1.msra.mxu0 0.0
    %6516 = vmatprep.subr.mxu0 0.0
    %6517 = vmatpush1.msra.mxu0 0.0
    %6518 = vmatprep.subr.mxu0 0.0
    %6519 = vmatpush1.msra.mxu0 0.0
    %6520 = vmatprep.subr.mxu0 0.0
    %6521 = vmatpush1.msra.mxu0 0.0
    %6522 = vmatprep.subr.mxu0 0.0
    %6523 = vmatpush1.msra.mxu0 0.0
    %6524 = vmatprep.subr.mxu0 0.0
    %6525 = vmatpush1.msra.mxu0 0.0
    %6526 = vmatprep.subr.mxu0 0.0
    %6527 = vmatpush1.msra.mxu0 0.0
    %6528 = vmatprep.subr.mxu0 0.0
    %6529 = vmatpush1.msra.mxu0 0.0
    %6530 = vmatprep.subr.mxu0 0.0
    %6531 = vmatpush1.msra.mxu0 0.0
    %6532 = vmatprep.subr.mxu0 0.0
    %6533 = vmatpush1.msra.mxu0 0.0
    %6534 = vmatprep.subr.mxu0 0.0
    %6535 = vmatpush1.msra.mxu0 0.0
    %6536 = vmatprep.mubr.f32.mxu0 0.0
    %6537 = vmatmul.mubr.f32.gmra.mrb[0].mxu0 %v6470
    %v6538 = vpop.f32.mrb[0].mxu0
    %v6539 = vadd.f32 %v6467, %v6538
    %v6540 = vpop.f32.mrb[0].mxu0
    %6541 = vdwg.mxu0
    %vm6542 = vcmask 17408
    %6543 = vst.msk [vmem:[#allocation4] sm:$0x3] %vm6542, %v6539
    // Predicated region
    $region54: #{forward.1} parent=1 // pred_check
      _
    $region55: #{forward.1} parent=1 // pred_check_branch
      %6545 = sbr.rel (0) target = $region57
    $region56: #{forward.1} parent=1 // pred_region
      %s6547 = ssub.s32 32, 32
      %6548 = vsyncadd [#allocation5], %s6547
      %s6550 = sshll.u32 [#allocation4], 4
      %s6551 = int_to_ptr.vmem [resolvable:$true] %s6550
      %6553 = dma.vmem_to_hbm [thread:$0]  %s6551, 32, %s13, [#allocation5]
    $region57: #{forward.1} parent=1 // pred_fallthru
      _
    // Predicated region
    $region58: #{forward.1} parent=1 // pred_check
      _
    $region59: #{forward.1} parent=1 // pred_check_branch
      %6555 = sbr.rel (0) target = $region61
    $region60: #{forward.1} parent=1 // pred_region
      _
    $region61: #{forward.1} parent=1 // pred_fallthru
      _
    // Predicated region
    $region62: #{forward.1} parent=1 // pred_check
      _
    $region63: #{forward.1} parent=1 // pred_check_branch
      %6557 = sbr.rel (0) target = $region65
    $region64: #{forward.1} parent=1 // pred_region
      %6558 = dma.done [#allocation5], 32
    $region65: #{forward.1} parent=1 // pred_fallthru
      _
    // Predicated region
    $region66: #{forward.1} parent=1 // pred_check
      _
    $region67: #{forward.1} parent=1 // pred_check_branch
      %6560 = sbr.rel (0) target = $region69
    $region68: #{forward.1} parent=1 // pred_region
      _
    $region69: #{forward.1} parent=1 // pred_fallthru
      _
    %6561 = vsyncpa [#allocation5], 1

</llo_original>
